<compile_context>
chip_gen: v6e
topology: v6e:2x2x1
jax: 0.10.0
libtpu: 0.0.40
codegen_flags: <defaults>
</compile_context>

<pallas_src>
import functools

import jax
import jax.numpy as jnp
from jax.experimental import pallas as pl
from jax.experimental.pallas import tpu as pltpu

# Fixed channel geometry of the module.
C_DSC = 256                          # dsc input channels
C_LOW = 24                           # low_level_feat / reduce_low_dsc channels
C_MID = 32                           # middle_level_feat channels
C_HIGH = 256                         # high_level_feat channels
C_CAT = C_HIGH + C_MID + C_LOW       # 312 concat channels
C_PAD = 384                          # concat channels padded to 3*128 (K align)
C_HID = 256                          # last_conv hidden channels
C_OUT = 128                          # class channels padded to one lane tile
OUT_DTYPE = jnp.float32

_TAPS = tuple((kh, kw) for kh in range(3) for kw in range(3))


# ----------------------------------------------------------------------------
# Fused conv-stack kernel (one grid step == one batch element)
#   input : flattened zero-padded concat plane ((Hl+5)*(Wl+4), 384) bf16
#   output: class logits on the same flattened-row layout (Hl*(Wl+4), 128)
# ----------------------------------------------------------------------------
def _decoder_kernel(fin_ref, mask_ref, w1_ref, b1_ref, w2_ref, b2_ref,
                    wc_ref, bc_ref, out_ref, y_ref, *, Hl, Wl):
    f32, bf16 = jnp.float32, jnp.bfloat16
    Wp = Wl + 4                       # padded row width (shared by all planes)
    M1 = Hl * Wp                      # flattened output rows (incl. 4 wrap cols)

    # Zero only the small top/bottom halo bands of the conv-2 input plane.
    # The left/right halo columns are written as (masked) zeros by the store
    # below, so the whole plane is rewritten every step (megacore safe).
    y_ref[pl.ds(0, Wp + 2), :] = jnp.zeros((Wp + 2, C_HID), f32)
    y_ref[pl.ds((Hl + 1) * Wp + 2, 2 * Wp - 2), :] = (
        jnp.zeros((2 * Wp - 2, C_HID), f32))

    mask = mask_ref[...]              # (M1, 1) f32: 1 real column, 0 wrap column

    # ---- last_conv[0..2]: 3x3 conv, dilation=2, pad=2 (+BN folded) + ReLU ----
    # Each tap is a contiguous slice of the flattened padded input; bf16 MXU
    # operands, f32 value accumulation (no scratch accumulator RMW passes).
    acc = None
    for t, (kh, kw) in enumerate(_TAPS):
        start = (2 * kh) * Wp + 2 * kw
        part = jnp.dot(fin_ref[pl.ds(start, M1), :], w1_ref[t],
                       preferred_element_type=f32)
        acc = part if acc is None else acc + part
    y1 = jnp.maximum(acc + b1_ref[...], 0.0) * mask
    # Single contiguous store; masked wrap columns land exactly on the
    # left/right halo columns of the y plane (which must be zero).
    y_ref[pl.ds(Wp + 2, M1), :] = y1

    # ---- last_conv[3..5]: 3x3 conv, dilation=1, pad=1 (+BN folded) + ReLU ----
    acc = None
    for t, (kh, kw) in enumerate(_TAPS):
        start = kh * Wp + kw + 1
        part = jnp.dot(y_ref[pl.ds(start, M1), :].astype(bf16), w2_ref[t],
                       preferred_element_type=f32)
        acc = part if acc is None else acc + part
    y2 = jnp.maximum(acc + b2_ref[...], 0.0)

    # ---- class_conv epilogue: lane-dense 128-wide output (sliced outside) ----
    out = jnp.dot(y2.astype(bf16), wc_ref[...], preferred_element_type=f32)
    out_ref[...] = (out + bc_ref[...]).astype(out_ref.dtype)


def _decoder_pallas(params, fin2, colmask, Hl, Wl):
    N = fin2.shape[0]
    Wp = Wl + 4
    P = (Hl + 5) * Wp
    M1 = Hl * Wp

    kernel = functools.partial(_decoder_kernel, Hl=Hl, Wl=Wl)

    def whole(x):
        nd = x.ndim
        return pl.BlockSpec(x.shape, lambda n, _nd=nd: (0,) * _nd)

    in_specs = [
        pl.BlockSpec((None, P, C_PAD), lambda n: (n, 0, 0)),   # padded concat
        whole(colmask),
        whole(params["w1"]), whole(params["b1"]),
        whole(params["w2"]), whole(params["b2"]),
        whole(params["w_cls"]), whole(params["b_cls"]),
    ]
    out_specs = pl.BlockSpec((None, M1, C_OUT), lambda n: (n, 0, 0))

    # Explicit VMEM budget: double-buffered input/output/weights + y scratch
    # + f32 accumulator temporaries + slack.
    wbytes = sum(int(params[k].size) * params[k].dtype.itemsize
                 for k in ("w1", "b1", "w2", "b2", "w_cls", "b_cls"))
    need = (2 * P * C_PAD * 2                                   # bf16 input
            + 2 * M1 * C_OUT * jnp.dtype(OUT_DTYPE).itemsize    # output
            + 2 * wbytes
            + (Hl + 3) * Wp * C_HID * 4                         # y scratch
            + 3 * M1 * C_HID * 4                                # accum temps
            + (4 << 20))
    vmem_limit = int(min(max(need, 32 << 20), 100 << 20))

    flops = 2 * N * M1 * (9 * C_PAD * C_HID + 9 * C_HID * C_HID
                          + C_HID * C_OUT)
    bytes_accessed = (int(fin2.size) * 2 + int(colmask.size) * 4 + wbytes
                      + N * M1 * C_OUT * jnp.dtype(OUT_DTYPE).itemsize)

    return pl.pallas_call(
        kernel,
        out_shape=jax.ShapeDtypeStruct((N, M1, C_OUT), OUT_DTYPE),
        grid=(N,),
        in_specs=in_specs,
        out_specs=out_specs,
        scratch_shapes=[
            pltpu.VMEM(((Hl + 3) * Wp, C_HID), jnp.float32),    # conv2 input plane
        ],
        compiler_params=pltpu.CompilerParams(
            dimension_semantics=("parallel",),
            vmem_limit_bytes=vmem_limit),
        cost_estimate=pl.CostEstimate(
            flops=flops, transcendentals=0, bytes_accessed=bytes_accessed),
    )(fin2, colmask, params["w1"], params["b1"], params["w2"], params["b2"],
      params["w_cls"], params["b_cls"])


# ----------------------------------------------------------------------------
# Plain-JAX glue: bilinear upsampling (align_corners=True)
# ----------------------------------------------------------------------------
def _interp_matrix(out_size, in_size):
    """Row-stochastic (out_size, in_size) bilinear matrix, align_corners=True."""
    if out_size == 1 or in_size == 1:
        a = jnp.zeros((out_size, in_size), jnp.float32)
        return a.at[:, 0].set(1.0)
    scale = (in_size - 1) / (out_size - 1)
    src = jnp.arange(out_size, dtype=jnp.float32) * scale
    lo = jnp.clip(jnp.floor(src).astype(jnp.int32), 0, in_size - 1)
    hi = jnp.clip(lo + 1, 0, in_size - 1)
    frac = src - lo.astype(jnp.float32)
    rows = jnp.arange(out_size)
    a = jnp.zeros((out_size, in_size), jnp.float32)
    a = a.at[rows, lo].add(1.0 - frac)
    a = a.at[rows, hi].add(frac)
    return a


def bilinear_resize(x, out_h, out_w):
    """x: (N,H,W,C) -> (N,out_h,out_w,C); matches F.interpolate(bilinear,
    align_corners=True)."""
    _, h, w, _ = x.shape
    ah = _interp_matrix(out_h, h)
    aw = _interp_matrix(out_w, w)
    y = jnp.einsum("oh,nhwc->nowc", ah, x)
    y = jnp.einsum("pw,nowc->nopc", aw, y)
    return y


# ----------------------------------------------------------------------------
# Parameters (deterministic kaiming-style init, BN folded; bf16 conv weights)
# ----------------------------------------------------------------------------
def init_params(num_classes, key):
    ks = jax.random.split(key, 6)
    f32, bf16 = jnp.float32, jnp.bfloat16

    def kaiming(k, shape, fan_in):
        return jax.random.normal(k, shape, f32) * jnp.sqrt(2.0 / fan_in)

    def bias(k, shape, fan_in):
        bound = 1.0 / jnp.sqrt(fan_in)
        return jax.random.uniform(k, shape, f32, -bound, bound)

    eps = 1e-5
    bn_scale = 1.0 / jnp.sqrt(1.0 + eps)      # gamma=1, var=1, mean=0, beta=0
    p = {}
    # reduce_low_dsc: Conv2d(256 -> 24, 1x1, bias=True), weight as (Cin, Cout)
    p["w_reduce"] = kaiming(ks[0], (C_DSC, C_LOW), C_DSC)
    p["b_reduce"] = bias(ks[1], (C_LOW,), float(C_DSC))
    # last_conv[0]: Conv2d(312->256, 3x3, dil=2, bias=False) + BN folded.
    # Layout (tap, cin, cout), cin order [high(256) | mid(32) | low(24)],
    # K padded 312 -> 384 with zero rows.
    w1 = kaiming(ks[2], (9, C_CAT, C_HID), 9 * C_CAT) * bn_scale
    p["w1"] = jnp.pad(w1, ((0, 0), (0, C_PAD - C_CAT), (0, 0))).astype(bf16)
    p["b1"] = jnp.zeros((1, C_HID), f32)
    # last_conv[3]: Conv2d(256->256, 3x3, dil=1, bias=False) + BN folded
    w2 = kaiming(ks[3], (9, C_HID, C_HID), 9 * C_HID) * bn_scale
    p["w2"] = w2.astype(bf16)
    p["b2"] = jnp.zeros((1, C_HID), f32)
    # class_conv: Conv2d(256 -> num_classes, 1x1, bias=True), out padded to 128
    wc = kaiming(ks[4], (C_HID, num_classes), C_HID)
    p["w_cls"] = jnp.pad(wc, ((0, 0), (0, C_OUT - num_classes))).astype(bf16)
    bc = bias(ks[5], (1, num_classes), float(C_HID))
    p["b_cls"] = jnp.pad(bc, ((0, 0), (0, C_OUT - num_classes)))
    # beta_low: nn.Parameter(ones(24,1,1)) -> per-channel scale
    p["beta_low"] = jnp.ones((C_LOW,), f32)
    return p


# ----------------------------------------------------------------------------
# Pure-JAX reference of the same conv-stack math (correctness check only)
# ----------------------------------------------------------------------------
def _reference_path(params, final_bf16):
    f32, bf16 = jnp.float32, jnp.bfloat16
    hi = jax.lax.Precision.HIGHEST
    x = final_bf16.astype(f32)
    x = jnp.pad(x, ((0, 0), (0, 0), (0, 0), (0, C_PAD - C_CAT)))

    def conv3x3(x, w, b, dil):
        n, h, wd, c = x.shape
        xp = jnp.pad(x, ((0, 0), (dil, dil), (dil, dil), (0, 0)))
        acc = None
        for t, (kh, kw) in enumerate(_TAPS):
            patch = xp[:, kh * dil:kh * dil + h, kw * dil:kw * dil + wd, :]
            part = jnp.einsum("nhwc,co->nhwo",
                              patch.astype(bf16).astype(f32),
                              w[t].astype(f32), precision=hi)
            acc = part if acc is None else acc + part
        return jnp.maximum(acc + b, 0.0)

    y = conv3x3(x, params["w1"], params["b1"], 2)
    y = conv3x3(y, params["w2"], params["b2"], 1)
    out = jnp.einsum("nhwc,co->nhwo", y.astype(bf16).astype(f32),
                     params["w_cls"].astype(f32), precision=hi)
    return (out + params["b_cls"]).astype(OUT_DTYPE)     # (N, Hl, Wl, 128)


# ----------------------------------------------------------------------------
# Forward pass (inputs/outputs NCHW to match PyTorch)
# ----------------------------------------------------------------------------
@functools.partial(jax.jit, static_argnames=("num_classes", "use_pallas"))
def decoder_forward(params, dsc, low_level_feat, middle_level_feat,
                    high_level_feat, num_classes, use_pallas=True):
    f32, bf16 = jnp.float32, jnp.bfloat16
    # NCHW -> NHWC
    dsc = jnp.transpose(dsc, (0, 2, 3, 1)).astype(f32)
    low = jnp.transpose(low_level_feat, (0, 2, 3, 1)).astype(f32)
    mid = jnp.transpose(middle_level_feat, (0, 2, 3, 1)).astype(f32)
    high = jnp.transpose(high_level_feat, (0, 2, 3, 1)).astype(f32)
    N, Hl, Wl, _ = low.shape

    # reduce_low_dsc at the ORIGINAL dsc resolution (PyTorch order), then
    # bilinear upsample (align_corners=True) of the 24-channel result; gating
    # and the upsampling of high/mid are thin XLA glue.
    low_dsc = (jnp.einsum("nhwc,co->nhwo", dsc, params["w_reduce"])
               + params["b_reduce"])
    low_dsc = bilinear_resize(low_dsc, Hl, Wl)
    diff = low_dsc - low
    gated = jnp.log1p(diff * diff) * params["beta_low"] * low

    high_up = bilinear_resize(high, Hl, Wl)
    mid_up = bilinear_resize(mid, Hl, Wl)

    # Concat channels [high | mid | gated-low], cast once to bf16.
    final = jnp.concatenate([high_up, mid_up, gated], axis=-1).astype(bf16)

    if use_pallas:
        Wp = Wl + 4
        # Zero-pad: channels 312->384, rows +2/+3, cols +2/+2, then flatten
        # (H, W) so every conv tap inside the kernel is a contiguous slice.
        finp = jnp.pad(final, ((0, 0), (2, 3), (2, 2), (0, C_PAD - C_CAT)))
        fin2 = finp.reshape(N, (Hl + 5) * Wp, C_PAD)
        colmask = jnp.tile((jnp.arange(Wp) < Wl).astype(f32), Hl)[:, None]
        out2 = _decoder_pallas(params, fin2, colmask, Hl, Wl)
        out = out2.reshape(N, Hl, Wp, C_OUT)[:, :, :Wl, :]
    else:
        out = _reference_path(params, final)

    out = out[..., :num_classes].astype(f32)      # drop lane padding
    return jnp.transpose(out, (0, 3, 1, 2))       # NHWC -> NCHW


# ----------------------------------------------------------------------------
if __name__ == "__main__":
    num_classes = 6
    key = jax.random.PRNGKey(0)
    k_par, k_dsc, k_low, k_mid, k_high = jax.random.split(key, 5)

    params = init_params(num_classes, k_par)

    # Channel counts fixed by the module (256 / 24 / 32 / 256 -> concat 312);
    # spatial sizes kept small.
    dsc = jax.random.normal(k_dsc, (2, 256, 4, 4), jnp.float32)
    low_level_feat = jax.random.normal(k_low, (2, 24, 8, 8), jnp.float32)
    middle_level_feat = jax.random.normal(k_mid, (2, 32, 4, 4), jnp.float32)
    high_level_feat = jax.random.normal(k_high, (2, 256, 4, 4), jnp.float32)

    out = decoder_forward(params, dsc, low_level_feat, middle_level_feat,
                          high_level_feat, num_classes=num_classes)
    out = jax.block_until_ready(out)
    assert out.shape == (2, num_classes, 8, 8), out.shape
    assert bool(jnp.all(jnp.isfinite(out)))

    # Cross-check against a pure-JAX reference of the same math.
    ref = jax.block_until_ready(
        decoder_forward(params, dsc, low_level_feat, middle_level_feat,
                        high_level_feat, num_classes=num_classes,
                        use_pallas=False))
    max_err = float(jnp.max(jnp.abs(out - ref)))
    assert bool(jnp.allclose(out, ref, rtol=2e-2, atol=2e-2)), max_err

    print("KERNEL_OK")
</pallas_src>

<mosaic_0001>
module attributes {stable_mosaic.version = 11 : i64} {
  func.func private @main(%arg0: i32) attributes {dimension_semantics = [#tpu.dimension_semantics<core_parallel>], iteration_bounds = array<i64: 2>, tpu.core_type = #tpu.core_type<sc_scalar_subcore>, window_params = []} {
    return
  }
}

module attributes {stable_mosaic.version = 11 : i64} {
  func.func private @main(%arg0: i32) attributes {dimension_semantics = [#tpu.dimension_semantics<core_parallel>], iteration_bounds = array<i64: 2>, tpu.core_type = #tpu.core_type<sc_scalar_subcore>, window_params = []} {
    return
  }
}

module attributes {stable_mosaic.version = 11 : i64} {
  func.func @_decoder_kernel(%arg0: i32, %arg1: memref<1x156x384xbf16, #tpu.memory_space<vmem>>, %arg2: memref<96x1xf32, #tpu.memory_space<vmem>>, %arg3: memref<9x384x256xbf16, #tpu.memory_space<vmem>>, %arg4: memref<1x256xf32, #tpu.memory_space<vmem>>, %arg5: memref<9x256x256xbf16, #tpu.memory_space<vmem>>, %arg6: memref<1x256xf32, #tpu.memory_space<vmem>>, %arg7: memref<256x128xbf16, #tpu.memory_space<vmem>>, %arg8: memref<1x128xf32, #tpu.memory_space<vmem>>, %arg9: memref<1x96x128xf32, #tpu.memory_space<vmem>>, %arg10: memref<132x256xf32, #tpu.memory_space<vmem>>) attributes {dimension_semantics = [#tpu.dimension_semantics<parallel>], iteration_bounds = array<i64: 2>, scalar_prefetch = 0 : i64, scratch_operands = 1 : i64, tpu.core_type = #tpu.core_type<tc>, window_params = [{transform_indices = @transform_0, window_bounds = array<i64: 1, 156, 384>}, {pipeline_mode = #tpu.pipeline_mode<synchronous>, transform_indices = @transform_1, window_bounds = array<i64: 96, 1>}, {pipeline_mode = #tpu.pipeline_mode<synchronous>, transform_indices = @transform_2, window_bounds = array<i64: 9, 384, 256>}, {pipeline_mode = #tpu.pipeline_mode<synchronous>, transform_indices = @transform_3, window_bounds = array<i64: 1, 256>}, {pipeline_mode = #tpu.pipeline_mode<synchronous>, transform_indices = @transform_4, window_bounds = array<i64: 9, 256, 256>}, {pipeline_mode = #tpu.pipeline_mode<synchronous>, transform_indices = @transform_5, window_bounds = array<i64: 1, 256>}, {pipeline_mode = #tpu.pipeline_mode<synchronous>, transform_indices = @transform_6, window_bounds = array<i64: 256, 128>}, {pipeline_mode = #tpu.pipeline_mode<synchronous>, transform_indices = @transform_7, window_bounds = array<i64: 1, 128>}, {transform_indices = @transform_8, window_bounds = array<i64: 1, 96, 128>}]} {
    %cst = arith.constant 0.000000e+00 : f32
    %0 = vector.broadcast %cst : f32 to vector<14x256xf32>
    %c0 = arith.constant 0 : index
    %c0_0 = arith.constant 0 : index
    %1 = vector.load %arg10[%c0, %c0_0] : memref<132x256xf32, #tpu.memory_space<vmem>>, vector<14x256xf32>
    tpu.vector_store %arg10[%c0, %c0_0], %0 {strides = array<i32>} : memref<132x256xf32, #tpu.memory_space<vmem>>, vector<14x256xf32>,
    %cst_1 = arith.constant 0.000000e+00 : f32
    %2 = vector.broadcast %cst_1 : f32 to vector<22x256xf32>
    %c110 = arith.constant 110 : index
    %c0_2 = arith.constant 0 : index
    %3 = vector.load %arg10[%c110, %c0_2] : memref<132x256xf32, #tpu.memory_space<vmem>>, vector<22x256xf32>
    tpu.vector_store %arg10[%c110, %c0_2], %2 {strides = array<i32>} : memref<132x256xf32, #tpu.memory_space<vmem>>, vector<22x256xf32>,
    %c0_3 = arith.constant 0 : index
    %c0_4 = arith.constant 0 : index
    %4 = vector.load %arg2[%c0_3, %c0_4] : memref<96x1xf32, #tpu.memory_space<vmem>>, vector<96x1xf32>
    %c0_5 = arith.constant 0 : index
    %c0_6 = arith.constant 0 : index
    %c0_7 = arith.constant 0 : index
    %5 = vector.load %arg1[%c0_5, %c0_6, %c0_7] : memref<1x156x384xbf16, #tpu.memory_space<vmem>>, vector<1x96x384xbf16>
    %6 = vector.shape_cast %5 : vector<1x96x384xbf16> to vector<96x384xbf16>
    %c0_8 = arith.constant 0 : index
    %c0_9 = arith.constant 0 : index
    %c0_10 = arith.constant 0 : index
    %7 = vector.load %arg3[%c0_8, %c0_9, %c0_10] : memref<9x384x256xbf16, #tpu.memory_space<vmem>>, vector<1x384x256xbf16>
    %8 = vector.shape_cast %7 : vector<1x384x256xbf16> to vector<384x256xbf16>
    %cst_11 = arith.constant dense<0.000000e+00> : vector<96x256xf32>
    %9 = tpu.matmul %6, %8, %cst_11 {dimension_numbers = #tpu.dot_dimension_numbers<[1], [0], [0], [1], [0, 0, 1, 1], [], []>} : vector<96x384xbf16>, vector<384x256xbf16>, vector<96x256xf32> -> vector<96x256xf32>
    %c0_12 = arith.constant 0 : index
    %c2 = arith.constant 2 : index
    %c0_13 = arith.constant 0 : index
    %10 = vector.load %arg1[%c0_12, %c2, %c0_13] : memref<1x156x384xbf16, #tpu.memory_space<vmem>>, vector<1x96x384xbf16>
    %11 = vector.shape_cast %10 : vector<1x96x384xbf16> to vector<96x384xbf16>
    %c1 = arith.constant 1 : index
    %c0_14 = arith.constant 0 : index
    %c0_15 = arith.constant 0 : index
    %12 = vector.load %arg3[%c1, %c0_14, %c0_15] : memref<9x384x256xbf16, #tpu.memory_space<vmem>>, vector<1x384x256xbf16>
    %13 = vector.shape_cast %12 : vector<1x384x256xbf16> to vector<384x256xbf16>
    %cst_16 = arith.constant dense<0.000000e+00> : vector<96x256xf32>
    %14 = tpu.matmul %11, %13, %cst_16 {dimension_numbers = #tpu.dot_dimension_numbers<[1], [0], [0], [1], [0, 0, 1, 1], [], []>} : vector<96x384xbf16>, vector<384x256xbf16>, vector<96x256xf32> -> vector<96x256xf32>
    %15 = arith.addf %9, %14 : vector<96x256xf32>
    %c0_17 = arith.constant 0 : index
    %c4 = arith.constant 4 : index
    %c0_18 = arith.constant 0 : index
    %16 = vector.load %arg1[%c0_17, %c4, %c0_18] : memref<1x156x384xbf16, #tpu.memory_space<vmem>>, vector<1x96x384xbf16>
    %17 = vector.shape_cast %16 : vector<1x96x384xbf16> to vector<96x384xbf16>
    %c2_19 = arith.constant 2 : index
    %c0_20 = arith.constant 0 : index
    %c0_21 = arith.constant 0 : index
    %18 = vector.load %arg3[%c2_19, %c0_20, %c0_21] : memref<9x384x256xbf16, #tpu.memory_space<vmem>>, vector<1x384x256xbf16>
    %19 = vector.shape_cast %18 : vector<1x384x256xbf16> to vector<384x256xbf16>
    %cst_22 = arith.constant dense<0.000000e+00> : vector<96x256xf32>
    %20 = tpu.matmul %17, %19, %cst_22 {dimension_numbers = #tpu.dot_dimension_numbers<[1], [0], [0], [1], [0, 0, 1, 1], [], []>} : vector<96x384xbf16>, vector<384x256xbf16>, vector<96x256xf32> -> vector<96x256xf32>
    %21 = arith.addf %15, %20 : vector<96x256xf32>
    %c0_23 = arith.constant 0 : index
    %c24 = arith.constant 24 : index
    %c0_24 = arith.constant 0 : index
    %22 = vector.load %arg1[%c0_23, %c24, %c0_24] : memref<1x156x384xbf16, #tpu.memory_space<vmem>>, vector<1x96x384xbf16>
    %23 = vector.shape_cast %22 : vector<1x96x384xbf16> to vector<96x384xbf16>
    %c3 = arith.constant 3 : index
    %c0_25 = arith.constant 0 : index
    %c0_26 = arith.constant 0 : index
    %24 = vector.load %arg3[%c3, %c0_25, %c0_26] : memref<9x384x256xbf16, #tpu.memory_space<vmem>>, vector<1x384x256xbf16>
    %25 = vector.shape_cast %24 : vector<1x384x256xbf16> to vector<384x256xbf16>
    %cst_27 = arith.constant dense<0.000000e+00> : vector<96x256xf32>
    %26 = tpu.matmul %23, %25, %cst_27 {dimension_numbers = #tpu.dot_dimension_numbers<[1], [0], [0], [1], [0, 0, 1, 1], [], []>} : vector<96x384xbf16>, vector<384x256xbf16>, vector<96x256xf32> -> vector<96x256xf32>
    %27 = arith.addf %21, %26 : vector<96x256xf32>
    %c0_28 = arith.constant 0 : index
    %c26 = arith.constant 26 : index
    %c0_29 = arith.constant 0 : index
    %28 = vector.load %arg1[%c0_28, %c26, %c0_29] : memref<1x156x384xbf16, #tpu.memory_space<vmem>>, vector<1x96x384xbf16>
    %29 = vector.shape_cast %28 : vector<1x96x384xbf16> to vector<96x384xbf16>
    %c4_30 = arith.constant 4 : index
    %c0_31 = arith.constant 0 : index
    %c0_32 = arith.constant 0 : index
    %30 = vector.load %arg3[%c4_30, %c0_31, %c0_32] : memref<9x384x256xbf16, #tpu.memory_space<vmem>>, vector<1x384x256xbf16>
    %31 = vector.shape_cast %30 : vector<1x384x256xbf16> to vector<384x256xbf16>
    %cst_33 = arith.constant dense<0.000000e+00> : vector<96x256xf32>
    %32 = tpu.matmul %29, %31, %cst_33 {dimension_numbers = #tpu.dot_dimension_numbers<[1], [0], [0], [1], [0, 0, 1, 1], [], []>} : vector<96x384xbf16>, vector<384x256xbf16>, vector<96x256xf32> -> vector<96x256xf32>
    %33 = arith.addf %27, %32 : vector<96x256xf32>
    %c0_34 = arith.constant 0 : index
    %c28 = arith.constant 28 : index
    %c0_35 = arith.constant 0 : index
    %34 = vector.load %arg1[%c0_34, %c28, %c0_35] : memref<1x156x384xbf16, #tpu.memory_space<vmem>>, vector<1x96x384xbf16>
    %35 = vector.shape_cast %34 : vector<1x96x384xbf16> to vector<96x384xbf16>
    %c5 = arith.constant 5 : index
    %c0_36 = arith.constant 0 : index
    %c0_37 = arith.constant 0 : index
    %36 = vector.load %arg3[%c5, %c0_36, %c0_37] : memref<9x384x256xbf16, #tpu.memory_space<vmem>>, vector<1x384x256xbf16>
    %37 = vector.shape_cast %36 : vector<1x384x256xbf16> to vector<384x256xbf16>
    %cst_38 = arith.constant dense<0.000000e+00> : vector<96x256xf32>
    %38 = tpu.matmul %35, %37, %cst_38 {dimension_numbers = #tpu.dot_dimension_numbers<[1], [0], [0], [1], [0, 0, 1, 1], [], []>} : vector<96x384xbf16>, vector<384x256xbf16>, vector<96x256xf32> -> vector<96x256xf32>
    %39 = arith.addf %33, %38 : vector<96x256xf32>
    %c0_39 = arith.constant 0 : index
    %c48 = arith.constant 48 : index
    %c0_40 = arith.constant 0 : index
    %40 = vector.load %arg1[%c0_39, %c48, %c0_40] : memref<1x156x384xbf16, #tpu.memory_space<vmem>>, vector<1x96x384xbf16>
    %41 = vector.shape_cast %40 : vector<1x96x384xbf16> to vector<96x384xbf16>
    %c6 = arith.constant 6 : index
    %c0_41 = arith.constant 0 : index
    %c0_42 = arith.constant 0 : index
    %42 = vector.load %arg3[%c6, %c0_41, %c0_42] : memref<9x384x256xbf16, #tpu.memory_space<vmem>>, vector<1x384x256xbf16>
    %43 = vector.shape_cast %42 : vector<1x384x256xbf16> to vector<384x256xbf16>
    %cst_43 = arith.constant dense<0.000000e+00> : vector<96x256xf32>
    %44 = tpu.matmul %41, %43, %cst_43 {dimension_numbers = #tpu.dot_dimension_numbers<[1], [0], [0], [1], [0, 0, 1, 1], [], []>} : vector<96x384xbf16>, vector<384x256xbf16>, vector<96x256xf32> -> vector<96x256xf32>
    %45 = arith.addf %39, %44 : vector<96x256xf32>
    %c0_44 = arith.constant 0 : index
    %c50 = arith.constant 50 : index
    %c0_45 = arith.constant 0 : index
    %46 = vector.load %arg1[%c0_44, %c50, %c0_45] : memref<1x156x384xbf16, #tpu.memory_space<vmem>>, vector<1x96x384xbf16>
    %47 = vector.shape_cast %46 : vector<1x96x384xbf16> to vector<96x384xbf16>
    %c7 = arith.constant 7 : index
    %c0_46 = arith.constant 0 : index
    %c0_47 = arith.constant 0 : index
    %48 = vector.load %arg3[%c7, %c0_46, %c0_47] : memref<9x384x256xbf16, #tpu.memory_space<vmem>>, vector<1x384x256xbf16>
    %49 = vector.shape_cast %48 : vector<1x384x256xbf16> to vector<384x256xbf16>
    %cst_48 = arith.constant dense<0.000000e+00> : vector<96x256xf32>
    %50 = tpu.matmul %47, %49, %cst_48 {dimension_numbers = #tpu.dot_dimension_numbers<[1], [0], [0], [1], [0, 0, 1, 1], [], []>} : vector<96x384xbf16>, vector<384x256xbf16>, vector<96x256xf32> -> vector<96x256xf32>
    %51 = arith.addf %45, %50 : vector<96x256xf32>
    %c0_49 = arith.constant 0 : index
    %c52 = arith.constant 52 : index
    %c0_50 = arith.constant 0 : index
    %52 = vector.load %arg1[%c0_49, %c52, %c0_50] : memref<1x156x384xbf16, #tpu.memory_space<vmem>>, vector<1x96x384xbf16>
    %53 = vector.shape_cast %52 : vector<1x96x384xbf16> to vector<96x384xbf16>
    %c8 = arith.constant 8 : index
    %c0_51 = arith.constant 0 : index
    %c0_52 = arith.constant 0 : index
    %54 = vector.load %arg3[%c8, %c0_51, %c0_52] : memref<9x384x256xbf16, #tpu.memory_space<vmem>>, vector<1x384x256xbf16>
    %55 = vector.shape_cast %54 : vector<1x384x256xbf16> to vector<384x256xbf16>
    %cst_53 = arith.constant dense<0.000000e+00> : vector<96x256xf32>
    %56 = tpu.matmul %53, %55, %cst_53 {dimension_numbers = #tpu.dot_dimension_numbers<[1], [0], [0], [1], [0, 0, 1, 1], [], []>} : vector<96x384xbf16>, vector<384x256xbf16>, vector<96x256xf32> -> vector<96x256xf32>
    %57 = arith.addf %51, %56 : vector<96x256xf32>
    %c0_54 = arith.constant 0 : index
    %c0_55 = arith.constant 0 : index
    %58 = vector.load %arg4[%c0_54, %c0_55] : memref<1x256xf32, #tpu.memory_space<vmem>>, vector<1x256xf32>
    %59 = vector.broadcast %58 : vector<1x256xf32> to vector<96x256xf32>
    %60 = arith.addf %57, %59 : vector<96x256xf32>
    %cst_56 = arith.constant 0.000000e+00 : f32
    %61 = vector.broadcast %cst_56 : f32 to vector<96x256xf32>
    %62 = arith.maximumf %60, %61 : vector<96x256xf32>
    %63 = vector.broadcast %4 : vector<96x1xf32> to vector<96x256xf32>
    %64 = arith.mulf %62, %63 : vector<96x256xf32>
    %c14 = arith.constant 14 : index
    %c0_57 = arith.constant 0 : index
    %65 = vector.load %arg10[%c14, %c0_57] : memref<132x256xf32, #tpu.memory_space<vmem>>, vector<96x256xf32>
    tpu.vector_store %arg10[%c14, %c0_57], %64 {strides = array<i32>} : memref<132x256xf32, #tpu.memory_space<vmem>>, vector<96x256xf32>,
    %c1_58 = arith.constant 1 : index
    %c0_59 = arith.constant 0 : index
    %66 = vector.load %arg10[%c1_58, %c0_59] : memref<132x256xf32, #tpu.memory_space<vmem>>, vector<96x256xf32>
    %67 = arith.truncf %66 : vector<96x256xf32> to vector<96x256xbf16>
    %c0_60 = arith.constant 0 : index
    %c0_61 = arith.constant 0 : index
    %c0_62 = arith.constant 0 : index
    %68 = vector.load %arg5[%c0_60, %c0_61, %c0_62] : memref<9x256x256xbf16, #tpu.memory_space<vmem>>, vector<1x256x256xbf16>
    %69 = vector.shape_cast %68 : vector<1x256x256xbf16> to vector<256x256xbf16>
    %cst_63 = arith.constant dense<0.000000e+00> : vector<96x256xf32>
    %70 = tpu.matmul %67, %69, %cst_63 {dimension_numbers = #tpu.dot_dimension_numbers<[1], [0], [0], [1], [0, 0, 1, 1], [], []>} : vector<96x256xbf16>, vector<256x256xbf16>, vector<96x256xf32> -> vector<96x256xf32>
    %c2_64 = arith.constant 2 : index
    %c0_65 = arith.constant 0 : index
    %71 = vector.load %arg10[%c2_64, %c0_65] : memref<132x256xf32, #tpu.memory_space<vmem>>, vector<96x256xf32>
    %72 = arith.truncf %71 : vector<96x256xf32> to vector<96x256xbf16>
    %c1_66 = arith.constant 1 : index
    %c0_67 = arith.constant 0 : index
    %c0_68 = arith.constant 0 : index
    %73 = vector.load %arg5[%c1_66, %c0_67, %c0_68] : memref<9x256x256xbf16, #tpu.memory_space<vmem>>, vector<1x256x256xbf16>
    %74 = vector.shape_cast %73 : vector<1x256x256xbf16> to vector<256x256xbf16>
    %cst_69 = arith.constant dense<0.000000e+00> : vector<96x256xf32>
    %75 = tpu.matmul %72, %74, %cst_69 {dimension_numbers = #tpu.dot_dimension_numbers<[1], [0], [0], [1], [0, 0, 1, 1], [], []>} : vector<96x256xbf16>, vector<256x256xbf16>, vector<96x256xf32> -> vector<96x256xf32>
    %76 = arith.addf %70, %75 : vector<96x256xf32>
    %c3_70 = arith.constant 3 : index
    %c0_71 = arith.constant 0 : index
    %77 = vector.load %arg10[%c3_70, %c0_71] : memref<132x256xf32, #tpu.memory_space<vmem>>, vector<96x256xf32>
    %78 = arith.truncf %77 : vector<96x256xf32> to vector<96x256xbf16>
    %c2_72 = arith.constant 2 : index
    %c0_73 = arith.constant 0 : index
    %c0_74 = arith.constant 0 : index
    %79 = vector.load %arg5[%c2_72, %c0_73, %c0_74] : memref<9x256x256xbf16, #tpu.memory_space<vmem>>, vector<1x256x256xbf16>
    %80 = vector.shape_cast %79 : vector<1x256x256xbf16> to vector<256x256xbf16>
    %cst_75 = arith.constant dense<0.000000e+00> : vector<96x256xf32>
    %81 = tpu.matmul %78, %80, %cst_75 {dimension_numbers = #tpu.dot_dimension_numbers<[1], [0], [0], [1], [0, 0, 1, 1], [], []>} : vector<96x256xbf16>, vector<256x256xbf16>, vector<96x256xf32> -> vector<96x256xf32>
    %82 = arith.addf %76, %81 : vector<96x256xf32>
    %c13 = arith.constant 13 : index
    %c0_76 = arith.constant 0 : index
    %83 = vector.load %arg10[%c13, %c0_76] : memref<132x256xf32, #tpu.memory_space<vmem>>, vector<96x256xf32>
    %84 = arith.truncf %83 : vector<96x256xf32> to vector<96x256xbf16>
    %c3_77 = arith.constant 3 : index
    %c0_78 = arith.constant 0 : index
    %c0_79 = arith.constant 0 : index
    %85 = vector.load %arg5[%c3_77, %c0_78, %c0_79] : memref<9x256x256xbf16, #tpu.memory_space<vmem>>, vector<1x256x256xbf16>
    %86 = vector.shape_cast %85 : vector<1x256x256xbf16> to vector<256x256xbf16>
    %cst_80 = arith.constant dense<0.000000e+00> : vector<96x256xf32>
    %87 = tpu.matmul %84, %86, %cst_80 {dimension_numbers = #tpu.dot_dimension_numbers<[1], [0], [0], [1], [0, 0, 1, 1], [], []>} : vector<96x256xbf16>, vector<256x256xbf16>, vector<96x256xf32> -> vector<96x256xf32>
    %88 = arith.addf %82, %87 : vector<96x256xf32>
    %c14_81 = arith.constant 14 : index
    %c0_82 = arith.constant 0 : index
    %89 = vector.load %arg10[%c14_81, %c0_82] : memref<132x256xf32, #tpu.memory_space<vmem>>, vector<96x256xf32>
    %90 = arith.truncf %89 : vector<96x256xf32> to vector<96x256xbf16>
    %c4_83 = arith.constant 4 : index
    %c0_84 = arith.constant 0 : index
    %c0_85 = arith.constant 0 : index
    %91 = vector.load %arg5[%c4_83, %c0_84, %c0_85] : memref<9x256x256xbf16, #tpu.memory_space<vmem>>, vector<1x256x256xbf16>
    %92 = vector.shape_cast %91 : vector<1x256x256xbf16> to vector<256x256xbf16>
    %cst_86 = arith.constant dense<0.000000e+00> : vector<96x256xf32>
    %93 = tpu.matmul %90, %92, %cst_86 {dimension_numbers = #tpu.dot_dimension_numbers<[1], [0], [0], [1], [0, 0, 1, 1], [], []>} : vector<96x256xbf16>, vector<256x256xbf16>, vector<96x256xf32> -> vector<96x256xf32>
    %94 = arith.addf %88, %93 : vector<96x256xf32>
    %c15 = arith.constant 15 : index
    %c0_87 = arith.constant 0 : index
    %95 = vector.load %arg10[%c15, %c0_87] : memref<132x256xf32, #tpu.memory_space<vmem>>, vector<96x256xf32>
    %96 = arith.truncf %95 : vector<96x256xf32> to vector<96x256xbf16>
    %c5_88 = arith.constant 5 : index
    %c0_89 = arith.constant 0 : index
    %c0_90 = arith.constant 0 : index
    %97 = vector.load %arg5[%c5_88, %c0_89, %c0_90] : memref<9x256x256xbf16, #tpu.memory_space<vmem>>, vector<1x256x256xbf16>
    %98 = vector.shape_cast %97 : vector<1x256x256xbf16> to vector<256x256xbf16>
    %cst_91 = arith.constant dense<0.000000e+00> : vector<96x256xf32>
    %99 = tpu.matmul %96, %98, %cst_91 {dimension_numbers = #tpu.dot_dimension_numbers<[1], [0], [0], [1], [0, 0, 1, 1], [], []>} : vector<96x256xbf16>, vector<256x256xbf16>, vector<96x256xf32> -> vector<96x256xf32>
    %100 = arith.addf %94, %99 : vector<96x256xf32>
    %c25 = arith.constant 25 : index
    %c0_92 = arith.constant 0 : index
    %101 = vector.load %arg10[%c25, %c0_92] : memref<132x256xf32, #tpu.memory_space<vmem>>, vector<96x256xf32>
    %102 = arith.truncf %101 : vector<96x256xf32> to vector<96x256xbf16>
    %c6_93 = arith.constant 6 : index
    %c0_94 = arith.constant 0 : index
    %c0_95 = arith.constant 0 : index
    %103 = vector.load %arg5[%c6_93, %c0_94, %c0_95] : memref<9x256x256xbf16, #tpu.memory_space<vmem>>, vector<1x256x256xbf16>
    %104 = vector.shape_cast %103 : vector<1x256x256xbf16> to vector<256x256xbf16>
    %cst_96 = arith.constant dense<0.000000e+00> : vector<96x256xf32>
    %105 = tpu.matmul %102, %104, %cst_96 {dimension_numbers = #tpu.dot_dimension_numbers<[1], [0], [0], [1], [0, 0, 1, 1], [], []>} : vector<96x256xbf16>, vector<256x256xbf16>, vector<96x256xf32> -> vector<96x256xf32>
    %106 = arith.addf %100, %105 : vector<96x256xf32>
    %c26_97 = arith.constant 26 : index
    %c0_98 = arith.constant 0 : index
    %107 = vector.load %arg10[%c26_97, %c0_98] : memref<132x256xf32, #tpu.memory_space<vmem>>, vector<96x256xf32>
    %108 = arith.truncf %107 : vector<96x256xf32> to vector<96x256xbf16>
    %c7_99 = arith.constant 7 : index
    %c0_100 = arith.constant 0 : index
    %c0_101 = arith.constant 0 : index
    %109 = vector.load %arg5[%c7_99, %c0_100, %c0_101] : memref<9x256x256xbf16, #tpu.memory_space<vmem>>, vector<1x256x256xbf16>
    %110 = vector.shape_cast %109 : vector<1x256x256xbf16> to vector<256x256xbf16>
    %cst_102 = arith.constant dense<0.000000e+00> : vector<96x256xf32>
    %111 = tpu.matmul %108, %110, %cst_102 {dimension_numbers = #tpu.dot_dimension_numbers<[1], [0], [0], [1], [0, 0, 1, 1], [], []>} : vector<96x256xbf16>, vector<256x256xbf16>, vector<96x256xf32> -> vector<96x256xf32>
    %112 = arith.addf %106, %111 : vector<96x256xf32>
    %c27 = arith.constant 27 : index
    %c0_103 = arith.constant 0 : index
    %113 = vector.load %arg10[%c27, %c0_103] : memref<132x256xf32, #tpu.memory_space<vmem>>, vector<96x256xf32>
    %114 = arith.truncf %113 : vector<96x256xf32> to vector<96x256xbf16>
    %c8_104 = arith.constant 8 : index
    %c0_105 = arith.constant 0 : index
    %c0_106 = arith.constant 0 : index
    %115 = vector.load %arg5[%c8_104, %c0_105, %c0_106] : memref<9x256x256xbf16, #tpu.memory_space<vmem>>, vector<1x256x256xbf16>
    %116 = vector.shape_cast %115 : vector<1x256x256xbf16> to vector<256x256xbf16>
    %cst_107 = arith.constant dense<0.000000e+00> : vector<96x256xf32>
    %117 = tpu.matmul %114, %116, %cst_107 {dimension_numbers = #tpu.dot_dimension_numbers<[1], [0], [0], [1], [0, 0, 1, 1], [], []>} : vector<96x256xbf16>, vector<256x256xbf16>, vector<96x256xf32> -> vector<96x256xf32>
    %118 = arith.addf %112, %117 : vector<96x256xf32>
    %c0_108 = arith.constant 0 : index
    %c0_109 = arith.constant 0 : index
    %119 = vector.load %arg6[%c0_108, %c0_109] : memref<1x256xf32, #tpu.memory_space<vmem>>, vector<1x256xf32>
    %120 = vector.broadcast %119 : vector<1x256xf32> to vector<96x256xf32>
    %121 = arith.addf %118, %120 : vector<96x256xf32>
    %cst_110 = arith.constant 0.000000e+00 : f32
    %122 = vector.broadcast %cst_110 : f32 to vector<96x256xf32>
    %123 = arith.maximumf %121, %122 : vector<96x256xf32>
    %124 = arith.truncf %123 : vector<96x256xf32> to vector<96x256xbf16>
    %c0_111 = arith.constant 0 : index
    %c0_112 = arith.constant 0 : index
    %125 = vector.load %arg7[%c0_111, %c0_112] : memref<256x128xbf16, #tpu.memory_space<vmem>>, vector<256x128xbf16>
    %cst_113 = arith.constant dense<0.000000e+00> : vector<96x128xf32>
    %126 = tpu.matmul %124, %125, %cst_113 {dimension_numbers = #tpu.dot_dimension_numbers<[1], [0], [0], [1], [0, 0, 1, 1], [], []>} : vector<96x256xbf16>, vector<256x128xbf16>, vector<96x128xf32> -> vector<96x128xf32>
    %c0_114 = arith.constant 0 : index
    %c0_115 = arith.constant 0 : index
    %127 = vector.load %arg8[%c0_114, %c0_115] : memref<1x128xf32, #tpu.memory_space<vmem>>, vector<1x128xf32>
    %128 = vector.broadcast %127 : vector<1x128xf32> to vector<96x128xf32>
    %129 = arith.addf %126, %128 : vector<96x128xf32>
    %c0_116 = arith.constant 0 : index
    %c0_117 = arith.constant 0 : index
    %c0_118 = arith.constant 0 : index
    %130 = vector.load %arg9[%c0_116, %c0_117, %c0_118] : memref<1x96x128xf32, #tpu.memory_space<vmem>>, vector<1x96x128xf32>
    %131 = vector.shape_cast %130 : vector<1x96x128xf32> to vector<96x128xf32>
    %132 = vector.shape_cast %129 : vector<96x128xf32> to vector<1x96x128xf32>
    tpu.vector_store %arg9[%c0_116, %c0_117, %c0_118], %132 {strides = array<i32>} : memref<1x96x128xf32, #tpu.memory_space<vmem>>, vector<1x96x128xf32>,
    return
  }
  func.func @transform_0(%arg0: i32) -> (i32, i32, i32) {
    %c0_i32 = arith.constant 0 : i32
    %c0_i32_0 = arith.constant 0 : i32
    %c0_i32_1 = arith.constant 0 : i32
    return %arg0, %c0_i32, %c0_i32_0 : i32, i32, i32
  }
  func.func @transform_1(%arg0: i32) -> (i32, i32) {
    %c0_i32 = arith.constant 0 : i32
    %c0_i32_0 = arith.constant 0 : i32
    %c0_i32_1 = arith.constant 0 : i32
    return %c0_i32, %c0_i32_0 : i32, i32
  }
  func.func @transform_2(%arg0: i32) -> (i32, i32, i32) {
    %c0_i32 = arith.constant 0 : i32
    %c0_i32_0 = arith.constant 0 : i32
    %c0_i32_1 = arith.constant 0 : i32
    %c0_i32_2 = arith.constant 0 : i32
    return %c0_i32, %c0_i32_0, %c0_i32_1 : i32, i32, i32
  }
  func.func @transform_3(%arg0: i32) -> (i32, i32) {
    %c0_i32 = arith.constant 0 : i32
    %c0_i32_0 = arith.constant 0 : i32
    %c0_i32_1 = arith.constant 0 : i32
    return %c0_i32, %c0_i32_0 : i32, i32
  }
  func.func @transform_4(%arg0: i32) -> (i32, i32, i32) {
    %c0_i32 = arith.constant 0 : i32
    %c0_i32_0 = arith.constant 0 : i32
    %c0_i32_1 = arith.constant 0 : i32
    %c0_i32_2 = arith.constant 0 : i32
    return %c0_i32, %c0_i32_0, %c0_i32_1 : i32, i32, i32
  }
  func.func @transform_5(%arg0: i32) -> (i32, i32) {
    %c0_i32 = arith.constant 0 : i32
    %c0_i32_0 = arith.constant 0 : i32
    %c0_i32_1 = arith.constant 0 : i32
    return %c0_i32, %c0_i32_0 : i32, i32
  }
  func.func @transform_6(%arg0: i32) -> (i32, i32) {
    %c0_i32 = arith.constant 0 : i32
    %c0_i32_0 = arith.constant 0 : i32
    %c0_i32_1 = arith.constant 0 : i32
    return %c0_i32, %c0_i32_0 : i32, i32
  }
  func.func @transform_7(%arg0: i32) -> (i32, i32) {
    %c0_i32 = arith.constant 0 : i32
    %c0_i32_0 = arith.constant 0 : i32
    %c0_i32_1 = arith.constant 0 : i32
    return %c0_i32, %c0_i32_0 : i32, i32
  }
  func.func @transform_8(%arg0: i32) -> (i32, i32, i32) {
    %c0_i32 = arith.constant 0 : i32
    %c0_i32_0 = arith.constant 0 : i32
    %c0_i32_1 = arith.constant 0 : i32
    return %arg0, %c0_i32, %c0_i32_0 : i32, i32, i32
  }
}

</mosaic_0001>

<llo_original>
// kernel: tile.8
$region0: #{tile.8}
  #allocation0 [shape = 's32[1]{0}', space=sflag, size = 0x4, scoped, tag = 'scoped memory for tile.8']
  %s0 = inlined_call_operand.vmem [shape: f32[12], index: 0, kind: input, shape index: {}]
  %s1 = inlined_call_operand.vmem [shape: f32[8,12], index: 1, kind: output, shape index: {}]
  // Predicated region
  $region2: #{tile.8} parent=0 // pred_check
    _
  $region3: #{tile.8} parent=0 // pred_check_branch
    %3 = sbr.rel (0) target = $region5
  $region4: #{tile.8} parent=0 // pred_region
    _
  $region5: #{tile.8} parent=0 // pred_fallthru
    _
  %v4 = vld [vmem:[%s0] ss:$0 sm:$0xff]
  %5 = vst [vmem:[%s1] sm:$0xff] %v4

// kernel: tile.0
$region0: #{tile.0}
  %s0 = inlined_call_operand.vmem [shape: f32[8,12], index: 0, kind: input, shape index: {}]
  %s1 = inlined_call_operand.vmem [shape: f32[96,1], index: 1, kind: output, shape index: {}]
  %v2 = vld [vmem:[%s0] sm:$0xff]
  %vm3 = vcmask 7168
  %4 = vst.msk [vmem:[%s1] ss:$12 sm:$0xff] %vm3, %v2
  %v5 = vld.sshfl [vmem:[%s0] sm:$0xff pattern:$0x52741630]
  %6 = vrot.lane.b32.xlu0 %v5, 127
  %v7 = vpop.permute.xlu0 %6
  %vm8 = vcmask 7168
  %s9 = scalar_lea.vmem %s1, 1
  %10 = vst.msk [vmem:[%s9] ss:$36 sm:$0x7] %vm8, %v7
  %s11 = scalar_lea.vmem %s1, 4294967201
  %12 = vst.msk [vmem:[%s11] ss:$36 sm:$0x38] %vm8, %v7
  %s13 = scalar_lea.vmem %s1, 4294967105
  %14 = vst.msk [vmem:[%s13] ss:$36 sm:$0xc0] %vm8, %v7
  %v15 = vld.sshfl [vmem:[%s0] sm:$0xff pattern:$0x52741630]
  %16 = vrot.lane.b32.xlu0 %v15, 126
  %v17 = vpop.permute.xlu0 %16
  %vm18 = vcmask 7168
  %s19 = scalar_lea.vmem %s1, 2
  %20 = vst.msk [vmem:[%s19] ss:$36 sm:$0x7] %vm18, %v17
  %s21 = scalar_lea.vmem %s1, 4294967202
  %22 = vst.msk [vmem:[%s21] ss:$36 sm:$0x38] %vm18, %v17
  %s23 = scalar_lea.vmem %s1, 4294967106
  %24 = vst.msk [vmem:[%s23] ss:$36 sm:$0xc0] %vm18, %v17
  %v25 = vld.sshfl [vmem:[%s0] sm:$0xff pattern:$0x52741630]
  %26 = vrot.lane.b32.xlu0 %v25, 125
  %v27 = vpop.permute.xlu0 %26
  %vm28 = vcmask 7168
  %s29 = scalar_lea.vmem %s1, 3
  %30 = vst.msk [vmem:[%s29] ss:$36 sm:$0x7] %vm28, %v27
  %s31 = scalar_lea.vmem %s1, 4294967203
  %32 = vst.msk [vmem:[%s31] ss:$36 sm:$0x38] %vm28, %v27
  %s33 = scalar_lea.vmem %s1, 4294967107
  %34 = vst.msk [vmem:[%s33] ss:$36 sm:$0xc0] %vm28, %v27
  %v35 = vld.sshfl [vmem:[%s0] sm:$0xff pattern:$0x27416305]
  %36 = vrot.lane.b32.xlu0 %v35, 124
  %v37 = vpop.permute.xlu0 %36
  %vm38 = vcmask 7168
  %s39 = scalar_lea.vmem %s1, 64
  %40 = vst.msk [vmem:[%s39] ss:$-60 sm:$0x3] %vm38, %v37
  %s41 = scalar_lea.vmem %s1, 4294967264
  %42 = vst.msk [vmem:[%s41] ss:$36 sm:$0xc] %vm38, %v37
  %s43 = scalar_lea.vmem %s1, 4294967168
  %44 = vst.msk [vmem:[%s43] ss:$36 sm:$0x70] %vm38, %v37
  %s45 = scalar_lea.vmem %s1, 21
  %46 = vst.msk [vmem:[%s45] sm:$0x80] %vm38, %v37
  %v47 = vld.sshfl [vmem:[%s0] sm:$0xff pattern:$0x27416305]
  %48 = vrot.lane.b32.xlu0 %v47, 123
  %v49 = vpop.permute.xlu0 %48
  %vm50 = vcmask 7168
  %s51 = scalar_lea.vmem %s1, 65
  %52 = vst.msk [vmem:[%s51] ss:$-60 sm:$0x3] %vm50, %v49
  %s53 = scalar_lea.vmem %s1, 4294967265
  %54 = vst.msk [vmem:[%s53] ss:$36 sm:$0xc] %vm50, %v49
  %s55 = scalar_lea.vmem %s1, 4294967169
  %56 = vst.msk [vmem:[%s55] ss:$36 sm:$0x70] %vm50, %v49
  %s57 = scalar_lea.vmem %s1, 22
  %58 = vst.msk [vmem:[%s57] sm:$0x80] %vm50, %v49
  %v59 = vld.sshfl [vmem:[%s0] sm:$0xff pattern:$0x27416305]
  %60 = vrot.lane.b32.xlu0 %v59, 122
  %v61 = vpop.permute.xlu0 %60
  %vm62 = vcmask 7168
  %s63 = scalar_lea.vmem %s1, 66
  %64 = vst.msk [vmem:[%s63] ss:$-60 sm:$0x3] %vm62, %v61
  %s65 = scalar_lea.vmem %s1, 4294967266
  %66 = vst.msk [vmem:[%s65] ss:$36 sm:$0xc] %vm62, %v61
  %s67 = scalar_lea.vmem %s1, 4294967170
  %68 = vst.msk [vmem:[%s67] ss:$36 sm:$0x70] %vm62, %v61
  %s69 = scalar_lea.vmem %s1, 23
  %70 = vst.msk [vmem:[%s69] sm:$0x80] %vm62, %v61
  %v71 = vld.sshfl [vmem:[%s0] sm:$0xff pattern:$0x27416305]
  %72 = vrot.lane.b32.xlu0 %v71, 121
  %v73 = vpop.permute.xlu0 %72
  %vm74 = vcmask 7168
  %s75 = scalar_lea.vmem %s1, 67
  %76 = vst.msk [vmem:[%s75] ss:$-60 sm:$0x3] %vm74, %v73
  %s77 = scalar_lea.vmem %s1, 4294967267
  %78 = vst.msk [vmem:[%s77] ss:$36 sm:$0xc] %vm74, %v73
  %s79 = scalar_lea.vmem %s1, 4294967171
  %80 = vst.msk [vmem:[%s79] ss:$36 sm:$0x70] %vm74, %v73
  %s81 = scalar_lea.vmem %s1, 24
  %82 = vst.msk [vmem:[%s81] sm:$0x80] %vm74, %v73
  %v83 = vld.sshfl [vmem:[%s0] sm:$0xff pattern:$0x74163052]
  %84 = vrot.lane.b32.xlu0 %v83, 120
  %v85 = vpop.permute.xlu0 %84
  %vm86 = vcmask 7168
  %s87 = scalar_lea.vmem %s1, 32
  %88 = vst.msk [vmem:[%s87] ss:$36 sm:$0x3] %vm86, %v85
  %s89 = scalar_lea.vmem %s1, 4294967232
  %90 = vst.msk [vmem:[%s89] ss:$36 sm:$0x1c] %vm86, %v85
  %s91 = scalar_lea.vmem %s1, 4294967136
  %92 = vst.msk [vmem:[%s91] ss:$36 sm:$0xe0] %vm86, %v85
  %v93 = vld.sshfl [vmem:[%s0] sm:$0xff pattern:$0x74163052]
  %94 = vrot.lane.b32.xlu0 %v93, 119
  %v95 = vpop.permute.xlu0 %94
  %vm96 = vcmask 7168
  %s97 = scalar_lea.vmem %s1, 33
  %98 = vst.msk [vmem:[%s97] ss:$36 sm:$0x3] %vm96, %v95
  %s99 = scalar_lea.vmem %s1, 4294967233
  %100 = vst.msk [vmem:[%s99] ss:$36 sm:$0x1c] %vm96, %v95
  %s101 = scalar_lea.vmem %s1, 4294967137
  %102 = vst.msk [vmem:[%s101] ss:$36 sm:$0xe0] %vm96, %v95
  %v103 = vld.sshfl [vmem:[%s0] sm:$0xff pattern:$0x74163052]
  %104 = vrot.lane.b32.xlu0 %v103, 118
  %v105 = vpop.permute.xlu0 %104
  %vm106 = vcmask 7168
  %s107 = scalar_lea.vmem %s1, 34
  %108 = vst.msk [vmem:[%s107] ss:$36 sm:$0x3] %vm106, %v105
  %s109 = scalar_lea.vmem %s1, 4294967234
  %110 = vst.msk [vmem:[%s109] ss:$36 sm:$0x1c] %vm106, %v105
  %s111 = scalar_lea.vmem %s1, 4294967138
  %112 = vst.msk [vmem:[%s111] ss:$36 sm:$0xe0] %vm106, %v105
  %v113 = vld.sshfl [vmem:[%s0] sm:$0xff pattern:$0x74163052]
  %114 = vrot.lane.b32.xlu0 %v113, 117
  %v115 = vpop.permute.xlu0 %114
  %vm116 = vcmask 7168
  %s117 = scalar_lea.vmem %s1, 35
  %118 = vst.msk [vmem:[%s117] ss:$36 sm:$0x3] %vm116, %v115
  %s119 = scalar_lea.vmem %s1, 4294967235
  %120 = vst.msk [vmem:[%s119] ss:$36 sm:$0x1c] %vm116, %v115
  %s121 = scalar_lea.vmem %s1, 4294967139
  %122 = vst.msk [vmem:[%s121] ss:$36 sm:$0xe0] %vm116, %v115

// kernel: decoder_forward.1
$region0: #{decoder_forward.1}
  #allocation0 [shape = 'u32[]', space=smem, size = 0x4, offset = 0x4, fixed_abs, tag = 'smem constant byte address 0x4 - core index']
  #allocation1 [shape = 'u32[144,128]{1,0:T(1,128)}', space=vmem, size = 0x12000, scoped, tag = 'internal scratch']
  #allocation2 [shape = 'f32[132,256]{1,0:T(8,128)}', space=vmem, size = 0x22000, scoped, tag = 'scratch operand']
  %s0 = inlined_call_operand.vmem [shape: bf16[2,156,384], index: 0, kind: input, shape index: {}]
  %s1 = inlined_call_operand.vmem [shape: f32[96,1], index: 1, kind: input, shape index: {}]
  %s2 = inlined_call_operand.vmem [shape: bf16[9,384,256], index: 2, kind: input, shape index: {}]
  %s3 = inlined_call_operand.vmem [shape: f32[1,256], index: 3, kind: input, shape index: {}]
  %s4 = inlined_call_operand.vmem [shape: bf16[9,256,256], index: 4, kind: input, shape index: {}]
  %s5 = inlined_call_operand.vmem [shape: f32[1,256], index: 5, kind: input, shape index: {}]
  %s6 = inlined_call_operand.vmem [shape: bf16[256,128], index: 6, kind: input, shape index: {}]
  %s7 = inlined_call_operand.vmem [shape: f32[1,128], index: 7, kind: input, shape index: {}]
  %s8 = inlined_call_operand.vmem [shape: f32[2,96,128], index: 8, kind: output, shape index: {}]
  %s9 = sld [smem:[#allocation0]]
  $region65: #{decoder_forward.1} parent=0
    _
  %s11 = ssub.s32 1, %s9
  %s12 = scalar_select 0, %s11, %s9
  loop: start=0, step=1, limit=4
  $region2: #{decoder_forward.1} parent=0 // loop_pre_header
    _
  $region3: #{decoder_forward.1} parent=0 // loop_header
    %s14 = sphi 0, %s18
    %p15 = scmp.ge.s32.totalorder %s14, 4
    %s24 = sphi 0, %s26
    %s27 = sphi 0, %s24
    %s28 = sphi 0, %s27
    %s44 = sphi 0, %s28
    %s48 = sphi 0, %s48
    %s50 = sphi 0, %s48
    %s51 = sphi 0, %s50
    %s65 = sphi 0, %s51
    %s69 = sphi 0, %s69
    %s71 = sphi 0, %s69
    %s72 = sphi 0, %s71
    %s86 = sphi 0, %s72
    %s90 = sphi 0, %s90
    %s92 = sphi 0, %s90
    %s93 = sphi 0, %s92
    %s107 = sphi 0, %s93
    %s111 = sphi 0, %s111
    %s113 = sphi 0, %s111
    %s114 = sphi 0, %s113
    %s128 = sphi 0, %s114
    %s132 = sphi 0, %s132
    %s134 = sphi 0, %s132
    %s135 = sphi 0, %s134
    %s149 = sphi 0, %s135
    %s153 = sphi 0, %s153
    %s155 = sphi 0, %s153
    %s156 = sphi 0, %s155
    %s170 = sphi 0, %s156
    %s174 = sphi 0, %s174
    %s176 = sphi 0, %s174
    %s177 = sphi 0, %s176
    %s191 = sphi 0, %s177
    %s197 = sphi 0, %s199
    %s200 = sphi 0, %s197
    %s201 = sphi 0, %s200
    %s217 = sphi 0, %s201
  $region4: #{decoder_forward.1} parent=0 // loop_header_branch
    %17 = sbr.rel (%p15) target = $region8
  $region5: #{decoder_forward.1} parent=0 // loop_body
    %s19 = ssub.s32 %s14, 1
    %s20 = ssub.s32 %s14, 2
    %s21 = sadd.s32 %s14, 1
    %s22 = ssub.s32 %s14, %s21
    %p23 = scmp.eq.s32.totalorder %s22, 0
    %s25 = sadd.s32 %s24, 1
    %s26 = scalar_select %p23, %s24, %s25
    %p29 = pneg %p23
    %p30 = scmp.eq.s32.totalorder %s14, 1
    %p31 = por %p29, %p30
    %p32 = scmp.ne.s32.totalorder %s24, %s27
    %p33 = scmp.eq.s32.totalorder %s14, 0
    %p34 = por %p32, %p33
    %p35 = scmp.ne.s32.totalorder %s24, %s27
    %p36 = scmp.eq.s32.totalorder %s19, 1
    %p37 = por %p35, %p36
    %p38 = scmp.ne.s32.totalorder %s27, %s28
    %p39 = scmp.eq.s32.totalorder %s19, 0
    %p40 = por %p38, %p39
    %p41 = scmp.ne.s32.totalorder %s27, %s28
    %p42 = scmp.eq.s32.totalorder %s20, 1
    %p43 = por %p41, %p42
    %p45 = scmp.ne.s32.totalorder %s28, %s44
    %p46 = scmp.eq.s32.totalorder %s20, 0
    %p47 = por %p45, %p46
    %s49 = sadd.s32 %s48, 1
    %p52 = scmp.eq.s32.totalorder %s14, 1
    %p53 = scmp.ne.s32.totalorder %s48, %s50
    %p54 = scmp.eq.s32.totalorder %s14, 0
    %p55 = por %p53, %p54
    %p56 = scmp.ne.s32.totalorder %s48, %s50
    %p57 = scmp.eq.s32.totalorder %s19, 1
    %p58 = por %p56, %p57
    %p59 = scmp.ne.s32.totalorder %s50, %s51
    %p60 = scmp.eq.s32.totalorder %s19, 0
    %p61 = por %p59, %p60
    %p62 = scmp.ne.s32.totalorder %s50, %s51
    %p63 = scmp.eq.s32.totalorder %s20, 1
    %p64 = por %p62, %p63
    %p66 = scmp.ne.s32.totalorder %s51, %s65
    %p67 = scmp.eq.s32.totalorder %s20, 0
    %p68 = por %p66, %p67
    %s70 = sadd.s32 %s69, 1
    %p73 = scmp.eq.s32.totalorder %s14, 1
    %p74 = scmp.ne.s32.totalorder %s69, %s71
    %p75 = scmp.eq.s32.totalorder %s14, 0
    %p76 = por %p74, %p75
    %p77 = scmp.ne.s32.totalorder %s69, %s71
    %p78 = scmp.eq.s32.totalorder %s19, 1
    %p79 = por %p77, %p78
    %p80 = scmp.ne.s32.totalorder %s71, %s72
    %p81 = scmp.eq.s32.totalorder %s19, 0
    %p82 = por %p80, %p81
    %p83 = scmp.ne.s32.totalorder %s71, %s72
    %p84 = scmp.eq.s32.totalorder %s20, 1
    %p85 = por %p83, %p84
    %p87 = scmp.ne.s32.totalorder %s72, %s86
    %p88 = scmp.eq.s32.totalorder %s20, 0
    %p89 = por %p87, %p88
    %s91 = sadd.s32 %s90, 1
    %p94 = scmp.eq.s32.totalorder %s14, 1
    %p95 = scmp.ne.s32.totalorder %s90, %s92
    %p96 = scmp.eq.s32.totalorder %s14, 0
    %p97 = por %p95, %p96
    %p98 = scmp.ne.s32.totalorder %s90, %s92
    %p99 = scmp.eq.s32.totalorder %s19, 1
    %p100 = por %p98, %p99
    %p101 = scmp.ne.s32.totalorder %s92, %s93
    %p102 = scmp.eq.s32.totalorder %s19, 0
    %p103 = por %p101, %p102
    %p104 = scmp.ne.s32.totalorder %s92, %s93
    %p105 = scmp.eq.s32.totalorder %s20, 1
    %p106 = por %p104, %p105
    %p108 = scmp.ne.s32.totalorder %s93, %s107
    %p109 = scmp.eq.s32.totalorder %s20, 0
    %p110 = por %p108, %p109
    %s112 = sadd.s32 %s111, 1
    %p115 = scmp.eq.s32.totalorder %s14, 1
    %p116 = scmp.ne.s32.totalorder %s111, %s113
    %p117 = scmp.eq.s32.totalorder %s14, 0
    %p118 = por %p116, %p117
    %p119 = scmp.ne.s32.totalorder %s111, %s113
    %p120 = scmp.eq.s32.totalorder %s19, 1
    %p121 = por %p119, %p120
    %p122 = scmp.ne.s32.totalorder %s113, %s114
    %p123 = scmp.eq.s32.totalorder %s19, 0
    %p124 = por %p122, %p123
    %p125 = scmp.ne.s32.totalorder %s113, %s114
    %p126 = scmp.eq.s32.totalorder %s20, 1
    %p127 = por %p125, %p126
    %p129 = scmp.ne.s32.totalorder %s114, %s128
    %p130 = scmp.eq.s32.totalorder %s20, 0
    %p131 = por %p129, %p130
    %s133 = sadd.s32 %s132, 1
    %p136 = scmp.eq.s32.totalorder %s14, 1
    %p137 = scmp.ne.s32.totalorder %s132, %s134
    %p138 = scmp.eq.s32.totalorder %s14, 0
    %p139 = por %p137, %p138
    %p140 = scmp.ne.s32.totalorder %s132, %s134
    %p141 = scmp.eq.s32.totalorder %s19, 1
    %p142 = por %p140, %p141
    %p143 = scmp.ne.s32.totalorder %s134, %s135
    %p144 = scmp.eq.s32.totalorder %s19, 0
    %p145 = por %p143, %p144
    %p146 = scmp.ne.s32.totalorder %s134, %s135
    %p147 = scmp.eq.s32.totalorder %s20, 1
    %p148 = por %p146, %p147
    %p150 = scmp.ne.s32.totalorder %s135, %s149
    %p151 = scmp.eq.s32.totalorder %s20, 0
    %p152 = por %p150, %p151
    %s154 = sadd.s32 %s153, 1
    %p157 = scmp.eq.s32.totalorder %s14, 1
    %p158 = scmp.ne.s32.totalorder %s153, %s155
    %p159 = scmp.eq.s32.totalorder %s14, 0
    %p160 = por %p158, %p159
    %p161 = scmp.ne.s32.totalorder %s153, %s155
    %p162 = scmp.eq.s32.totalorder %s19, 1
    %p163 = por %p161, %p162
    %p164 = scmp.ne.s32.totalorder %s155, %s156
    %p165 = scmp.eq.s32.totalorder %s19, 0
    %p166 = por %p164, %p165
    %p167 = scmp.ne.s32.totalorder %s155, %s156
    %p168 = scmp.eq.s32.totalorder %s20, 1
    %p169 = por %p167, %p168
    %p171 = scmp.ne.s32.totalorder %s156, %s170
    %p172 = scmp.eq.s32.totalorder %s20, 0
    %p173 = por %p171, %p172
    %s175 = sadd.s32 %s174, 1
    %p178 = scmp.eq.s32.totalorder %s14, 1
    %p179 = scmp.ne.s32.totalorder %s174, %s176
    %p180 = scmp.eq.s32.totalorder %s14, 0
    %p181 = por %p179, %p180
    %p182 = scmp.ne.s32.totalorder %s174, %s176
    %p183 = scmp.eq.s32.totalorder %s19, 1
    %p184 = por %p182, %p183
    %p185 = scmp.ne.s32.totalorder %s176, %s177
    %p186 = scmp.eq.s32.totalorder %s19, 0
    %p187 = por %p185, %p186
    %p188 = scmp.ne.s32.totalorder %s176, %s177
    %p189 = scmp.eq.s32.totalorder %s20, 1
    %p190 = por %p188, %p189
    %p192 = scmp.ne.s32.totalorder %s177, %s191
    %p193 = scmp.eq.s32.totalorder %s20, 0
    %p194 = por %p192, %p193
    %s195 = ssub.s32 %s14, %s21
    %p196 = scmp.eq.s32.totalorder %s195, 0
    %s198 = sadd.s32 %s197, 1
    %s199 = scalar_select %p196, %s197, %s198
    %p202 = pneg %p196
    %p203 = scmp.eq.s32.totalorder %s14, 1
    %p204 = por %p202, %p203
    %p205 = scmp.ne.s32.totalorder %s197, %s200
    %p206 = scmp.eq.s32.totalorder %s14, 0
    %p207 = por %p205, %p206
    %p208 = scmp.ne.s32.totalorder %s197, %s200
    %p209 = scmp.eq.s32.totalorder %s19, 1
    %p210 = por %p208, %p209
    %p211 = scmp.ne.s32.totalorder %s200, %s201
    %p212 = scmp.eq.s32.totalorder %s19, 0
    %p213 = por %p211, %p212
    %p214 = scmp.ne.s32.totalorder %s200, %s201
    %p215 = scmp.eq.s32.totalorder %s20, 1
    %p216 = por %p214, %p215
    %p218 = scmp.ne.s32.totalorder %s201, %s217
    %p219 = scmp.eq.s32.totalorder %s20, 0
    %p220 = por %p218, %p219
    %p221 = scmp.le.s32.totalorder 1, %s14
    %p222 = scmp.lt.s32.totalorder %s14, 3
    %p223 = pnand %p221, %p222
    %p224 = pneg %p223
    // Predicated region
    $region9: #{decoder_forward.1} parent=5 // pred_check
      _
    $region10: #{decoder_forward.1} parent=5 // pred_check_branch
      %226 = sbr.rel (%p223) target = $region12
    $region11: #{decoder_forward.1} parent=5 // pred_region
      %s227 = ssub.s32 %s14, 1
      // Predicated region
      $region13: #{decoder_forward.1} parent=11 // pred_check
        %p228 = pneg %p61
      $region14: #{decoder_forward.1} parent=11 // pred_check_branch
        %230 = sbr.rel (%p228) target = $region16
      $region15: #{decoder_forward.1} parent=11 // pred_region
        _
      $region16: #{decoder_forward.1} parent=11 // pred_fallthru
        _
      // Predicated region
      $region17: #{decoder_forward.1} parent=11 // pred_check
        %p231 = pneg %p82
      $region18: #{decoder_forward.1} parent=11 // pred_check_branch
        %233 = sbr.rel (%p231) target = $region20
      $region19: #{decoder_forward.1} parent=11 // pred_region
        _
      $region20: #{decoder_forward.1} parent=11 // pred_fallthru
        _
      // Predicated region
      $region21: #{decoder_forward.1} parent=11 // pred_check
        %p234 = pneg %p103
      $region22: #{decoder_forward.1} parent=11 // pred_check_branch
        %236 = sbr.rel (%p234) target = $region24
      $region23: #{decoder_forward.1} parent=11 // pred_region
        _
      $region24: #{decoder_forward.1} parent=11 // pred_fallthru
        _
      // Predicated region
      $region25: #{decoder_forward.1} parent=11 // pred_check
        %p237 = pneg %p124
      $region26: #{decoder_forward.1} parent=11 // pred_check_branch
        %239 = sbr.rel (%p237) target = $region28
      $region27: #{decoder_forward.1} parent=11 // pred_region
        _
      $region28: #{decoder_forward.1} parent=11 // pred_fallthru
        _
      // Predicated region
      $region29: #{decoder_forward.1} parent=11 // pred_check
        %p240 = pneg %p145
      $region30: #{decoder_forward.1} parent=11 // pred_check_branch
        %242 = sbr.rel (%p240) target = $region32
      $region31: #{decoder_forward.1} parent=11 // pred_region
        _
      $region32: #{decoder_forward.1} parent=11 // pred_fallthru
        _
      // Predicated region
      $region33: #{decoder_forward.1} parent=11 // pred_check
        %p243 = pneg %p166
      $region34: #{decoder_forward.1} parent=11 // pred_check_branch
        %245 = sbr.rel (%p243) target = $region36
      $region35: #{decoder_forward.1} parent=11 // pred_region
        _
      $region36: #{decoder_forward.1} parent=11 // pred_fallthru
        _
      // Predicated region
      $region37: #{decoder_forward.1} parent=11 // pred_check
        %p246 = pneg %p187
      $region38: #{decoder_forward.1} parent=11 // pred_check_branch
        %248 = sbr.rel (%p246) target = $region40
      $region39: #{decoder_forward.1} parent=11 // pred_region
        _
      $region40: #{decoder_forward.1} parent=11 // pred_fallthru
        _
    $region12: #{decoder_forward.1} parent=5 // pred_fallthru
      _
    %p249 = scmp.lt.s32.totalorder %s14, 2
    // Predicated region
    $region41: #{decoder_forward.1} parent=5 // pred_check
      %p250 = pneg %p249
    $region42: #{decoder_forward.1} parent=5 // pred_check_branch
      %252 = sbr.rel (%p250) target = $region44
    $region43: #{decoder_forward.1} parent=5 // pred_region
      // Predicated region
      $region45: #{decoder_forward.1} parent=43 // pred_check
        %p253 = pneg %p34
      $region46: #{decoder_forward.1} parent=43 // pred_check_branch
        %255 = sbr.rel (%p253) target = $region48
      $region47: #{decoder_forward.1} parent=43 // pred_region
        %p256 = scmp.lt.s32.totalorder %s14, 1
        %s257 = scalar_select %p256, %s14, 1
        %s258 = smul.addr %s257, 60
        %s259 = smul.addr %s258, 4
        %s260 = scalar_lea.vmem %s0, %s259
      $region48: #{decoder_forward.1} parent=43 // pred_fallthru
        _
    $region44: #{decoder_forward.1} parent=5 // pred_fallthru
      _
    %p261 = scmp.le.s32.totalorder 1, %s14
    %p262 = scmp.lt.s32.totalorder %s14, 3
    %p263 = pnand %p261, %p262
    %p264 = pneg %p263
    // Predicated region
    $region49: #{decoder_forward.1} parent=5 // pred_check
      _
    $region50: #{decoder_forward.1} parent=5 // pred_check_branch
      %266 = sbr.rel (%p263) target = $region52
    $region51: #{decoder_forward.1} parent=5 // pred_region
      %s267 = ssub.s32 %s14, 1
      %p268 = scmp.lt.s32.totalorder %s19, 1
      %s269 = scalar_select %p268, %s19, 1
      %s270 = smul.addr %s269, 60
      %s271 = smul.addr %s270, 4
      %s272 = scalar_lea.vmem %s0, %s271
      %p273 = pneg %p40
      %p274 = pneg %p37
      %p275 = pneg %p61
      %p276 = pneg %p58
      %p277 = pneg %p82
      %p278 = pneg %p79
      %p279 = pneg %p103
      %p280 = pneg %p100
      %p281 = pneg %p124
      %p282 = pneg %p121
      %p283 = pneg %p145
      %p284 = pneg %p142
      %p285 = pneg %p166
      %p286 = pneg %p163
      %p287 = pneg %p187
      %p288 = pneg %p184
      %p289 = pneg %p213
      %p290 = pneg %p210
      %p291 = scmp.lt.s32.totalorder %s19, 1
      %s292 = scalar_select %p291, %s19, 1
      %s293 = smul.addr %s292, 12
      %s294 = smul.addr %s293, 8
      %s295 = scalar_lea.vmem %s8, %s294
      %p296 = scmp.lt.s32.totalorder %s19, 1
      %s297 = scalar_select %p296, %s19, 1
      %s298 = smul.addr %s297, 60
      %s299 = smul.addr %s298, 4
      %s300 = scalar_lea.vmem %s0, %s299
      %p301 = scmp.lt.s32.totalorder %s19, 1
      %s302 = scalar_select %p301, %s19, 1
      %s303 = smul.addr %s302, 12
      %s304 = smul.addr %s303, 8
      %s305 = scalar_lea.vmem %s8, %s304
      %307 = vst [vmem:[#allocation2] sm:$0xff] 0.0
      %308 = vst [vmem:[#allocation2 + $0x8] sm:$0xff] 0.0
      %309 = vst [vmem:[#allocation2 + $0x10] sm:$0x3f] 0.0
      %310 = vst [vmem:[#allocation2 + $0x18] sm:$0x3f] 0.0
      %311 = vst [vmem:[#allocation2 + $0xd0] sm:$0xc0] 0.0
      %312 = vst [vmem:[#allocation2 + $0xd8] sm:$0xc0] 0.0
      %313 = vst [vmem:[#allocation2 + $0xe0] sm:$0xff] 0.0
      %314 = vst [vmem:[#allocation2 + $0xe8] sm:$0xff] 0.0
      %315 = vst [vmem:[#allocation2 + $0xf0] sm:$0xff] 0.0
      %316 = vst [vmem:[#allocation2 + $0xf8] sm:$0xff] 0.0
      %317 = vst [vmem:[#allocation2 + $0x100] sm:$0xf] 0.0
      %318 = vst [vmem:[#allocation2 + $0x108] sm:$0xf] 0.0
      %v319 = vld [vmem:[%s1] sm:$0xff]
      %v320 = vld [vmem:[%s1 + $0x8] sm:$0xff]
      %v321 = vld [vmem:[%s1 + $0x10] sm:$0xff]
      %v322 = vld [vmem:[%s1 + $0x18] sm:$0xff]
      %v323 = vld [vmem:[%s1 + $0x20] sm:$0xff]
      %v324 = vld [vmem:[%s1 + $0x28] sm:$0xff]
      %v325 = vld [vmem:[%s1 + $0x30] sm:$0xff]
      %v326 = vld [vmem:[%s1 + $0x38] sm:$0xff]
      %v327 = vld [vmem:[%s1 + $0x40] sm:$0xff]
      %v328 = vld [vmem:[%s1 + $0x48] sm:$0xff]
      %v329 = vld [vmem:[%s1 + $0x50] sm:$0xff]
      %v330 = vld [vmem:[%s1 + $0x58] sm:$0xff]
      %v331 = vld [vmem:[%s300] sm:$0xff]
      %v332 = vld [vmem:[%s300 + $0x8] sm:$0xf]
      %v333 = vld [vmem:[%s300 + $0xc] sm:$0xff]
      %v334 = vld [vmem:[%s300 + $0x14] sm:$0xf]
      %v335 = vld [vmem:[%s300 + $0x18] sm:$0xff]
      %v336 = vld [vmem:[%s300 + $0x20] sm:$0xf]
      %v337 = vld [vmem:[%s300 + $0x24] sm:$0xff]
      %v338 = vld [vmem:[%s300 + $0x2c] sm:$0xf]
      %v339 = vld [vmem:[%s300 + $0x30] sm:$0xff]
      %v340 = vld [vmem:[%s300 + $0x38] sm:$0xf]
      %v341 = vld [vmem:[%s300 + $0x3c] sm:$0xff]
      %v342 = vld [vmem:[%s300 + $0x44] sm:$0xf]
      %v343 = vld [vmem:[%s300 + $0x48] sm:$0xff]
      %v344 = vld [vmem:[%s300 + $0x50] sm:$0xf]
      %v345 = vld [vmem:[%s300 + $0x54] sm:$0xff]
      %v346 = vld [vmem:[%s300 + $0x5c] sm:$0xf]
      %v347 = vld [vmem:[%s300 + $0x60] sm:$0xff]
      %v348 = vld [vmem:[%s300 + $0x68] sm:$0xf]
      %v349 = vld [vmem:[%s300 + $0x6c] sm:$0xff]
      %v350 = vld [vmem:[%s300 + $0x74] sm:$0xf]
      %v351 = vld [vmem:[%s300 + $0x78] sm:$0xff]
      %v352 = vld [vmem:[%s300 + $0x80] sm:$0xf]
      %v353 = vld [vmem:[%s300 + $0x84] sm:$0xff]
      %v354 = vld [vmem:[%s300 + $0x8c] sm:$0xf]
      %v355 = vld [vmem:[%s2] sm:$0xff]
      %v356 = vld [vmem:[%s2 + $0x8] sm:$0xff]
      %v357 = vld [vmem:[%s2 + $0x10] sm:$0xff]
      %v358 = vld [vmem:[%s2 + $0x18] sm:$0xff]
      %v359 = vld [vmem:[%s2 + $0x20] sm:$0xff]
      %v360 = vld [vmem:[%s2 + $0x28] sm:$0xff]
      %v361 = vld [vmem:[%s2 + $0x30] sm:$0xff]
      %v362 = vld [vmem:[%s2 + $0x38] sm:$0xff]
      %v363 = vld [vmem:[%s2 + $0x40] sm:$0xff]
      %v364 = vld [vmem:[%s2 + $0x48] sm:$0xff]
      %v365 = vld [vmem:[%s2 + $0x50] sm:$0xff]
      %v366 = vld [vmem:[%s2 + $0x58] sm:$0xff]
      %v367 = vld [vmem:[%s2 + $0x60] sm:$0xff]
      %v368 = vld [vmem:[%s2 + $0x68] sm:$0xff]
      %v369 = vld [vmem:[%s2 + $0x70] sm:$0xff]
      %v370 = vld [vmem:[%s2 + $0x78] sm:$0xff]
      %v371 = vld [vmem:[%s2 + $0x80] sm:$0xff]
      %v372 = vld [vmem:[%s2 + $0x88] sm:$0xff]
      %v373 = vld [vmem:[%s2 + $0x90] sm:$0xff]
      %v374 = vld [vmem:[%s2 + $0x98] sm:$0xff]
      %v375 = vld [vmem:[%s2 + $0xa0] sm:$0xff]
      %v376 = vld [vmem:[%s2 + $0xa8] sm:$0xff]
      %v377 = vld [vmem:[%s2 + $0xb0] sm:$0xff]
      %v378 = vld [vmem:[%s2 + $0xb8] sm:$0xff]
      %v379 = vld [vmem:[%s2 + $0xc0] sm:$0xff]
      %v380 = vld [vmem:[%s2 + $0xc8] sm:$0xff]
      %v381 = vld [vmem:[%s2 + $0xd0] sm:$0xff]
      %v382 = vld [vmem:[%s2 + $0xd8] sm:$0xff]
      %v383 = vld [vmem:[%s2 + $0xe0] sm:$0xff]
      %v384 = vld [vmem:[%s2 + $0xe8] sm:$0xff]
      %v385 = vld [vmem:[%s2 + $0xf0] sm:$0xff]
      %v386 = vld [vmem:[%s2 + $0xf8] sm:$0xff]
      %v387 = vld [vmem:[%s2 + $0x100] sm:$0xff]
      %v388 = vld [vmem:[%s2 + $0x108] sm:$0xff]
      %v389 = vld [vmem:[%s2 + $0x110] sm:$0xff]
      %v390 = vld [vmem:[%s2 + $0x118] sm:$0xff]
      %v391 = vld [vmem:[%s2 + $0x120] sm:$0xff]
      %v392 = vld [vmem:[%s2 + $0x128] sm:$0xff]
      %v393 = vld [vmem:[%s2 + $0x130] sm:$0xff]
      %v394 = vld [vmem:[%s2 + $0x138] sm:$0xff]
      %v395 = vld [vmem:[%s2 + $0x140] sm:$0xff]
      %v396 = vld [vmem:[%s2 + $0x148] sm:$0xff]
      %v397 = vld [vmem:[%s2 + $0x150] sm:$0xff]
      %v398 = vld [vmem:[%s2 + $0x158] sm:$0xff]
      %v399 = vld [vmem:[%s2 + $0x160] sm:$0xff]
      %v400 = vld [vmem:[%s2 + $0x168] sm:$0xff]
      %v401 = vld [vmem:[%s2 + $0x170] sm:$0xff]
      %v402 = vld [vmem:[%s2 + $0x178] sm:$0xff]
      %v403 = vld [vmem:[%s300] sm:$0xee]
      %v404 = vld [vmem:[%s300 + $0x8] sm:$0xe]
      %v405 = vld [vmem:[%s300 + $0x90] sm:$0x11]
      %v406 = vld [vmem:[%s300 + $0x98] sm:$0x1]
      %s407 = scalar_lea.vmem %s2, 384
      %v408 = vld [vmem:[%s407] sm:$0xff]
      %v409 = vld [vmem:[%s407 + $0x8] sm:$0xff]
      %v410 = vld [vmem:[%s407 + $0x10] sm:$0xff]
      %v411 = vld [vmem:[%s407 + $0x18] sm:$0xff]
      %v412 = vld [vmem:[%s407 + $0x20] sm:$0xff]
      %v413 = vld [vmem:[%s407 + $0x28] sm:$0xff]
      %v414 = vld [vmem:[%s407 + $0x30] sm:$0xff]
      %v415 = vld [vmem:[%s407 + $0x38] sm:$0xff]
      %v416 = vld [vmem:[%s407 + $0x40] sm:$0xff]
      %v417 = vld [vmem:[%s407 + $0x48] sm:$0xff]
      %v418 = vld [vmem:[%s407 + $0x50] sm:$0xff]
      %v419 = vld [vmem:[%s407 + $0x58] sm:$0xff]
      %v420 = vld [vmem:[%s407 + $0x60] sm:$0xff]
      %v421 = vld [vmem:[%s407 + $0x68] sm:$0xff]
      %v422 = vld [vmem:[%s407 + $0x70] sm:$0xff]
      %v423 = vld [vmem:[%s407 + $0x78] sm:$0xff]
      %v424 = vld [vmem:[%s407 + $0x80] sm:$0xff]
      %v425 = vld [vmem:[%s407 + $0x88] sm:$0xff]
      %v426 = vld [vmem:[%s407 + $0x90] sm:$0xff]
      %v427 = vld [vmem:[%s407 + $0x98] sm:$0xff]
      %v428 = vld [vmem:[%s407 + $0xa0] sm:$0xff]
      %v429 = vld [vmem:[%s407 + $0xa8] sm:$0xff]
      %v430 = vld [vmem:[%s407 + $0xb0] sm:$0xff]
      %v431 = vld [vmem:[%s407 + $0xb8] sm:$0xff]
      %v432 = vld [vmem:[%s407 + $0xc0] sm:$0xff]
      %v433 = vld [vmem:[%s407 + $0xc8] sm:$0xff]
      %v434 = vld [vmem:[%s407 + $0xd0] sm:$0xff]
      %v435 = vld [vmem:[%s407 + $0xd8] sm:$0xff]
      %v436 = vld [vmem:[%s407 + $0xe0] sm:$0xff]
      %v437 = vld [vmem:[%s407 + $0xe8] sm:$0xff]
      %v438 = vld [vmem:[%s407 + $0xf0] sm:$0xff]
      %v439 = vld [vmem:[%s407 + $0xf8] sm:$0xff]
      %v440 = vld [vmem:[%s407 + $0x100] sm:$0xff]
      %v441 = vld [vmem:[%s407 + $0x108] sm:$0xff]
      %v442 = vld [vmem:[%s407 + $0x110] sm:$0xff]
      %v443 = vld [vmem:[%s407 + $0x118] sm:$0xff]
      %v444 = vld [vmem:[%s407 + $0x120] sm:$0xff]
      %v445 = vld [vmem:[%s407 + $0x128] sm:$0xff]
      %v446 = vld [vmem:[%s407 + $0x130] sm:$0xff]
      %v447 = vld [vmem:[%s407 + $0x138] sm:$0xff]
      %v448 = vld [vmem:[%s407 + $0x140] sm:$0xff]
      %v449 = vld [vmem:[%s407 + $0x148] sm:$0xff]
      %v450 = vld [vmem:[%s407 + $0x150] sm:$0xff]
      %v451 = vld [vmem:[%s407 + $0x158] sm:$0xff]
      %v452 = vld [vmem:[%s407 + $0x160] sm:$0xff]
      %v453 = vld [vmem:[%s407 + $0x168] sm:$0xff]
      %v454 = vld [vmem:[%s407 + $0x170] sm:$0xff]
      %v455 = vld [vmem:[%s407 + $0x178] sm:$0xff]
      %v482 = vunpack.c.l.b16 %v403
      %v483 = vunpack.c.h.b16 %v403
      %v484 = vunpack.c.l.b16 %v404
      %v485 = vunpack.c.l.b16 %v333
      %v486 = vunpack.c.h.b16 %v333
      %v487 = vunpack.c.l.b16 %v334
      %v488 = vunpack.c.l.b16 %v335
      %v489 = vunpack.c.h.b16 %v335
      %v490 = vunpack.c.l.b16 %v336
      %v491 = vunpack.c.l.b16 %v337
      %v492 = vunpack.c.h.b16 %v337
      %v493 = vunpack.c.l.b16 %v338
      %v494 = vunpack.c.l.b16 %v339
      %v495 = vunpack.c.h.b16 %v339
      %v496 = vunpack.c.l.b16 %v340
      %v497 = vunpack.c.l.b16 %v341
      %v498 = vunpack.c.h.b16 %v341
      %v499 = vunpack.c.l.b16 %v342
      %v500 = vunpack.c.l.b16 %v343
      %v501 = vunpack.c.h.b16 %v343
      %v502 = vunpack.c.l.b16 %v344
      %v503 = vunpack.c.l.b16 %v345
      %v504 = vunpack.c.h.b16 %v345
      %v505 = vunpack.c.l.b16 %v346
      %v506 = vunpack.c.l.b16 %v347
      %v507 = vunpack.c.h.b16 %v347
      %v508 = vunpack.c.l.b16 %v348
      %v509 = vunpack.c.l.b16 %v349
      %v510 = vunpack.c.h.b16 %v349
      %v511 = vunpack.c.l.b16 %v350
      %v512 = vunpack.c.l.b16 %v351
      %v513 = vunpack.c.h.b16 %v351
      %v514 = vunpack.c.l.b16 %v352
      %v515 = vunpack.c.l.b16 %v353
      %v516 = vunpack.c.h.b16 %v353
      %v517 = vunpack.c.l.b16 %v354
      %v518 = vunpack.c.l.b16 %v405
      %v519 = vunpack.c.h.b16 %v405
      %v520 = vunpack.c.l.b16 %v406
      %v521 = vpack.c.b16 %v485, %v482
      %v522 = vpack.c.b16 %v486, %v483
      %v523 = vpack.c.b16 %v487, %v484
      %v524 = vpack.c.b16 %v491, %v488
      %v525 = vpack.c.b16 %v492, %v489
      %v526 = vpack.c.b16 %v493, %v490
      %v527 = vpack.c.b16 %v497, %v494
      %v528 = vpack.c.b16 %v498, %v495
      %v529 = vpack.c.b16 %v499, %v496
      %v530 = vpack.c.b16 %v503, %v500
      %v531 = vpack.c.b16 %v504, %v501
      %v532 = vpack.c.b16 %v505, %v502
      %v533 = vpack.c.b16 %v509, %v506
      %v534 = vpack.c.b16 %v510, %v507
      %v535 = vpack.c.b16 %v511, %v508
      %v536 = vpack.c.b16 %v515, %v512
      %v537 = vpack.c.b16 %v516, %v513
      %v538 = vpack.c.b16 %v517, %v514
      %v539 = vpack.c.b16 %v518, %v518
      %v540 = vpack.c.b16 %v519, %v519
      %v541 = vpack.c.b16 %v520, %v520
      %vm542 = vcmask 1046528
      %v543 = vrot.slane %v521, 1
      %v544 = vrot.slane %v524, 1
      %v545 = vsel %vm542, %v543, %v544
      %v546 = vrot.slane %v522, 1
      %v547 = vrot.slane %v525, 1
      %v548 = vsel %vm542, %v546, %v547
      %v549 = vrot.slane %v523, 1
      %v550 = vrot.slane %v526, 1
      %v551 = vsel %vm542, %v549, %v550
      %v552 = vrot.slane %v527, 1
      %v553 = vsel %vm542, %v544, %v552
      %v554 = vrot.slane %v528, 1
      %v555 = vsel %vm542, %v547, %v554
      %v556 = vrot.slane %v529, 1
      %v557 = vsel %vm542, %v550, %v556
      %v558 = vrot.slane %v530, 1
      %v559 = vsel %vm542, %v552, %v558
      %v560 = vrot.slane %v531, 1
      %v561 = vsel %vm542, %v554, %v560
      %v562 = vrot.slane %v532, 1
      %v563 = vsel %vm542, %v556, %v562
      %v564 = vrot.slane %v533, 1
      %v565 = vsel %vm542, %v558, %v564
      %v566 = vrot.slane %v534, 1
      %v567 = vsel %vm542, %v560, %v566
      %v568 = vrot.slane %v535, 1
      %v569 = vsel %vm542, %v562, %v568
      %v570 = vrot.slane %v536, 1
      %v571 = vsel %vm542, %v564, %v570
      %v572 = vrot.slane %v537, 1
      %v573 = vsel %vm542, %v566, %v572
      %v574 = vrot.slane %v538, 1
      %v575 = vsel %vm542, %v568, %v574
      %v576 = vrot.slane %v539, 1
      %v577 = vsel %vm542, %v570, %v576
      %v578 = vrot.slane %v540, 1
      %v579 = vsel %vm542, %v572, %v578
      %v580 = vrot.slane %v541, 1
      %v581 = vsel %vm542, %v574, %v580
      %v648 = vunpack.c.l.b16 %v408
      %v649 = vunpack.c.h.b16 %v408
      %v650 = vunpack.c.l.b16 %v409
      %v651 = vunpack.c.h.b16 %v409
      %v652 = vunpack.c.l.b16 %v410
      %v653 = vunpack.c.h.b16 %v410
      %v654 = vunpack.c.l.b16 %v411
      %v655 = vunpack.c.h.b16 %v411
      %v656 = vunpack.c.l.b16 %v412
      %v657 = vunpack.c.h.b16 %v412
      %v658 = vunpack.c.l.b16 %v413
      %v659 = vunpack.c.h.b16 %v413
      %v660 = vunpack.c.l.b16 %v414
      %v661 = vunpack.c.h.b16 %v414
      %v662 = vunpack.c.l.b16 %v415
      %v663 = vunpack.c.h.b16 %v415
      %v664 = vunpack.c.l.b16 %v416
      %v665 = vunpack.c.h.b16 %v416
      %v666 = vunpack.c.l.b16 %v417
      %v667 = vunpack.c.h.b16 %v417
      %v668 = vunpack.c.l.b16 %v418
      %v669 = vunpack.c.h.b16 %v418
      %v670 = vunpack.c.l.b16 %v419
      %v671 = vunpack.c.h.b16 %v419
      %v672 = vunpack.c.l.b16 %v420
      %v673 = vunpack.c.h.b16 %v420
      %v674 = vunpack.c.l.b16 %v421
      %v675 = vunpack.c.h.b16 %v421
      %v676 = vunpack.c.l.b16 %v422
      %v677 = vunpack.c.h.b16 %v422
      %v678 = vunpack.c.l.b16 %v423
      %v679 = vunpack.c.h.b16 %v423
      %v680 = vunpack.c.l.b16 %v424
      %v681 = vunpack.c.h.b16 %v424
      %v682 = vunpack.c.l.b16 %v425
      %v683 = vunpack.c.h.b16 %v425
      %v684 = vunpack.c.l.b16 %v426
      %v685 = vunpack.c.h.b16 %v426
      %v686 = vunpack.c.l.b16 %v427
      %v687 = vunpack.c.h.b16 %v427
      %v688 = vunpack.c.l.b16 %v428
      %v689 = vunpack.c.h.b16 %v428
      %v690 = vunpack.c.l.b16 %v429
      %v691 = vunpack.c.h.b16 %v429
      %v692 = vunpack.c.l.b16 %v430
      %v693 = vunpack.c.h.b16 %v430
      %v694 = vunpack.c.l.b16 %v431
      %v695 = vunpack.c.h.b16 %v431
      %v696 = vunpack.c.l.b16 %v432
      %v697 = vunpack.c.h.b16 %v432
      %v698 = vunpack.c.l.b16 %v433
      %v699 = vunpack.c.h.b16 %v433
      %v700 = vunpack.c.l.b16 %v434
      %v701 = vunpack.c.h.b16 %v434
      %v702 = vunpack.c.l.b16 %v435
      %v703 = vunpack.c.h.b16 %v435
      %v704 = vunpack.c.l.b16 %v436
      %v705 = vunpack.c.h.b16 %v436
      %v706 = vunpack.c.l.b16 %v437
      %v707 = vunpack.c.h.b16 %v437
      %v708 = vunpack.c.l.b16 %v438
      %v709 = vunpack.c.h.b16 %v438
      %v710 = vunpack.c.l.b16 %v439
      %v711 = vunpack.c.h.b16 %v439
      %v712 = vunpack.c.l.b16 %v440
      %v713 = vunpack.c.h.b16 %v440
      %v714 = vunpack.c.l.b16 %v441
      %v715 = vunpack.c.h.b16 %v441
      %v716 = vunpack.c.l.b16 %v442
      %v717 = vunpack.c.h.b16 %v442
      %v718 = vunpack.c.l.b16 %v443
      %v719 = vunpack.c.h.b16 %v443
      %v720 = vunpack.c.l.b16 %v444
      %v721 = vunpack.c.h.b16 %v444
      %v722 = vunpack.c.l.b16 %v445
      %v723 = vunpack.c.h.b16 %v445
      %v724 = vunpack.c.l.b16 %v446
      %v725 = vunpack.c.h.b16 %v446
      %v726 = vunpack.c.l.b16 %v447
      %v727 = vunpack.c.h.b16 %v447
      %v728 = vunpack.c.l.b16 %v448
      %v729 = vunpack.c.h.b16 %v448
      %v730 = vunpack.c.l.b16 %v449
      %v731 = vunpack.c.h.b16 %v449
      %v732 = vunpack.c.l.b16 %v450
      %v733 = vunpack.c.h.b16 %v450
      %v734 = vunpack.c.l.b16 %v451
      %v735 = vunpack.c.h.b16 %v451
      %v736 = vunpack.c.l.b16 %v452
      %v737 = vunpack.c.h.b16 %v452
      %v738 = vunpack.c.l.b16 %v453
      %v739 = vunpack.c.h.b16 %v453
      %v740 = vunpack.c.l.b16 %v454
      %v741 = vunpack.c.h.b16 %v454
      %v742 = vunpack.c.l.b16 %v455
      %v743 = vunpack.c.h.b16 %v455
      %v744 = vpack.c.b16 %v650, %v648
      %v745 = vpack.c.b16 %v651, %v649
      %v746 = vpack.c.b16 %v654, %v652
      %v747 = vpack.c.b16 %v655, %v653
      %v748 = vpack.c.b16 %v658, %v656
      %v749 = vpack.c.b16 %v659, %v657
      %v750 = vpack.c.b16 %v662, %v660
      %v751 = vpack.c.b16 %v663, %v661
      %v752 = vpack.c.b16 %v666, %v664
      %v753 = vpack.c.b16 %v667, %v665
      %v754 = vpack.c.b16 %v670, %v668
      %v755 = vpack.c.b16 %v671, %v669
      %v756 = vpack.c.b16 %v674, %v672
      %v757 = vpack.c.b16 %v675, %v673
      %v758 = vpack.c.b16 %v678, %v676
      %v759 = vpack.c.b16 %v679, %v677
      %v760 = vpack.c.b16 %v682, %v680
      %v761 = vpack.c.b16 %v683, %v681
      %v762 = vpack.c.b16 %v686, %v684
      %v763 = vpack.c.b16 %v687, %v685
      %v764 = vpack.c.b16 %v690, %v688
      %v765 = vpack.c.b16 %v691, %v689
      %v766 = vpack.c.b16 %v694, %v692
      %v767 = vpack.c.b16 %v695, %v693
      %v768 = vpack.c.b16 %v698, %v696
      %v769 = vpack.c.b16 %v699, %v697
      %v770 = vpack.c.b16 %v702, %v700
      %v771 = vpack.c.b16 %v703, %v701
      %v772 = vpack.c.b16 %v706, %v704
      %v773 = vpack.c.b16 %v707, %v705
      %v774 = vpack.c.b16 %v710, %v708
      %v775 = vpack.c.b16 %v711, %v709
      %v776 = vpack.c.b16 %v714, %v712
      %v777 = vpack.c.b16 %v715, %v713
      %v778 = vpack.c.b16 %v718, %v716
      %v779 = vpack.c.b16 %v719, %v717
      %v780 = vpack.c.b16 %v722, %v720
      %v781 = vpack.c.b16 %v723, %v721
      %v782 = vpack.c.b16 %v726, %v724
      %v783 = vpack.c.b16 %v727, %v725
      %v784 = vpack.c.b16 %v730, %v728
      %v785 = vpack.c.b16 %v731, %v729
      %v786 = vpack.c.b16 %v734, %v732
      %v787 = vpack.c.b16 %v735, %v733
      %v788 = vpack.c.b16 %v738, %v736
      %v789 = vpack.c.b16 %v739, %v737
      %v790 = vpack.c.b16 %v742, %v740
      %v791 = vpack.c.b16 %v743, %v741
      %840 = vmatprep.subr.bf16.mxu0 %v759
      %841 = vmatpush1.bf16.msra.mxu0 %v758
      %842 = vmatprep.subr.bf16.mxu0 %v757
      %843 = vmatpush1.bf16.msra.mxu0 %v756
      %844 = vmatprep.subr.bf16.mxu0 %v755
      %845 = vmatpush1.bf16.msra.mxu0 %v754
      %846 = vmatprep.subr.bf16.mxu0 %v753
      %847 = vmatpush1.bf16.msra.mxu0 %v752
      %848 = vmatprep.subr.bf16.mxu0 %v751
      %849 = vmatpush1.bf16.msra.mxu0 %v750
      %850 = vmatprep.subr.bf16.mxu0 %v749
      %851 = vmatpush1.bf16.msra.mxu0 %v748
      %852 = vmatprep.subr.bf16.mxu0 %v747
      %853 = vmatpush1.bf16.msra.mxu0 %v746
      %854 = vmatprep.subr.bf16.mxu0 %v745
      %855 = vmatpush1.bf16.msra.mxu0 %v744
      %856 = vmatprep.subr.bf16.mxu0 %v775
      %857 = vmatpush2.bf16.msra.mxu0 %v774
      %858 = vmatprep.subr.bf16.mxu0 %v773
      %859 = vmatpush2.bf16.msra.mxu0 %v772
      %860 = vmatprep.subr.bf16.mxu0 %v771
      %861 = vmatpush2.bf16.msra.mxu0 %v770
      %862 = vmatprep.subr.bf16.mxu0 %v769
      %863 = vmatpush2.bf16.msra.mxu0 %v768
      %864 = vmatprep.subr.bf16.mxu0 %v767
      %865 = vmatpush2.bf16.msra.mxu0 %v766
      %866 = vmatprep.subr.bf16.mxu0 %v765
      %867 = vmatpush2.bf16.msra.mxu0 %v764
      %868 = vmatprep.subr.bf16.mxu0 %v763
      %869 = vmatpush2.bf16.msra.mxu0 %v762
      %870 = vmatprep.subr.bf16.mxu0 %v761
      %871 = vmatpush2.bf16.msra.mxu0 %v760
      %872 = vmatprep.mubr.bf16.mxu0 %v548
      %873 = vmatmul.mubr.bf16.gmra.mxu0 %v545
      %v874 = vpop.f32.mrf.mxu0
      %v875 = vadd.f32 0.0, %v874
      %v876 = vpop.f32.mrf.mxu0
      %v877 = vadd.f32 0.0, %v876
      %v878 = vpop.f32.mrf.mxu0
      %v879 = vadd.f32 0.0, %v878
      %v880 = vpop.f32.mrf.mxu0
      %v881 = vadd.f32 0.0, %v880
      %882 = vmatprep.mubr.bf16.mxu0 %v555
      %883 = vmatmul.mubr.bf16.gmra.mxu0 %v553
      %v884 = vpop.f32.mrf.mxu0
      %v885 = vadd.f32 0.0, %v884
      %v886 = vpop.f32.mrf.mxu0
      %v887 = vadd.f32 0.0, %v886
      %v888 = vpop.f32.mrf.mxu0
      %v889 = vadd.f32 0.0, %v888
      %v890 = vpop.f32.mrf.mxu0
      %v891 = vadd.f32 0.0, %v890
      %892 = vmatprep.mubr.bf16.mxu0 %v561
      %893 = vmatmul.mubr.bf16.gmra.mxu0 %v559
      %v894 = vpop.f32.mrf.mxu0
      %v895 = vadd.f32 0.0, %v894
      %v896 = vpop.f32.mrf.mxu0
      %v897 = vadd.f32 0.0, %v896
      %v898 = vpop.f32.mrf.mxu0
      %v899 = vadd.f32 0.0, %v898
      %v900 = vpop.f32.mrf.mxu0
      %v901 = vadd.f32 0.0, %v900
      %902 = vmatprep.mubr.bf16.mxu0 %v567
      %903 = vmatmul.mubr.bf16.gmra.mxu0 %v565
      %v904 = vpop.f32.mrf.mxu0
      %v905 = vadd.f32 0.0, %v904
      %v906 = vpop.f32.mrf.mxu0
      %v907 = vadd.f32 0.0, %v906
      %v908 = vpop.f32.mrf.mxu0
      %v909 = vadd.f32 0.0, %v908
      %v910 = vpop.f32.mrf.mxu0
      %v911 = vadd.f32 0.0, %v910
      %912 = vmatprep.mubr.bf16.mxu0 %v573
      %913 = vmatmul.mubr.bf16.gmra.mxu0 %v571
      %v914 = vpop.f32.mrf.mxu0
      %v915 = vadd.f32 0.0, %v914
      %v916 = vpop.f32.mrf.mxu0
      %v917 = vadd.f32 0.0, %v916
      %v918 = vpop.f32.mrf.mxu0
      %v919 = vadd.f32 0.0, %v918
      %v920 = vpop.f32.mrf.mxu0
      %v921 = vadd.f32 0.0, %v920
      %922 = vmatprep.mubr.bf16.mxu0 %v579
      %923 = vmatmul.mubr.bf16.gmra.mxu0 %v577
      %v924 = vpop.f32.mrf.mxu0
      %v925 = vadd.f32 0.0, %v924
      %v926 = vpop.f32.mrf.mxu0
      %v927 = vadd.f32 0.0, %v926
      %v928 = vpop.f32.mrf.mxu0
      %v929 = vadd.f32 0.0, %v928
      %v930 = vpop.f32.mrf.mxu0
      %v931 = vadd.f32 0.0, %v930
      %932 = vdwg.mxu0
      %933 = vmatprep.subr.bf16.mxu0 %v791
      %934 = vmatpush1.bf16.msra.mxu0 %v790
      %935 = vmatprep.subr.bf16.mxu0 %v789
      %936 = vmatpush1.bf16.msra.mxu0 %v788
      %937 = vmatprep.subr.bf16.mxu0 %v787
      %938 = vmatpush1.bf16.msra.mxu0 %v786
      %939 = vmatprep.subr.bf16.mxu0 %v785
      %940 = vmatpush1.bf16.msra.mxu0 %v784
      %941 = vmatprep.subr.bf16.mxu0 %v783
      %942 = vmatpush1.bf16.msra.mxu0 %v782
      %943 = vmatprep.subr.bf16.mxu0 %v781
      %944 = vmatpush1.bf16.msra.mxu0 %v780
      %945 = vmatprep.subr.bf16.mxu0 %v779
      %946 = vmatpush1.bf16.msra.mxu0 %v778
      %947 = vmatprep.subr.bf16.mxu0 %v777
      %948 = vmatpush1.bf16.msra.mxu0 %v776
      %949 = vmatprep.subr.bf16.mxu0 0
      %950 = vmatpush2.bf16.msra.mxu0 0
      %951 = vmatprep.subr.bf16.mxu0 0
      %952 = vmatpush2.bf16.msra.mxu0 0
      %953 = vmatprep.subr.bf16.mxu0 0
      %954 = vmatpush2.bf16.msra.mxu0 0
      %955 = vmatprep.subr.bf16.mxu0 0
      %956 = vmatpush2.bf16.msra.mxu0 0
      %957 = vmatprep.subr.bf16.mxu0 0
      %958 = vmatpush2.bf16.msra.mxu0 0
      %959 = vmatprep.subr.bf16.mxu0 0
      %960 = vmatpush2.bf16.msra.mxu0 0
      %961 = vmatprep.subr.bf16.mxu0 0
      %962 = vmatpush2.bf16.msra.mxu0 0
      %963 = vmatprep.subr.bf16.mxu0 0
      %964 = vmatpush2.bf16.msra.mxu0 0
      %965 = vmatprep.mubr.bf16.mxu0 0
      %966 = vmatmul.mubr.bf16.gmra.mxu0 %v551
      %v967 = vpop.f32.mrf.mxu0
      %v968 = vadd.f32 %v875, %v967
      %v969 = vpop.f32.mrf.mxu0
      %v970 = vadd.f32 %v877, %v969
      %v971 = vpop.f32.mrf.mxu0
      %v972 = vadd.f32 %v879, %v971
      %v973 = vpop.f32.mrf.mxu0
      %v974 = vadd.f32 %v881, %v973
      %975 = vmatprep.mubr.bf16.mxu0 0
      %976 = vmatmul.mubr.bf16.gmra.mxu0 %v557
      %v977 = vpop.f32.mrf.mxu0
      %v978 = vadd.f32 %v885, %v977
      %v979 = vpop.f32.mrf.mxu0
      %v980 = vadd.f32 %v887, %v979
      %v981 = vpop.f32.mrf.mxu0
      %v982 = vadd.f32 %v889, %v981
      %v983 = vpop.f32.mrf.mxu0
      %v984 = vadd.f32 %v891, %v983
      %985 = vmatprep.mubr.bf16.mxu0 0
      %986 = vmatmul.mubr.bf16.gmra.mxu0 %v563
      %v987 = vpop.f32.mrf.mxu0
      %v988 = vadd.f32 %v895, %v987
      %v989 = vpop.f32.mrf.mxu0
      %v990 = vadd.f32 %v897, %v989
      %v991 = vpop.f32.mrf.mxu0
      %v992 = vadd.f32 %v899, %v991
      %v993 = vpop.f32.mrf.mxu0
      %v994 = vadd.f32 %v901, %v993
      %995 = vmatprep.mubr.bf16.mxu0 0
      %996 = vmatmul.mubr.bf16.gmra.mxu0 %v569
      %v997 = vpop.f32.mrf.mxu0
      %v998 = vadd.f32 %v905, %v997
      %v999 = vpop.f32.mrf.mxu0
      %v1000 = vadd.f32 %v907, %v999
      %v1001 = vpop.f32.mrf.mxu0
      %v1002 = vadd.f32 %v909, %v1001
      %v1003 = vpop.f32.mrf.mxu0
      %v1004 = vadd.f32 %v911, %v1003
      %1005 = vmatprep.mubr.bf16.mxu0 0
      %1006 = vmatmul.mubr.bf16.gmra.mxu0 %v575
      %v1007 = vpop.f32.mrf.mxu0
      %v1008 = vadd.f32 %v915, %v1007
      %v1009 = vpop.f32.mrf.mxu0
      %v1010 = vadd.f32 %v917, %v1009
      %v1011 = vpop.f32.mrf.mxu0
      %v1012 = vadd.f32 %v919, %v1011
      %v1013 = vpop.f32.mrf.mxu0
      %v1014 = vadd.f32 %v921, %v1013
      %1015 = vmatprep.mubr.bf16.mxu0 0
      %1016 = vmatmul.mubr.bf16.gmra.mxu0 %v581
      %v1017 = vpop.f32.mrf.mxu0
      %v1018 = vadd.f32 %v925, %v1017
      %v1019 = vpop.f32.mrf.mxu0
      %v1020 = vadd.f32 %v927, %v1019
      %v1021 = vpop.f32.mrf.mxu0
      %v1022 = vadd.f32 %v929, %v1021
      %v1023 = vpop.f32.mrf.mxu0
      %v1024 = vadd.f32 %v931, %v1023
      %1025 = vdwg.mxu0
      %v1028 = vunpack.c.l.b16 %v331
      %v1029 = vunpack.c.h.b16 %v331
      %v1030 = vunpack.c.l.b16 %v332
      %v1031 = vpack.c.b16 %v485, %v1028
      %v1032 = vpack.c.b16 %v486, %v1029
      %v1033 = vpack.c.b16 %v487, %v1030
      %v1100 = vunpack.c.l.b16 %v355
      %v1101 = vunpack.c.h.b16 %v355
      %v1102 = vunpack.c.l.b16 %v356
      %v1103 = vunpack.c.h.b16 %v356
      %v1104 = vunpack.c.l.b16 %v357
      %v1105 = vunpack.c.h.b16 %v357
      %v1106 = vunpack.c.l.b16 %v358
      %v1107 = vunpack.c.h.b16 %v358
      %v1108 = vunpack.c.l.b16 %v359
      %v1109 = vunpack.c.h.b16 %v359
      %v1110 = vunpack.c.l.b16 %v360
      %v1111 = vunpack.c.h.b16 %v360
      %v1112 = vunpack.c.l.b16 %v361
      %v1113 = vunpack.c.h.b16 %v361
      %v1114 = vunpack.c.l.b16 %v362
      %v1115 = vunpack.c.h.b16 %v362
      %v1116 = vunpack.c.l.b16 %v363
      %v1117 = vunpack.c.h.b16 %v363
      %v1118 = vunpack.c.l.b16 %v364
      %v1119 = vunpack.c.h.b16 %v364
      %v1120 = vunpack.c.l.b16 %v365
      %v1121 = vunpack.c.h.b16 %v365
      %v1122 = vunpack.c.l.b16 %v366
      %v1123 = vunpack.c.h.b16 %v366
      %v1124 = vunpack.c.l.b16 %v367
      %v1125 = vunpack.c.h.b16 %v367
      %v1126 = vunpack.c.l.b16 %v368
      %v1127 = vunpack.c.h.b16 %v368
      %v1128 = vunpack.c.l.b16 %v369
      %v1129 = vunpack.c.h.b16 %v369
      %v1130 = vunpack.c.l.b16 %v370
      %v1131 = vunpack.c.h.b16 %v370
      %v1132 = vunpack.c.l.b16 %v371
      %v1133 = vunpack.c.h.b16 %v371
      %v1134 = vunpack.c.l.b16 %v372
      %v1135 = vunpack.c.h.b16 %v372
      %v1136 = vunpack.c.l.b16 %v373
      %v1137 = vunpack.c.h.b16 %v373
      %v1138 = vunpack.c.l.b16 %v374
      %v1139 = vunpack.c.h.b16 %v374
      %v1140 = vunpack.c.l.b16 %v375
      %v1141 = vunpack.c.h.b16 %v375
      %v1142 = vunpack.c.l.b16 %v376
      %v1143 = vunpack.c.h.b16 %v376
      %v1144 = vunpack.c.l.b16 %v377
      %v1145 = vunpack.c.h.b16 %v377
      %v1146 = vunpack.c.l.b16 %v378
      %v1147 = vunpack.c.h.b16 %v378
      %v1148 = vunpack.c.l.b16 %v379
      %v1149 = vunpack.c.h.b16 %v379
      %v1150 = vunpack.c.l.b16 %v380
      %v1151 = vunpack.c.h.b16 %v380
      %v1152 = vunpack.c.l.b16 %v381
      %v1153 = vunpack.c.h.b16 %v381
      %v1154 = vunpack.c.l.b16 %v382
      %v1155 = vunpack.c.h.b16 %v382
      %v1156 = vunpack.c.l.b16 %v383
      %v1157 = vunpack.c.h.b16 %v383
      %v1158 = vunpack.c.l.b16 %v384
      %v1159 = vunpack.c.h.b16 %v384
      %v1160 = vunpack.c.l.b16 %v385
      %v1161 = vunpack.c.h.b16 %v385
      %v1162 = vunpack.c.l.b16 %v386
      %v1163 = vunpack.c.h.b16 %v386
      %v1164 = vunpack.c.l.b16 %v387
      %v1165 = vunpack.c.h.b16 %v387
      %v1166 = vunpack.c.l.b16 %v388
      %v1167 = vunpack.c.h.b16 %v388
      %v1168 = vunpack.c.l.b16 %v389
      %v1169 = vunpack.c.h.b16 %v389
      %v1170 = vunpack.c.l.b16 %v390
      %v1171 = vunpack.c.h.b16 %v390
      %v1172 = vunpack.c.l.b16 %v391
      %v1173 = vunpack.c.h.b16 %v391
      %v1174 = vunpack.c.l.b16 %v392
      %v1175 = vunpack.c.h.b16 %v392
      %v1176 = vunpack.c.l.b16 %v393
      %v1177 = vunpack.c.h.b16 %v393
      %v1178 = vunpack.c.l.b16 %v394
      %v1179 = vunpack.c.h.b16 %v394
      %v1180 = vunpack.c.l.b16 %v395
      %v1181 = vunpack.c.h.b16 %v395
      %v1182 = vunpack.c.l.b16 %v396
      %v1183 = vunpack.c.h.b16 %v396
      %v1184 = vunpack.c.l.b16 %v397
      %v1185 = vunpack.c.h.b16 %v397
      %v1186 = vunpack.c.l.b16 %v398
      %v1187 = vunpack.c.h.b16 %v398
      %v1188 = vunpack.c.l.b16 %v399
      %v1189 = vunpack.c.h.b16 %v399
      %v1190 = vunpack.c.l.b16 %v400
      %v1191 = vunpack.c.h.b16 %v400
      %v1192 = vunpack.c.l.b16 %v401
      %v1193 = vunpack.c.h.b16 %v401
      %v1194 = vunpack.c.l.b16 %v402
      %v1195 = vunpack.c.h.b16 %v402
      %v1196 = vpack.c.b16 %v1102, %v1100
      %v1197 = vpack.c.b16 %v1103, %v1101
      %v1198 = vpack.c.b16 %v1106, %v1104
      %v1199 = vpack.c.b16 %v1107, %v1105
      %v1200 = vpack.c.b16 %v1110, %v1108
      %v1201 = vpack.c.b16 %v1111, %v1109
      %v1202 = vpack.c.b16 %v1114, %v1112
      %v1203 = vpack.c.b16 %v1115, %v1113
      %v1204 = vpack.c.b16 %v1118, %v1116
      %v1205 = vpack.c.b16 %v1119, %v1117
      %v1206 = vpack.c.b16 %v1122, %v1120
      %v1207 = vpack.c.b16 %v1123, %v1121
      %v1208 = vpack.c.b16 %v1126, %v1124
      %v1209 = vpack.c.b16 %v1127, %v1125
      %v1210 = vpack.c.b16 %v1130, %v1128
      %v1211 = vpack.c.b16 %v1131, %v1129
      %v1212 = vpack.c.b16 %v1134, %v1132
      %v1213 = vpack.c.b16 %v1135, %v1133
      %v1214 = vpack.c.b16 %v1138, %v1136
      %v1215 = vpack.c.b16 %v1139, %v1137
      %v1216 = vpack.c.b16 %v1142, %v1140
      %v1217 = vpack.c.b16 %v1143, %v1141
      %v1218 = vpack.c.b16 %v1146, %v1144
      %v1219 = vpack.c.b16 %v1147, %v1145
      %v1220 = vpack.c.b16 %v1150, %v1148
      %v1221 = vpack.c.b16 %v1151, %v1149
      %v1222 = vpack.c.b16 %v1154, %v1152
      %v1223 = vpack.c.b16 %v1155, %v1153
      %v1224 = vpack.c.b16 %v1158, %v1156
      %v1225 = vpack.c.b16 %v1159, %v1157
      %v1226 = vpack.c.b16 %v1162, %v1160
      %v1227 = vpack.c.b16 %v1163, %v1161
      %v1228 = vpack.c.b16 %v1166, %v1164
      %v1229 = vpack.c.b16 %v1167, %v1165
      %v1230 = vpack.c.b16 %v1170, %v1168
      %v1231 = vpack.c.b16 %v1171, %v1169
      %v1232 = vpack.c.b16 %v1174, %v1172
      %v1233 = vpack.c.b16 %v1175, %v1173
      %v1234 = vpack.c.b16 %v1178, %v1176
      %v1235 = vpack.c.b16 %v1179, %v1177
      %v1236 = vpack.c.b16 %v1182, %v1180
      %v1237 = vpack.c.b16 %v1183, %v1181
      %v1238 = vpack.c.b16 %v1186, %v1184
      %v1239 = vpack.c.b16 %v1187, %v1185
      %v1240 = vpack.c.b16 %v1190, %v1188
      %v1241 = vpack.c.b16 %v1191, %v1189
      %v1242 = vpack.c.b16 %v1194, %v1192
      %v1243 = vpack.c.b16 %v1195, %v1193
      %1292 = vmatprep.subr.bf16.mxu0 %v1211
      %1293 = vmatpush1.bf16.msra.mxu0 %v1210
      %1294 = vmatprep.subr.bf16.mxu0 %v1209
      %1295 = vmatpush1.bf16.msra.mxu0 %v1208
      %1296 = vmatprep.subr.bf16.mxu0 %v1207
      %1297 = vmatpush1.bf16.msra.mxu0 %v1206
      %1298 = vmatprep.subr.bf16.mxu0 %v1205
      %1299 = vmatpush1.bf16.msra.mxu0 %v1204
      %1300 = vmatprep.subr.bf16.mxu0 %v1203
      %1301 = vmatpush1.bf16.msra.mxu0 %v1202
      %1302 = vmatprep.subr.bf16.mxu0 %v1201
      %1303 = vmatpush1.bf16.msra.mxu0 %v1200
      %1304 = vmatprep.subr.bf16.mxu0 %v1199
      %1305 = vmatpush1.bf16.msra.mxu0 %v1198
      %1306 = vmatprep.subr.bf16.mxu0 %v1197
      %1307 = vmatpush1.bf16.msra.mxu0 %v1196
      %1308 = vmatprep.subr.bf16.mxu0 %v1227
      %1309 = vmatpush2.bf16.msra.mxu0 %v1226
      %1310 = vmatprep.subr.bf16.mxu0 %v1225
      %1311 = vmatpush2.bf16.msra.mxu0 %v1224
      %1312 = vmatprep.subr.bf16.mxu0 %v1223
      %1313 = vmatpush2.bf16.msra.mxu0 %v1222
      %1314 = vmatprep.subr.bf16.mxu0 %v1221
      %1315 = vmatpush2.bf16.msra.mxu0 %v1220
      %1316 = vmatprep.subr.bf16.mxu0 %v1219
      %1317 = vmatpush2.bf16.msra.mxu0 %v1218
      %1318 = vmatprep.subr.bf16.mxu0 %v1217
      %1319 = vmatpush2.bf16.msra.mxu0 %v1216
      %1320 = vmatprep.subr.bf16.mxu0 %v1215
      %1321 = vmatpush2.bf16.msra.mxu0 %v1214
      %1322 = vmatprep.subr.bf16.mxu0 %v1213
      %1323 = vmatpush2.bf16.msra.mxu0 %v1212
      %1324 = vmatprep.mubr.bf16.mxu0 %v1032
      %1325 = vmatmul.mubr.bf16.gmra.mxu0 %v1031
      %v1326 = vpop.f32.mrf.mxu0
      %v1327 = vadd.f32 %v968, %v1326
      %v1328 = vpop.f32.mrf.mxu0
      %v1329 = vadd.f32 %v970, %v1328
      %v1330 = vpop.f32.mrf.mxu0
      %v1331 = vadd.f32 %v972, %v1330
      %v1332 = vpop.f32.mrf.mxu0
      %v1333 = vadd.f32 %v974, %v1332
      %1334 = vmatprep.mubr.bf16.mxu0 %v525
      %1335 = vmatmul.mubr.bf16.gmra.mxu0 %v524
      %v1336 = vpop.f32.mrf.mxu0
      %v1337 = vadd.f32 %v978, %v1336
      %v1338 = vpop.f32.mrf.mxu0
      %v1339 = vadd.f32 %v980, %v1338
      %v1340 = vpop.f32.mrf.mxu0
      %v1341 = vadd.f32 %v982, %v1340
      %v1342 = vpop.f32.mrf.mxu0
      %v1343 = vadd.f32 %v984, %v1342
      %1344 = vmatprep.mubr.bf16.mxu0 %v528
      %1345 = vmatmul.mubr.bf16.gmra.mxu0 %v527
      %v1346 = vpop.f32.mrf.mxu0
      %v1347 = vadd.f32 %v988, %v1346
      %v1348 = vpop.f32.mrf.mxu0
      %v1349 = vadd.f32 %v990, %v1348
      %v1350 = vpop.f32.mrf.mxu0
      %v1351 = vadd.f32 %v992, %v1350
      %v1352 = vpop.f32.mrf.mxu0
      %v1353 = vadd.f32 %v994, %v1352
      %1354 = vmatprep.mubr.bf16.mxu0 %v531
      %1355 = vmatmul.mubr.bf16.gmra.mxu0 %v530
      %v1356 = vpop.f32.mrf.mxu0
      %v1357 = vadd.f32 %v998, %v1356
      %v1358 = vpop.f32.mrf.mxu0
      %v1359 = vadd.f32 %v1000, %v1358
      %v1360 = vpop.f32.mrf.mxu0
      %v1361 = vadd.f32 %v1002, %v1360
      %v1362 = vpop.f32.mrf.mxu0
      %v1363 = vadd.f32 %v1004, %v1362
      %1364 = vmatprep.mubr.bf16.mxu0 %v534
      %1365 = vmatmul.mubr.bf16.gmra.mxu0 %v533
      %v1366 = vpop.f32.mrf.mxu0
      %v1367 = vadd.f32 %v1008, %v1366
      %v1368 = vpop.f32.mrf.mxu0
      %v1369 = vadd.f32 %v1010, %v1368
      %v1370 = vpop.f32.mrf.mxu0
      %v1371 = vadd.f32 %v1012, %v1370
      %v1372 = vpop.f32.mrf.mxu0
      %v1373 = vadd.f32 %v1014, %v1372
      %1374 = vmatprep.mubr.bf16.mxu0 %v537
      %1375 = vmatmul.mubr.bf16.gmra.mxu0 %v536
      %v1376 = vpop.f32.mrf.mxu0
      %v1377 = vadd.f32 %v1018, %v1376
      %v1378 = vpop.f32.mrf.mxu0
      %v1379 = vadd.f32 %v1020, %v1378
      %v1380 = vpop.f32.mrf.mxu0
      %v1381 = vadd.f32 %v1022, %v1380
      %v1382 = vpop.f32.mrf.mxu0
      %v1383 = vadd.f32 %v1024, %v1382
      %1384 = vdwg.mxu0
      %1385 = vmatprep.subr.bf16.mxu0 %v1243
      %1386 = vmatpush1.bf16.msra.mxu0 %v1242
      %1387 = vmatprep.subr.bf16.mxu0 %v1241
      %1388 = vmatpush1.bf16.msra.mxu0 %v1240
      %1389 = vmatprep.subr.bf16.mxu0 %v1239
      %1390 = vmatpush1.bf16.msra.mxu0 %v1238
      %1391 = vmatprep.subr.bf16.mxu0 %v1237
      %1392 = vmatpush1.bf16.msra.mxu0 %v1236
      %1393 = vmatprep.subr.bf16.mxu0 %v1235
      %1394 = vmatpush1.bf16.msra.mxu0 %v1234
      %1395 = vmatprep.subr.bf16.mxu0 %v1233
      %1396 = vmatpush1.bf16.msra.mxu0 %v1232
      %1397 = vmatprep.subr.bf16.mxu0 %v1231
      %1398 = vmatpush1.bf16.msra.mxu0 %v1230
      %1399 = vmatprep.subr.bf16.mxu0 %v1229
      %1400 = vmatpush1.bf16.msra.mxu0 %v1228
      %1401 = vmatprep.subr.bf16.mxu0 0
      %1402 = vmatpush2.bf16.msra.mxu0 0
      %1403 = vmatprep.subr.bf16.mxu0 0
      %1404 = vmatpush2.bf16.msra.mxu0 0
      %1405 = vmatprep.subr.bf16.mxu0 0
      %1406 = vmatpush2.bf16.msra.mxu0 0
      %1407 = vmatprep.subr.bf16.mxu0 0
      %1408 = vmatpush2.bf16.msra.mxu0 0
      %1409 = vmatprep.subr.bf16.mxu0 0
      %1410 = vmatpush2.bf16.msra.mxu0 0
      %1411 = vmatprep.subr.bf16.mxu0 0
      %1412 = vmatpush2.bf16.msra.mxu0 0
      %1413 = vmatprep.subr.bf16.mxu0 0
      %1414 = vmatpush2.bf16.msra.mxu0 0
      %1415 = vmatprep.subr.bf16.mxu0 0
      %1416 = vmatpush2.bf16.msra.mxu0 0
      %1417 = vmatprep.mubr.bf16.mxu0 0
      %1418 = vmatmul.mubr.bf16.gmra.mxu0 %v1033
      %v1419 = vpop.f32.mrf.mxu0
      %v1420 = vadd.f32 %v1327, %v1419
      %v1421 = vpop.f32.mrf.mxu0
      %v1422 = vadd.f32 %v1329, %v1421
      %v1423 = vpop.f32.mrf.mxu0
      %v1424 = vadd.f32 %v1331, %v1423
      %v1425 = vpop.f32.mrf.mxu0
      %v1426 = vadd.f32 %v1333, %v1425
      %1427 = vmatprep.mubr.bf16.mxu0 0
      %1428 = vmatmul.mubr.bf16.gmra.mxu0 %v526
      %v1429 = vpop.f32.mrf.mxu0
      %v1430 = vadd.f32 %v1337, %v1429
      %v1431 = vpop.f32.mrf.mxu0
      %v1432 = vadd.f32 %v1339, %v1431
      %v1433 = vpop.f32.mrf.mxu0
      %v1434 = vadd.f32 %v1341, %v1433
      %v1435 = vpop.f32.mrf.mxu0
      %v1436 = vadd.f32 %v1343, %v1435
      %1437 = vmatprep.mubr.bf16.mxu0 0
      %1438 = vmatmul.mubr.bf16.gmra.mxu0 %v529
      %v1439 = vpop.f32.mrf.mxu0
      %v1440 = vadd.f32 %v1347, %v1439
      %v1441 = vpop.f32.mrf.mxu0
      %v1442 = vadd.f32 %v1349, %v1441
      %v1443 = vpop.f32.mrf.mxu0
      %v1444 = vadd.f32 %v1351, %v1443
      %v1445 = vpop.f32.mrf.mxu0
      %v1446 = vadd.f32 %v1353, %v1445
      %1447 = vmatprep.mubr.bf16.mxu0 0
      %1448 = vmatmul.mubr.bf16.gmra.mxu0 %v532
      %v1449 = vpop.f32.mrf.mxu0
      %v1450 = vadd.f32 %v1357, %v1449
      %v1451 = vpop.f32.mrf.mxu0
      %v1452 = vadd.f32 %v1359, %v1451
      %v1453 = vpop.f32.mrf.mxu0
      %v1454 = vadd.f32 %v1361, %v1453
      %v1455 = vpop.f32.mrf.mxu0
      %v1456 = vadd.f32 %v1363, %v1455
      %1457 = vmatprep.mubr.bf16.mxu0 0
      %1458 = vmatmul.mubr.bf16.gmra.mxu0 %v535
      %v1459 = vpop.f32.mrf.mxu0
      %v1460 = vadd.f32 %v1367, %v1459
      %v1461 = vpop.f32.mrf.mxu0
      %v1462 = vadd.f32 %v1369, %v1461
      %v1463 = vpop.f32.mrf.mxu0
      %v1464 = vadd.f32 %v1371, %v1463
      %v1465 = vpop.f32.mrf.mxu0
      %v1466 = vadd.f32 %v1373, %v1465
      %1467 = vmatprep.mubr.bf16.mxu0 0
      %1468 = vmatmul.mubr.bf16.gmra.mxu0 %v538
      %v1469 = vpop.f32.mrf.mxu0
      %v1470 = vadd.f32 %v1377, %v1469
      %v1471 = vpop.f32.mrf.mxu0
      %v1472 = vadd.f32 %v1379, %v1471
      %v1473 = vpop.f32.mrf.mxu0
      %v1474 = vadd.f32 %v1381, %v1473
      %v1475 = vpop.f32.mrf.mxu0
      %v1476 = vadd.f32 %v1383, %v1475
      %1477 = vdwg.mxu0
      %v1478 = vld [vmem:[%s300] sm:$0xcc]
      %v1479 = vld [vmem:[%s300 + $0x8] sm:$0xc]
      %v1480 = vld [vmem:[%s300 + $0x90] sm:$0x33]
      %v1481 = vld [vmem:[%s300 + $0x98] sm:$0x3]
      %s1482 = scalar_lea.vmem %s2, 768
      %v1483 = vld [vmem:[%s1482] sm:$0xff]
      %v1484 = vld [vmem:[%s1482 + $0x8] sm:$0xff]
      %v1485 = vld [vmem:[%s1482 + $0x10] sm:$0xff]
      %v1486 = vld [vmem:[%s1482 + $0x18] sm:$0xff]
      %v1487 = vld [vmem:[%s1482 + $0x20] sm:$0xff]
      %v1488 = vld [vmem:[%s1482 + $0x28] sm:$0xff]
      %v1489 = vld [vmem:[%s1482 + $0x30] sm:$0xff]
      %v1490 = vld [vmem:[%s1482 + $0x38] sm:$0xff]
      %v1491 = vld [vmem:[%s1482 + $0x40] sm:$0xff]
      %v1492 = vld [vmem:[%s1482 + $0x48] sm:$0xff]
      %v1493 = vld [vmem:[%s1482 + $0x50] sm:$0xff]
      %v1494 = vld [vmem:[%s1482 + $0x58] sm:$0xff]
      %v1495 = vld [vmem:[%s1482 + $0x60] sm:$0xff]
      %v1496 = vld [vmem:[%s1482 + $0x68] sm:$0xff]
      %v1497 = vld [vmem:[%s1482 + $0x70] sm:$0xff]
      %v1498 = vld [vmem:[%s1482 + $0x78] sm:$0xff]
      %v1499 = vld [vmem:[%s1482 + $0x80] sm:$0xff]
      %v1500 = vld [vmem:[%s1482 + $0x88] sm:$0xff]
      %v1501 = vld [vmem:[%s1482 + $0x90] sm:$0xff]
      %v1502 = vld [vmem:[%s1482 + $0x98] sm:$0xff]
      %v1503 = vld [vmem:[%s1482 + $0xa0] sm:$0xff]
      %v1504 = vld [vmem:[%s1482 + $0xa8] sm:$0xff]
      %v1505 = vld [vmem:[%s1482 + $0xb0] sm:$0xff]
      %v1506 = vld [vmem:[%s1482 + $0xb8] sm:$0xff]
      %v1507 = vld [vmem:[%s1482 + $0xc0] sm:$0xff]
      %v1508 = vld [vmem:[%s1482 + $0xc8] sm:$0xff]
      %v1509 = vld [vmem:[%s1482 + $0xd0] sm:$0xff]
      %v1510 = vld [vmem:[%s1482 + $0xd8] sm:$0xff]
      %v1511 = vld [vmem:[%s1482 + $0xe0] sm:$0xff]
      %v1512 = vld [vmem:[%s1482 + $0xe8] sm:$0xff]
      %v1513 = vld [vmem:[%s1482 + $0xf0] sm:$0xff]
      %v1514 = vld [vmem:[%s1482 + $0xf8] sm:$0xff]
      %v1515 = vld [vmem:[%s1482 + $0x100] sm:$0xff]
      %v1516 = vld [vmem:[%s1482 + $0x108] sm:$0xff]
      %v1517 = vld [vmem:[%s1482 + $0x110] sm:$0xff]
      %v1518 = vld [vmem:[%s1482 + $0x118] sm:$0xff]
      %v1519 = vld [vmem:[%s1482 + $0x120] sm:$0xff]
      %v1520 = vld [vmem:[%s1482 + $0x128] sm:$0xff]
      %v1521 = vld [vmem:[%s1482 + $0x130] sm:$0xff]
      %v1522 = vld [vmem:[%s1482 + $0x138] sm:$0xff]
      %v1523 = vld [vmem:[%s1482 + $0x140] sm:$0xff]
      %v1524 = vld [vmem:[%s1482 + $0x148] sm:$0xff]
      %v1525 = vld [vmem:[%s1482 + $0x150] sm:$0xff]
      %v1526 = vld [vmem:[%s1482 + $0x158] sm:$0xff]
      %v1527 = vld [vmem:[%s1482 + $0x160] sm:$0xff]
      %v1528 = vld [vmem:[%s1482 + $0x168] sm:$0xff]
      %v1529 = vld [vmem:[%s1482 + $0x170] sm:$0xff]
      %v1530 = vld [vmem:[%s1482 + $0x178] sm:$0xff]
      %v1535 = vunpack.c.l.b16 %v1478
      %v1536 = vunpack.c.h.b16 %v1478
      %v1537 = vunpack.c.l.b16 %v1479
      %v1538 = vunpack.c.l.b16 %v1480
      %v1539 = vunpack.c.h.b16 %v1480
      %v1540 = vunpack.c.l.b16 %v1481
      %v1541 = vpack.c.b16 %v485, %v1535
      %v1542 = vpack.c.b16 %v486, %v1536
      %v1543 = vpack.c.b16 %v487, %v1537
      %v1544 = vpack.c.b16 %v1538, %v1538
      %v1545 = vpack.c.b16 %v1539, %v1539
      %v1546 = vpack.c.b16 %v1540, %v1540
      %vm1547 = vcmask 1045504
      %v1548 = vrot.slane %v1541, 2
      %v1549 = vrot.slane %v524, 2
      %v1550 = vsel %vm1547, %v1548, %v1549
      %v1551 = vrot.slane %v1542, 2
      %v1552 = vrot.slane %v525, 2
      %v1553 = vsel %vm1547, %v1551, %v1552
      %v1554 = vrot.slane %v1543, 2
      %v1555 = vrot.slane %v526, 2
      %v1556 = vsel %vm1547, %v1554, %v1555
      %v1557 = vrot.slane %v527, 2
      %v1558 = vsel %vm1547, %v1549, %v1557
      %v1559 = vrot.slane %v528, 2
      %v1560 = vsel %vm1547, %v1552, %v1559
      %v1561 = vrot.slane %v529, 2
      %v1562 = vsel %vm1547, %v1555, %v1561
      %v1563 = vrot.slane %v530, 2
      %v1564 = vsel %vm1547, %v1557, %v1563
      %v1565 = vrot.slane %v531, 2
      %v1566 = vsel %vm1547, %v1559, %v1565
      %v1567 = vrot.slane %v532, 2
      %v1568 = vsel %vm1547, %v1561, %v1567
      %v1569 = vrot.slane %v533, 2
      %v1570 = vsel %vm1547, %v1563, %v1569
      %v1571 = vrot.slane %v534, 2
      %v1572 = vsel %vm1547, %v1565, %v1571
      %v1573 = vrot.slane %v535, 2
      %v1574 = vsel %vm1547, %v1567, %v1573
      %v1575 = vrot.slane %v536, 2
      %v1576 = vsel %vm1547, %v1569, %v1575
      %v1577 = vrot.slane %v537, 2
      %v1578 = vsel %vm1547, %v1571, %v1577
      %v1579 = vrot.slane %v538, 2
      %v1580 = vsel %vm1547, %v1573, %v1579
      %v1581 = vrot.slane %v1544, 2
      %v1582 = vsel %vm1547, %v1575, %v1581
      %v1583 = vrot.slane %v1545, 2
      %v1584 = vsel %vm1547, %v1577, %v1583
      %v1585 = vrot.slane %v1546, 2
      %v1586 = vsel %vm1547, %v1579, %v1585
      %v1653 = vunpack.c.l.b16 %v1483
      %v1654 = vunpack.c.h.b16 %v1483
      %v1655 = vunpack.c.l.b16 %v1484
      %v1656 = vunpack.c.h.b16 %v1484
      %v1657 = vunpack.c.l.b16 %v1485
      %v1658 = vunpack.c.h.b16 %v1485
      %v1659 = vunpack.c.l.b16 %v1486
      %v1660 = vunpack.c.h.b16 %v1486
      %v1661 = vunpack.c.l.b16 %v1487
      %v1662 = vunpack.c.h.b16 %v1487
      %v1663 = vunpack.c.l.b16 %v1488
      %v1664 = vunpack.c.h.b16 %v1488
      %v1665 = vunpack.c.l.b16 %v1489
      %v1666 = vunpack.c.h.b16 %v1489
      %v1667 = vunpack.c.l.b16 %v1490
      %v1668 = vunpack.c.h.b16 %v1490
      %v1669 = vunpack.c.l.b16 %v1491
      %v1670 = vunpack.c.h.b16 %v1491
      %v1671 = vunpack.c.l.b16 %v1492
      %v1672 = vunpack.c.h.b16 %v1492
      %v1673 = vunpack.c.l.b16 %v1493
      %v1674 = vunpack.c.h.b16 %v1493
      %v1675 = vunpack.c.l.b16 %v1494
      %v1676 = vunpack.c.h.b16 %v1494
      %v1677 = vunpack.c.l.b16 %v1495
      %v1678 = vunpack.c.h.b16 %v1495
      %v1679 = vunpack.c.l.b16 %v1496
      %v1680 = vunpack.c.h.b16 %v1496
      %v1681 = vunpack.c.l.b16 %v1497
      %v1682 = vunpack.c.h.b16 %v1497
      %v1683 = vunpack.c.l.b16 %v1498
      %v1684 = vunpack.c.h.b16 %v1498
      %v1685 = vunpack.c.l.b16 %v1499
      %v1686 = vunpack.c.h.b16 %v1499
      %v1687 = vunpack.c.l.b16 %v1500
      %v1688 = vunpack.c.h.b16 %v1500
      %v1689 = vunpack.c.l.b16 %v1501
      %v1690 = vunpack.c.h.b16 %v1501
      %v1691 = vunpack.c.l.b16 %v1502
      %v1692 = vunpack.c.h.b16 %v1502
      %v1693 = vunpack.c.l.b16 %v1503
      %v1694 = vunpack.c.h.b16 %v1503
      %v1695 = vunpack.c.l.b16 %v1504
      %v1696 = vunpack.c.h.b16 %v1504
      %v1697 = vunpack.c.l.b16 %v1505
      %v1698 = vunpack.c.h.b16 %v1505
      %v1699 = vunpack.c.l.b16 %v1506
      %v1700 = vunpack.c.h.b16 %v1506
      %v1701 = vunpack.c.l.b16 %v1507
      %v1702 = vunpack.c.h.b16 %v1507
      %v1703 = vunpack.c.l.b16 %v1508
      %v1704 = vunpack.c.h.b16 %v1508
      %v1705 = vunpack.c.l.b16 %v1509
      %v1706 = vunpack.c.h.b16 %v1509
      %v1707 = vunpack.c.l.b16 %v1510
      %v1708 = vunpack.c.h.b16 %v1510
      %v1709 = vunpack.c.l.b16 %v1511
      %v1710 = vunpack.c.h.b16 %v1511
      %v1711 = vunpack.c.l.b16 %v1512
      %v1712 = vunpack.c.h.b16 %v1512
      %v1713 = vunpack.c.l.b16 %v1513
      %v1714 = vunpack.c.h.b16 %v1513
      %v1715 = vunpack.c.l.b16 %v1514
      %v1716 = vunpack.c.h.b16 %v1514
      %v1717 = vunpack.c.l.b16 %v1515
      %v1718 = vunpack.c.h.b16 %v1515
      %v1719 = vunpack.c.l.b16 %v1516
      %v1720 = vunpack.c.h.b16 %v1516
      %v1721 = vunpack.c.l.b16 %v1517
      %v1722 = vunpack.c.h.b16 %v1517
      %v1723 = vunpack.c.l.b16 %v1518
      %v1724 = vunpack.c.h.b16 %v1518
      %v1725 = vunpack.c.l.b16 %v1519
      %v1726 = vunpack.c.h.b16 %v1519
      %v1727 = vunpack.c.l.b16 %v1520
      %v1728 = vunpack.c.h.b16 %v1520
      %v1729 = vunpack.c.l.b16 %v1521
      %v1730 = vunpack.c.h.b16 %v1521
      %v1731 = vunpack.c.l.b16 %v1522
      %v1732 = vunpack.c.h.b16 %v1522
      %v1733 = vunpack.c.l.b16 %v1523
      %v1734 = vunpack.c.h.b16 %v1523
      %v1735 = vunpack.c.l.b16 %v1524
      %v1736 = vunpack.c.h.b16 %v1524
      %v1737 = vunpack.c.l.b16 %v1525
      %v1738 = vunpack.c.h.b16 %v1525
      %v1739 = vunpack.c.l.b16 %v1526
      %v1740 = vunpack.c.h.b16 %v1526
      %v1741 = vunpack.c.l.b16 %v1527
      %v1742 = vunpack.c.h.b16 %v1527
      %v1743 = vunpack.c.l.b16 %v1528
      %v1744 = vunpack.c.h.b16 %v1528
      %v1745 = vunpack.c.l.b16 %v1529
      %v1746 = vunpack.c.h.b16 %v1529
      %v1747 = vunpack.c.l.b16 %v1530
      %v1748 = vunpack.c.h.b16 %v1530
      %v1749 = vpack.c.b16 %v1655, %v1653
      %v1750 = vpack.c.b16 %v1656, %v1654
      %v1751 = vpack.c.b16 %v1659, %v1657
      %v1752 = vpack.c.b16 %v1660, %v1658
      %v1753 = vpack.c.b16 %v1663, %v1661
      %v1754 = vpack.c.b16 %v1664, %v1662
      %v1755 = vpack.c.b16 %v1667, %v1665
      %v1756 = vpack.c.b16 %v1668, %v1666
      %v1757 = vpack.c.b16 %v1671, %v1669
      %v1758 = vpack.c.b16 %v1672, %v1670
      %v1759 = vpack.c.b16 %v1675, %v1673
      %v1760 = vpack.c.b16 %v1676, %v1674
      %v1761 = vpack.c.b16 %v1679, %v1677
      %v1762 = vpack.c.b16 %v1680, %v1678
      %v1763 = vpack.c.b16 %v1683, %v1681
      %v1764 = vpack.c.b16 %v1684, %v1682
      %v1765 = vpack.c.b16 %v1687, %v1685
      %v1766 = vpack.c.b16 %v1688, %v1686
      %v1767 = vpack.c.b16 %v1691, %v1689
      %v1768 = vpack.c.b16 %v1692, %v1690
      %v1769 = vpack.c.b16 %v1695, %v1693
      %v1770 = vpack.c.b16 %v1696, %v1694
      %v1771 = vpack.c.b16 %v1699, %v1697
      %v1772 = vpack.c.b16 %v1700, %v1698
      %v1773 = vpack.c.b16 %v1703, %v1701
      %v1774 = vpack.c.b16 %v1704, %v1702
      %v1775 = vpack.c.b16 %v1707, %v1705
      %v1776 = vpack.c.b16 %v1708, %v1706
      %v1777 = vpack.c.b16 %v1711, %v1709
      %v1778 = vpack.c.b16 %v1712, %v1710
      %v1779 = vpack.c.b16 %v1715, %v1713
      %v1780 = vpack.c.b16 %v1716, %v1714
      %v1781 = vpack.c.b16 %v1719, %v1717
      %v1782 = vpack.c.b16 %v1720, %v1718
      %v1783 = vpack.c.b16 %v1723, %v1721
      %v1784 = vpack.c.b16 %v1724, %v1722
      %v1785 = vpack.c.b16 %v1727, %v1725
      %v1786 = vpack.c.b16 %v1728, %v1726
      %v1787 = vpack.c.b16 %v1731, %v1729
      %v1788 = vpack.c.b16 %v1732, %v1730
      %v1789 = vpack.c.b16 %v1735, %v1733
      %v1790 = vpack.c.b16 %v1736, %v1734
      %v1791 = vpack.c.b16 %v1739, %v1737
      %v1792 = vpack.c.b16 %v1740, %v1738
      %v1793 = vpack.c.b16 %v1743, %v1741
      %v1794 = vpack.c.b16 %v1744, %v1742
      %v1795 = vpack.c.b16 %v1747, %v1745
      %v1796 = vpack.c.b16 %v1748, %v1746
      %1845 = vmatprep.subr.bf16.mxu0 %v1764
      %1846 = vmatpush1.bf16.msra.mxu0 %v1763
      %1847 = vmatprep.subr.bf16.mxu0 %v1762
      %1848 = vmatpush1.bf16.msra.mxu0 %v1761
      %1849 = vmatprep.subr.bf16.mxu0 %v1760
      %1850 = vmatpush1.bf16.msra.mxu0 %v1759
      %1851 = vmatprep.subr.bf16.mxu0 %v1758
      %1852 = vmatpush1.bf16.msra.mxu0 %v1757
      %1853 = vmatprep.subr.bf16.mxu0 %v1756
      %1854 = vmatpush1.bf16.msra.mxu0 %v1755
      %1855 = vmatprep.subr.bf16.mxu0 %v1754
      %1856 = vmatpush1.bf16.msra.mxu0 %v1753
      %1857 = vmatprep.subr.bf16.mxu0 %v1752
      %1858 = vmatpush1.bf16.msra.mxu0 %v1751
      %1859 = vmatprep.subr.bf16.mxu0 %v1750
      %1860 = vmatpush1.bf16.msra.mxu0 %v1749
      %1861 = vmatprep.subr.bf16.mxu0 %v1780
      %1862 = vmatpush2.bf16.msra.mxu0 %v1779
      %1863 = vmatprep.subr.bf16.mxu0 %v1778
      %1864 = vmatpush2.bf16.msra.mxu0 %v1777
      %1865 = vmatprep.subr.bf16.mxu0 %v1776
      %1866 = vmatpush2.bf16.msra.mxu0 %v1775
      %1867 = vmatprep.subr.bf16.mxu0 %v1774
      %1868 = vmatpush2.bf16.msra.mxu0 %v1773
      %1869 = vmatprep.subr.bf16.mxu0 %v1772
      %1870 = vmatpush2.bf16.msra.mxu0 %v1771
      %1871 = vmatprep.subr.bf16.mxu0 %v1770
      %1872 = vmatpush2.bf16.msra.mxu0 %v1769
      %1873 = vmatprep.subr.bf16.mxu0 %v1768
      %1874 = vmatpush2.bf16.msra.mxu0 %v1767
      %1875 = vmatprep.subr.bf16.mxu0 %v1766
      %1876 = vmatpush2.bf16.msra.mxu0 %v1765
      %1877 = vmatprep.mubr.bf16.mxu0 %v1553
      %1878 = vmatmul.mubr.bf16.gmra.mxu0 %v1550
      %v1879 = vpop.f32.mrf.mxu0
      %v1880 = vadd.f32 0.0, %v1879
      %v1881 = vpop.f32.mrf.mxu0
      %v1882 = vadd.f32 0.0, %v1881
      %v1883 = vpop.f32.mrf.mxu0
      %v1884 = vadd.f32 0.0, %v1883
      %v1885 = vpop.f32.mrf.mxu0
      %v1886 = vadd.f32 0.0, %v1885
      %1887 = vmatprep.mubr.bf16.mxu0 %v1560
      %1888 = vmatmul.mubr.bf16.gmra.mxu0 %v1558
      %v1889 = vpop.f32.mrf.mxu0
      %v1890 = vadd.f32 0.0, %v1889
      %v1891 = vpop.f32.mrf.mxu0
      %v1892 = vadd.f32 0.0, %v1891
      %v1893 = vpop.f32.mrf.mxu0
      %v1894 = vadd.f32 0.0, %v1893
      %v1895 = vpop.f32.mrf.mxu0
      %v1896 = vadd.f32 0.0, %v1895
      %1897 = vmatprep.mubr.bf16.mxu0 %v1566
      %1898 = vmatmul.mubr.bf16.gmra.mxu0 %v1564
      %v1899 = vpop.f32.mrf.mxu0
      %v1900 = vadd.f32 0.0, %v1899
      %v1901 = vpop.f32.mrf.mxu0
      %v1902 = vadd.f32 0.0, %v1901
      %v1903 = vpop.f32.mrf.mxu0
      %v1904 = vadd.f32 0.0, %v1903
      %v1905 = vpop.f32.mrf.mxu0
      %v1906 = vadd.f32 0.0, %v1905
      %1907 = vmatprep.mubr.bf16.mxu0 %v1572
      %1908 = vmatmul.mubr.bf16.gmra.mxu0 %v1570
      %v1909 = vpop.f32.mrf.mxu0
      %v1910 = vadd.f32 0.0, %v1909
      %v1911 = vpop.f32.mrf.mxu0
      %v1912 = vadd.f32 0.0, %v1911
      %v1913 = vpop.f32.mrf.mxu0
      %v1914 = vadd.f32 0.0, %v1913
      %v1915 = vpop.f32.mrf.mxu0
      %v1916 = vadd.f32 0.0, %v1915
      %1917 = vmatprep.mubr.bf16.mxu0 %v1578
      %1918 = vmatmul.mubr.bf16.gmra.mxu0 %v1576
      %v1919 = vpop.f32.mrf.mxu0
      %v1920 = vadd.f32 0.0, %v1919
      %v1921 = vpop.f32.mrf.mxu0
      %v1922 = vadd.f32 0.0, %v1921
      %v1923 = vpop.f32.mrf.mxu0
      %v1924 = vadd.f32 0.0, %v1923
      %v1925 = vpop.f32.mrf.mxu0
      %v1926 = vadd.f32 0.0, %v1925
      %1927 = vmatprep.mubr.bf16.mxu0 %v1584
      %1928 = vmatmul.mubr.bf16.gmra.mxu0 %v1582
      %v1929 = vpop.f32.mrf.mxu0
      %v1930 = vadd.f32 0.0, %v1929
      %v1931 = vpop.f32.mrf.mxu0
      %v1932 = vadd.f32 0.0, %v1931
      %v1933 = vpop.f32.mrf.mxu0
      %v1934 = vadd.f32 0.0, %v1933
      %v1935 = vpop.f32.mrf.mxu0
      %v1936 = vadd.f32 0.0, %v1935
      %1937 = vdwg.mxu0
      %1938 = vmatprep.subr.bf16.mxu0 %v1796
      %1939 = vmatpush1.bf16.msra.mxu0 %v1795
      %1940 = vmatprep.subr.bf16.mxu0 %v1794
      %1941 = vmatpush1.bf16.msra.mxu0 %v1793
      %1942 = vmatprep.subr.bf16.mxu0 %v1792
      %1943 = vmatpush1.bf16.msra.mxu0 %v1791
      %1944 = vmatprep.subr.bf16.mxu0 %v1790
      %1945 = vmatpush1.bf16.msra.mxu0 %v1789
      %1946 = vmatprep.subr.bf16.mxu0 %v1788
      %1947 = vmatpush1.bf16.msra.mxu0 %v1787
      %1948 = vmatprep.subr.bf16.mxu0 %v1786
      %1949 = vmatpush1.bf16.msra.mxu0 %v1785
      %1950 = vmatprep.subr.bf16.mxu0 %v1784
      %1951 = vmatpush1.bf16.msra.mxu0 %v1783
      %1952 = vmatprep.subr.bf16.mxu0 %v1782
      %1953 = vmatpush1.bf16.msra.mxu0 %v1781
      %1954 = vmatprep.subr.bf16.mxu0 0
      %1955 = vmatpush2.bf16.msra.mxu0 0
      %1956 = vmatprep.subr.bf16.mxu0 0
      %1957 = vmatpush2.bf16.msra.mxu0 0
      %1958 = vmatprep.subr.bf16.mxu0 0
      %1959 = vmatpush2.bf16.msra.mxu0 0
      %1960 = vmatprep.subr.bf16.mxu0 0
      %1961 = vmatpush2.bf16.msra.mxu0 0
      %1962 = vmatprep.subr.bf16.mxu0 0
      %1963 = vmatpush2.bf16.msra.mxu0 0
      %1964 = vmatprep.subr.bf16.mxu0 0
      %1965 = vmatpush2.bf16.msra.mxu0 0
      %1966 = vmatprep.subr.bf16.mxu0 0
      %1967 = vmatpush2.bf16.msra.mxu0 0
      %1968 = vmatprep.subr.bf16.mxu0 0
      %1969 = vmatpush2.bf16.msra.mxu0 0
      %1970 = vmatprep.mubr.bf16.mxu0 0
      %1971 = vmatmul.mubr.bf16.gmra.mxu0 %v1556
      %v1972 = vpop.f32.mrf.mxu0
      %v1973 = vadd.f32 %v1880, %v1972
      %v1974 = vpop.f32.mrf.mxu0
      %v1975 = vadd.f32 %v1882, %v1974
      %v1976 = vpop.f32.mrf.mxu0
      %v1977 = vadd.f32 %v1884, %v1976
      %v1978 = vpop.f32.mrf.mxu0
      %v1979 = vadd.f32 %v1886, %v1978
      %1980 = vmatprep.mubr.bf16.mxu0 0
      %1981 = vmatmul.mubr.bf16.gmra.mxu0 %v1562
      %v1982 = vpop.f32.mrf.mxu0
      %v1983 = vadd.f32 %v1890, %v1982
      %v1984 = vpop.f32.mrf.mxu0
      %v1985 = vadd.f32 %v1892, %v1984
      %v1986 = vpop.f32.mrf.mxu0
      %v1987 = vadd.f32 %v1894, %v1986
      %v1988 = vpop.f32.mrf.mxu0
      %v1989 = vadd.f32 %v1896, %v1988
      %1990 = vmatprep.mubr.bf16.mxu0 0
      %1991 = vmatmul.mubr.bf16.gmra.mxu0 %v1568
      %v1992 = vpop.f32.mrf.mxu0
      %v1993 = vadd.f32 %v1900, %v1992
      %v1994 = vpop.f32.mrf.mxu0
      %v1995 = vadd.f32 %v1902, %v1994
      %v1996 = vpop.f32.mrf.mxu0
      %v1997 = vadd.f32 %v1904, %v1996
      %v1998 = vpop.f32.mrf.mxu0
      %v1999 = vadd.f32 %v1906, %v1998
      %2000 = vmatprep.mubr.bf16.mxu0 0
      %2001 = vmatmul.mubr.bf16.gmra.mxu0 %v1574
      %v2002 = vpop.f32.mrf.mxu0
      %v2003 = vadd.f32 %v1910, %v2002
      %v2004 = vpop.f32.mrf.mxu0
      %v2005 = vadd.f32 %v1912, %v2004
      %v2006 = vpop.f32.mrf.mxu0
      %v2007 = vadd.f32 %v1914, %v2006
      %v2008 = vpop.f32.mrf.mxu0
      %v2009 = vadd.f32 %v1916, %v2008
      %2010 = vmatprep.mubr.bf16.mxu0 0
      %2011 = vmatmul.mubr.bf16.gmra.mxu0 %v1580
      %v2012 = vpop.f32.mrf.mxu0
      %v2013 = vadd.f32 %v1920, %v2012
      %v2014 = vpop.f32.mrf.mxu0
      %v2015 = vadd.f32 %v1922, %v2014
      %v2016 = vpop.f32.mrf.mxu0
      %v2017 = vadd.f32 %v1924, %v2016
      %v2018 = vpop.f32.mrf.mxu0
      %v2019 = vadd.f32 %v1926, %v2018
      %2020 = vmatprep.mubr.bf16.mxu0 0
      %2021 = vmatmul.mubr.bf16.gmra.mxu0 %v1586
      %v2022 = vpop.f32.mrf.mxu0
      %v2023 = vadd.f32 %v1930, %v2022
      %v2024 = vpop.f32.mrf.mxu0
      %v2025 = vadd.f32 %v1932, %v2024
      %v2026 = vpop.f32.mrf.mxu0
      %v2027 = vadd.f32 %v1934, %v2026
      %v2028 = vpop.f32.mrf.mxu0
      %v2029 = vadd.f32 %v1936, %v2028
      %2030 = vdwg.mxu0
      %v2031 = vadd.f32 %v1420, %v1973
      %v2032 = vadd.f32 %v1422, %v1975
      %v2033 = vadd.f32 %v1424, %v1977
      %v2034 = vadd.f32 %v1426, %v1979
      %v2035 = vadd.f32 %v1430, %v1983
      %v2036 = vadd.f32 %v1432, %v1985
      %v2037 = vadd.f32 %v1434, %v1987
      %v2038 = vadd.f32 %v1436, %v1989
      %v2039 = vadd.f32 %v1440, %v1993
      %v2040 = vadd.f32 %v1442, %v1995
      %v2041 = vadd.f32 %v1444, %v1997
      %v2042 = vadd.f32 %v1446, %v1999
      %v2043 = vadd.f32 %v1450, %v2003
      %v2044 = vadd.f32 %v1452, %v2005
      %v2045 = vadd.f32 %v1454, %v2007
      %v2046 = vadd.f32 %v1456, %v2009
      %v2047 = vadd.f32 %v1460, %v2013
      %v2048 = vadd.f32 %v1462, %v2015
      %v2049 = vadd.f32 %v1464, %v2017
      %v2050 = vadd.f32 %v1466, %v2019
      %v2051 = vadd.f32 %v1470, %v2023
      %v2052 = vadd.f32 %v1472, %v2025
      %v2053 = vadd.f32 %v1474, %v2027
      %v2054 = vadd.f32 %v1476, %v2029
      %v2055 = vld [vmem:[%s300 + $0x24] sm:$0xff]
      %v2056 = vld [vmem:[%s300 + $0x2c] sm:$0xf]
      %v2057 = vld [vmem:[%s300 + $0x30] sm:$0xff]
      %v2058 = vld [vmem:[%s300 + $0x38] sm:$0xf]
      %v2059 = vld [vmem:[%s300 + $0x3c] sm:$0xff]
      %v2060 = vld [vmem:[%s300 + $0x44] sm:$0xf]
      %v2061 = vld [vmem:[%s300 + $0x48] sm:$0xff]
      %v2062 = vld [vmem:[%s300 + $0x50] sm:$0xf]
      %v2063 = vld [vmem:[%s300 + $0x54] sm:$0xff]
      %v2064 = vld [vmem:[%s300 + $0x5c] sm:$0xf]
      %v2065 = vld [vmem:[%s300 + $0x60] sm:$0xff]
      %v2066 = vld [vmem:[%s300 + $0x68] sm:$0xf]
      %v2067 = vld [vmem:[%s300 + $0x6c] sm:$0xff]
      %v2068 = vld [vmem:[%s300 + $0x74] sm:$0xf]
      %v2069 = vld [vmem:[%s300 + $0x78] sm:$0xff]
      %v2070 = vld [vmem:[%s300 + $0x80] sm:$0xf]
      %v2071 = vld [vmem:[%s300 + $0x84] sm:$0xff]
      %v2072 = vld [vmem:[%s300 + $0x8c] sm:$0xf]
      %v2073 = vld [vmem:[%s300 + $0x90] sm:$0xff]
      %v2074 = vld [vmem:[%s300 + $0x98] sm:$0xf]
      %v2075 = vld [vmem:[%s300 + $0x9c] sm:$0xff]
      %v2076 = vld [vmem:[%s300 + $0xa4] sm:$0xf]
      %v2077 = vld [vmem:[%s300 + $0xa8] sm:$0xff]
      %v2078 = vld [vmem:[%s300 + $0xb0] sm:$0xf]
      %s2079 = scalar_lea.vmem %s2, 1152
      %v2080 = vld [vmem:[%s2079] sm:$0xff]
      %v2081 = vld [vmem:[%s2079 + $0x8] sm:$0xff]
      %v2082 = vld [vmem:[%s2079 + $0x10] sm:$0xff]
      %v2083 = vld [vmem:[%s2079 + $0x18] sm:$0xff]
      %v2084 = vld [vmem:[%s2079 + $0x20] sm:$0xff]
      %v2085 = vld [vmem:[%s2079 + $0x28] sm:$0xff]
      %v2086 = vld [vmem:[%s2079 + $0x30] sm:$0xff]
      %v2087 = vld [vmem:[%s2079 + $0x38] sm:$0xff]
      %v2088 = vld [vmem:[%s2079 + $0x40] sm:$0xff]
      %v2089 = vld [vmem:[%s2079 + $0x48] sm:$0xff]
      %v2090 = vld [vmem:[%s2079 + $0x50] sm:$0xff]
      %v2091 = vld [vmem:[%s2079 + $0x58] sm:$0xff]
      %v2092 = vld [vmem:[%s2079 + $0x60] sm:$0xff]
      %v2093 = vld [vmem:[%s2079 + $0x68] sm:$0xff]
      %v2094 = vld [vmem:[%s2079 + $0x70] sm:$0xff]
      %v2095 = vld [vmem:[%s2079 + $0x78] sm:$0xff]
      %v2096 = vld [vmem:[%s2079 + $0x80] sm:$0xff]
      %v2097 = vld [vmem:[%s2079 + $0x88] sm:$0xff]
      %v2098 = vld [vmem:[%s2079 + $0x90] sm:$0xff]
      %v2099 = vld [vmem:[%s2079 + $0x98] sm:$0xff]
      %v2100 = vld [vmem:[%s2079 + $0xa0] sm:$0xff]
      %v2101 = vld [vmem:[%s2079 + $0xa8] sm:$0xff]
      %v2102 = vld [vmem:[%s2079 + $0xb0] sm:$0xff]
      %v2103 = vld [vmem:[%s2079 + $0xb8] sm:$0xff]
      %v2104 = vld [vmem:[%s2079 + $0xc0] sm:$0xff]
      %v2105 = vld [vmem:[%s2079 + $0xc8] sm:$0xff]
      %v2106 = vld [vmem:[%s2079 + $0xd0] sm:$0xff]
      %v2107 = vld [vmem:[%s2079 + $0xd8] sm:$0xff]
      %v2108 = vld [vmem:[%s2079 + $0xe0] sm:$0xff]
      %v2109 = vld [vmem:[%s2079 + $0xe8] sm:$0xff]
      %v2110 = vld [vmem:[%s2079 + $0xf0] sm:$0xff]
      %v2111 = vld [vmem:[%s2079 + $0xf8] sm:$0xff]
      %v2112 = vld [vmem:[%s2079 + $0x100] sm:$0xff]
      %v2113 = vld [vmem:[%s2079 + $0x108] sm:$0xff]
      %v2114 = vld [vmem:[%s2079 + $0x110] sm:$0xff]
      %v2115 = vld [vmem:[%s2079 + $0x118] sm:$0xff]
      %v2116 = vld [vmem:[%s2079 + $0x120] sm:$0xff]
      %v2117 = vld [vmem:[%s2079 + $0x128] sm:$0xff]
      %v2118 = vld [vmem:[%s2079 + $0x130] sm:$0xff]
      %v2119 = vld [vmem:[%s2079 + $0x138] sm:$0xff]
      %v2120 = vld [vmem:[%s2079 + $0x140] sm:$0xff]
      %v2121 = vld [vmem:[%s2079 + $0x148] sm:$0xff]
      %v2122 = vld [vmem:[%s2079 + $0x150] sm:$0xff]
      %v2123 = vld [vmem:[%s2079 + $0x158] sm:$0xff]
      %v2124 = vld [vmem:[%s2079 + $0x160] sm:$0xff]
      %v2125 = vld [vmem:[%s2079 + $0x168] sm:$0xff]
      %v2126 = vld [vmem:[%s2079 + $0x170] sm:$0xff]
      %v2127 = vld [vmem:[%s2079 + $0x178] sm:$0xff]
      %v2152 = vunpack.c.l.b16 %v2055
      %v2153 = vunpack.c.h.b16 %v2055
      %v2154 = vunpack.c.l.b16 %v2056
      %v2155 = vunpack.c.l.b16 %v2057
      %v2156 = vunpack.c.h.b16 %v2057
      %v2157 = vunpack.c.l.b16 %v2058
      %v2158 = vunpack.c.l.b16 %v2059
      %v2159 = vunpack.c.h.b16 %v2059
      %v2160 = vunpack.c.l.b16 %v2060
      %v2161 = vunpack.c.l.b16 %v2061
      %v2162 = vunpack.c.h.b16 %v2061
      %v2163 = vunpack.c.l.b16 %v2062
      %v2164 = vunpack.c.l.b16 %v2063
      %v2165 = vunpack.c.h.b16 %v2063
      %v2166 = vunpack.c.l.b16 %v2064
      %v2167 = vunpack.c.l.b16 %v2065
      %v2168 = vunpack.c.h.b16 %v2065
      %v2169 = vunpack.c.l.b16 %v2066
      %v2170 = vunpack.c.l.b16 %v2067
      %v2171 = vunpack.c.h.b16 %v2067
      %v2172 = vunpack.c.l.b16 %v2068
      %v2173 = vunpack.c.l.b16 %v2069
      %v2174 = vunpack.c.h.b16 %v2069
      %v2175 = vunpack.c.l.b16 %v2070
      %v2176 = vunpack.c.l.b16 %v2071
      %v2177 = vunpack.c.h.b16 %v2071
      %v2178 = vunpack.c.l.b16 %v2072
      %v2179 = vunpack.c.l.b16 %v2073
      %v2180 = vunpack.c.h.b16 %v2073
      %v2181 = vunpack.c.l.b16 %v2074
      %v2182 = vunpack.c.l.b16 %v2075
      %v2183 = vunpack.c.h.b16 %v2075
      %v2184 = vunpack.c.l.b16 %v2076
      %v2185 = vunpack.c.l.b16 %v2077
      %v2186 = vunpack.c.h.b16 %v2077
      %v2187 = vunpack.c.l.b16 %v2078
      %v2188 = vpack.c.b16 %v2155, %v2152
      %v2189 = vpack.c.b16 %v2156, %v2153
      %v2190 = vpack.c.b16 %v2157, %v2154
      %v2191 = vpack.c.b16 %v2161, %v2158
      %v2192 = vpack.c.b16 %v2162, %v2159
      %v2193 = vpack.c.b16 %v2163, %v2160
      %v2194 = vpack.c.b16 %v2167, %v2164
      %v2195 = vpack.c.b16 %v2168, %v2165
      %v2196 = vpack.c.b16 %v2169, %v2166
      %v2197 = vpack.c.b16 %v2173, %v2170
      %v2198 = vpack.c.b16 %v2174, %v2171
      %v2199 = vpack.c.b16 %v2175, %v2172
      %v2200 = vpack.c.b16 %v2179, %v2176
      %v2201 = vpack.c.b16 %v2180, %v2177
      %v2202 = vpack.c.b16 %v2181, %v2178
      %v2203 = vpack.c.b16 %v2185, %v2182
      %v2204 = vpack.c.b16 %v2186, %v2183
      %v2205 = vpack.c.b16 %v2187, %v2184
      %v2272 = vunpack.c.l.b16 %v2080
      %v2273 = vunpack.c.h.b16 %v2080
      %v2274 = vunpack.c.l.b16 %v2081
      %v2275 = vunpack.c.h.b16 %v2081
      %v2276 = vunpack.c.l.b16 %v2082
      %v2277 = vunpack.c.h.b16 %v2082
      %v2278 = vunpack.c.l.b16 %v2083
      %v2279 = vunpack.c.h.b16 %v2083
      %v2280 = vunpack.c.l.b16 %v2084
      %v2281 = vunpack.c.h.b16 %v2084
      %v2282 = vunpack.c.l.b16 %v2085
      %v2283 = vunpack.c.h.b16 %v2085
      %v2284 = vunpack.c.l.b16 %v2086
      %v2285 = vunpack.c.h.b16 %v2086
      %v2286 = vunpack.c.l.b16 %v2087
      %v2287 = vunpack.c.h.b16 %v2087
      %v2288 = vunpack.c.l.b16 %v2088
      %v2289 = vunpack.c.h.b16 %v2088
      %v2290 = vunpack.c.l.b16 %v2089
      %v2291 = vunpack.c.h.b16 %v2089
      %v2292 = vunpack.c.l.b16 %v2090
      %v2293 = vunpack.c.h.b16 %v2090
      %v2294 = vunpack.c.l.b16 %v2091
      %v2295 = vunpack.c.h.b16 %v2091
      %v2296 = vunpack.c.l.b16 %v2092
      %v2297 = vunpack.c.h.b16 %v2092
      %v2298 = vunpack.c.l.b16 %v2093
      %v2299 = vunpack.c.h.b16 %v2093
      %v2300 = vunpack.c.l.b16 %v2094
      %v2301 = vunpack.c.h.b16 %v2094
      %v2302 = vunpack.c.l.b16 %v2095
      %v2303 = vunpack.c.h.b16 %v2095
      %v2304 = vunpack.c.l.b16 %v2096
      %v2305 = vunpack.c.h.b16 %v2096
      %v2306 = vunpack.c.l.b16 %v2097
      %v2307 = vunpack.c.h.b16 %v2097
      %v2308 = vunpack.c.l.b16 %v2098
      %v2309 = vunpack.c.h.b16 %v2098
      %v2310 = vunpack.c.l.b16 %v2099
      %v2311 = vunpack.c.h.b16 %v2099
      %v2312 = vunpack.c.l.b16 %v2100
      %v2313 = vunpack.c.h.b16 %v2100
      %v2314 = vunpack.c.l.b16 %v2101
      %v2315 = vunpack.c.h.b16 %v2101
      %v2316 = vunpack.c.l.b16 %v2102
      %v2317 = vunpack.c.h.b16 %v2102
      %v2318 = vunpack.c.l.b16 %v2103
      %v2319 = vunpack.c.h.b16 %v2103
      %v2320 = vunpack.c.l.b16 %v2104
      %v2321 = vunpack.c.h.b16 %v2104
      %v2322 = vunpack.c.l.b16 %v2105
      %v2323 = vunpack.c.h.b16 %v2105
      %v2324 = vunpack.c.l.b16 %v2106
      %v2325 = vunpack.c.h.b16 %v2106
      %v2326 = vunpack.c.l.b16 %v2107
      %v2327 = vunpack.c.h.b16 %v2107
      %v2328 = vunpack.c.l.b16 %v2108
      %v2329 = vunpack.c.h.b16 %v2108
      %v2330 = vunpack.c.l.b16 %v2109
      %v2331 = vunpack.c.h.b16 %v2109
      %v2332 = vunpack.c.l.b16 %v2110
      %v2333 = vunpack.c.h.b16 %v2110
      %v2334 = vunpack.c.l.b16 %v2111
      %v2335 = vunpack.c.h.b16 %v2111
      %v2336 = vunpack.c.l.b16 %v2112
      %v2337 = vunpack.c.h.b16 %v2112
      %v2338 = vunpack.c.l.b16 %v2113
      %v2339 = vunpack.c.h.b16 %v2113
      %v2340 = vunpack.c.l.b16 %v2114
      %v2341 = vunpack.c.h.b16 %v2114
      %v2342 = vunpack.c.l.b16 %v2115
      %v2343 = vunpack.c.h.b16 %v2115
      %v2344 = vunpack.c.l.b16 %v2116
      %v2345 = vunpack.c.h.b16 %v2116
      %v2346 = vunpack.c.l.b16 %v2117
      %v2347 = vunpack.c.h.b16 %v2117
      %v2348 = vunpack.c.l.b16 %v2118
      %v2349 = vunpack.c.h.b16 %v2118
      %v2350 = vunpack.c.l.b16 %v2119
      %v2351 = vunpack.c.h.b16 %v2119
      %v2352 = vunpack.c.l.b16 %v2120
      %v2353 = vunpack.c.h.b16 %v2120
      %v2354 = vunpack.c.l.b16 %v2121
      %v2355 = vunpack.c.h.b16 %v2121
      %v2356 = vunpack.c.l.b16 %v2122
      %v2357 = vunpack.c.h.b16 %v2122
      %v2358 = vunpack.c.l.b16 %v2123
      %v2359 = vunpack.c.h.b16 %v2123
      %v2360 = vunpack.c.l.b16 %v2124
      %v2361 = vunpack.c.h.b16 %v2124
      %v2362 = vunpack.c.l.b16 %v2125
      %v2363 = vunpack.c.h.b16 %v2125
      %v2364 = vunpack.c.l.b16 %v2126
      %v2365 = vunpack.c.h.b16 %v2126
      %v2366 = vunpack.c.l.b16 %v2127
      %v2367 = vunpack.c.h.b16 %v2127
      %v2368 = vpack.c.b16 %v2274, %v2272
      %v2369 = vpack.c.b16 %v2275, %v2273
      %v2370 = vpack.c.b16 %v2278, %v2276
      %v2371 = vpack.c.b16 %v2279, %v2277
      %v2372 = vpack.c.b16 %v2282, %v2280
      %v2373 = vpack.c.b16 %v2283, %v2281
      %v2374 = vpack.c.b16 %v2286, %v2284
      %v2375 = vpack.c.b16 %v2287, %v2285
      %v2376 = vpack.c.b16 %v2290, %v2288
      %v2377 = vpack.c.b16 %v2291, %v2289
      %v2378 = vpack.c.b16 %v2294, %v2292
      %v2379 = vpack.c.b16 %v2295, %v2293
      %v2380 = vpack.c.b16 %v2298, %v2296
      %v2381 = vpack.c.b16 %v2299, %v2297
      %v2382 = vpack.c.b16 %v2302, %v2300
      %v2383 = vpack.c.b16 %v2303, %v2301
      %v2384 = vpack.c.b16 %v2306, %v2304
      %v2385 = vpack.c.b16 %v2307, %v2305
      %v2386 = vpack.c.b16 %v2310, %v2308
      %v2387 = vpack.c.b16 %v2311, %v2309
      %v2388 = vpack.c.b16 %v2314, %v2312
      %v2389 = vpack.c.b16 %v2315, %v2313
      %v2390 = vpack.c.b16 %v2318, %v2316
      %v2391 = vpack.c.b16 %v2319, %v2317
      %v2392 = vpack.c.b16 %v2322, %v2320
      %v2393 = vpack.c.b16 %v2323, %v2321
      %v2394 = vpack.c.b16 %v2326, %v2324
      %v2395 = vpack.c.b16 %v2327, %v2325
      %v2396 = vpack.c.b16 %v2330, %v2328
      %v2397 = vpack.c.b16 %v2331, %v2329
      %v2398 = vpack.c.b16 %v2334, %v2332
      %v2399 = vpack.c.b16 %v2335, %v2333
      %v2400 = vpack.c.b16 %v2338, %v2336
      %v2401 = vpack.c.b16 %v2339, %v2337
      %v2402 = vpack.c.b16 %v2342, %v2340
      %v2403 = vpack.c.b16 %v2343, %v2341
      %v2404 = vpack.c.b16 %v2346, %v2344
      %v2405 = vpack.c.b16 %v2347, %v2345
      %v2406 = vpack.c.b16 %v2350, %v2348
      %v2407 = vpack.c.b16 %v2351, %v2349
      %v2408 = vpack.c.b16 %v2354, %v2352
      %v2409 = vpack.c.b16 %v2355, %v2353
      %v2410 = vpack.c.b16 %v2358, %v2356
      %v2411 = vpack.c.b16 %v2359, %v2357
      %v2412 = vpack.c.b16 %v2362, %v2360
      %v2413 = vpack.c.b16 %v2363, %v2361
      %v2414 = vpack.c.b16 %v2366, %v2364
      %v2415 = vpack.c.b16 %v2367, %v2365
      %2464 = vmatprep.subr.bf16.mxu0 %v2383
      %2465 = vmatpush1.bf16.msra.mxu0 %v2382
      %2466 = vmatprep.subr.bf16.mxu0 %v2381
      %2467 = vmatpush1.bf16.msra.mxu0 %v2380
      %2468 = vmatprep.subr.bf16.mxu0 %v2379
      %2469 = vmatpush1.bf16.msra.mxu0 %v2378
      %2470 = vmatprep.subr.bf16.mxu0 %v2377
      %2471 = vmatpush1.bf16.msra.mxu0 %v2376
      %2472 = vmatprep.subr.bf16.mxu0 %v2375
      %2473 = vmatpush1.bf16.msra.mxu0 %v2374
      %2474 = vmatprep.subr.bf16.mxu0 %v2373
      %2475 = vmatpush1.bf16.msra.mxu0 %v2372
      %2476 = vmatprep.subr.bf16.mxu0 %v2371
      %2477 = vmatpush1.bf16.msra.mxu0 %v2370
      %2478 = vmatprep.subr.bf16.mxu0 %v2369
      %2479 = vmatpush1.bf16.msra.mxu0 %v2368
      %2480 = vmatprep.subr.bf16.mxu0 %v2399
      %2481 = vmatpush2.bf16.msra.mxu0 %v2398
      %2482 = vmatprep.subr.bf16.mxu0 %v2397
      %2483 = vmatpush2.bf16.msra.mxu0 %v2396
      %2484 = vmatprep.subr.bf16.mxu0 %v2395
      %2485 = vmatpush2.bf16.msra.mxu0 %v2394
      %2486 = vmatprep.subr.bf16.mxu0 %v2393
      %2487 = vmatpush2.bf16.msra.mxu0 %v2392
      %2488 = vmatprep.subr.bf16.mxu0 %v2391
      %2489 = vmatpush2.bf16.msra.mxu0 %v2390
      %2490 = vmatprep.subr.bf16.mxu0 %v2389
      %2491 = vmatpush2.bf16.msra.mxu0 %v2388
      %2492 = vmatprep.subr.bf16.mxu0 %v2387
      %2493 = vmatpush2.bf16.msra.mxu0 %v2386
      %2494 = vmatprep.subr.bf16.mxu0 %v2385
      %2495 = vmatpush2.bf16.msra.mxu0 %v2384
      %2496 = vmatprep.mubr.bf16.mxu0 %v2189
      %2497 = vmatmul.mubr.bf16.gmra.mxu0 %v2188
      %v2498 = vpop.f32.mrf.mxu0
      %v2499 = vadd.f32 0.0, %v2498
      %v2500 = vpop.f32.mrf.mxu0
      %v2501 = vadd.f32 0.0, %v2500
      %v2502 = vpop.f32.mrf.mxu0
      %v2503 = vadd.f32 0.0, %v2502
      %v2504 = vpop.f32.mrf.mxu0
      %v2505 = vadd.f32 0.0, %v2504
      %2506 = vmatprep.mubr.bf16.mxu0 %v2192
      %2507 = vmatmul.mubr.bf16.gmra.mxu0 %v2191
      %v2508 = vpop.f32.mrf.mxu0
      %v2509 = vadd.f32 0.0, %v2508
      %v2510 = vpop.f32.mrf.mxu0
      %v2511 = vadd.f32 0.0, %v2510
      %v2512 = vpop.f32.mrf.mxu0
      %v2513 = vadd.f32 0.0, %v2512
      %v2514 = vpop.f32.mrf.mxu0
      %v2515 = vadd.f32 0.0, %v2514
      %2516 = vmatprep.mubr.bf16.mxu0 %v2195
      %2517 = vmatmul.mubr.bf16.gmra.mxu0 %v2194
      %v2518 = vpop.f32.mrf.mxu0
      %v2519 = vadd.f32 0.0, %v2518
      %v2520 = vpop.f32.mrf.mxu0
      %v2521 = vadd.f32 0.0, %v2520
      %v2522 = vpop.f32.mrf.mxu0
      %v2523 = vadd.f32 0.0, %v2522
      %v2524 = vpop.f32.mrf.mxu0
      %v2525 = vadd.f32 0.0, %v2524
      %2526 = vmatprep.mubr.bf16.mxu0 %v2198
      %2527 = vmatmul.mubr.bf16.gmra.mxu0 %v2197
      %v2528 = vpop.f32.mrf.mxu0
      %v2529 = vadd.f32 0.0, %v2528
      %v2530 = vpop.f32.mrf.mxu0
      %v2531 = vadd.f32 0.0, %v2530
      %v2532 = vpop.f32.mrf.mxu0
      %v2533 = vadd.f32 0.0, %v2532
      %v2534 = vpop.f32.mrf.mxu0
      %v2535 = vadd.f32 0.0, %v2534
      %2536 = vmatprep.mubr.bf16.mxu0 %v2201
      %2537 = vmatmul.mubr.bf16.gmra.mxu0 %v2200
      %v2538 = vpop.f32.mrf.mxu0
      %v2539 = vadd.f32 0.0, %v2538
      %v2540 = vpop.f32.mrf.mxu0
      %v2541 = vadd.f32 0.0, %v2540
      %v2542 = vpop.f32.mrf.mxu0
      %v2543 = vadd.f32 0.0, %v2542
      %v2544 = vpop.f32.mrf.mxu0
      %v2545 = vadd.f32 0.0, %v2544
      %2546 = vmatprep.mubr.bf16.mxu0 %v2204
      %2547 = vmatmul.mubr.bf16.gmra.mxu0 %v2203
      %v2548 = vpop.f32.mrf.mxu0
      %v2549 = vadd.f32 0.0, %v2548
      %v2550 = vpop.f32.mrf.mxu0
      %v2551 = vadd.f32 0.0, %v2550
      %v2552 = vpop.f32.mrf.mxu0
      %v2553 = vadd.f32 0.0, %v2552
      %v2554 = vpop.f32.mrf.mxu0
      %v2555 = vadd.f32 0.0, %v2554
      %2556 = vdwg.mxu0
      %2557 = vmatprep.subr.bf16.mxu0 %v2415
      %2558 = vmatpush1.bf16.msra.mxu0 %v2414
      %2559 = vmatprep.subr.bf16.mxu0 %v2413
      %2560 = vmatpush1.bf16.msra.mxu0 %v2412
      %2561 = vmatprep.subr.bf16.mxu0 %v2411
      %2562 = vmatpush1.bf16.msra.mxu0 %v2410
      %2563 = vmatprep.subr.bf16.mxu0 %v2409
      %2564 = vmatpush1.bf16.msra.mxu0 %v2408
      %2565 = vmatprep.subr.bf16.mxu0 %v2407
      %2566 = vmatpush1.bf16.msra.mxu0 %v2406
      %2567 = vmatprep.subr.bf16.mxu0 %v2405
      %2568 = vmatpush1.bf16.msra.mxu0 %v2404
      %2569 = vmatprep.subr.bf16.mxu0 %v2403
      %2570 = vmatpush1.bf16.msra.mxu0 %v2402
      %2571 = vmatprep.subr.bf16.mxu0 %v2401
      %2572 = vmatpush1.bf16.msra.mxu0 %v2400
      %2573 = vmatprep.subr.bf16.mxu0 0
      %2574 = vmatpush2.bf16.msra.mxu0 0
      %2575 = vmatprep.subr.bf16.mxu0 0
      %2576 = vmatpush2.bf16.msra.mxu0 0
      %2577 = vmatprep.subr.bf16.mxu0 0
      %2578 = vmatpush2.bf16.msra.mxu0 0
      %2579 = vmatprep.subr.bf16.mxu0 0
      %2580 = vmatpush2.bf16.msra.mxu0 0
      %2581 = vmatprep.subr.bf16.mxu0 0
      %2582 = vmatpush2.bf16.msra.mxu0 0
      %2583 = vmatprep.subr.bf16.mxu0 0
      %2584 = vmatpush2.bf16.msra.mxu0 0
      %2585 = vmatprep.subr.bf16.mxu0 0
      %2586 = vmatpush2.bf16.msra.mxu0 0
      %2587 = vmatprep.subr.bf16.mxu0 0
      %2588 = vmatpush2.bf16.msra.mxu0 0
      %2589 = vmatprep.mubr.bf16.mxu0 0
      %2590 = vmatmul.mubr.bf16.gmra.mxu0 %v2190
      %v2591 = vpop.f32.mrf.mxu0
      %v2592 = vadd.f32 %v2499, %v2591
      %v2593 = vpop.f32.mrf.mxu0
      %v2594 = vadd.f32 %v2501, %v2593
      %v2595 = vpop.f32.mrf.mxu0
      %v2596 = vadd.f32 %v2503, %v2595
      %v2597 = vpop.f32.mrf.mxu0
      %v2598 = vadd.f32 %v2505, %v2597
      %2599 = vmatprep.mubr.bf16.mxu0 0
      %2600 = vmatmul.mubr.bf16.gmra.mxu0 %v2193
      %v2601 = vpop.f32.mrf.mxu0
      %v2602 = vadd.f32 %v2509, %v2601
      %v2603 = vpop.f32.mrf.mxu0
      %v2604 = vadd.f32 %v2511, %v2603
      %v2605 = vpop.f32.mrf.mxu0
      %v2606 = vadd.f32 %v2513, %v2605
      %v2607 = vpop.f32.mrf.mxu0
      %v2608 = vadd.f32 %v2515, %v2607
      %2609 = vmatprep.mubr.bf16.mxu0 0
      %2610 = vmatmul.mubr.bf16.gmra.mxu0 %v2196
      %v2611 = vpop.f32.mrf.mxu0
      %v2612 = vadd.f32 %v2519, %v2611
      %v2613 = vpop.f32.mrf.mxu0
      %v2614 = vadd.f32 %v2521, %v2613
      %v2615 = vpop.f32.mrf.mxu0
      %v2616 = vadd.f32 %v2523, %v2615
      %v2617 = vpop.f32.mrf.mxu0
      %v2618 = vadd.f32 %v2525, %v2617
      %2619 = vmatprep.mubr.bf16.mxu0 0
      %2620 = vmatmul.mubr.bf16.gmra.mxu0 %v2199
      %v2621 = vpop.f32.mrf.mxu0
      %v2622 = vadd.f32 %v2529, %v2621
      %v2623 = vpop.f32.mrf.mxu0
      %v2624 = vadd.f32 %v2531, %v2623
      %v2625 = vpop.f32.mrf.mxu0
      %v2626 = vadd.f32 %v2533, %v2625
      %v2627 = vpop.f32.mrf.mxu0
      %v2628 = vadd.f32 %v2535, %v2627
      %2629 = vmatprep.mubr.bf16.mxu0 0
      %2630 = vmatmul.mubr.bf16.gmra.mxu0 %v2202
      %v2631 = vpop.f32.mrf.mxu0
      %v2632 = vadd.f32 %v2539, %v2631
      %v2633 = vpop.f32.mrf.mxu0
      %v2634 = vadd.f32 %v2541, %v2633
      %v2635 = vpop.f32.mrf.mxu0
      %v2636 = vadd.f32 %v2543, %v2635
      %v2637 = vpop.f32.mrf.mxu0
      %v2638 = vadd.f32 %v2545, %v2637
      %2639 = vmatprep.mubr.bf16.mxu0 0
      %2640 = vmatmul.mubr.bf16.gmra.mxu0 %v2205
      %v2641 = vpop.f32.mrf.mxu0
      %v2642 = vadd.f32 %v2549, %v2641
      %v2643 = vpop.f32.mrf.mxu0
      %v2644 = vadd.f32 %v2551, %v2643
      %v2645 = vpop.f32.mrf.mxu0
      %v2646 = vadd.f32 %v2553, %v2645
      %v2647 = vpop.f32.mrf.mxu0
      %v2648 = vadd.f32 %v2555, %v2647
      %2649 = vdwg.mxu0
      %v2650 = vadd.f32 %v2031, %v2592
      %v2651 = vadd.f32 %v2032, %v2594
      %v2652 = vadd.f32 %v2033, %v2596
      %v2653 = vadd.f32 %v2034, %v2598
      %v2654 = vadd.f32 %v2035, %v2602
      %v2655 = vadd.f32 %v2036, %v2604
      %v2656 = vadd.f32 %v2037, %v2606
      %v2657 = vadd.f32 %v2038, %v2608
      %v2658 = vadd.f32 %v2039, %v2612
      %v2659 = vadd.f32 %v2040, %v2614
      %v2660 = vadd.f32 %v2041, %v2616
      %v2661 = vadd.f32 %v2042, %v2618
      %v2662 = vadd.f32 %v2043, %v2622
      %v2663 = vadd.f32 %v2044, %v2624
      %v2664 = vadd.f32 %v2045, %v2626
      %v2665 = vadd.f32 %v2046, %v2628
      %v2666 = vadd.f32 %v2047, %v2632
      %v2667 = vadd.f32 %v2048, %v2634
      %v2668 = vadd.f32 %v2049, %v2636
      %v2669 = vadd.f32 %v2050, %v2638
      %v2670 = vadd.f32 %v2051, %v2642
      %v2671 = vadd.f32 %v2052, %v2644
      %v2672 = vadd.f32 %v2053, %v2646
      %v2673 = vadd.f32 %v2054, %v2648
      %v2674 = vld [vmem:[%s300 + $0x24] sm:$0xee]
      %v2675 = vld [vmem:[%s300 + $0x2c] sm:$0xe]
      %v2676 = vld [vmem:[%s300 + $0x30] sm:$0xff]
      %v2677 = vld [vmem:[%s300 + $0x38] sm:$0xf]
      %v2678 = vld [vmem:[%s300 + $0x3c] sm:$0xff]
      %v2679 = vld [vmem:[%s300 + $0x44] sm:$0xf]
      %v2680 = vld [vmem:[%s300 + $0x48] sm:$0xff]
      %v2681 = vld [vmem:[%s300 + $0x50] sm:$0xf]
      %v2682 = vld [vmem:[%s300 + $0x54] sm:$0xff]
      %v2683 = vld [vmem:[%s300 + $0x5c] sm:$0xf]
      %v2684 = vld [vmem:[%s300 + $0x60] sm:$0xff]
      %v2685 = vld [vmem:[%s300 + $0x68] sm:$0xf]
      %v2686 = vld [vmem:[%s300 + $0x6c] sm:$0xff]
      %v2687 = vld [vmem:[%s300 + $0x74] sm:$0xf]
      %v2688 = vld [vmem:[%s300 + $0x78] sm:$0xff]
      %v2689 = vld [vmem:[%s300 + $0x80] sm:$0xf]
      %v2690 = vld [vmem:[%s300 + $0x84] sm:$0xff]
      %v2691 = vld [vmem:[%s300 + $0x8c] sm:$0xf]
      %v2692 = vld [vmem:[%s300 + $0x90] sm:$0xff]
      %v2693 = vld [vmem:[%s300 + $0x98] sm:$0xf]
      %v2694 = vld [vmem:[%s300 + $0x9c] sm:$0xff]
      %v2695 = vld [vmem:[%s300 + $0xa4] sm:$0xf]
      %v2696 = vld [vmem:[%s300 + $0xa8] sm:$0xff]
      %v2697 = vld [vmem:[%s300 + $0xb0] sm:$0xf]
      %v2698 = vld [vmem:[%s300 + $0xb4] sm:$0x11]
      %v2699 = vld [vmem:[%s300 + $0xbc] sm:$0x1]
      %s2700 = scalar_lea.vmem %s2, 1536
      %v2701 = vld [vmem:[%s2700] sm:$0xff]
      %v2702 = vld [vmem:[%s2700 + $0x8] sm:$0xff]
      %v2703 = vld [vmem:[%s2700 + $0x10] sm:$0xff]
      %v2704 = vld [vmem:[%s2700 + $0x18] sm:$0xff]
      %v2705 = vld [vmem:[%s2700 + $0x20] sm:$0xff]
      %v2706 = vld [vmem:[%s2700 + $0x28] sm:$0xff]
      %v2707 = vld [vmem:[%s2700 + $0x30] sm:$0xff]
      %v2708 = vld [vmem:[%s2700 + $0x38] sm:$0xff]
      %v2709 = vld [vmem:[%s2700 + $0x40] sm:$0xff]
      %v2710 = vld [vmem:[%s2700 + $0x48] sm:$0xff]
      %v2711 = vld [vmem:[%s2700 + $0x50] sm:$0xff]
      %v2712 = vld [vmem:[%s2700 + $0x58] sm:$0xff]
      %v2713 = vld [vmem:[%s2700 + $0x60] sm:$0xff]
      %v2714 = vld [vmem:[%s2700 + $0x68] sm:$0xff]
      %v2715 = vld [vmem:[%s2700 + $0x70] sm:$0xff]
      %v2716 = vld [vmem:[%s2700 + $0x78] sm:$0xff]
      %v2717 = vld [vmem:[%s2700 + $0x80] sm:$0xff]
      %v2718 = vld [vmem:[%s2700 + $0x88] sm:$0xff]
      %v2719 = vld [vmem:[%s2700 + $0x90] sm:$0xff]
      %v2720 = vld [vmem:[%s2700 + $0x98] sm:$0xff]
      %v2721 = vld [vmem:[%s2700 + $0xa0] sm:$0xff]
      %v2722 = vld [vmem:[%s2700 + $0xa8] sm:$0xff]
      %v2723 = vld [vmem:[%s2700 + $0xb0] sm:$0xff]
      %v2724 = vld [vmem:[%s2700 + $0xb8] sm:$0xff]
      %v2725 = vld [vmem:[%s2700 + $0xc0] sm:$0xff]
      %v2726 = vld [vmem:[%s2700 + $0xc8] sm:$0xff]
      %v2727 = vld [vmem:[%s2700 + $0xd0] sm:$0xff]
      %v2728 = vld [vmem:[%s2700 + $0xd8] sm:$0xff]
      %v2729 = vld [vmem:[%s2700 + $0xe0] sm:$0xff]
      %v2730 = vld [vmem:[%s2700 + $0xe8] sm:$0xff]
      %v2731 = vld [vmem:[%s2700 + $0xf0] sm:$0xff]
      %v2732 = vld [vmem:[%s2700 + $0xf8] sm:$0xff]
      %v2733 = vld [vmem:[%s2700 + $0x100] sm:$0xff]
      %v2734 = vld [vmem:[%s2700 + $0x108] sm:$0xff]
      %v2735 = vld [vmem:[%s2700 + $0x110] sm:$0xff]
      %v2736 = vld [vmem:[%s2700 + $0x118] sm:$0xff]
      %v2737 = vld [vmem:[%s2700 + $0x120] sm:$0xff]
      %v2738 = vld [vmem:[%s2700 + $0x128] sm:$0xff]
      %v2739 = vld [vmem:[%s2700 + $0x130] sm:$0xff]
      %v2740 = vld [vmem:[%s2700 + $0x138] sm:$0xff]
      %v2741 = vld [vmem:[%s2700 + $0x140] sm:$0xff]
      %v2742 = vld [vmem:[%s2700 + $0x148] sm:$0xff]
      %v2743 = vld [vmem:[%s2700 + $0x150] sm:$0xff]
      %v2744 = vld [vmem:[%s2700 + $0x158] sm:$0xff]
      %v2745 = vld [vmem:[%s2700 + $0x160] sm:$0xff]
      %v2746 = vld [vmem:[%s2700 + $0x168] sm:$0xff]
      %v2747 = vld [vmem:[%s2700 + $0x170] sm:$0xff]
      %v2748 = vld [vmem:[%s2700 + $0x178] sm:$0xff]
      %v2775 = vunpack.c.l.b16 %v2674
      %v2776 = vunpack.c.h.b16 %v2674
      %v2777 = vunpack.c.l.b16 %v2675
      %v2778 = vunpack.c.l.b16 %v2676
      %v2779 = vunpack.c.h.b16 %v2676
      %v2780 = vunpack.c.l.b16 %v2677
      %v2781 = vunpack.c.l.b16 %v2678
      %v2782 = vunpack.c.h.b16 %v2678
      %v2783 = vunpack.c.l.b16 %v2679
      %v2784 = vunpack.c.l.b16 %v2680
      %v2785 = vunpack.c.h.b16 %v2680
      %v2786 = vunpack.c.l.b16 %v2681
      %v2787 = vunpack.c.l.b16 %v2682
      %v2788 = vunpack.c.h.b16 %v2682
      %v2789 = vunpack.c.l.b16 %v2683
      %v2790 = vunpack.c.l.b16 %v2684
      %v2791 = vunpack.c.h.b16 %v2684
      %v2792 = vunpack.c.l.b16 %v2685
      %v2793 = vunpack.c.l.b16 %v2686
      %v2794 = vunpack.c.h.b16 %v2686
      %v2795 = vunpack.c.l.b16 %v2687
      %v2796 = vunpack.c.l.b16 %v2688
      %v2797 = vunpack.c.h.b16 %v2688
      %v2798 = vunpack.c.l.b16 %v2689
      %v2799 = vunpack.c.l.b16 %v2690
      %v2800 = vunpack.c.h.b16 %v2690
      %v2801 = vunpack.c.l.b16 %v2691
      %v2802 = vunpack.c.l.b16 %v2692
      %v2803 = vunpack.c.h.b16 %v2692
      %v2804 = vunpack.c.l.b16 %v2693
      %v2805 = vunpack.c.l.b16 %v2694
      %v2806 = vunpack.c.h.b16 %v2694
      %v2807 = vunpack.c.l.b16 %v2695
      %v2808 = vunpack.c.l.b16 %v2696
      %v2809 = vunpack.c.h.b16 %v2696
      %v2810 = vunpack.c.l.b16 %v2697
      %v2811 = vunpack.c.l.b16 %v2698
      %v2812 = vunpack.c.h.b16 %v2698
      %v2813 = vunpack.c.l.b16 %v2699
      %v2814 = vpack.c.b16 %v2778, %v2775
      %v2815 = vpack.c.b16 %v2779, %v2776
      %v2816 = vpack.c.b16 %v2780, %v2777
      %v2817 = vpack.c.b16 %v2784, %v2781
      %v2818 = vpack.c.b16 %v2785, %v2782
      %v2819 = vpack.c.b16 %v2786, %v2783
      %v2820 = vpack.c.b16 %v2790, %v2787
      %v2821 = vpack.c.b16 %v2791, %v2788
      %v2822 = vpack.c.b16 %v2792, %v2789
      %v2823 = vpack.c.b16 %v2796, %v2793
      %v2824 = vpack.c.b16 %v2797, %v2794
      %v2825 = vpack.c.b16 %v2798, %v2795
      %v2826 = vpack.c.b16 %v2802, %v2799
      %v2827 = vpack.c.b16 %v2803, %v2800
      %v2828 = vpack.c.b16 %v2804, %v2801
      %v2829 = vpack.c.b16 %v2808, %v2805
      %v2830 = vpack.c.b16 %v2809, %v2806
      %v2831 = vpack.c.b16 %v2810, %v2807
      %v2832 = vpack.c.b16 %v2811, %v2811
      %v2833 = vpack.c.b16 %v2812, %v2812
      %v2834 = vpack.c.b16 %v2813, %v2813
      %v2835 = vrot.slane %v2814, 1
      %v2836 = vrot.slane %v2817, 1
      %v2837 = vsel %vm542, %v2835, %v2836
      %v2838 = vrot.slane %v2815, 1
      %v2839 = vrot.slane %v2818, 1
      %v2840 = vsel %vm542, %v2838, %v2839
      %v2841 = vrot.slane %v2816, 1
      %v2842 = vrot.slane %v2819, 1
      %v2843 = vsel %vm542, %v2841, %v2842
      %v2844 = vrot.slane %v2820, 1
      %v2845 = vsel %vm542, %v2836, %v2844
      %v2846 = vrot.slane %v2821, 1
      %v2847 = vsel %vm542, %v2839, %v2846
      %v2848 = vrot.slane %v2822, 1
      %v2849 = vsel %vm542, %v2842, %v2848
      %v2850 = vrot.slane %v2823, 1
      %v2851 = vsel %vm542, %v2844, %v2850
      %v2852 = vrot.slane %v2824, 1
      %v2853 = vsel %vm542, %v2846, %v2852
      %v2854 = vrot.slane %v2825, 1
      %v2855 = vsel %vm542, %v2848, %v2854
      %v2856 = vrot.slane %v2826, 1
      %v2857 = vsel %vm542, %v2850, %v2856
      %v2858 = vrot.slane %v2827, 1
      %v2859 = vsel %vm542, %v2852, %v2858
      %v2860 = vrot.slane %v2828, 1
      %v2861 = vsel %vm542, %v2854, %v2860
      %v2862 = vrot.slane %v2829, 1
      %v2863 = vsel %vm542, %v2856, %v2862
      %v2864 = vrot.slane %v2830, 1
      %v2865 = vsel %vm542, %v2858, %v2864
      %v2866 = vrot.slane %v2831, 1
      %v2867 = vsel %vm542, %v2860, %v2866
      %v2868 = vrot.slane %v2832, 1
      %v2869 = vsel %vm542, %v2862, %v2868
      %v2870 = vrot.slane %v2833, 1
      %v2871 = vsel %vm542, %v2864, %v2870
      %v2872 = vrot.slane %v2834, 1
      %v2873 = vsel %vm542, %v2866, %v2872
      %v2940 = vunpack.c.l.b16 %v2701
      %v2941 = vunpack.c.h.b16 %v2701
      %v2942 = vunpack.c.l.b16 %v2702
      %v2943 = vunpack.c.h.b16 %v2702
      %v2944 = vunpack.c.l.b16 %v2703
      %v2945 = vunpack.c.h.b16 %v2703
      %v2946 = vunpack.c.l.b16 %v2704
      %v2947 = vunpack.c.h.b16 %v2704
      %v2948 = vunpack.c.l.b16 %v2705
      %v2949 = vunpack.c.h.b16 %v2705
      %v2950 = vunpack.c.l.b16 %v2706
      %v2951 = vunpack.c.h.b16 %v2706
      %v2952 = vunpack.c.l.b16 %v2707
      %v2953 = vunpack.c.h.b16 %v2707
      %v2954 = vunpack.c.l.b16 %v2708
      %v2955 = vunpack.c.h.b16 %v2708
      %v2956 = vunpack.c.l.b16 %v2709
      %v2957 = vunpack.c.h.b16 %v2709
      %v2958 = vunpack.c.l.b16 %v2710
      %v2959 = vunpack.c.h.b16 %v2710
      %v2960 = vunpack.c.l.b16 %v2711
      %v2961 = vunpack.c.h.b16 %v2711
      %v2962 = vunpack.c.l.b16 %v2712
      %v2963 = vunpack.c.h.b16 %v2712
      %v2964 = vunpack.c.l.b16 %v2713
      %v2965 = vunpack.c.h.b16 %v2713
      %v2966 = vunpack.c.l.b16 %v2714
      %v2967 = vunpack.c.h.b16 %v2714
      %v2968 = vunpack.c.l.b16 %v2715
      %v2969 = vunpack.c.h.b16 %v2715
      %v2970 = vunpack.c.l.b16 %v2716
      %v2971 = vunpack.c.h.b16 %v2716
      %v2972 = vunpack.c.l.b16 %v2717
      %v2973 = vunpack.c.h.b16 %v2717
      %v2974 = vunpack.c.l.b16 %v2718
      %v2975 = vunpack.c.h.b16 %v2718
      %v2976 = vunpack.c.l.b16 %v2719
      %v2977 = vunpack.c.h.b16 %v2719
      %v2978 = vunpack.c.l.b16 %v2720
      %v2979 = vunpack.c.h.b16 %v2720
      %v2980 = vunpack.c.l.b16 %v2721
      %v2981 = vunpack.c.h.b16 %v2721
      %v2982 = vunpack.c.l.b16 %v2722
      %v2983 = vunpack.c.h.b16 %v2722
      %v2984 = vunpack.c.l.b16 %v2723
      %v2985 = vunpack.c.h.b16 %v2723
      %v2986 = vunpack.c.l.b16 %v2724
      %v2987 = vunpack.c.h.b16 %v2724
      %v2988 = vunpack.c.l.b16 %v2725
      %v2989 = vunpack.c.h.b16 %v2725
      %v2990 = vunpack.c.l.b16 %v2726
      %v2991 = vunpack.c.h.b16 %v2726
      %v2992 = vunpack.c.l.b16 %v2727
      %v2993 = vunpack.c.h.b16 %v2727
      %v2994 = vunpack.c.l.b16 %v2728
      %v2995 = vunpack.c.h.b16 %v2728
      %v2996 = vunpack.c.l.b16 %v2729
      %v2997 = vunpack.c.h.b16 %v2729
      %v2998 = vunpack.c.l.b16 %v2730
      %v2999 = vunpack.c.h.b16 %v2730
      %v3000 = vunpack.c.l.b16 %v2731
      %v3001 = vunpack.c.h.b16 %v2731
      %v3002 = vunpack.c.l.b16 %v2732
      %v3003 = vunpack.c.h.b16 %v2732
      %v3004 = vunpack.c.l.b16 %v2733
      %v3005 = vunpack.c.h.b16 %v2733
      %v3006 = vunpack.c.l.b16 %v2734
      %v3007 = vunpack.c.h.b16 %v2734
      %v3008 = vunpack.c.l.b16 %v2735
      %v3009 = vunpack.c.h.b16 %v2735
      %v3010 = vunpack.c.l.b16 %v2736
      %v3011 = vunpack.c.h.b16 %v2736
      %v3012 = vunpack.c.l.b16 %v2737
      %v3013 = vunpack.c.h.b16 %v2737
      %v3014 = vunpack.c.l.b16 %v2738
      %v3015 = vunpack.c.h.b16 %v2738
      %v3016 = vunpack.c.l.b16 %v2739
      %v3017 = vunpack.c.h.b16 %v2739
      %v3018 = vunpack.c.l.b16 %v2740
      %v3019 = vunpack.c.h.b16 %v2740
      %v3020 = vunpack.c.l.b16 %v2741
      %v3021 = vunpack.c.h.b16 %v2741
      %v3022 = vunpack.c.l.b16 %v2742
      %v3023 = vunpack.c.h.b16 %v2742
      %v3024 = vunpack.c.l.b16 %v2743
      %v3025 = vunpack.c.h.b16 %v2743
      %v3026 = vunpack.c.l.b16 %v2744
      %v3027 = vunpack.c.h.b16 %v2744
      %v3028 = vunpack.c.l.b16 %v2745
      %v3029 = vunpack.c.h.b16 %v2745
      %v3030 = vunpack.c.l.b16 %v2746
      %v3031 = vunpack.c.h.b16 %v2746
      %v3032 = vunpack.c.l.b16 %v2747
      %v3033 = vunpack.c.h.b16 %v2747
      %v3034 = vunpack.c.l.b16 %v2748
      %v3035 = vunpack.c.h.b16 %v2748
      %v3036 = vpack.c.b16 %v2942, %v2940
      %v3037 = vpack.c.b16 %v2943, %v2941
      %v3038 = vpack.c.b16 %v2946, %v2944
      %v3039 = vpack.c.b16 %v2947, %v2945
      %v3040 = vpack.c.b16 %v2950, %v2948
      %v3041 = vpack.c.b16 %v2951, %v2949
      %v3042 = vpack.c.b16 %v2954, %v2952
      %v3043 = vpack.c.b16 %v2955, %v2953
      %v3044 = vpack.c.b16 %v2958, %v2956
      %v3045 = vpack.c.b16 %v2959, %v2957
      %v3046 = vpack.c.b16 %v2962, %v2960
      %v3047 = vpack.c.b16 %v2963, %v2961
      %v3048 = vpack.c.b16 %v2966, %v2964
      %v3049 = vpack.c.b16 %v2967, %v2965
      %v3050 = vpack.c.b16 %v2970, %v2968
      %v3051 = vpack.c.b16 %v2971, %v2969
      %v3052 = vpack.c.b16 %v2974, %v2972
      %v3053 = vpack.c.b16 %v2975, %v2973
      %v3054 = vpack.c.b16 %v2978, %v2976
      %v3055 = vpack.c.b16 %v2979, %v2977
      %v3056 = vpack.c.b16 %v2982, %v2980
      %v3057 = vpack.c.b16 %v2983, %v2981
      %v3058 = vpack.c.b16 %v2986, %v2984
      %v3059 = vpack.c.b16 %v2987, %v2985
      %v3060 = vpack.c.b16 %v2990, %v2988
      %v3061 = vpack.c.b16 %v2991, %v2989
      %v3062 = vpack.c.b16 %v2994, %v2992
      %v3063 = vpack.c.b16 %v2995, %v2993
      %v3064 = vpack.c.b16 %v2998, %v2996
      %v3065 = vpack.c.b16 %v2999, %v2997
      %v3066 = vpack.c.b16 %v3002, %v3000
      %v3067 = vpack.c.b16 %v3003, %v3001
      %v3068 = vpack.c.b16 %v3006, %v3004
      %v3069 = vpack.c.b16 %v3007, %v3005
      %v3070 = vpack.c.b16 %v3010, %v3008
      %v3071 = vpack.c.b16 %v3011, %v3009
      %v3072 = vpack.c.b16 %v3014, %v3012
      %v3073 = vpack.c.b16 %v3015, %v3013
      %v3074 = vpack.c.b16 %v3018, %v3016
      %v3075 = vpack.c.b16 %v3019, %v3017
      %v3076 = vpack.c.b16 %v3022, %v3020
      %v3077 = vpack.c.b16 %v3023, %v3021
      %v3078 = vpack.c.b16 %v3026, %v3024
      %v3079 = vpack.c.b16 %v3027, %v3025
      %v3080 = vpack.c.b16 %v3030, %v3028
      %v3081 = vpack.c.b16 %v3031, %v3029
      %v3082 = vpack.c.b16 %v3034, %v3032
      %v3083 = vpack.c.b16 %v3035, %v3033
      %3132 = vmatprep.subr.bf16.mxu0 %v3051
      %3133 = vmatpush1.bf16.msra.mxu0 %v3050
      %3134 = vmatprep.subr.bf16.mxu0 %v3049
      %3135 = vmatpush1.bf16.msra.mxu0 %v3048
      %3136 = vmatprep.subr.bf16.mxu0 %v3047
      %3137 = vmatpush1.bf16.msra.mxu0 %v3046
      %3138 = vmatprep.subr.bf16.mxu0 %v3045
      %3139 = vmatpush1.bf16.msra.mxu0 %v3044
      %3140 = vmatprep.subr.bf16.mxu0 %v3043
      %3141 = vmatpush1.bf16.msra.mxu0 %v3042
      %3142 = vmatprep.subr.bf16.mxu0 %v3041
      %3143 = vmatpush1.bf16.msra.mxu0 %v3040
      %3144 = vmatprep.subr.bf16.mxu0 %v3039
      %3145 = vmatpush1.bf16.msra.mxu0 %v3038
      %3146 = vmatprep.subr.bf16.mxu0 %v3037
      %3147 = vmatpush1.bf16.msra.mxu0 %v3036
      %3148 = vmatprep.subr.bf16.mxu0 %v3067
      %3149 = vmatpush2.bf16.msra.mxu0 %v3066
      %3150 = vmatprep.subr.bf16.mxu0 %v3065
      %3151 = vmatpush2.bf16.msra.mxu0 %v3064
      %3152 = vmatprep.subr.bf16.mxu0 %v3063
      %3153 = vmatpush2.bf16.msra.mxu0 %v3062
      %3154 = vmatprep.subr.bf16.mxu0 %v3061
      %3155 = vmatpush2.bf16.msra.mxu0 %v3060
      %3156 = vmatprep.subr.bf16.mxu0 %v3059
      %3157 = vmatpush2.bf16.msra.mxu0 %v3058
      %3158 = vmatprep.subr.bf16.mxu0 %v3057
      %3159 = vmatpush2.bf16.msra.mxu0 %v3056
      %3160 = vmatprep.subr.bf16.mxu0 %v3055
      %3161 = vmatpush2.bf16.msra.mxu0 %v3054
      %3162 = vmatprep.subr.bf16.mxu0 %v3053
      %3163 = vmatpush2.bf16.msra.mxu0 %v3052
      %3164 = vmatprep.mubr.bf16.mxu0 %v2840
      %3165 = vmatmul.mubr.bf16.gmra.mxu0 %v2837
      %v3166 = vpop.f32.mrf.mxu0
      %v3167 = vadd.f32 0.0, %v3166
      %v3168 = vpop.f32.mrf.mxu0
      %v3169 = vadd.f32 0.0, %v3168
      %v3170 = vpop.f32.mrf.mxu0
      %v3171 = vadd.f32 0.0, %v3170
      %v3172 = vpop.f32.mrf.mxu0
      %v3173 = vadd.f32 0.0, %v3172
      %3174 = vmatprep.mubr.bf16.mxu0 %v2847
      %3175 = vmatmul.mubr.bf16.gmra.mxu0 %v2845
      %v3176 = vpop.f32.mrf.mxu0
      %v3177 = vadd.f32 0.0, %v3176
      %v3178 = vpop.f32.mrf.mxu0
      %v3179 = vadd.f32 0.0, %v3178
      %v3180 = vpop.f32.mrf.mxu0
      %v3181 = vadd.f32 0.0, %v3180
      %v3182 = vpop.f32.mrf.mxu0
      %v3183 = vadd.f32 0.0, %v3182
      %3184 = vmatprep.mubr.bf16.mxu0 %v2853
      %3185 = vmatmul.mubr.bf16.gmra.mxu0 %v2851
      %v3186 = vpop.f32.mrf.mxu0
      %v3187 = vadd.f32 0.0, %v3186
      %v3188 = vpop.f32.mrf.mxu0
      %v3189 = vadd.f32 0.0, %v3188
      %v3190 = vpop.f32.mrf.mxu0
      %v3191 = vadd.f32 0.0, %v3190
      %v3192 = vpop.f32.mrf.mxu0
      %v3193 = vadd.f32 0.0, %v3192
      %3194 = vmatprep.mubr.bf16.mxu0 %v2859
      %3195 = vmatmul.mubr.bf16.gmra.mxu0 %v2857
      %v3196 = vpop.f32.mrf.mxu0
      %v3197 = vadd.f32 0.0, %v3196
      %v3198 = vpop.f32.mrf.mxu0
      %v3199 = vadd.f32 0.0, %v3198
      %v3200 = vpop.f32.mrf.mxu0
      %v3201 = vadd.f32 0.0, %v3200
      %v3202 = vpop.f32.mrf.mxu0
      %v3203 = vadd.f32 0.0, %v3202
      %3204 = vmatprep.mubr.bf16.mxu0 %v2865
      %3205 = vmatmul.mubr.bf16.gmra.mxu0 %v2863
      %v3206 = vpop.f32.mrf.mxu0
      %v3207 = vadd.f32 0.0, %v3206
      %v3208 = vpop.f32.mrf.mxu0
      %v3209 = vadd.f32 0.0, %v3208
      %v3210 = vpop.f32.mrf.mxu0
      %v3211 = vadd.f32 0.0, %v3210
      %v3212 = vpop.f32.mrf.mxu0
      %v3213 = vadd.f32 0.0, %v3212
      %3214 = vmatprep.mubr.bf16.mxu0 %v2871
      %3215 = vmatmul.mubr.bf16.gmra.mxu0 %v2869
      %v3216 = vpop.f32.mrf.mxu0
      %v3217 = vadd.f32 0.0, %v3216
      %v3218 = vpop.f32.mrf.mxu0
      %v3219 = vadd.f32 0.0, %v3218
      %v3220 = vpop.f32.mrf.mxu0
      %v3221 = vadd.f32 0.0, %v3220
      %v3222 = vpop.f32.mrf.mxu0
      %v3223 = vadd.f32 0.0, %v3222
      %3224 = vdwg.mxu0
      %3225 = vmatprep.subr.bf16.mxu0 %v3083
      %3226 = vmatpush1.bf16.msra.mxu0 %v3082
      %3227 = vmatprep.subr.bf16.mxu0 %v3081
      %3228 = vmatpush1.bf16.msra.mxu0 %v3080
      %3229 = vmatprep.subr.bf16.mxu0 %v3079
      %3230 = vmatpush1.bf16.msra.mxu0 %v3078
      %3231 = vmatprep.subr.bf16.mxu0 %v3077
      %3232 = vmatpush1.bf16.msra.mxu0 %v3076
      %3233 = vmatprep.subr.bf16.mxu0 %v3075
      %3234 = vmatpush1.bf16.msra.mxu0 %v3074
      %3235 = vmatprep.subr.bf16.mxu0 %v3073
      %3236 = vmatpush1.bf16.msra.mxu0 %v3072
      %3237 = vmatprep.subr.bf16.mxu0 %v3071
      %3238 = vmatpush1.bf16.msra.mxu0 %v3070
      %3239 = vmatprep.subr.bf16.mxu0 %v3069
      %3240 = vmatpush1.bf16.msra.mxu0 %v3068
      %3241 = vmatprep.subr.bf16.mxu0 0
      %3242 = vmatpush2.bf16.msra.mxu0 0
      %3243 = vmatprep.subr.bf16.mxu0 0
      %3244 = vmatpush2.bf16.msra.mxu0 0
      %3245 = vmatprep.subr.bf16.mxu0 0
      %3246 = vmatpush2.bf16.msra.mxu0 0
      %3247 = vmatprep.subr.bf16.mxu0 0
      %3248 = vmatpush2.bf16.msra.mxu0 0
      %3249 = vmatprep.subr.bf16.mxu0 0
      %3250 = vmatpush2.bf16.msra.mxu0 0
      %3251 = vmatprep.subr.bf16.mxu0 0
      %3252 = vmatpush2.bf16.msra.mxu0 0
      %3253 = vmatprep.subr.bf16.mxu0 0
      %3254 = vmatpush2.bf16.msra.mxu0 0
      %3255 = vmatprep.subr.bf16.mxu0 0
      %3256 = vmatpush2.bf16.msra.mxu0 0
      %3257 = vmatprep.mubr.bf16.mxu0 0
      %3258 = vmatmul.mubr.bf16.gmra.mxu0 %v2843
      %v3259 = vpop.f32.mrf.mxu0
      %v3260 = vadd.f32 %v3167, %v3259
      %v3261 = vpop.f32.mrf.mxu0
      %v3262 = vadd.f32 %v3169, %v3261
      %v3263 = vpop.f32.mrf.mxu0
      %v3264 = vadd.f32 %v3171, %v3263
      %v3265 = vpop.f32.mrf.mxu0
      %v3266 = vadd.f32 %v3173, %v3265
      %3267 = vmatprep.mubr.bf16.mxu0 0
      %3268 = vmatmul.mubr.bf16.gmra.mxu0 %v2849
      %v3269 = vpop.f32.mrf.mxu0
      %v3270 = vadd.f32 %v3177, %v3269
      %v3271 = vpop.f32.mrf.mxu0
      %v3272 = vadd.f32 %v3179, %v3271
      %v3273 = vpop.f32.mrf.mxu0
      %v3274 = vadd.f32 %v3181, %v3273
      %v3275 = vpop.f32.mrf.mxu0
      %v3276 = vadd.f32 %v3183, %v3275
      %3277 = vmatprep.mubr.bf16.mxu0 0
      %3278 = vmatmul.mubr.bf16.gmra.mxu0 %v2855
      %v3279 = vpop.f32.mrf.mxu0
      %v3280 = vadd.f32 %v3187, %v3279
      %v3281 = vpop.f32.mrf.mxu0
      %v3282 = vadd.f32 %v3189, %v3281
      %v3283 = vpop.f32.mrf.mxu0
      %v3284 = vadd.f32 %v3191, %v3283
      %v3285 = vpop.f32.mrf.mxu0
      %v3286 = vadd.f32 %v3193, %v3285
      %3287 = vmatprep.mubr.bf16.mxu0 0
      %3288 = vmatmul.mubr.bf16.gmra.mxu0 %v2861
      %v3289 = vpop.f32.mrf.mxu0
      %v3290 = vadd.f32 %v3197, %v3289
      %v3291 = vpop.f32.mrf.mxu0
      %v3292 = vadd.f32 %v3199, %v3291
      %v3293 = vpop.f32.mrf.mxu0
      %v3294 = vadd.f32 %v3201, %v3293
      %v3295 = vpop.f32.mrf.mxu0
      %v3296 = vadd.f32 %v3203, %v3295
      %3297 = vmatprep.mubr.bf16.mxu0 0
      %3298 = vmatmul.mubr.bf16.gmra.mxu0 %v2867
      %v3299 = vpop.f32.mrf.mxu0
      %v3300 = vadd.f32 %v3207, %v3299
      %v3301 = vpop.f32.mrf.mxu0
      %v3302 = vadd.f32 %v3209, %v3301
      %v3303 = vpop.f32.mrf.mxu0
      %v3304 = vadd.f32 %v3211, %v3303
      %v3305 = vpop.f32.mrf.mxu0
      %v3306 = vadd.f32 %v3213, %v3305
      %3307 = vmatprep.mubr.bf16.mxu0 0
      %3308 = vmatmul.mubr.bf16.gmra.mxu0 %v2873
      %v3309 = vpop.f32.mrf.mxu0
      %v3310 = vadd.f32 %v3217, %v3309
      %v3311 = vpop.f32.mrf.mxu0
      %v3312 = vadd.f32 %v3219, %v3311
      %v3313 = vpop.f32.mrf.mxu0
      %v3314 = vadd.f32 %v3221, %v3313
      %v3315 = vpop.f32.mrf.mxu0
      %v3316 = vadd.f32 %v3223, %v3315
      %3317 = vdwg.mxu0
      %v3318 = vadd.f32 %v2650, %v3260
      %v3319 = vadd.f32 %v2651, %v3262
      %v3320 = vadd.f32 %v2652, %v3264
      %v3321 = vadd.f32 %v2653, %v3266
      %v3322 = vadd.f32 %v2654, %v3270
      %v3323 = vadd.f32 %v2655, %v3272
      %v3324 = vadd.f32 %v2656, %v3274
      %v3325 = vadd.f32 %v2657, %v3276
      %v3326 = vadd.f32 %v2658, %v3280
      %v3327 = vadd.f32 %v2659, %v3282
      %v3328 = vadd.f32 %v2660, %v3284
      %v3329 = vadd.f32 %v2661, %v3286
      %v3330 = vadd.f32 %v2662, %v3290
      %v3331 = vadd.f32 %v2663, %v3292
      %v3332 = vadd.f32 %v2664, %v3294
      %v3333 = vadd.f32 %v2665, %v3296
      %v3334 = vadd.f32 %v2666, %v3300
      %v3335 = vadd.f32 %v2667, %v3302
      %v3336 = vadd.f32 %v2668, %v3304
      %v3337 = vadd.f32 %v2669, %v3306
      %v3338 = vadd.f32 %v2670, %v3310
      %v3339 = vadd.f32 %v2671, %v3312
      %v3340 = vadd.f32 %v2672, %v3314
      %v3341 = vadd.f32 %v2673, %v3316
      %v3342 = vld [vmem:[%s300 + $0x24] sm:$0xcc]
      %v3343 = vld [vmem:[%s300 + $0x2c] sm:$0xc]
      %v3344 = vld [vmem:[%s300 + $0xb4] sm:$0x33]
      %v3345 = vld [vmem:[%s300 + $0xbc] sm:$0x3]
      %s3346 = scalar_lea.vmem %s2, 1920
      %v3347 = vld [vmem:[%s3346] sm:$0xff]
      %v3348 = vld [vmem:[%s3346 + $0x8] sm:$0xff]
      %v3349 = vld [vmem:[%s3346 + $0x10] sm:$0xff]
      %v3350 = vld [vmem:[%s3346 + $0x18] sm:$0xff]
      %v3351 = vld [vmem:[%s3346 + $0x20] sm:$0xff]
      %v3352 = vld [vmem:[%s3346 + $0x28] sm:$0xff]
      %v3353 = vld [vmem:[%s3346 + $0x30] sm:$0xff]
      %v3354 = vld [vmem:[%s3346 + $0x38] sm:$0xff]
      %v3355 = vld [vmem:[%s3346 + $0x40] sm:$0xff]
      %v3356 = vld [vmem:[%s3346 + $0x48] sm:$0xff]
      %v3357 = vld [vmem:[%s3346 + $0x50] sm:$0xff]
      %v3358 = vld [vmem:[%s3346 + $0x58] sm:$0xff]
      %v3359 = vld [vmem:[%s3346 + $0x60] sm:$0xff]
      %v3360 = vld [vmem:[%s3346 + $0x68] sm:$0xff]
      %v3361 = vld [vmem:[%s3346 + $0x70] sm:$0xff]
      %v3362 = vld [vmem:[%s3346 + $0x78] sm:$0xff]
      %v3363 = vld [vmem:[%s3346 + $0x80] sm:$0xff]
      %v3364 = vld [vmem:[%s3346 + $0x88] sm:$0xff]
      %v3365 = vld [vmem:[%s3346 + $0x90] sm:$0xff]
      %v3366 = vld [vmem:[%s3346 + $0x98] sm:$0xff]
      %v3367 = vld [vmem:[%s3346 + $0xa0] sm:$0xff]
      %v3368 = vld [vmem:[%s3346 + $0xa8] sm:$0xff]
      %v3369 = vld [vmem:[%s3346 + $0xb0] sm:$0xff]
      %v3370 = vld [vmem:[%s3346 + $0xb8] sm:$0xff]
      %v3371 = vld [vmem:[%s3346 + $0xc0] sm:$0xff]
      %v3372 = vld [vmem:[%s3346 + $0xc8] sm:$0xff]
      %v3373 = vld [vmem:[%s3346 + $0xd0] sm:$0xff]
      %v3374 = vld [vmem:[%s3346 + $0xd8] sm:$0xff]
      %v3375 = vld [vmem:[%s3346 + $0xe0] sm:$0xff]
      %v3376 = vld [vmem:[%s3346 + $0xe8] sm:$0xff]
      %v3377 = vld [vmem:[%s3346 + $0xf0] sm:$0xff]
      %v3378 = vld [vmem:[%s3346 + $0xf8] sm:$0xff]
      %v3379 = vld [vmem:[%s3346 + $0x100] sm:$0xff]
      %v3380 = vld [vmem:[%s3346 + $0x108] sm:$0xff]
      %v3381 = vld [vmem:[%s3346 + $0x110] sm:$0xff]
      %v3382 = vld [vmem:[%s3346 + $0x118] sm:$0xff]
      %v3383 = vld [vmem:[%s3346 + $0x120] sm:$0xff]
      %v3384 = vld [vmem:[%s3346 + $0x128] sm:$0xff]
      %v3385 = vld [vmem:[%s3346 + $0x130] sm:$0xff]
      %v3386 = vld [vmem:[%s3346 + $0x138] sm:$0xff]
      %v3387 = vld [vmem:[%s3346 + $0x140] sm:$0xff]
      %v3388 = vld [vmem:[%s3346 + $0x148] sm:$0xff]
      %v3389 = vld [vmem:[%s3346 + $0x150] sm:$0xff]
      %v3390 = vld [vmem:[%s3346 + $0x158] sm:$0xff]
      %v3391 = vld [vmem:[%s3346 + $0x160] sm:$0xff]
      %v3392 = vld [vmem:[%s3346 + $0x168] sm:$0xff]
      %v3393 = vld [vmem:[%s3346 + $0x170] sm:$0xff]
      %v3394 = vld [vmem:[%s3346 + $0x178] sm:$0xff]
      %v3399 = vunpack.c.l.b16 %v3342
      %v3400 = vunpack.c.h.b16 %v3342
      %v3401 = vunpack.c.l.b16 %v3343
      %v3402 = vunpack.c.l.b16 %v3344
      %v3403 = vunpack.c.h.b16 %v3344
      %v3404 = vunpack.c.l.b16 %v3345
      %v3405 = vpack.c.b16 %v2778, %v3399
      %v3406 = vpack.c.b16 %v2779, %v3400
      %v3407 = vpack.c.b16 %v2780, %v3401
      %v3408 = vpack.c.b16 %v3402, %v3402
      %v3409 = vpack.c.b16 %v3403, %v3403
      %v3410 = vpack.c.b16 %v3404, %v3404
      %v3411 = vrot.slane %v3405, 2
      %v3412 = vrot.slane %v2817, 2
      %v3413 = vsel %vm1547, %v3411, %v3412
      %v3414 = vrot.slane %v3406, 2
      %v3415 = vrot.slane %v2818, 2
      %v3416 = vsel %vm1547, %v3414, %v3415
      %v3417 = vrot.slane %v3407, 2
      %v3418 = vrot.slane %v2819, 2
      %v3419 = vsel %vm1547, %v3417, %v3418
      %v3420 = vrot.slane %v2820, 2
      %v3421 = vsel %vm1547, %v3412, %v3420
      %v3422 = vrot.slane %v2821, 2
      %v3423 = vsel %vm1547, %v3415, %v3422
      %v3424 = vrot.slane %v2822, 2
      %v3425 = vsel %vm1547, %v3418, %v3424
      %v3426 = vrot.slane %v2823, 2
      %v3427 = vsel %vm1547, %v3420, %v3426
      %v3428 = vrot.slane %v2824, 2
      %v3429 = vsel %vm1547, %v3422, %v3428
      %v3430 = vrot.slane %v2825, 2
      %v3431 = vsel %vm1547, %v3424, %v3430
      %v3432 = vrot.slane %v2826, 2
      %v3433 = vsel %vm1547, %v3426, %v3432
      %v3434 = vrot.slane %v2827, 2
      %v3435 = vsel %vm1547, %v3428, %v3434
      %v3436 = vrot.slane %v2828, 2
      %v3437 = vsel %vm1547, %v3430, %v3436
      %v3438 = vrot.slane %v2829, 2
      %v3439 = vsel %vm1547, %v3432, %v3438
      %v3440 = vrot.slane %v2830, 2
      %v3441 = vsel %vm1547, %v3434, %v3440
      %v3442 = vrot.slane %v2831, 2
      %v3443 = vsel %vm1547, %v3436, %v3442
      %v3444 = vrot.slane %v3408, 2
      %v3445 = vsel %vm1547, %v3438, %v3444
      %v3446 = vrot.slane %v3409, 2
      %v3447 = vsel %vm1547, %v3440, %v3446
      %v3448 = vrot.slane %v3410, 2
      %v3449 = vsel %vm1547, %v3442, %v3448
      %v3516 = vunpack.c.l.b16 %v3347
      %v3517 = vunpack.c.h.b16 %v3347
      %v3518 = vunpack.c.l.b16 %v3348
      %v3519 = vunpack.c.h.b16 %v3348
      %v3520 = vunpack.c.l.b16 %v3349
      %v3521 = vunpack.c.h.b16 %v3349
      %v3522 = vunpack.c.l.b16 %v3350
      %v3523 = vunpack.c.h.b16 %v3350
      %v3524 = vunpack.c.l.b16 %v3351
      %v3525 = vunpack.c.h.b16 %v3351
      %v3526 = vunpack.c.l.b16 %v3352
      %v3527 = vunpack.c.h.b16 %v3352
      %v3528 = vunpack.c.l.b16 %v3353
      %v3529 = vunpack.c.h.b16 %v3353
      %v3530 = vunpack.c.l.b16 %v3354
      %v3531 = vunpack.c.h.b16 %v3354
      %v3532 = vunpack.c.l.b16 %v3355
      %v3533 = vunpack.c.h.b16 %v3355
      %v3534 = vunpack.c.l.b16 %v3356
      %v3535 = vunpack.c.h.b16 %v3356
      %v3536 = vunpack.c.l.b16 %v3357
      %v3537 = vunpack.c.h.b16 %v3357
      %v3538 = vunpack.c.l.b16 %v3358
      %v3539 = vunpack.c.h.b16 %v3358
      %v3540 = vunpack.c.l.b16 %v3359
      %v3541 = vunpack.c.h.b16 %v3359
      %v3542 = vunpack.c.l.b16 %v3360
      %v3543 = vunpack.c.h.b16 %v3360
      %v3544 = vunpack.c.l.b16 %v3361
      %v3545 = vunpack.c.h.b16 %v3361
      %v3546 = vunpack.c.l.b16 %v3362
      %v3547 = vunpack.c.h.b16 %v3362
      %v3548 = vunpack.c.l.b16 %v3363
      %v3549 = vunpack.c.h.b16 %v3363
      %v3550 = vunpack.c.l.b16 %v3364
      %v3551 = vunpack.c.h.b16 %v3364
      %v3552 = vunpack.c.l.b16 %v3365
      %v3553 = vunpack.c.h.b16 %v3365
      %v3554 = vunpack.c.l.b16 %v3366
      %v3555 = vunpack.c.h.b16 %v3366
      %v3556 = vunpack.c.l.b16 %v3367
      %v3557 = vunpack.c.h.b16 %v3367
      %v3558 = vunpack.c.l.b16 %v3368
      %v3559 = vunpack.c.h.b16 %v3368
      %v3560 = vunpack.c.l.b16 %v3369
      %v3561 = vunpack.c.h.b16 %v3369
      %v3562 = vunpack.c.l.b16 %v3370
      %v3563 = vunpack.c.h.b16 %v3370
      %v3564 = vunpack.c.l.b16 %v3371
      %v3565 = vunpack.c.h.b16 %v3371
      %v3566 = vunpack.c.l.b16 %v3372
      %v3567 = vunpack.c.h.b16 %v3372
      %v3568 = vunpack.c.l.b16 %v3373
      %v3569 = vunpack.c.h.b16 %v3373
      %v3570 = vunpack.c.l.b16 %v3374
      %v3571 = vunpack.c.h.b16 %v3374
      %v3572 = vunpack.c.l.b16 %v3375
      %v3573 = vunpack.c.h.b16 %v3375
      %v3574 = vunpack.c.l.b16 %v3376
      %v3575 = vunpack.c.h.b16 %v3376
      %v3576 = vunpack.c.l.b16 %v3377
      %v3577 = vunpack.c.h.b16 %v3377
      %v3578 = vunpack.c.l.b16 %v3378
      %v3579 = vunpack.c.h.b16 %v3378
      %v3580 = vunpack.c.l.b16 %v3379
      %v3581 = vunpack.c.h.b16 %v3379
      %v3582 = vunpack.c.l.b16 %v3380
      %v3583 = vunpack.c.h.b16 %v3380
      %v3584 = vunpack.c.l.b16 %v3381
      %v3585 = vunpack.c.h.b16 %v3381
      %v3586 = vunpack.c.l.b16 %v3382
      %v3587 = vunpack.c.h.b16 %v3382
      %v3588 = vunpack.c.l.b16 %v3383
      %v3589 = vunpack.c.h.b16 %v3383
      %v3590 = vunpack.c.l.b16 %v3384
      %v3591 = vunpack.c.h.b16 %v3384
      %v3592 = vunpack.c.l.b16 %v3385
      %v3593 = vunpack.c.h.b16 %v3385
      %v3594 = vunpack.c.l.b16 %v3386
      %v3595 = vunpack.c.h.b16 %v3386
      %v3596 = vunpack.c.l.b16 %v3387
      %v3597 = vunpack.c.h.b16 %v3387
      %v3598 = vunpack.c.l.b16 %v3388
      %v3599 = vunpack.c.h.b16 %v3388
      %v3600 = vunpack.c.l.b16 %v3389
      %v3601 = vunpack.c.h.b16 %v3389
      %v3602 = vunpack.c.l.b16 %v3390
      %v3603 = vunpack.c.h.b16 %v3390
      %v3604 = vunpack.c.l.b16 %v3391
      %v3605 = vunpack.c.h.b16 %v3391
      %v3606 = vunpack.c.l.b16 %v3392
      %v3607 = vunpack.c.h.b16 %v3392
      %v3608 = vunpack.c.l.b16 %v3393
      %v3609 = vunpack.c.h.b16 %v3393
      %v3610 = vunpack.c.l.b16 %v3394
      %v3611 = vunpack.c.h.b16 %v3394
      %v3612 = vpack.c.b16 %v3518, %v3516
      %v3613 = vpack.c.b16 %v3519, %v3517
      %v3614 = vpack.c.b16 %v3522, %v3520
      %v3615 = vpack.c.b16 %v3523, %v3521
      %v3616 = vpack.c.b16 %v3526, %v3524
      %v3617 = vpack.c.b16 %v3527, %v3525
      %v3618 = vpack.c.b16 %v3530, %v3528
      %v3619 = vpack.c.b16 %v3531, %v3529
      %v3620 = vpack.c.b16 %v3534, %v3532
      %v3621 = vpack.c.b16 %v3535, %v3533
      %v3622 = vpack.c.b16 %v3538, %v3536
      %v3623 = vpack.c.b16 %v3539, %v3537
      %v3624 = vpack.c.b16 %v3542, %v3540
      %v3625 = vpack.c.b16 %v3543, %v3541
      %v3626 = vpack.c.b16 %v3546, %v3544
      %v3627 = vpack.c.b16 %v3547, %v3545
      %v3628 = vpack.c.b16 %v3550, %v3548
      %v3629 = vpack.c.b16 %v3551, %v3549
      %v3630 = vpack.c.b16 %v3554, %v3552
      %v3631 = vpack.c.b16 %v3555, %v3553
      %v3632 = vpack.c.b16 %v3558, %v3556
      %v3633 = vpack.c.b16 %v3559, %v3557
      %v3634 = vpack.c.b16 %v3562, %v3560
      %v3635 = vpack.c.b16 %v3563, %v3561
      %v3636 = vpack.c.b16 %v3566, %v3564
      %v3637 = vpack.c.b16 %v3567, %v3565
      %v3638 = vpack.c.b16 %v3570, %v3568
      %v3639 = vpack.c.b16 %v3571, %v3569
      %v3640 = vpack.c.b16 %v3574, %v3572
      %v3641 = vpack.c.b16 %v3575, %v3573
      %v3642 = vpack.c.b16 %v3578, %v3576
      %v3643 = vpack.c.b16 %v3579, %v3577
      %v3644 = vpack.c.b16 %v3582, %v3580
      %v3645 = vpack.c.b16 %v3583, %v3581
      %v3646 = vpack.c.b16 %v3586, %v3584
      %v3647 = vpack.c.b16 %v3587, %v3585
      %v3648 = vpack.c.b16 %v3590, %v3588
      %v3649 = vpack.c.b16 %v3591, %v3589
      %v3650 = vpack.c.b16 %v3594, %v3592
      %v3651 = vpack.c.b16 %v3595, %v3593
      %v3652 = vpack.c.b16 %v3598, %v3596
      %v3653 = vpack.c.b16 %v3599, %v3597
      %v3654 = vpack.c.b16 %v3602, %v3600
      %v3655 = vpack.c.b16 %v3603, %v3601
      %v3656 = vpack.c.b16 %v3606, %v3604
      %v3657 = vpack.c.b16 %v3607, %v3605
      %v3658 = vpack.c.b16 %v3610, %v3608
      %v3659 = vpack.c.b16 %v3611, %v3609
      %3708 = vmatprep.subr.bf16.mxu0 %v3627
      %3709 = vmatpush1.bf16.msra.mxu0 %v3626
      %3710 = vmatprep.subr.bf16.mxu0 %v3625
      %3711 = vmatpush1.bf16.msra.mxu0 %v3624
      %3712 = vmatprep.subr.bf16.mxu0 %v3623
      %3713 = vmatpush1.bf16.msra.mxu0 %v3622
      %3714 = vmatprep.subr.bf16.mxu0 %v3621
      %3715 = vmatpush1.bf16.msra.mxu0 %v3620
      %3716 = vmatprep.subr.bf16.mxu0 %v3619
      %3717 = vmatpush1.bf16.msra.mxu0 %v3618
      %3718 = vmatprep.subr.bf16.mxu0 %v3617
      %3719 = vmatpush1.bf16.msra.mxu0 %v3616
      %3720 = vmatprep.subr.bf16.mxu0 %v3615
      %3721 = vmatpush1.bf16.msra.mxu0 %v3614
      %3722 = vmatprep.subr.bf16.mxu0 %v3613
      %3723 = vmatpush1.bf16.msra.mxu0 %v3612
      %3724 = vmatprep.subr.bf16.mxu0 %v3643
      %3725 = vmatpush2.bf16.msra.mxu0 %v3642
      %3726 = vmatprep.subr.bf16.mxu0 %v3641
      %3727 = vmatpush2.bf16.msra.mxu0 %v3640
      %3728 = vmatprep.subr.bf16.mxu0 %v3639
      %3729 = vmatpush2.bf16.msra.mxu0 %v3638
      %3730 = vmatprep.subr.bf16.mxu0 %v3637
      %3731 = vmatpush2.bf16.msra.mxu0 %v3636
      %3732 = vmatprep.subr.bf16.mxu0 %v3635
      %3733 = vmatpush2.bf16.msra.mxu0 %v3634
      %3734 = vmatprep.subr.bf16.mxu0 %v3633
      %3735 = vmatpush2.bf16.msra.mxu0 %v3632
      %3736 = vmatprep.subr.bf16.mxu0 %v3631
      %3737 = vmatpush2.bf16.msra.mxu0 %v3630
      %3738 = vmatprep.subr.bf16.mxu0 %v3629
      %3739 = vmatpush2.bf16.msra.mxu0 %v3628
      %3740 = vmatprep.mubr.bf16.mxu0 %v3416
      %3741 = vmatmul.mubr.bf16.gmra.mxu0 %v3413
      %v3742 = vpop.f32.mrf.mxu0
      %v3743 = vadd.f32 0.0, %v3742
      %v3744 = vpop.f32.mrf.mxu0
      %v3745 = vadd.f32 0.0, %v3744
      %v3746 = vpop.f32.mrf.mxu0
      %v3747 = vadd.f32 0.0, %v3746
      %v3748 = vpop.f32.mrf.mxu0
      %v3749 = vadd.f32 0.0, %v3748
      %3750 = vmatprep.mubr.bf16.mxu0 %v3423
      %3751 = vmatmul.mubr.bf16.gmra.mxu0 %v3421
      %v3752 = vpop.f32.mrf.mxu0
      %v3753 = vadd.f32 0.0, %v3752
      %v3754 = vpop.f32.mrf.mxu0
      %v3755 = vadd.f32 0.0, %v3754
      %v3756 = vpop.f32.mrf.mxu0
      %v3757 = vadd.f32 0.0, %v3756
      %v3758 = vpop.f32.mrf.mxu0
      %v3759 = vadd.f32 0.0, %v3758
      %3760 = vmatprep.mubr.bf16.mxu0 %v3429
      %3761 = vmatmul.mubr.bf16.gmra.mxu0 %v3427
      %v3762 = vpop.f32.mrf.mxu0
      %v3763 = vadd.f32 0.0, %v3762
      %v3764 = vpop.f32.mrf.mxu0
      %v3765 = vadd.f32 0.0, %v3764
      %v3766 = vpop.f32.mrf.mxu0
      %v3767 = vadd.f32 0.0, %v3766
      %v3768 = vpop.f32.mrf.mxu0
      %v3769 = vadd.f32 0.0, %v3768
      %3770 = vmatprep.mubr.bf16.mxu0 %v3435
      %3771 = vmatmul.mubr.bf16.gmra.mxu0 %v3433
      %v3772 = vpop.f32.mrf.mxu0
      %v3773 = vadd.f32 0.0, %v3772
      %v3774 = vpop.f32.mrf.mxu0
      %v3775 = vadd.f32 0.0, %v3774
      %v3776 = vpop.f32.mrf.mxu0
      %v3777 = vadd.f32 0.0, %v3776
      %v3778 = vpop.f32.mrf.mxu0
      %v3779 = vadd.f32 0.0, %v3778
      %3780 = vmatprep.mubr.bf16.mxu0 %v3441
      %3781 = vmatmul.mubr.bf16.gmra.mxu0 %v3439
      %v3782 = vpop.f32.mrf.mxu0
      %v3783 = vadd.f32 0.0, %v3782
      %v3784 = vpop.f32.mrf.mxu0
      %v3785 = vadd.f32 0.0, %v3784
      %v3786 = vpop.f32.mrf.mxu0
      %v3787 = vadd.f32 0.0, %v3786
      %v3788 = vpop.f32.mrf.mxu0
      %v3789 = vadd.f32 0.0, %v3788
      %3790 = vmatprep.mubr.bf16.mxu0 %v3447
      %3791 = vmatmul.mubr.bf16.gmra.mxu0 %v3445
      %v3792 = vpop.f32.mrf.mxu0
      %v3793 = vadd.f32 0.0, %v3792
      %v3794 = vpop.f32.mrf.mxu0
      %v3795 = vadd.f32 0.0, %v3794
      %v3796 = vpop.f32.mrf.mxu0
      %v3797 = vadd.f32 0.0, %v3796
      %v3798 = vpop.f32.mrf.mxu0
      %v3799 = vadd.f32 0.0, %v3798
      %3800 = vdwg.mxu0
      %3801 = vmatprep.subr.bf16.mxu0 %v3659
      %3802 = vmatpush1.bf16.msra.mxu0 %v3658
      %3803 = vmatprep.subr.bf16.mxu0 %v3657
      %3804 = vmatpush1.bf16.msra.mxu0 %v3656
      %3805 = vmatprep.subr.bf16.mxu0 %v3655
      %3806 = vmatpush1.bf16.msra.mxu0 %v3654
      %3807 = vmatprep.subr.bf16.mxu0 %v3653
      %3808 = vmatpush1.bf16.msra.mxu0 %v3652
      %3809 = vmatprep.subr.bf16.mxu0 %v3651
      %3810 = vmatpush1.bf16.msra.mxu0 %v3650
      %3811 = vmatprep.subr.bf16.mxu0 %v3649
      %3812 = vmatpush1.bf16.msra.mxu0 %v3648
      %3813 = vmatprep.subr.bf16.mxu0 %v3647
      %3814 = vmatpush1.bf16.msra.mxu0 %v3646
      %3815 = vmatprep.subr.bf16.mxu0 %v3645
      %3816 = vmatpush1.bf16.msra.mxu0 %v3644
      %3817 = vmatprep.subr.bf16.mxu0 0
      %3818 = vmatpush2.bf16.msra.mxu0 0
      %3819 = vmatprep.subr.bf16.mxu0 0
      %3820 = vmatpush2.bf16.msra.mxu0 0
      %3821 = vmatprep.subr.bf16.mxu0 0
      %3822 = vmatpush2.bf16.msra.mxu0 0
      %3823 = vmatprep.subr.bf16.mxu0 0
      %3824 = vmatpush2.bf16.msra.mxu0 0
      %3825 = vmatprep.subr.bf16.mxu0 0
      %3826 = vmatpush2.bf16.msra.mxu0 0
      %3827 = vmatprep.subr.bf16.mxu0 0
      %3828 = vmatpush2.bf16.msra.mxu0 0
      %3829 = vmatprep.subr.bf16.mxu0 0
      %3830 = vmatpush2.bf16.msra.mxu0 0
      %3831 = vmatprep.subr.bf16.mxu0 0
      %3832 = vmatpush2.bf16.msra.mxu0 0
      %3833 = vmatprep.mubr.bf16.mxu0 0
      %3834 = vmatmul.mubr.bf16.gmra.mxu0 %v3419
      %v3835 = vpop.f32.mrf.mxu0
      %v3836 = vadd.f32 %v3743, %v3835
      %v3837 = vpop.f32.mrf.mxu0
      %v3838 = vadd.f32 %v3745, %v3837
      %v3839 = vpop.f32.mrf.mxu0
      %v3840 = vadd.f32 %v3747, %v3839
      %v3841 = vpop.f32.mrf.mxu0
      %v3842 = vadd.f32 %v3749, %v3841
      %3843 = vmatprep.mubr.bf16.mxu0 0
      %3844 = vmatmul.mubr.bf16.gmra.mxu0 %v3425
      %v3845 = vpop.f32.mrf.mxu0
      %v3846 = vadd.f32 %v3753, %v3845
      %v3847 = vpop.f32.mrf.mxu0
      %v3848 = vadd.f32 %v3755, %v3847
      %v3849 = vpop.f32.mrf.mxu0
      %v3850 = vadd.f32 %v3757, %v3849
      %v3851 = vpop.f32.mrf.mxu0
      %v3852 = vadd.f32 %v3759, %v3851
      %3853 = vmatprep.mubr.bf16.mxu0 0
      %3854 = vmatmul.mubr.bf16.gmra.mxu0 %v3431
      %v3855 = vpop.f32.mrf.mxu0
      %v3856 = vadd.f32 %v3763, %v3855
      %v3857 = vpop.f32.mrf.mxu0
      %v3858 = vadd.f32 %v3765, %v3857
      %v3859 = vpop.f32.mrf.mxu0
      %v3860 = vadd.f32 %v3767, %v3859
      %v3861 = vpop.f32.mrf.mxu0
      %v3862 = vadd.f32 %v3769, %v3861
      %3863 = vmatprep.mubr.bf16.mxu0 0
      %3864 = vmatmul.mubr.bf16.gmra.mxu0 %v3437
      %v3865 = vpop.f32.mrf.mxu0
      %v3866 = vadd.f32 %v3773, %v3865
      %v3867 = vpop.f32.mrf.mxu0
      %v3868 = vadd.f32 %v3775, %v3867
      %v3869 = vpop.f32.mrf.mxu0
      %v3870 = vadd.f32 %v3777, %v3869
      %v3871 = vpop.f32.mrf.mxu0
      %v3872 = vadd.f32 %v3779, %v3871
      %3873 = vmatprep.mubr.bf16.mxu0 0
      %3874 = vmatmul.mubr.bf16.gmra.mxu0 %v3443
      %v3875 = vpop.f32.mrf.mxu0
      %v3876 = vadd.f32 %v3783, %v3875
      %v3877 = vpop.f32.mrf.mxu0
      %v3878 = vadd.f32 %v3785, %v3877
      %v3879 = vpop.f32.mrf.mxu0
      %v3880 = vadd.f32 %v3787, %v3879
      %v3881 = vpop.f32.mrf.mxu0
      %v3882 = vadd.f32 %v3789, %v3881
      %3883 = vmatprep.mubr.bf16.mxu0 0
      %3884 = vmatmul.mubr.bf16.gmra.mxu0 %v3449
      %v3885 = vpop.f32.mrf.mxu0
      %v3886 = vadd.f32 %v3793, %v3885
      %v3887 = vpop.f32.mrf.mxu0
      %v3888 = vadd.f32 %v3795, %v3887
      %v3889 = vpop.f32.mrf.mxu0
      %v3890 = vadd.f32 %v3797, %v3889
      %v3891 = vpop.f32.mrf.mxu0
      %v3892 = vadd.f32 %v3799, %v3891
      %3893 = vdwg.mxu0
      %v3894 = vadd.f32 %v3318, %v3836
      %v3895 = vadd.f32 %v3319, %v3838
      %v3896 = vadd.f32 %v3320, %v3840
      %v3897 = vadd.f32 %v3321, %v3842
      %v3898 = vadd.f32 %v3322, %v3846
      %v3899 = vadd.f32 %v3323, %v3848
      %v3900 = vadd.f32 %v3324, %v3850
      %v3901 = vadd.f32 %v3325, %v3852
      %v3902 = vadd.f32 %v3326, %v3856
      %v3903 = vadd.f32 %v3327, %v3858
      %v3904 = vadd.f32 %v3328, %v3860
      %v3905 = vadd.f32 %v3329, %v3862
      %v3906 = vadd.f32 %v3330, %v3866
      %v3907 = vadd.f32 %v3331, %v3868
      %v3908 = vadd.f32 %v3332, %v3870
      %v3909 = vadd.f32 %v3333, %v3872
      %v3910 = vadd.f32 %v3334, %v3876
      %v3911 = vadd.f32 %v3335, %v3878
      %v3912 = vadd.f32 %v3336, %v3880
      %v3913 = vadd.f32 %v3337, %v3882
      %v3914 = vadd.f32 %v3338, %v3886
      %v3915 = vadd.f32 %v3339, %v3888
      %v3916 = vadd.f32 %v3340, %v3890
      %v3917 = vadd.f32 %v3341, %v3892
      %v3918 = vld [vmem:[%s300 + $0x48] sm:$0xff]
      %v3919 = vld [vmem:[%s300 + $0x50] sm:$0xf]
      %v3920 = vld [vmem:[%s300 + $0x54] sm:$0xff]
      %v3921 = vld [vmem:[%s300 + $0x5c] sm:$0xf]
      %v3922 = vld [vmem:[%s300 + $0x60] sm:$0xff]
      %v3923 = vld [vmem:[%s300 + $0x68] sm:$0xf]
      %v3924 = vld [vmem:[%s300 + $0x6c] sm:$0xff]
      %v3925 = vld [vmem:[%s300 + $0x74] sm:$0xf]
      %v3926 = vld [vmem:[%s300 + $0x78] sm:$0xff]
      %v3927 = vld [vmem:[%s300 + $0x80] sm:$0xf]
      %v3928 = vld [vmem:[%s300 + $0x84] sm:$0xff]
      %v3929 = vld [vmem:[%s300 + $0x8c] sm:$0xf]
      %v3930 = vld [vmem:[%s300 + $0x90] sm:$0xff]
      %v3931 = vld [vmem:[%s300 + $0x98] sm:$0xf]
      %v3932 = vld [vmem:[%s300 + $0x9c] sm:$0xff]
      %v3933 = vld [vmem:[%s300 + $0xa4] sm:$0xf]
      %v3934 = vld [vmem:[%s300 + $0xa8] sm:$0xff]
      %v3935 = vld [vmem:[%s300 + $0xb0] sm:$0xf]
      %v3936 = vld [vmem:[%s300 + $0xb4] sm:$0xff]
      %v3937 = vld [vmem:[%s300 + $0xbc] sm:$0xf]
      %v3938 = vld [vmem:[%s300 + $0xc0] sm:$0xff]
      %v3939 = vld [vmem:[%s300 + $0xc8] sm:$0xf]
      %v3940 = vld [vmem:[%s300 + $0xcc] sm:$0xff]
      %v3941 = vld [vmem:[%s300 + $0xd4] sm:$0xf]
      %s3942 = scalar_lea.vmem %s2, 2304
      %v3943 = vld [vmem:[%s3942] sm:$0xff]
      %v3944 = vld [vmem:[%s3942 + $0x8] sm:$0xff]
      %v3945 = vld [vmem:[%s3942 + $0x10] sm:$0xff]
      %v3946 = vld [vmem:[%s3942 + $0x18] sm:$0xff]
      %v3947 = vld [vmem:[%s3942 + $0x20] sm:$0xff]
      %v3948 = vld [vmem:[%s3942 + $0x28] sm:$0xff]
      %v3949 = vld [vmem:[%s3942 + $0x30] sm:$0xff]
      %v3950 = vld [vmem:[%s3942 + $0x38] sm:$0xff]
      %v3951 = vld [vmem:[%s3942 + $0x40] sm:$0xff]
      %v3952 = vld [vmem:[%s3942 + $0x48] sm:$0xff]
      %v3953 = vld [vmem:[%s3942 + $0x50] sm:$0xff]
      %v3954 = vld [vmem:[%s3942 + $0x58] sm:$0xff]
      %v3955 = vld [vmem:[%s3942 + $0x60] sm:$0xff]
      %v3956 = vld [vmem:[%s3942 + $0x68] sm:$0xff]
      %v3957 = vld [vmem:[%s3942 + $0x70] sm:$0xff]
      %v3958 = vld [vmem:[%s3942 + $0x78] sm:$0xff]
      %v3959 = vld [vmem:[%s3942 + $0x80] sm:$0xff]
      %v3960 = vld [vmem:[%s3942 + $0x88] sm:$0xff]
      %v3961 = vld [vmem:[%s3942 + $0x90] sm:$0xff]
      %v3962 = vld [vmem:[%s3942 + $0x98] sm:$0xff]
      %v3963 = vld [vmem:[%s3942 + $0xa0] sm:$0xff]
      %v3964 = vld [vmem:[%s3942 + $0xa8] sm:$0xff]
      %v3965 = vld [vmem:[%s3942 + $0xb0] sm:$0xff]
      %v3966 = vld [vmem:[%s3942 + $0xb8] sm:$0xff]
      %v3967 = vld [vmem:[%s3942 + $0xc0] sm:$0xff]
      %v3968 = vld [vmem:[%s3942 + $0xc8] sm:$0xff]
      %v3969 = vld [vmem:[%s3942 + $0xd0] sm:$0xff]
      %v3970 = vld [vmem:[%s3942 + $0xd8] sm:$0xff]
      %v3971 = vld [vmem:[%s3942 + $0xe0] sm:$0xff]
      %v3972 = vld [vmem:[%s3942 + $0xe8] sm:$0xff]
      %v3973 = vld [vmem:[%s3942 + $0xf0] sm:$0xff]
      %v3974 = vld [vmem:[%s3942 + $0xf8] sm:$0xff]
      %v3975 = vld [vmem:[%s3942 + $0x100] sm:$0xff]
      %v3976 = vld [vmem:[%s3942 + $0x108] sm:$0xff]
      %v3977 = vld [vmem:[%s3942 + $0x110] sm:$0xff]
      %v3978 = vld [vmem:[%s3942 + $0x118] sm:$0xff]
      %v3979 = vld [vmem:[%s3942 + $0x120] sm:$0xff]
      %v3980 = vld [vmem:[%s3942 + $0x128] sm:$0xff]
      %v3981 = vld [vmem:[%s3942 + $0x130] sm:$0xff]
      %v3982 = vld [vmem:[%s3942 + $0x138] sm:$0xff]
      %v3983 = vld [vmem:[%s3942 + $0x140] sm:$0xff]
      %v3984 = vld [vmem:[%s3942 + $0x148] sm:$0xff]
      %v3985 = vld [vmem:[%s3942 + $0x150] sm:$0xff]
      %v3986 = vld [vmem:[%s3942 + $0x158] sm:$0xff]
      %v3987 = vld [vmem:[%s3942 + $0x160] sm:$0xff]
      %v3988 = vld [vmem:[%s3942 + $0x168] sm:$0xff]
      %v3989 = vld [vmem:[%s3942 + $0x170] sm:$0xff]
      %v3990 = vld [vmem:[%s3942 + $0x178] sm:$0xff]
      %v4015 = vunpack.c.l.b16 %v3918
      %v4016 = vunpack.c.h.b16 %v3918
      %v4017 = vunpack.c.l.b16 %v3919
      %v4018 = vunpack.c.l.b16 %v3920
      %v4019 = vunpack.c.h.b16 %v3920
      %v4020 = vunpack.c.l.b16 %v3921
      %v4021 = vunpack.c.l.b16 %v3922
      %v4022 = vunpack.c.h.b16 %v3922
      %v4023 = vunpack.c.l.b16 %v3923
      %v4024 = vunpack.c.l.b16 %v3924
      %v4025 = vunpack.c.h.b16 %v3924
      %v4026 = vunpack.c.l.b16 %v3925
      %v4027 = vunpack.c.l.b16 %v3926
      %v4028 = vunpack.c.h.b16 %v3926
      %v4029 = vunpack.c.l.b16 %v3927
      %v4030 = vunpack.c.l.b16 %v3928
      %v4031 = vunpack.c.h.b16 %v3928
      %v4032 = vunpack.c.l.b16 %v3929
      %v4033 = vunpack.c.l.b16 %v3930
      %v4034 = vunpack.c.h.b16 %v3930
      %v4035 = vunpack.c.l.b16 %v3931
      %v4036 = vunpack.c.l.b16 %v3932
      %v4037 = vunpack.c.h.b16 %v3932
      %v4038 = vunpack.c.l.b16 %v3933
      %v4039 = vunpack.c.l.b16 %v3934
      %v4040 = vunpack.c.h.b16 %v3934
      %v4041 = vunpack.c.l.b16 %v3935
      %v4042 = vunpack.c.l.b16 %v3936
      %v4043 = vunpack.c.h.b16 %v3936
      %v4044 = vunpack.c.l.b16 %v3937
      %v4045 = vunpack.c.l.b16 %v3938
      %v4046 = vunpack.c.h.b16 %v3938
      %v4047 = vunpack.c.l.b16 %v3939
      %v4048 = vunpack.c.l.b16 %v3940
      %v4049 = vunpack.c.h.b16 %v3940
      %v4050 = vunpack.c.l.b16 %v3941
      %v4051 = vpack.c.b16 %v4018, %v4015
      %v4052 = vpack.c.b16 %v4019, %v4016
      %v4053 = vpack.c.b16 %v4020, %v4017
      %v4054 = vpack.c.b16 %v4024, %v4021
      %v4055 = vpack.c.b16 %v4025, %v4022
      %v4056 = vpack.c.b16 %v4026, %v4023
      %v4057 = vpack.c.b16 %v4030, %v4027
      %v4058 = vpack.c.b16 %v4031, %v4028
      %v4059 = vpack.c.b16 %v4032, %v4029
      %v4060 = vpack.c.b16 %v4036, %v4033
      %v4061 = vpack.c.b16 %v4037, %v4034
      %v4062 = vpack.c.b16 %v4038, %v4035
      %v4063 = vpack.c.b16 %v4042, %v4039
      %v4064 = vpack.c.b16 %v4043, %v4040
      %v4065 = vpack.c.b16 %v4044, %v4041
      %v4066 = vpack.c.b16 %v4048, %v4045
      %v4067 = vpack.c.b16 %v4049, %v4046
      %v4068 = vpack.c.b16 %v4050, %v4047
      %v4135 = vunpack.c.l.b16 %v3943
      %v4136 = vunpack.c.h.b16 %v3943
      %v4137 = vunpack.c.l.b16 %v3944
      %v4138 = vunpack.c.h.b16 %v3944
      %v4139 = vunpack.c.l.b16 %v3945
      %v4140 = vunpack.c.h.b16 %v3945
      %v4141 = vunpack.c.l.b16 %v3946
      %v4142 = vunpack.c.h.b16 %v3946
      %v4143 = vunpack.c.l.b16 %v3947
      %v4144 = vunpack.c.h.b16 %v3947
      %v4145 = vunpack.c.l.b16 %v3948
      %v4146 = vunpack.c.h.b16 %v3948
      %v4147 = vunpack.c.l.b16 %v3949
      %v4148 = vunpack.c.h.b16 %v3949
      %v4149 = vunpack.c.l.b16 %v3950
      %v4150 = vunpack.c.h.b16 %v3950
      %v4151 = vunpack.c.l.b16 %v3951
      %v4152 = vunpack.c.h.b16 %v3951
      %v4153 = vunpack.c.l.b16 %v3952
      %v4154 = vunpack.c.h.b16 %v3952
      %v4155 = vunpack.c.l.b16 %v3953
      %v4156 = vunpack.c.h.b16 %v3953
      %v4157 = vunpack.c.l.b16 %v3954
      %v4158 = vunpack.c.h.b16 %v3954
      %v4159 = vunpack.c.l.b16 %v3955
      %v4160 = vunpack.c.h.b16 %v3955
      %v4161 = vunpack.c.l.b16 %v3956
      %v4162 = vunpack.c.h.b16 %v3956
      %v4163 = vunpack.c.l.b16 %v3957
      %v4164 = vunpack.c.h.b16 %v3957
      %v4165 = vunpack.c.l.b16 %v3958
      %v4166 = vunpack.c.h.b16 %v3958
      %v4167 = vunpack.c.l.b16 %v3959
      %v4168 = vunpack.c.h.b16 %v3959
      %v4169 = vunpack.c.l.b16 %v3960
      %v4170 = vunpack.c.h.b16 %v3960
      %v4171 = vunpack.c.l.b16 %v3961
      %v4172 = vunpack.c.h.b16 %v3961
      %v4173 = vunpack.c.l.b16 %v3962
      %v4174 = vunpack.c.h.b16 %v3962
      %v4175 = vunpack.c.l.b16 %v3963
      %v4176 = vunpack.c.h.b16 %v3963
      %v4177 = vunpack.c.l.b16 %v3964
      %v4178 = vunpack.c.h.b16 %v3964
      %v4179 = vunpack.c.l.b16 %v3965
      %v4180 = vunpack.c.h.b16 %v3965
      %v4181 = vunpack.c.l.b16 %v3966
      %v4182 = vunpack.c.h.b16 %v3966
      %v4183 = vunpack.c.l.b16 %v3967
      %v4184 = vunpack.c.h.b16 %v3967
      %v4185 = vunpack.c.l.b16 %v3968
      %v4186 = vunpack.c.h.b16 %v3968
      %v4187 = vunpack.c.l.b16 %v3969
      %v4188 = vunpack.c.h.b16 %v3969
      %v4189 = vunpack.c.l.b16 %v3970
      %v4190 = vunpack.c.h.b16 %v3970
      %v4191 = vunpack.c.l.b16 %v3971
      %v4192 = vunpack.c.h.b16 %v3971
      %v4193 = vunpack.c.l.b16 %v3972
      %v4194 = vunpack.c.h.b16 %v3972
      %v4195 = vunpack.c.l.b16 %v3973
      %v4196 = vunpack.c.h.b16 %v3973
      %v4197 = vunpack.c.l.b16 %v3974
      %v4198 = vunpack.c.h.b16 %v3974
      %v4199 = vunpack.c.l.b16 %v3975
      %v4200 = vunpack.c.h.b16 %v3975
      %v4201 = vunpack.c.l.b16 %v3976
      %v4202 = vunpack.c.h.b16 %v3976
      %v4203 = vunpack.c.l.b16 %v3977
      %v4204 = vunpack.c.h.b16 %v3977
      %v4205 = vunpack.c.l.b16 %v3978
      %v4206 = vunpack.c.h.b16 %v3978
      %v4207 = vunpack.c.l.b16 %v3979
      %v4208 = vunpack.c.h.b16 %v3979
      %v4209 = vunpack.c.l.b16 %v3980
      %v4210 = vunpack.c.h.b16 %v3980
      %v4211 = vunpack.c.l.b16 %v3981
      %v4212 = vunpack.c.h.b16 %v3981
      %v4213 = vunpack.c.l.b16 %v3982
      %v4214 = vunpack.c.h.b16 %v3982
      %v4215 = vunpack.c.l.b16 %v3983
      %v4216 = vunpack.c.h.b16 %v3983
      %v4217 = vunpack.c.l.b16 %v3984
      %v4218 = vunpack.c.h.b16 %v3984
      %v4219 = vunpack.c.l.b16 %v3985
      %v4220 = vunpack.c.h.b16 %v3985
      %v4221 = vunpack.c.l.b16 %v3986
      %v4222 = vunpack.c.h.b16 %v3986
      %v4223 = vunpack.c.l.b16 %v3987
      %v4224 = vunpack.c.h.b16 %v3987
      %v4225 = vunpack.c.l.b16 %v3988
      %v4226 = vunpack.c.h.b16 %v3988
      %v4227 = vunpack.c.l.b16 %v3989
      %v4228 = vunpack.c.h.b16 %v3989
      %v4229 = vunpack.c.l.b16 %v3990
      %v4230 = vunpack.c.h.b16 %v3990
      %v4231 = vpack.c.b16 %v4137, %v4135
      %v4232 = vpack.c.b16 %v4138, %v4136
      %v4233 = vpack.c.b16 %v4141, %v4139
      %v4234 = vpack.c.b16 %v4142, %v4140
      %v4235 = vpack.c.b16 %v4145, %v4143
      %v4236 = vpack.c.b16 %v4146, %v4144
      %v4237 = vpack.c.b16 %v4149, %v4147
      %v4238 = vpack.c.b16 %v4150, %v4148
      %v4239 = vpack.c.b16 %v4153, %v4151
      %v4240 = vpack.c.b16 %v4154, %v4152
      %v4241 = vpack.c.b16 %v4157, %v4155
      %v4242 = vpack.c.b16 %v4158, %v4156
      %v4243 = vpack.c.b16 %v4161, %v4159
      %v4244 = vpack.c.b16 %v4162, %v4160
      %v4245 = vpack.c.b16 %v4165, %v4163
      %v4246 = vpack.c.b16 %v4166, %v4164
      %v4247 = vpack.c.b16 %v4169, %v4167
      %v4248 = vpack.c.b16 %v4170, %v4168
      %v4249 = vpack.c.b16 %v4173, %v4171
      %v4250 = vpack.c.b16 %v4174, %v4172
      %v4251 = vpack.c.b16 %v4177, %v4175
      %v4252 = vpack.c.b16 %v4178, %v4176
      %v4253 = vpack.c.b16 %v4181, %v4179
      %v4254 = vpack.c.b16 %v4182, %v4180
      %v4255 = vpack.c.b16 %v4185, %v4183
      %v4256 = vpack.c.b16 %v4186, %v4184
      %v4257 = vpack.c.b16 %v4189, %v4187
      %v4258 = vpack.c.b16 %v4190, %v4188
      %v4259 = vpack.c.b16 %v4193, %v4191
      %v4260 = vpack.c.b16 %v4194, %v4192
      %v4261 = vpack.c.b16 %v4197, %v4195
      %v4262 = vpack.c.b16 %v4198, %v4196
      %v4263 = vpack.c.b16 %v4201, %v4199
      %v4264 = vpack.c.b16 %v4202, %v4200
      %v4265 = vpack.c.b16 %v4205, %v4203
      %v4266 = vpack.c.b16 %v4206, %v4204
      %v4267 = vpack.c.b16 %v4209, %v4207
      %v4268 = vpack.c.b16 %v4210, %v4208
      %v4269 = vpack.c.b16 %v4213, %v4211
      %v4270 = vpack.c.b16 %v4214, %v4212
      %v4271 = vpack.c.b16 %v4217, %v4215
      %v4272 = vpack.c.b16 %v4218, %v4216
      %v4273 = vpack.c.b16 %v4221, %v4219
      %v4274 = vpack.c.b16 %v4222, %v4220
      %v4275 = vpack.c.b16 %v4225, %v4223
      %v4276 = vpack.c.b16 %v4226, %v4224
      %v4277 = vpack.c.b16 %v4229, %v4227
      %v4278 = vpack.c.b16 %v4230, %v4228
      %4327 = vmatprep.subr.bf16.mxu0 %v4246
      %4328 = vmatpush1.bf16.msra.mxu0 %v4245
      %4329 = vmatprep.subr.bf16.mxu0 %v4244
      %4330 = vmatpush1.bf16.msra.mxu0 %v4243
      %4331 = vmatprep.subr.bf16.mxu0 %v4242
      %4332 = vmatpush1.bf16.msra.mxu0 %v4241
      %4333 = vmatprep.subr.bf16.mxu0 %v4240
      %4334 = vmatpush1.bf16.msra.mxu0 %v4239
      %4335 = vmatprep.subr.bf16.mxu0 %v4238
      %4336 = vmatpush1.bf16.msra.mxu0 %v4237
      %4337 = vmatprep.subr.bf16.mxu0 %v4236
      %4338 = vmatpush1.bf16.msra.mxu0 %v4235
      %4339 = vmatprep.subr.bf16.mxu0 %v4234
      %4340 = vmatpush1.bf16.msra.mxu0 %v4233
      %4341 = vmatprep.subr.bf16.mxu0 %v4232
      %4342 = vmatpush1.bf16.msra.mxu0 %v4231
      %4343 = vmatprep.subr.bf16.mxu0 %v4262
      %4344 = vmatpush2.bf16.msra.mxu0 %v4261
      %4345 = vmatprep.subr.bf16.mxu0 %v4260
      %4346 = vmatpush2.bf16.msra.mxu0 %v4259
      %4347 = vmatprep.subr.bf16.mxu0 %v4258
      %4348 = vmatpush2.bf16.msra.mxu0 %v4257
      %4349 = vmatprep.subr.bf16.mxu0 %v4256
      %4350 = vmatpush2.bf16.msra.mxu0 %v4255
      %4351 = vmatprep.subr.bf16.mxu0 %v4254
      %4352 = vmatpush2.bf16.msra.mxu0 %v4253
      %4353 = vmatprep.subr.bf16.mxu0 %v4252
      %4354 = vmatpush2.bf16.msra.mxu0 %v4251
      %4355 = vmatprep.subr.bf16.mxu0 %v4250
      %4356 = vmatpush2.bf16.msra.mxu0 %v4249
      %4357 = vmatprep.subr.bf16.mxu0 %v4248
      %4358 = vmatpush2.bf16.msra.mxu0 %v4247
      %4359 = vmatprep.mubr.bf16.mxu0 %v4052
      %4360 = vmatmul.mubr.bf16.gmra.mxu0 %v4051
      %v4361 = vpop.f32.mrf.mxu0
      %v4362 = vadd.f32 0.0, %v4361
      %v4363 = vpop.f32.mrf.mxu0
      %v4364 = vadd.f32 0.0, %v4363
      %v4365 = vpop.f32.mrf.mxu0
      %v4366 = vadd.f32 0.0, %v4365
      %v4367 = vpop.f32.mrf.mxu0
      %v4368 = vadd.f32 0.0, %v4367
      %4369 = vmatprep.mubr.bf16.mxu0 %v4055
      %4370 = vmatmul.mubr.bf16.gmra.mxu0 %v4054
      %v4371 = vpop.f32.mrf.mxu0
      %v4372 = vadd.f32 0.0, %v4371
      %v4373 = vpop.f32.mrf.mxu0
      %v4374 = vadd.f32 0.0, %v4373
      %v4375 = vpop.f32.mrf.mxu0
      %v4376 = vadd.f32 0.0, %v4375
      %v4377 = vpop.f32.mrf.mxu0
      %v4378 = vadd.f32 0.0, %v4377
      %4379 = vmatprep.mubr.bf16.mxu0 %v4058
      %4380 = vmatmul.mubr.bf16.gmra.mxu0 %v4057
      %v4381 = vpop.f32.mrf.mxu0
      %v4382 = vadd.f32 0.0, %v4381
      %v4383 = vpop.f32.mrf.mxu0
      %v4384 = vadd.f32 0.0, %v4383
      %v4385 = vpop.f32.mrf.mxu0
      %v4386 = vadd.f32 0.0, %v4385
      %v4387 = vpop.f32.mrf.mxu0
      %v4388 = vadd.f32 0.0, %v4387
      %4389 = vmatprep.mubr.bf16.mxu0 %v4061
      %4390 = vmatmul.mubr.bf16.gmra.mxu0 %v4060
      %v4391 = vpop.f32.mrf.mxu0
      %v4392 = vadd.f32 0.0, %v4391
      %v4393 = vpop.f32.mrf.mxu0
      %v4394 = vadd.f32 0.0, %v4393
      %v4395 = vpop.f32.mrf.mxu0
      %v4396 = vadd.f32 0.0, %v4395
      %v4397 = vpop.f32.mrf.mxu0
      %v4398 = vadd.f32 0.0, %v4397
      %4399 = vmatprep.mubr.bf16.mxu0 %v4064
      %4400 = vmatmul.mubr.bf16.gmra.mxu0 %v4063
      %v4401 = vpop.f32.mrf.mxu0
      %v4402 = vadd.f32 0.0, %v4401
      %v4403 = vpop.f32.mrf.mxu0
      %v4404 = vadd.f32 0.0, %v4403
      %v4405 = vpop.f32.mrf.mxu0
      %v4406 = vadd.f32 0.0, %v4405
      %v4407 = vpop.f32.mrf.mxu0
      %v4408 = vadd.f32 0.0, %v4407
      %4409 = vmatprep.mubr.bf16.mxu0 %v4067
      %4410 = vmatmul.mubr.bf16.gmra.mxu0 %v4066
      %v4411 = vpop.f32.mrf.mxu0
      %v4412 = vadd.f32 0.0, %v4411
      %v4413 = vpop.f32.mrf.mxu0
      %v4414 = vadd.f32 0.0, %v4413
      %v4415 = vpop.f32.mrf.mxu0
      %v4416 = vadd.f32 0.0, %v4415
      %v4417 = vpop.f32.mrf.mxu0
      %v4418 = vadd.f32 0.0, %v4417
      %4419 = vdwg.mxu0
      %4420 = vmatprep.subr.bf16.mxu0 %v4278
      %4421 = vmatpush1.bf16.msra.mxu0 %v4277
      %4422 = vmatprep.subr.bf16.mxu0 %v4276
      %4423 = vmatpush1.bf16.msra.mxu0 %v4275
      %4424 = vmatprep.subr.bf16.mxu0 %v4274
      %4425 = vmatpush1.bf16.msra.mxu0 %v4273
      %4426 = vmatprep.subr.bf16.mxu0 %v4272
      %4427 = vmatpush1.bf16.msra.mxu0 %v4271
      %4428 = vmatprep.subr.bf16.mxu0 %v4270
      %4429 = vmatpush1.bf16.msra.mxu0 %v4269
      %4430 = vmatprep.subr.bf16.mxu0 %v4268
      %4431 = vmatpush1.bf16.msra.mxu0 %v4267
      %4432 = vmatprep.subr.bf16.mxu0 %v4266
      %4433 = vmatpush1.bf16.msra.mxu0 %v4265
      %4434 = vmatprep.subr.bf16.mxu0 %v4264
      %4435 = vmatpush1.bf16.msra.mxu0 %v4263
      %4436 = vmatprep.subr.bf16.mxu0 0
      %4437 = vmatpush2.bf16.msra.mxu0 0
      %4438 = vmatprep.subr.bf16.mxu0 0
      %4439 = vmatpush2.bf16.msra.mxu0 0
      %4440 = vmatprep.subr.bf16.mxu0 0
      %4441 = vmatpush2.bf16.msra.mxu0 0
      %4442 = vmatprep.subr.bf16.mxu0 0
      %4443 = vmatpush2.bf16.msra.mxu0 0
      %4444 = vmatprep.subr.bf16.mxu0 0
      %4445 = vmatpush2.bf16.msra.mxu0 0
      %4446 = vmatprep.subr.bf16.mxu0 0
      %4447 = vmatpush2.bf16.msra.mxu0 0
      %4448 = vmatprep.subr.bf16.mxu0 0
      %4449 = vmatpush2.bf16.msra.mxu0 0
      %4450 = vmatprep.subr.bf16.mxu0 0
      %4451 = vmatpush2.bf16.msra.mxu0 0
      %4452 = vmatprep.mubr.bf16.mxu0 0
      %4453 = vmatmul.mubr.bf16.gmra.mxu0 %v4053
      %v4454 = vpop.f32.mrf.mxu0
      %v4455 = vadd.f32 %v4362, %v4454
      %v4456 = vpop.f32.mrf.mxu0
      %v4457 = vadd.f32 %v4364, %v4456
      %v4458 = vpop.f32.mrf.mxu0
      %v4459 = vadd.f32 %v4366, %v4458
      %v4460 = vpop.f32.mrf.mxu0
      %v4461 = vadd.f32 %v4368, %v4460
      %4462 = vmatprep.mubr.bf16.mxu0 0
      %4463 = vmatmul.mubr.bf16.gmra.mxu0 %v4056
      %v4464 = vpop.f32.mrf.mxu0
      %v4465 = vadd.f32 %v4372, %v4464
      %v4466 = vpop.f32.mrf.mxu0
      %v4467 = vadd.f32 %v4374, %v4466
      %v4468 = vpop.f32.mrf.mxu0
      %v4469 = vadd.f32 %v4376, %v4468
      %v4470 = vpop.f32.mrf.mxu0
      %v4471 = vadd.f32 %v4378, %v4470
      %4472 = vmatprep.mubr.bf16.mxu0 0
      %4473 = vmatmul.mubr.bf16.gmra.mxu0 %v4059
      %v4474 = vpop.f32.mrf.mxu0
      %v4475 = vadd.f32 %v4382, %v4474
      %v4476 = vpop.f32.mrf.mxu0
      %v4477 = vadd.f32 %v4384, %v4476
      %v4478 = vpop.f32.mrf.mxu0
      %v4479 = vadd.f32 %v4386, %v4478
      %v4480 = vpop.f32.mrf.mxu0
      %v4481 = vadd.f32 %v4388, %v4480
      %4482 = vmatprep.mubr.bf16.mxu0 0
      %4483 = vmatmul.mubr.bf16.gmra.mxu0 %v4062
      %v4484 = vpop.f32.mrf.mxu0
      %v4485 = vadd.f32 %v4392, %v4484
      %v4486 = vpop.f32.mrf.mxu0
      %v4487 = vadd.f32 %v4394, %v4486
      %v4488 = vpop.f32.mrf.mxu0
      %v4489 = vadd.f32 %v4396, %v4488
      %v4490 = vpop.f32.mrf.mxu0
      %v4491 = vadd.f32 %v4398, %v4490
      %4492 = vmatprep.mubr.bf16.mxu0 0
      %4493 = vmatmul.mubr.bf16.gmra.mxu0 %v4065
      %v4494 = vpop.f32.mrf.mxu0
      %v4495 = vadd.f32 %v4402, %v4494
      %v4496 = vpop.f32.mrf.mxu0
      %v4497 = vadd.f32 %v4404, %v4496
      %v4498 = vpop.f32.mrf.mxu0
      %v4499 = vadd.f32 %v4406, %v4498
      %v4500 = vpop.f32.mrf.mxu0
      %v4501 = vadd.f32 %v4408, %v4500
      %4502 = vmatprep.mubr.bf16.mxu0 0
      %4503 = vmatmul.mubr.bf16.gmra.mxu0 %v4068
      %v4504 = vpop.f32.mrf.mxu0
      %v4505 = vadd.f32 %v4412, %v4504
      %v4506 = vpop.f32.mrf.mxu0
      %v4507 = vadd.f32 %v4414, %v4506
      %v4508 = vpop.f32.mrf.mxu0
      %v4509 = vadd.f32 %v4416, %v4508
      %v4510 = vpop.f32.mrf.mxu0
      %v4511 = vadd.f32 %v4418, %v4510
      %4512 = vdwg.mxu0
      %v4513 = vadd.f32 %v3894, %v4455
      %v4514 = vadd.f32 %v3895, %v4457
      %v4515 = vadd.f32 %v3896, %v4459
      %v4516 = vadd.f32 %v3897, %v4461
      %v4517 = vadd.f32 %v3898, %v4465
      %v4518 = vadd.f32 %v3899, %v4467
      %v4519 = vadd.f32 %v3900, %v4469
      %v4520 = vadd.f32 %v3901, %v4471
      %v4521 = vadd.f32 %v3902, %v4475
      %v4522 = vadd.f32 %v3903, %v4477
      %v4523 = vadd.f32 %v3904, %v4479
      %v4524 = vadd.f32 %v3905, %v4481
      %v4525 = vadd.f32 %v3906, %v4485
      %v4526 = vadd.f32 %v3907, %v4487
      %v4527 = vadd.f32 %v3908, %v4489
      %v4528 = vadd.f32 %v3909, %v4491
      %v4529 = vadd.f32 %v3910, %v4495
      %v4530 = vadd.f32 %v3911, %v4497
      %v4531 = vadd.f32 %v3912, %v4499
      %v4532 = vadd.f32 %v3913, %v4501
      %v4533 = vadd.f32 %v3914, %v4505
      %v4534 = vadd.f32 %v3915, %v4507
      %v4535 = vadd.f32 %v3916, %v4509
      %v4536 = vadd.f32 %v3917, %v4511
      %v4537 = vld [vmem:[%s300 + $0x48] sm:$0xee]
      %v4538 = vld [vmem:[%s300 + $0x50] sm:$0xe]
      %v4539 = vld [vmem:[%s300 + $0x54] sm:$0xff]
      %v4540 = vld [vmem:[%s300 + $0x5c] sm:$0xf]
      %v4541 = vld [vmem:[%s300 + $0x60] sm:$0xff]
      %v4542 = vld [vmem:[%s300 + $0x68] sm:$0xf]
      %v4543 = vld [vmem:[%s300 + $0x6c] sm:$0xff]
      %v4544 = vld [vmem:[%s300 + $0x74] sm:$0xf]
      %v4545 = vld [vmem:[%s300 + $0x78] sm:$0xff]
      %v4546 = vld [vmem:[%s300 + $0x80] sm:$0xf]
      %v4547 = vld [vmem:[%s300 + $0x84] sm:$0xff]
      %v4548 = vld [vmem:[%s300 + $0x8c] sm:$0xf]
      %v4549 = vld [vmem:[%s300 + $0x90] sm:$0xff]
      %v4550 = vld [vmem:[%s300 + $0x98] sm:$0xf]
      %v4551 = vld [vmem:[%s300 + $0x9c] sm:$0xff]
      %v4552 = vld [vmem:[%s300 + $0xa4] sm:$0xf]
      %v4553 = vld [vmem:[%s300 + $0xa8] sm:$0xff]
      %v4554 = vld [vmem:[%s300 + $0xb0] sm:$0xf]
      %v4555 = vld [vmem:[%s300 + $0xb4] sm:$0xff]
      %v4556 = vld [vmem:[%s300 + $0xbc] sm:$0xf]
      %v4557 = vld [vmem:[%s300 + $0xc0] sm:$0xff]
      %v4558 = vld [vmem:[%s300 + $0xc8] sm:$0xf]
      %v4559 = vld [vmem:[%s300 + $0xcc] sm:$0xff]
      %v4560 = vld [vmem:[%s300 + $0xd4] sm:$0xf]
      %v4561 = vld [vmem:[%s300 + $0xd8] sm:$0x11]
      %v4562 = vld [vmem:[%s300 + $0xe0] sm:$0x1]
      %s4563 = scalar_lea.vmem %s2, 2688
      %v4564 = vld [vmem:[%s4563] sm:$0xff]
      %v4565 = vld [vmem:[%s4563 + $0x8] sm:$0xff]
      %v4566 = vld [vmem:[%s4563 + $0x10] sm:$0xff]
      %v4567 = vld [vmem:[%s4563 + $0x18] sm:$0xff]
      %v4568 = vld [vmem:[%s4563 + $0x20] sm:$0xff]
      %v4569 = vld [vmem:[%s4563 + $0x28] sm:$0xff]
      %v4570 = vld [vmem:[%s4563 + $0x30] sm:$0xff]
      %v4571 = vld [vmem:[%s4563 + $0x38] sm:$0xff]
      %v4572 = vld [vmem:[%s4563 + $0x40] sm:$0xff]
      %v4573 = vld [vmem:[%s4563 + $0x48] sm:$0xff]
      %v4574 = vld [vmem:[%s4563 + $0x50] sm:$0xff]
      %v4575 = vld [vmem:[%s4563 + $0x58] sm:$0xff]
      %v4576 = vld [vmem:[%s4563 + $0x60] sm:$0xff]
      %v4577 = vld [vmem:[%s4563 + $0x68] sm:$0xff]
      %v4578 = vld [vmem:[%s4563 + $0x70] sm:$0xff]
      %v4579 = vld [vmem:[%s4563 + $0x78] sm:$0xff]
      %v4580 = vld [vmem:[%s4563 + $0x80] sm:$0xff]
      %v4581 = vld [vmem:[%s4563 + $0x88] sm:$0xff]
      %v4582 = vld [vmem:[%s4563 + $0x90] sm:$0xff]
      %v4583 = vld [vmem:[%s4563 + $0x98] sm:$0xff]
      %v4584 = vld [vmem:[%s4563 + $0xa0] sm:$0xff]
      %v4585 = vld [vmem:[%s4563 + $0xa8] sm:$0xff]
      %v4586 = vld [vmem:[%s4563 + $0xb0] sm:$0xff]
      %v4587 = vld [vmem:[%s4563 + $0xb8] sm:$0xff]
      %v4588 = vld [vmem:[%s4563 + $0xc0] sm:$0xff]
      %v4589 = vld [vmem:[%s4563 + $0xc8] sm:$0xff]
      %v4590 = vld [vmem:[%s4563 + $0xd0] sm:$0xff]
      %v4591 = vld [vmem:[%s4563 + $0xd8] sm:$0xff]
      %v4592 = vld [vmem:[%s4563 + $0xe0] sm:$0xff]
      %v4593 = vld [vmem:[%s4563 + $0xe8] sm:$0xff]
      %v4594 = vld [vmem:[%s4563 + $0xf0] sm:$0xff]
      %v4595 = vld [vmem:[%s4563 + $0xf8] sm:$0xff]
      %v4596 = vld [vmem:[%s4563 + $0x100] sm:$0xff]
      %v4597 = vld [vmem:[%s4563 + $0x108] sm:$0xff]
      %v4598 = vld [vmem:[%s4563 + $0x110] sm:$0xff]
      %v4599 = vld [vmem:[%s4563 + $0x118] sm:$0xff]
      %v4600 = vld [vmem:[%s4563 + $0x120] sm:$0xff]
      %v4601 = vld [vmem:[%s4563 + $0x128] sm:$0xff]
      %v4602 = vld [vmem:[%s4563 + $0x130] sm:$0xff]
      %v4603 = vld [vmem:[%s4563 + $0x138] sm:$0xff]
      %v4604 = vld [vmem:[%s4563 + $0x140] sm:$0xff]
      %v4605 = vld [vmem:[%s4563 + $0x148] sm:$0xff]
      %v4606 = vld [vmem:[%s4563 + $0x150] sm:$0xff]
      %v4607 = vld [vmem:[%s4563 + $0x158] sm:$0xff]
      %v4608 = vld [vmem:[%s4563 + $0x160] sm:$0xff]
      %v4609 = vld [vmem:[%s4563 + $0x168] sm:$0xff]
      %v4610 = vld [vmem:[%s4563 + $0x170] sm:$0xff]
      %v4611 = vld [vmem:[%s4563 + $0x178] sm:$0xff]
      %v4638 = vunpack.c.l.b16 %v4537
      %v4639 = vunpack.c.h.b16 %v4537
      %v4640 = vunpack.c.l.b16 %v4538
      %v4641 = vunpack.c.l.b16 %v4539
      %v4642 = vunpack.c.h.b16 %v4539
      %v4643 = vunpack.c.l.b16 %v4540
      %v4644 = vunpack.c.l.b16 %v4541
      %v4645 = vunpack.c.h.b16 %v4541
      %v4646 = vunpack.c.l.b16 %v4542
      %v4647 = vunpack.c.l.b16 %v4543
      %v4648 = vunpack.c.h.b16 %v4543
      %v4649 = vunpack.c.l.b16 %v4544
      %v4650 = vunpack.c.l.b16 %v4545
      %v4651 = vunpack.c.h.b16 %v4545
      %v4652 = vunpack.c.l.b16 %v4546
      %v4653 = vunpack.c.l.b16 %v4547
      %v4654 = vunpack.c.h.b16 %v4547
      %v4655 = vunpack.c.l.b16 %v4548
      %v4656 = vunpack.c.l.b16 %v4549
      %v4657 = vunpack.c.h.b16 %v4549
      %v4658 = vunpack.c.l.b16 %v4550
      %v4659 = vunpack.c.l.b16 %v4551
      %v4660 = vunpack.c.h.b16 %v4551
      %v4661 = vunpack.c.l.b16 %v4552
      %v4662 = vunpack.c.l.b16 %v4553
      %v4663 = vunpack.c.h.b16 %v4553
      %v4664 = vunpack.c.l.b16 %v4554
      %v4665 = vunpack.c.l.b16 %v4555
      %v4666 = vunpack.c.h.b16 %v4555
      %v4667 = vunpack.c.l.b16 %v4556
      %v4668 = vunpack.c.l.b16 %v4557
      %v4669 = vunpack.c.h.b16 %v4557
      %v4670 = vunpack.c.l.b16 %v4558
      %v4671 = vunpack.c.l.b16 %v4559
      %v4672 = vunpack.c.h.b16 %v4559
      %v4673 = vunpack.c.l.b16 %v4560
      %v4674 = vunpack.c.l.b16 %v4561
      %v4675 = vunpack.c.h.b16 %v4561
      %v4676 = vunpack.c.l.b16 %v4562
      %v4677 = vpack.c.b16 %v4641, %v4638
      %v4678 = vpack.c.b16 %v4642, %v4639
      %v4679 = vpack.c.b16 %v4643, %v4640
      %v4680 = vpack.c.b16 %v4647, %v4644
      %v4681 = vpack.c.b16 %v4648, %v4645
      %v4682 = vpack.c.b16 %v4649, %v4646
      %v4683 = vpack.c.b16 %v4653, %v4650
      %v4684 = vpack.c.b16 %v4654, %v4651
      %v4685 = vpack.c.b16 %v4655, %v4652
      %v4686 = vpack.c.b16 %v4659, %v4656
      %v4687 = vpack.c.b16 %v4660, %v4657
      %v4688 = vpack.c.b16 %v4661, %v4658
      %v4689 = vpack.c.b16 %v4665, %v4662
      %v4690 = vpack.c.b16 %v4666, %v4663
      %v4691 = vpack.c.b16 %v4667, %v4664
      %v4692 = vpack.c.b16 %v4671, %v4668
      %v4693 = vpack.c.b16 %v4672, %v4669
      %v4694 = vpack.c.b16 %v4673, %v4670
      %v4695 = vpack.c.b16 %v4674, %v4674
      %v4696 = vpack.c.b16 %v4675, %v4675
      %v4697 = vpack.c.b16 %v4676, %v4676
      %v4698 = vrot.slane %v4677, 1
      %v4699 = vrot.slane %v4680, 1
      %v4700 = vsel %vm542, %v4698, %v4699
      %v4701 = vrot.slane %v4678, 1
      %v4702 = vrot.slane %v4681, 1
      %v4703 = vsel %vm542, %v4701, %v4702
      %v4704 = vrot.slane %v4679, 1
      %v4705 = vrot.slane %v4682, 1
      %v4706 = vsel %vm542, %v4704, %v4705
      %v4707 = vrot.slane %v4683, 1
      %v4708 = vsel %vm542, %v4699, %v4707
      %v4709 = vrot.slane %v4684, 1
      %v4710 = vsel %vm542, %v4702, %v4709
      %v4711 = vrot.slane %v4685, 1
      %v4712 = vsel %vm542, %v4705, %v4711
      %v4713 = vrot.slane %v4686, 1
      %v4714 = vsel %vm542, %v4707, %v4713
      %v4715 = vrot.slane %v4687, 1
      %v4716 = vsel %vm542, %v4709, %v4715
      %v4717 = vrot.slane %v4688, 1
      %v4718 = vsel %vm542, %v4711, %v4717
      %v4719 = vrot.slane %v4689, 1
      %v4720 = vsel %vm542, %v4713, %v4719
      %v4721 = vrot.slane %v4690, 1
      %v4722 = vsel %vm542, %v4715, %v4721
      %v4723 = vrot.slane %v4691, 1
      %v4724 = vsel %vm542, %v4717, %v4723
      %v4725 = vrot.slane %v4692, 1
      %v4726 = vsel %vm542, %v4719, %v4725
      %v4727 = vrot.slane %v4693, 1
      %v4728 = vsel %vm542, %v4721, %v4727
      %v4729 = vrot.slane %v4694, 1
      %v4730 = vsel %vm542, %v4723, %v4729
      %v4731 = vrot.slane %v4695, 1
      %v4732 = vsel %vm542, %v4725, %v4731
      %v4733 = vrot.slane %v4696, 1
      %v4734 = vsel %vm542, %v4727, %v4733
      %v4735 = vrot.slane %v4697, 1
      %v4736 = vsel %vm542, %v4729, %v4735
      %v4803 = vunpack.c.l.b16 %v4564
      %v4804 = vunpack.c.h.b16 %v4564
      %v4805 = vunpack.c.l.b16 %v4565
      %v4806 = vunpack.c.h.b16 %v4565
      %v4807 = vunpack.c.l.b16 %v4566
      %v4808 = vunpack.c.h.b16 %v4566
      %v4809 = vunpack.c.l.b16 %v4567
      %v4810 = vunpack.c.h.b16 %v4567
      %v4811 = vunpack.c.l.b16 %v4568
      %v4812 = vunpack.c.h.b16 %v4568
      %v4813 = vunpack.c.l.b16 %v4569
      %v4814 = vunpack.c.h.b16 %v4569
      %v4815 = vunpack.c.l.b16 %v4570
      %v4816 = vunpack.c.h.b16 %v4570
      %v4817 = vunpack.c.l.b16 %v4571
      %v4818 = vunpack.c.h.b16 %v4571
      %v4819 = vunpack.c.l.b16 %v4572
      %v4820 = vunpack.c.h.b16 %v4572
      %v4821 = vunpack.c.l.b16 %v4573
      %v4822 = vunpack.c.h.b16 %v4573
      %v4823 = vunpack.c.l.b16 %v4574
      %v4824 = vunpack.c.h.b16 %v4574
      %v4825 = vunpack.c.l.b16 %v4575
      %v4826 = vunpack.c.h.b16 %v4575
      %v4827 = vunpack.c.l.b16 %v4576
      %v4828 = vunpack.c.h.b16 %v4576
      %v4829 = vunpack.c.l.b16 %v4577
      %v4830 = vunpack.c.h.b16 %v4577
      %v4831 = vunpack.c.l.b16 %v4578
      %v4832 = vunpack.c.h.b16 %v4578
      %v4833 = vunpack.c.l.b16 %v4579
      %v4834 = vunpack.c.h.b16 %v4579
      %v4835 = vunpack.c.l.b16 %v4580
      %v4836 = vunpack.c.h.b16 %v4580
      %v4837 = vunpack.c.l.b16 %v4581
      %v4838 = vunpack.c.h.b16 %v4581
      %v4839 = vunpack.c.l.b16 %v4582
      %v4840 = vunpack.c.h.b16 %v4582
      %v4841 = vunpack.c.l.b16 %v4583
      %v4842 = vunpack.c.h.b16 %v4583
      %v4843 = vunpack.c.l.b16 %v4584
      %v4844 = vunpack.c.h.b16 %v4584
      %v4845 = vunpack.c.l.b16 %v4585
      %v4846 = vunpack.c.h.b16 %v4585
      %v4847 = vunpack.c.l.b16 %v4586
      %v4848 = vunpack.c.h.b16 %v4586
      %v4849 = vunpack.c.l.b16 %v4587
      %v4850 = vunpack.c.h.b16 %v4587
      %v4851 = vunpack.c.l.b16 %v4588
      %v4852 = vunpack.c.h.b16 %v4588
      %v4853 = vunpack.c.l.b16 %v4589
      %v4854 = vunpack.c.h.b16 %v4589
      %v4855 = vunpack.c.l.b16 %v4590
      %v4856 = vunpack.c.h.b16 %v4590
      %v4857 = vunpack.c.l.b16 %v4591
      %v4858 = vunpack.c.h.b16 %v4591
      %v4859 = vunpack.c.l.b16 %v4592
      %v4860 = vunpack.c.h.b16 %v4592
      %v4861 = vunpack.c.l.b16 %v4593
      %v4862 = vunpack.c.h.b16 %v4593
      %v4863 = vunpack.c.l.b16 %v4594
      %v4864 = vunpack.c.h.b16 %v4594
      %v4865 = vunpack.c.l.b16 %v4595
      %v4866 = vunpack.c.h.b16 %v4595
      %v4867 = vunpack.c.l.b16 %v4596
      %v4868 = vunpack.c.h.b16 %v4596
      %v4869 = vunpack.c.l.b16 %v4597
      %v4870 = vunpack.c.h.b16 %v4597
      %v4871 = vunpack.c.l.b16 %v4598
      %v4872 = vunpack.c.h.b16 %v4598
      %v4873 = vunpack.c.l.b16 %v4599
      %v4874 = vunpack.c.h.b16 %v4599
      %v4875 = vunpack.c.l.b16 %v4600
      %v4876 = vunpack.c.h.b16 %v4600
      %v4877 = vunpack.c.l.b16 %v4601
      %v4878 = vunpack.c.h.b16 %v4601
      %v4879 = vunpack.c.l.b16 %v4602
      %v4880 = vunpack.c.h.b16 %v4602
      %v4881 = vunpack.c.l.b16 %v4603
      %v4882 = vunpack.c.h.b16 %v4603
      %v4883 = vunpack.c.l.b16 %v4604
      %v4884 = vunpack.c.h.b16 %v4604
      %v4885 = vunpack.c.l.b16 %v4605
      %v4886 = vunpack.c.h.b16 %v4605
      %v4887 = vunpack.c.l.b16 %v4606
      %v4888 = vunpack.c.h.b16 %v4606
      %v4889 = vunpack.c.l.b16 %v4607
      %v4890 = vunpack.c.h.b16 %v4607
      %v4891 = vunpack.c.l.b16 %v4608
      %v4892 = vunpack.c.h.b16 %v4608
      %v4893 = vunpack.c.l.b16 %v4609
      %v4894 = vunpack.c.h.b16 %v4609
      %v4895 = vunpack.c.l.b16 %v4610
      %v4896 = vunpack.c.h.b16 %v4610
      %v4897 = vunpack.c.l.b16 %v4611
      %v4898 = vunpack.c.h.b16 %v4611
      %v4899 = vpack.c.b16 %v4805, %v4803
      %v4900 = vpack.c.b16 %v4806, %v4804
      %v4901 = vpack.c.b16 %v4809, %v4807
      %v4902 = vpack.c.b16 %v4810, %v4808
      %v4903 = vpack.c.b16 %v4813, %v4811
      %v4904 = vpack.c.b16 %v4814, %v4812
      %v4905 = vpack.c.b16 %v4817, %v4815
      %v4906 = vpack.c.b16 %v4818, %v4816
      %v4907 = vpack.c.b16 %v4821, %v4819
      %v4908 = vpack.c.b16 %v4822, %v4820
      %v4909 = vpack.c.b16 %v4825, %v4823
      %v4910 = vpack.c.b16 %v4826, %v4824
      %v4911 = vpack.c.b16 %v4829, %v4827
      %v4912 = vpack.c.b16 %v4830, %v4828
      %v4913 = vpack.c.b16 %v4833, %v4831
      %v4914 = vpack.c.b16 %v4834, %v4832
      %v4915 = vpack.c.b16 %v4837, %v4835
      %v4916 = vpack.c.b16 %v4838, %v4836
      %v4917 = vpack.c.b16 %v4841, %v4839
      %v4918 = vpack.c.b16 %v4842, %v4840
      %v4919 = vpack.c.b16 %v4845, %v4843
      %v4920 = vpack.c.b16 %v4846, %v4844
      %v4921 = vpack.c.b16 %v4849, %v4847
      %v4922 = vpack.c.b16 %v4850, %v4848
      %v4923 = vpack.c.b16 %v4853, %v4851
      %v4924 = vpack.c.b16 %v4854, %v4852
      %v4925 = vpack.c.b16 %v4857, %v4855
      %v4926 = vpack.c.b16 %v4858, %v4856
      %v4927 = vpack.c.b16 %v4861, %v4859
      %v4928 = vpack.c.b16 %v4862, %v4860
      %v4929 = vpack.c.b16 %v4865, %v4863
      %v4930 = vpack.c.b16 %v4866, %v4864
      %v4931 = vpack.c.b16 %v4869, %v4867
      %v4932 = vpack.c.b16 %v4870, %v4868
      %v4933 = vpack.c.b16 %v4873, %v4871
      %v4934 = vpack.c.b16 %v4874, %v4872
      %v4935 = vpack.c.b16 %v4877, %v4875
      %v4936 = vpack.c.b16 %v4878, %v4876
      %v4937 = vpack.c.b16 %v4881, %v4879
      %v4938 = vpack.c.b16 %v4882, %v4880
      %v4939 = vpack.c.b16 %v4885, %v4883
      %v4940 = vpack.c.b16 %v4886, %v4884
      %v4941 = vpack.c.b16 %v4889, %v4887
      %v4942 = vpack.c.b16 %v4890, %v4888
      %v4943 = vpack.c.b16 %v4893, %v4891
      %v4944 = vpack.c.b16 %v4894, %v4892
      %v4945 = vpack.c.b16 %v4897, %v4895
      %v4946 = vpack.c.b16 %v4898, %v4896
      %4995 = vmatprep.subr.bf16.mxu0 %v4914
      %4996 = vmatpush1.bf16.msra.mxu0 %v4913
      %4997 = vmatprep.subr.bf16.mxu0 %v4912
      %4998 = vmatpush1.bf16.msra.mxu0 %v4911
      %4999 = vmatprep.subr.bf16.mxu0 %v4910
      %5000 = vmatpush1.bf16.msra.mxu0 %v4909
      %5001 = vmatprep.subr.bf16.mxu0 %v4908
      %5002 = vmatpush1.bf16.msra.mxu0 %v4907
      %5003 = vmatprep.subr.bf16.mxu0 %v4906
      %5004 = vmatpush1.bf16.msra.mxu0 %v4905
      %5005 = vmatprep.subr.bf16.mxu0 %v4904
      %5006 = vmatpush1.bf16.msra.mxu0 %v4903
      %5007 = vmatprep.subr.bf16.mxu0 %v4902
      %5008 = vmatpush1.bf16.msra.mxu0 %v4901
      %5009 = vmatprep.subr.bf16.mxu0 %v4900
      %5010 = vmatpush1.bf16.msra.mxu0 %v4899
      %5011 = vmatprep.subr.bf16.mxu0 %v4930
      %5012 = vmatpush2.bf16.msra.mxu0 %v4929
      %5013 = vmatprep.subr.bf16.mxu0 %v4928
      %5014 = vmatpush2.bf16.msra.mxu0 %v4927
      %5015 = vmatprep.subr.bf16.mxu0 %v4926
      %5016 = vmatpush2.bf16.msra.mxu0 %v4925
      %5017 = vmatprep.subr.bf16.mxu0 %v4924
      %5018 = vmatpush2.bf16.msra.mxu0 %v4923
      %5019 = vmatprep.subr.bf16.mxu0 %v4922
      %5020 = vmatpush2.bf16.msra.mxu0 %v4921
      %5021 = vmatprep.subr.bf16.mxu0 %v4920
      %5022 = vmatpush2.bf16.msra.mxu0 %v4919
      %5023 = vmatprep.subr.bf16.mxu0 %v4918
      %5024 = vmatpush2.bf16.msra.mxu0 %v4917
      %5025 = vmatprep.subr.bf16.mxu0 %v4916
      %5026 = vmatpush2.bf16.msra.mxu0 %v4915
      %5027 = vmatprep.mubr.bf16.mxu0 %v4703
      %5028 = vmatmul.mubr.bf16.gmra.mxu0 %v4700
      %v5029 = vpop.f32.mrf.mxu0
      %v5030 = vadd.f32 0.0, %v5029
      %v5031 = vpop.f32.mrf.mxu0
      %v5032 = vadd.f32 0.0, %v5031
      %v5033 = vpop.f32.mrf.mxu0
      %v5034 = vadd.f32 0.0, %v5033
      %v5035 = vpop.f32.mrf.mxu0
      %v5036 = vadd.f32 0.0, %v5035
      %5037 = vmatprep.mubr.bf16.mxu0 %v4710
      %5038 = vmatmul.mubr.bf16.gmra.mxu0 %v4708
      %v5039 = vpop.f32.mrf.mxu0
      %v5040 = vadd.f32 0.0, %v5039
      %v5041 = vpop.f32.mrf.mxu0
      %v5042 = vadd.f32 0.0, %v5041
      %v5043 = vpop.f32.mrf.mxu0
      %v5044 = vadd.f32 0.0, %v5043
      %v5045 = vpop.f32.mrf.mxu0
      %v5046 = vadd.f32 0.0, %v5045
      %5047 = vmatprep.mubr.bf16.mxu0 %v4716
      %5048 = vmatmul.mubr.bf16.gmra.mxu0 %v4714
      %v5049 = vpop.f32.mrf.mxu0
      %v5050 = vadd.f32 0.0, %v5049
      %v5051 = vpop.f32.mrf.mxu0
      %v5052 = vadd.f32 0.0, %v5051
      %v5053 = vpop.f32.mrf.mxu0
      %v5054 = vadd.f32 0.0, %v5053
      %v5055 = vpop.f32.mrf.mxu0
      %v5056 = vadd.f32 0.0, %v5055
      %5057 = vmatprep.mubr.bf16.mxu0 %v4722
      %5058 = vmatmul.mubr.bf16.gmra.mxu0 %v4720
      %v5059 = vpop.f32.mrf.mxu0
      %v5060 = vadd.f32 0.0, %v5059
      %v5061 = vpop.f32.mrf.mxu0
      %v5062 = vadd.f32 0.0, %v5061
      %v5063 = vpop.f32.mrf.mxu0
      %v5064 = vadd.f32 0.0, %v5063
      %v5065 = vpop.f32.mrf.mxu0
      %v5066 = vadd.f32 0.0, %v5065
      %5067 = vmatprep.mubr.bf16.mxu0 %v4728
      %5068 = vmatmul.mubr.bf16.gmra.mxu0 %v4726
      %v5069 = vpop.f32.mrf.mxu0
      %v5070 = vadd.f32 0.0, %v5069
      %v5071 = vpop.f32.mrf.mxu0
      %v5072 = vadd.f32 0.0, %v5071
      %v5073 = vpop.f32.mrf.mxu0
      %v5074 = vadd.f32 0.0, %v5073
      %v5075 = vpop.f32.mrf.mxu0
      %v5076 = vadd.f32 0.0, %v5075
      %5077 = vmatprep.mubr.bf16.mxu0 %v4734
      %5078 = vmatmul.mubr.bf16.gmra.mxu0 %v4732
      %v5079 = vpop.f32.mrf.mxu0
      %v5080 = vadd.f32 0.0, %v5079
      %v5081 = vpop.f32.mrf.mxu0
      %v5082 = vadd.f32 0.0, %v5081
      %v5083 = vpop.f32.mrf.mxu0
      %v5084 = vadd.f32 0.0, %v5083
      %v5085 = vpop.f32.mrf.mxu0
      %v5086 = vadd.f32 0.0, %v5085
      %5087 = vdwg.mxu0
      %5088 = vmatprep.subr.bf16.mxu0 %v4946
      %5089 = vmatpush1.bf16.msra.mxu0 %v4945
      %5090 = vmatprep.subr.bf16.mxu0 %v4944
      %5091 = vmatpush1.bf16.msra.mxu0 %v4943
      %5092 = vmatprep.subr.bf16.mxu0 %v4942
      %5093 = vmatpush1.bf16.msra.mxu0 %v4941
      %5094 = vmatprep.subr.bf16.mxu0 %v4940
      %5095 = vmatpush1.bf16.msra.mxu0 %v4939
      %5096 = vmatprep.subr.bf16.mxu0 %v4938
      %5097 = vmatpush1.bf16.msra.mxu0 %v4937
      %5098 = vmatprep.subr.bf16.mxu0 %v4936
      %5099 = vmatpush1.bf16.msra.mxu0 %v4935
      %5100 = vmatprep.subr.bf16.mxu0 %v4934
      %5101 = vmatpush1.bf16.msra.mxu0 %v4933
      %5102 = vmatprep.subr.bf16.mxu0 %v4932
      %5103 = vmatpush1.bf16.msra.mxu0 %v4931
      %5104 = vmatprep.subr.bf16.mxu0 0
      %5105 = vmatpush2.bf16.msra.mxu0 0
      %5106 = vmatprep.subr.bf16.mxu0 0
      %5107 = vmatpush2.bf16.msra.mxu0 0
      %5108 = vmatprep.subr.bf16.mxu0 0
      %5109 = vmatpush2.bf16.msra.mxu0 0
      %5110 = vmatprep.subr.bf16.mxu0 0
      %5111 = vmatpush2.bf16.msra.mxu0 0
      %5112 = vmatprep.subr.bf16.mxu0 0
      %5113 = vmatpush2.bf16.msra.mxu0 0
      %5114 = vmatprep.subr.bf16.mxu0 0
      %5115 = vmatpush2.bf16.msra.mxu0 0
      %5116 = vmatprep.subr.bf16.mxu0 0
      %5117 = vmatpush2.bf16.msra.mxu0 0
      %5118 = vmatprep.subr.bf16.mxu0 0
      %5119 = vmatpush2.bf16.msra.mxu0 0
      %5120 = vmatprep.mubr.bf16.mxu0 0
      %5121 = vmatmul.mubr.bf16.gmra.mxu0 %v4706
      %v5122 = vpop.f32.mrf.mxu0
      %v5123 = vadd.f32 %v5030, %v5122
      %v5124 = vpop.f32.mrf.mxu0
      %v5125 = vadd.f32 %v5032, %v5124
      %v5126 = vpop.f32.mrf.mxu0
      %v5127 = vadd.f32 %v5034, %v5126
      %v5128 = vpop.f32.mrf.mxu0
      %v5129 = vadd.f32 %v5036, %v5128
      %5130 = vmatprep.mubr.bf16.mxu0 0
      %5131 = vmatmul.mubr.bf16.gmra.mxu0 %v4712
      %v5132 = vpop.f32.mrf.mxu0
      %v5133 = vadd.f32 %v5040, %v5132
      %v5134 = vpop.f32.mrf.mxu0
      %v5135 = vadd.f32 %v5042, %v5134
      %v5136 = vpop.f32.mrf.mxu0
      %v5137 = vadd.f32 %v5044, %v5136
      %v5138 = vpop.f32.mrf.mxu0
      %v5139 = vadd.f32 %v5046, %v5138
      %5140 = vmatprep.mubr.bf16.mxu0 0
      %5141 = vmatmul.mubr.bf16.gmra.mxu0 %v4718
      %v5142 = vpop.f32.mrf.mxu0
      %v5143 = vadd.f32 %v5050, %v5142
      %v5144 = vpop.f32.mrf.mxu0
      %v5145 = vadd.f32 %v5052, %v5144
      %v5146 = vpop.f32.mrf.mxu0
      %v5147 = vadd.f32 %v5054, %v5146
      %v5148 = vpop.f32.mrf.mxu0
      %v5149 = vadd.f32 %v5056, %v5148
      %5150 = vmatprep.mubr.bf16.mxu0 0
      %5151 = vmatmul.mubr.bf16.gmra.mxu0 %v4724
      %v5152 = vpop.f32.mrf.mxu0
      %v5153 = vadd.f32 %v5060, %v5152
      %v5154 = vpop.f32.mrf.mxu0
      %v5155 = vadd.f32 %v5062, %v5154
      %v5156 = vpop.f32.mrf.mxu0
      %v5157 = vadd.f32 %v5064, %v5156
      %v5158 = vpop.f32.mrf.mxu0
      %v5159 = vadd.f32 %v5066, %v5158
      %5160 = vmatprep.mubr.bf16.mxu0 0
      %5161 = vmatmul.mubr.bf16.gmra.mxu0 %v4730
      %v5162 = vpop.f32.mrf.mxu0
      %v5163 = vadd.f32 %v5070, %v5162
      %v5164 = vpop.f32.mrf.mxu0
      %v5165 = vadd.f32 %v5072, %v5164
      %v5166 = vpop.f32.mrf.mxu0
      %v5167 = vadd.f32 %v5074, %v5166
      %v5168 = vpop.f32.mrf.mxu0
      %v5169 = vadd.f32 %v5076, %v5168
      %5170 = vmatprep.mubr.bf16.mxu0 0
      %5171 = vmatmul.mubr.bf16.gmra.mxu0 %v4736
      %v5172 = vpop.f32.mrf.mxu0
      %v5173 = vadd.f32 %v5080, %v5172
      %v5174 = vpop.f32.mrf.mxu0
      %v5175 = vadd.f32 %v5082, %v5174
      %v5176 = vpop.f32.mrf.mxu0
      %v5177 = vadd.f32 %v5084, %v5176
      %v5178 = vpop.f32.mrf.mxu0
      %v5179 = vadd.f32 %v5086, %v5178
      %5180 = vdwg.mxu0
      %v5181 = vadd.f32 %v4513, %v5123
      %v5182 = vadd.f32 %v4514, %v5125
      %v5183 = vadd.f32 %v4515, %v5127
      %v5184 = vadd.f32 %v4516, %v5129
      %v5185 = vadd.f32 %v4517, %v5133
      %v5186 = vadd.f32 %v4518, %v5135
      %v5187 = vadd.f32 %v4519, %v5137
      %v5188 = vadd.f32 %v4520, %v5139
      %v5189 = vadd.f32 %v4521, %v5143
      %v5190 = vadd.f32 %v4522, %v5145
      %v5191 = vadd.f32 %v4523, %v5147
      %v5192 = vadd.f32 %v4524, %v5149
      %v5193 = vadd.f32 %v4525, %v5153
      %v5194 = vadd.f32 %v4526, %v5155
      %v5195 = vadd.f32 %v4527, %v5157
      %v5196 = vadd.f32 %v4528, %v5159
      %v5197 = vadd.f32 %v4529, %v5163
      %v5198 = vadd.f32 %v4530, %v5165
      %v5199 = vadd.f32 %v4531, %v5167
      %v5200 = vadd.f32 %v4532, %v5169
      %v5201 = vadd.f32 %v4533, %v5173
      %v5202 = vadd.f32 %v4534, %v5175
      %v5203 = vadd.f32 %v4535, %v5177
      %v5204 = vadd.f32 %v4536, %v5179
      %v5205 = vld [vmem:[%s300 + $0x48] sm:$0xcc]
      %v5206 = vld [vmem:[%s300 + $0x50] sm:$0xc]
      %v5207 = vld [vmem:[%s300 + $0xd8] sm:$0x33]
      %v5208 = vld [vmem:[%s300 + $0xe0] sm:$0x3]
      %s5209 = scalar_lea.vmem %s2, 3072
      %v5210 = vld [vmem:[%s5209] sm:$0xff]
      %v5211 = vld [vmem:[%s5209 + $0x8] sm:$0xff]
      %v5212 = vld [vmem:[%s5209 + $0x10] sm:$0xff]
      %v5213 = vld [vmem:[%s5209 + $0x18] sm:$0xff]
      %v5214 = vld [vmem:[%s5209 + $0x20] sm:$0xff]
      %v5215 = vld [vmem:[%s5209 + $0x28] sm:$0xff]
      %v5216 = vld [vmem:[%s5209 + $0x30] sm:$0xff]
      %v5217 = vld [vmem:[%s5209 + $0x38] sm:$0xff]
      %v5218 = vld [vmem:[%s5209 + $0x40] sm:$0xff]
      %v5219 = vld [vmem:[%s5209 + $0x48] sm:$0xff]
      %v5220 = vld [vmem:[%s5209 + $0x50] sm:$0xff]
      %v5221 = vld [vmem:[%s5209 + $0x58] sm:$0xff]
      %v5222 = vld [vmem:[%s5209 + $0x60] sm:$0xff]
      %v5223 = vld [vmem:[%s5209 + $0x68] sm:$0xff]
      %v5224 = vld [vmem:[%s5209 + $0x70] sm:$0xff]
      %v5225 = vld [vmem:[%s5209 + $0x78] sm:$0xff]
      %v5226 = vld [vmem:[%s5209 + $0x80] sm:$0xff]
      %v5227 = vld [vmem:[%s5209 + $0x88] sm:$0xff]
      %v5228 = vld [vmem:[%s5209 + $0x90] sm:$0xff]
      %v5229 = vld [vmem:[%s5209 + $0x98] sm:$0xff]
      %v5230 = vld [vmem:[%s5209 + $0xa0] sm:$0xff]
      %v5231 = vld [vmem:[%s5209 + $0xa8] sm:$0xff]
      %v5232 = vld [vmem:[%s5209 + $0xb0] sm:$0xff]
      %v5233 = vld [vmem:[%s5209 + $0xb8] sm:$0xff]
      %v5234 = vld [vmem:[%s5209 + $0xc0] sm:$0xff]
      %v5235 = vld [vmem:[%s5209 + $0xc8] sm:$0xff]
      %v5236 = vld [vmem:[%s5209 + $0xd0] sm:$0xff]
      %v5237 = vld [vmem:[%s5209 + $0xd8] sm:$0xff]
      %v5238 = vld [vmem:[%s5209 + $0xe0] sm:$0xff]
      %v5239 = vld [vmem:[%s5209 + $0xe8] sm:$0xff]
      %v5240 = vld [vmem:[%s5209 + $0xf0] sm:$0xff]
      %v5241 = vld [vmem:[%s5209 + $0xf8] sm:$0xff]
      %v5242 = vld [vmem:[%s5209 + $0x100] sm:$0xff]
      %v5243 = vld [vmem:[%s5209 + $0x108] sm:$0xff]
      %v5244 = vld [vmem:[%s5209 + $0x110] sm:$0xff]
      %v5245 = vld [vmem:[%s5209 + $0x118] sm:$0xff]
      %v5246 = vld [vmem:[%s5209 + $0x120] sm:$0xff]
      %v5247 = vld [vmem:[%s5209 + $0x128] sm:$0xff]
      %v5248 = vld [vmem:[%s5209 + $0x130] sm:$0xff]
      %v5249 = vld [vmem:[%s5209 + $0x138] sm:$0xff]
      %v5250 = vld [vmem:[%s5209 + $0x140] sm:$0xff]
      %v5251 = vld [vmem:[%s5209 + $0x148] sm:$0xff]
      %v5252 = vld [vmem:[%s5209 + $0x150] sm:$0xff]
      %v5253 = vld [vmem:[%s5209 + $0x158] sm:$0xff]
      %v5254 = vld [vmem:[%s5209 + $0x160] sm:$0xff]
      %v5255 = vld [vmem:[%s5209 + $0x168] sm:$0xff]
      %v5256 = vld [vmem:[%s5209 + $0x170] sm:$0xff]
      %v5257 = vld [vmem:[%s5209 + $0x178] sm:$0xff]
      %v5262 = vunpack.c.l.b16 %v5205
      %v5263 = vunpack.c.h.b16 %v5205
      %v5264 = vunpack.c.l.b16 %v5206
      %v5265 = vunpack.c.l.b16 %v5207
      %v5266 = vunpack.c.h.b16 %v5207
      %v5267 = vunpack.c.l.b16 %v5208
      %v5268 = vpack.c.b16 %v4641, %v5262
      %v5269 = vpack.c.b16 %v4642, %v5263
      %v5270 = vpack.c.b16 %v4643, %v5264
      %v5271 = vpack.c.b16 %v5265, %v5265
      %v5272 = vpack.c.b16 %v5266, %v5266
      %v5273 = vpack.c.b16 %v5267, %v5267
      %v5274 = vrot.slane %v5268, 2
      %v5275 = vrot.slane %v4680, 2
      %v5276 = vsel %vm1547, %v5274, %v5275
      %v5277 = vrot.slane %v5269, 2
      %v5278 = vrot.slane %v4681, 2
      %v5279 = vsel %vm1547, %v5277, %v5278
      %v5280 = vrot.slane %v5270, 2
      %v5281 = vrot.slane %v4682, 2
      %v5282 = vsel %vm1547, %v5280, %v5281
      %v5283 = vrot.slane %v4683, 2
      %v5284 = vsel %vm1547, %v5275, %v5283
      %v5285 = vrot.slane %v4684, 2
      %v5286 = vsel %vm1547, %v5278, %v5285
      %v5287 = vrot.slane %v4685, 2
      %v5288 = vsel %vm1547, %v5281, %v5287
      %v5289 = vrot.slane %v4686, 2
      %v5290 = vsel %vm1547, %v5283, %v5289
      %v5291 = vrot.slane %v4687, 2
      %v5292 = vsel %vm1547, %v5285, %v5291
      %v5293 = vrot.slane %v4688, 2
      %v5294 = vsel %vm1547, %v5287, %v5293
      %v5295 = vrot.slane %v4689, 2
      %v5296 = vsel %vm1547, %v5289, %v5295
      %v5297 = vrot.slane %v4690, 2
      %v5298 = vsel %vm1547, %v5291, %v5297
      %v5299 = vrot.slane %v4691, 2
      %v5300 = vsel %vm1547, %v5293, %v5299
      %v5301 = vrot.slane %v4692, 2
      %v5302 = vsel %vm1547, %v5295, %v5301
      %v5303 = vrot.slane %v4693, 2
      %v5304 = vsel %vm1547, %v5297, %v5303
      %v5305 = vrot.slane %v4694, 2
      %v5306 = vsel %vm1547, %v5299, %v5305
      %v5307 = vrot.slane %v5271, 2
      %v5308 = vsel %vm1547, %v5301, %v5307
      %v5309 = vrot.slane %v5272, 2
      %v5310 = vsel %vm1547, %v5303, %v5309
      %v5311 = vrot.slane %v5273, 2
      %v5312 = vsel %vm1547, %v5305, %v5311
      %v5379 = vunpack.c.l.b16 %v5210
      %v5380 = vunpack.c.h.b16 %v5210
      %v5381 = vunpack.c.l.b16 %v5211
      %v5382 = vunpack.c.h.b16 %v5211
      %v5383 = vunpack.c.l.b16 %v5212
      %v5384 = vunpack.c.h.b16 %v5212
      %v5385 = vunpack.c.l.b16 %v5213
      %v5386 = vunpack.c.h.b16 %v5213
      %v5387 = vunpack.c.l.b16 %v5214
      %v5388 = vunpack.c.h.b16 %v5214
      %v5389 = vunpack.c.l.b16 %v5215
      %v5390 = vunpack.c.h.b16 %v5215
      %v5391 = vunpack.c.l.b16 %v5216
      %v5392 = vunpack.c.h.b16 %v5216
      %v5393 = vunpack.c.l.b16 %v5217
      %v5394 = vunpack.c.h.b16 %v5217
      %v5395 = vunpack.c.l.b16 %v5218
      %v5396 = vunpack.c.h.b16 %v5218
      %v5397 = vunpack.c.l.b16 %v5219
      %v5398 = vunpack.c.h.b16 %v5219
      %v5399 = vunpack.c.l.b16 %v5220
      %v5400 = vunpack.c.h.b16 %v5220
      %v5401 = vunpack.c.l.b16 %v5221
      %v5402 = vunpack.c.h.b16 %v5221
      %v5403 = vunpack.c.l.b16 %v5222
      %v5404 = vunpack.c.h.b16 %v5222
      %v5405 = vunpack.c.l.b16 %v5223
      %v5406 = vunpack.c.h.b16 %v5223
      %v5407 = vunpack.c.l.b16 %v5224
      %v5408 = vunpack.c.h.b16 %v5224
      %v5409 = vunpack.c.l.b16 %v5225
      %v5410 = vunpack.c.h.b16 %v5225
      %v5411 = vunpack.c.l.b16 %v5226
      %v5412 = vunpack.c.h.b16 %v5226
      %v5413 = vunpack.c.l.b16 %v5227
      %v5414 = vunpack.c.h.b16 %v5227
      %v5415 = vunpack.c.l.b16 %v5228
      %v5416 = vunpack.c.h.b16 %v5228
      %v5417 = vunpack.c.l.b16 %v5229
      %v5418 = vunpack.c.h.b16 %v5229
      %v5419 = vunpack.c.l.b16 %v5230
      %v5420 = vunpack.c.h.b16 %v5230
      %v5421 = vunpack.c.l.b16 %v5231
      %v5422 = vunpack.c.h.b16 %v5231
      %v5423 = vunpack.c.l.b16 %v5232
      %v5424 = vunpack.c.h.b16 %v5232
      %v5425 = vunpack.c.l.b16 %v5233
      %v5426 = vunpack.c.h.b16 %v5233
      %v5427 = vunpack.c.l.b16 %v5234
      %v5428 = vunpack.c.h.b16 %v5234
      %v5429 = vunpack.c.l.b16 %v5235
      %v5430 = vunpack.c.h.b16 %v5235
      %v5431 = vunpack.c.l.b16 %v5236
      %v5432 = vunpack.c.h.b16 %v5236
      %v5433 = vunpack.c.l.b16 %v5237
      %v5434 = vunpack.c.h.b16 %v5237
      %v5435 = vunpack.c.l.b16 %v5238
      %v5436 = vunpack.c.h.b16 %v5238
      %v5437 = vunpack.c.l.b16 %v5239
      %v5438 = vunpack.c.h.b16 %v5239
      %v5439 = vunpack.c.l.b16 %v5240
      %v5440 = vunpack.c.h.b16 %v5240
      %v5441 = vunpack.c.l.b16 %v5241
      %v5442 = vunpack.c.h.b16 %v5241
      %v5443 = vunpack.c.l.b16 %v5242
      %v5444 = vunpack.c.h.b16 %v5242
      %v5445 = vunpack.c.l.b16 %v5243
      %v5446 = vunpack.c.h.b16 %v5243
      %v5447 = vunpack.c.l.b16 %v5244
      %v5448 = vunpack.c.h.b16 %v5244
      %v5449 = vunpack.c.l.b16 %v5245
      %v5450 = vunpack.c.h.b16 %v5245
      %v5451 = vunpack.c.l.b16 %v5246
      %v5452 = vunpack.c.h.b16 %v5246
      %v5453 = vunpack.c.l.b16 %v5247
      %v5454 = vunpack.c.h.b16 %v5247
      %v5455 = vunpack.c.l.b16 %v5248
      %v5456 = vunpack.c.h.b16 %v5248
      %v5457 = vunpack.c.l.b16 %v5249
      %v5458 = vunpack.c.h.b16 %v5249
      %v5459 = vunpack.c.l.b16 %v5250
      %v5460 = vunpack.c.h.b16 %v5250
      %v5461 = vunpack.c.l.b16 %v5251
      %v5462 = vunpack.c.h.b16 %v5251
      %v5463 = vunpack.c.l.b16 %v5252
      %v5464 = vunpack.c.h.b16 %v5252
      %v5465 = vunpack.c.l.b16 %v5253
      %v5466 = vunpack.c.h.b16 %v5253
      %v5467 = vunpack.c.l.b16 %v5254
      %v5468 = vunpack.c.h.b16 %v5254
      %v5469 = vunpack.c.l.b16 %v5255
      %v5470 = vunpack.c.h.b16 %v5255
      %v5471 = vunpack.c.l.b16 %v5256
      %v5472 = vunpack.c.h.b16 %v5256
      %v5473 = vunpack.c.l.b16 %v5257
      %v5474 = vunpack.c.h.b16 %v5257
      %v5475 = vpack.c.b16 %v5381, %v5379
      %v5476 = vpack.c.b16 %v5382, %v5380
      %v5477 = vpack.c.b16 %v5385, %v5383
      %v5478 = vpack.c.b16 %v5386, %v5384
      %v5479 = vpack.c.b16 %v5389, %v5387
      %v5480 = vpack.c.b16 %v5390, %v5388
      %v5481 = vpack.c.b16 %v5393, %v5391
      %v5482 = vpack.c.b16 %v5394, %v5392
      %v5483 = vpack.c.b16 %v5397, %v5395
      %v5484 = vpack.c.b16 %v5398, %v5396
      %v5485 = vpack.c.b16 %v5401, %v5399
      %v5486 = vpack.c.b16 %v5402, %v5400
      %v5487 = vpack.c.b16 %v5405, %v5403
      %v5488 = vpack.c.b16 %v5406, %v5404
      %v5489 = vpack.c.b16 %v5409, %v5407
      %v5490 = vpack.c.b16 %v5410, %v5408
      %v5491 = vpack.c.b16 %v5413, %v5411
      %v5492 = vpack.c.b16 %v5414, %v5412
      %v5493 = vpack.c.b16 %v5417, %v5415
      %v5494 = vpack.c.b16 %v5418, %v5416
      %v5495 = vpack.c.b16 %v5421, %v5419
      %v5496 = vpack.c.b16 %v5422, %v5420
      %v5497 = vpack.c.b16 %v5425, %v5423
      %v5498 = vpack.c.b16 %v5426, %v5424
      %v5499 = vpack.c.b16 %v5429, %v5427
      %v5500 = vpack.c.b16 %v5430, %v5428
      %v5501 = vpack.c.b16 %v5433, %v5431
      %v5502 = vpack.c.b16 %v5434, %v5432
      %v5503 = vpack.c.b16 %v5437, %v5435
      %v5504 = vpack.c.b16 %v5438, %v5436
      %v5505 = vpack.c.b16 %v5441, %v5439
      %v5506 = vpack.c.b16 %v5442, %v5440
      %v5507 = vpack.c.b16 %v5445, %v5443
      %v5508 = vpack.c.b16 %v5446, %v5444
      %v5509 = vpack.c.b16 %v5449, %v5447
      %v5510 = vpack.c.b16 %v5450, %v5448
      %v5511 = vpack.c.b16 %v5453, %v5451
      %v5512 = vpack.c.b16 %v5454, %v5452
      %v5513 = vpack.c.b16 %v5457, %v5455
      %v5514 = vpack.c.b16 %v5458, %v5456
      %v5515 = vpack.c.b16 %v5461, %v5459
      %v5516 = vpack.c.b16 %v5462, %v5460
      %v5517 = vpack.c.b16 %v5465, %v5463
      %v5518 = vpack.c.b16 %v5466, %v5464
      %v5519 = vpack.c.b16 %v5469, %v5467
      %v5520 = vpack.c.b16 %v5470, %v5468
      %v5521 = vpack.c.b16 %v5473, %v5471
      %v5522 = vpack.c.b16 %v5474, %v5472
      %5571 = vmatprep.subr.bf16.mxu0 %v5490
      %5572 = vmatpush1.bf16.msra.mxu0 %v5489
      %5573 = vmatprep.subr.bf16.mxu0 %v5488
      %5574 = vmatpush1.bf16.msra.mxu0 %v5487
      %5575 = vmatprep.subr.bf16.mxu0 %v5486
      %5576 = vmatpush1.bf16.msra.mxu0 %v5485
      %5577 = vmatprep.subr.bf16.mxu0 %v5484
      %5578 = vmatpush1.bf16.msra.mxu0 %v5483
      %5579 = vmatprep.subr.bf16.mxu0 %v5482
      %5580 = vmatpush1.bf16.msra.mxu0 %v5481
      %5581 = vmatprep.subr.bf16.mxu0 %v5480
      %5582 = vmatpush1.bf16.msra.mxu0 %v5479
      %5583 = vmatprep.subr.bf16.mxu0 %v5478
      %5584 = vmatpush1.bf16.msra.mxu0 %v5477
      %5585 = vmatprep.subr.bf16.mxu0 %v5476
      %5586 = vmatpush1.bf16.msra.mxu0 %v5475
      %5587 = vmatprep.subr.bf16.mxu0 %v5506
      %5588 = vmatpush2.bf16.msra.mxu0 %v5505
      %5589 = vmatprep.subr.bf16.mxu0 %v5504
      %5590 = vmatpush2.bf16.msra.mxu0 %v5503
      %5591 = vmatprep.subr.bf16.mxu0 %v5502
      %5592 = vmatpush2.bf16.msra.mxu0 %v5501
      %5593 = vmatprep.subr.bf16.mxu0 %v5500
      %5594 = vmatpush2.bf16.msra.mxu0 %v5499
      %5595 = vmatprep.subr.bf16.mxu0 %v5498
      %5596 = vmatpush2.bf16.msra.mxu0 %v5497
      %5597 = vmatprep.subr.bf16.mxu0 %v5496
      %5598 = vmatpush2.bf16.msra.mxu0 %v5495
      %5599 = vmatprep.subr.bf16.mxu0 %v5494
      %5600 = vmatpush2.bf16.msra.mxu0 %v5493
      %5601 = vmatprep.subr.bf16.mxu0 %v5492
      %5602 = vmatpush2.bf16.msra.mxu0 %v5491
      %5603 = vmatprep.mubr.bf16.mxu0 %v5279
      %5604 = vmatmul.mubr.bf16.gmra.mxu0 %v5276
      %v5605 = vpop.f32.mrf.mxu0
      %v5606 = vadd.f32 0.0, %v5605
      %v5607 = vpop.f32.mrf.mxu0
      %v5608 = vadd.f32 0.0, %v5607
      %v5609 = vpop.f32.mrf.mxu0
      %v5610 = vadd.f32 0.0, %v5609
      %v5611 = vpop.f32.mrf.mxu0
      %v5612 = vadd.f32 0.0, %v5611
      %5613 = vmatprep.mubr.bf16.mxu0 %v5286
      %5614 = vmatmul.mubr.bf16.gmra.mxu0 %v5284
      %v5615 = vpop.f32.mrf.mxu0
      %v5616 = vadd.f32 0.0, %v5615
      %v5617 = vpop.f32.mrf.mxu0
      %v5618 = vadd.f32 0.0, %v5617
      %v5619 = vpop.f32.mrf.mxu0
      %v5620 = vadd.f32 0.0, %v5619
      %v5621 = vpop.f32.mrf.mxu0
      %v5622 = vadd.f32 0.0, %v5621
      %5623 = vmatprep.mubr.bf16.mxu0 %v5292
      %5624 = vmatmul.mubr.bf16.gmra.mxu0 %v5290
      %v5625 = vpop.f32.mrf.mxu0
      %v5626 = vadd.f32 0.0, %v5625
      %v5627 = vpop.f32.mrf.mxu0
      %v5628 = vadd.f32 0.0, %v5627
      %v5629 = vpop.f32.mrf.mxu0
      %v5630 = vadd.f32 0.0, %v5629
      %v5631 = vpop.f32.mrf.mxu0
      %v5632 = vadd.f32 0.0, %v5631
      %5633 = vmatprep.mubr.bf16.mxu0 %v5298
      %5634 = vmatmul.mubr.bf16.gmra.mxu0 %v5296
      %v5635 = vpop.f32.mrf.mxu0
      %v5636 = vadd.f32 0.0, %v5635
      %v5637 = vpop.f32.mrf.mxu0
      %v5638 = vadd.f32 0.0, %v5637
      %v5639 = vpop.f32.mrf.mxu0
      %v5640 = vadd.f32 0.0, %v5639
      %v5641 = vpop.f32.mrf.mxu0
      %v5642 = vadd.f32 0.0, %v5641
      %5643 = vmatprep.mubr.bf16.mxu0 %v5304
      %5644 = vmatmul.mubr.bf16.gmra.mxu0 %v5302
      %v5645 = vpop.f32.mrf.mxu0
      %v5646 = vadd.f32 0.0, %v5645
      %v5647 = vpop.f32.mrf.mxu0
      %v5648 = vadd.f32 0.0, %v5647
      %v5649 = vpop.f32.mrf.mxu0
      %v5650 = vadd.f32 0.0, %v5649
      %v5651 = vpop.f32.mrf.mxu0
      %v5652 = vadd.f32 0.0, %v5651
      %5653 = vmatprep.mubr.bf16.mxu0 %v5310
      %5654 = vmatmul.mubr.bf16.gmra.mxu0 %v5308
      %v5655 = vpop.f32.mrf.mxu0
      %v5656 = vadd.f32 0.0, %v5655
      %v5657 = vpop.f32.mrf.mxu0
      %v5658 = vadd.f32 0.0, %v5657
      %v5659 = vpop.f32.mrf.mxu0
      %v5660 = vadd.f32 0.0, %v5659
      %v5661 = vpop.f32.mrf.mxu0
      %v5662 = vadd.f32 0.0, %v5661
      %5663 = vdwg.mxu0
      %5664 = vmatprep.subr.bf16.mxu0 %v5522
      %5665 = vmatpush1.bf16.msra.mxu0 %v5521
      %5666 = vmatprep.subr.bf16.mxu0 %v5520
      %5667 = vmatpush1.bf16.msra.mxu0 %v5519
      %5668 = vmatprep.subr.bf16.mxu0 %v5518
      %5669 = vmatpush1.bf16.msra.mxu0 %v5517
      %5670 = vmatprep.subr.bf16.mxu0 %v5516
      %5671 = vmatpush1.bf16.msra.mxu0 %v5515
      %5672 = vmatprep.subr.bf16.mxu0 %v5514
      %5673 = vmatpush1.bf16.msra.mxu0 %v5513
      %5674 = vmatprep.subr.bf16.mxu0 %v5512
      %5675 = vmatpush1.bf16.msra.mxu0 %v5511
      %5676 = vmatprep.subr.bf16.mxu0 %v5510
      %5677 = vmatpush1.bf16.msra.mxu0 %v5509
      %5678 = vmatprep.subr.bf16.mxu0 %v5508
      %5679 = vmatpush1.bf16.msra.mxu0 %v5507
      %5680 = vmatprep.subr.bf16.mxu0 0
      %5681 = vmatpush2.bf16.msra.mxu0 0
      %5682 = vmatprep.subr.bf16.mxu0 0
      %5683 = vmatpush2.bf16.msra.mxu0 0
      %5684 = vmatprep.subr.bf16.mxu0 0
      %5685 = vmatpush2.bf16.msra.mxu0 0
      %5686 = vmatprep.subr.bf16.mxu0 0
      %5687 = vmatpush2.bf16.msra.mxu0 0
      %5688 = vmatprep.subr.bf16.mxu0 0
      %5689 = vmatpush2.bf16.msra.mxu0 0
      %5690 = vmatprep.subr.bf16.mxu0 0
      %5691 = vmatpush2.bf16.msra.mxu0 0
      %5692 = vmatprep.subr.bf16.mxu0 0
      %5693 = vmatpush2.bf16.msra.mxu0 0
      %5694 = vmatprep.subr.bf16.mxu0 0
      %5695 = vmatpush2.bf16.msra.mxu0 0
      %5696 = vmatprep.mubr.bf16.mxu0 0
      %5697 = vmatmul.mubr.bf16.gmra.mxu0 %v5282
      %v5698 = vpop.f32.mrf.mxu0
      %v5699 = vadd.f32 %v5606, %v5698
      %v5700 = vpop.f32.mrf.mxu0
      %v5701 = vadd.f32 %v5608, %v5700
      %v5702 = vpop.f32.mrf.mxu0
      %v5703 = vadd.f32 %v5610, %v5702
      %v5704 = vpop.f32.mrf.mxu0
      %v5705 = vadd.f32 %v5612, %v5704
      %5706 = vmatprep.mubr.bf16.mxu0 0
      %5707 = vmatmul.mubr.bf16.gmra.mxu0 %v5288
      %v5708 = vpop.f32.mrf.mxu0
      %v5709 = vadd.f32 %v5616, %v5708
      %v5710 = vpop.f32.mrf.mxu0
      %v5711 = vadd.f32 %v5618, %v5710
      %v5712 = vpop.f32.mrf.mxu0
      %v5713 = vadd.f32 %v5620, %v5712
      %v5714 = vpop.f32.mrf.mxu0
      %v5715 = vadd.f32 %v5622, %v5714
      %5716 = vmatprep.mubr.bf16.mxu0 0
      %5717 = vmatmul.mubr.bf16.gmra.mxu0 %v5294
      %v5718 = vpop.f32.mrf.mxu0
      %v5719 = vadd.f32 %v5626, %v5718
      %v5720 = vpop.f32.mrf.mxu0
      %v5721 = vadd.f32 %v5628, %v5720
      %v5722 = vpop.f32.mrf.mxu0
      %v5723 = vadd.f32 %v5630, %v5722
      %v5724 = vpop.f32.mrf.mxu0
      %v5725 = vadd.f32 %v5632, %v5724
      %5726 = vmatprep.mubr.bf16.mxu0 0
      %5727 = vmatmul.mubr.bf16.gmra.mxu0 %v5300
      %v5728 = vpop.f32.mrf.mxu0
      %v5729 = vadd.f32 %v5636, %v5728
      %v5730 = vpop.f32.mrf.mxu0
      %v5731 = vadd.f32 %v5638, %v5730
      %v5732 = vpop.f32.mrf.mxu0
      %v5733 = vadd.f32 %v5640, %v5732
      %v5734 = vpop.f32.mrf.mxu0
      %v5735 = vadd.f32 %v5642, %v5734
      %5736 = vmatprep.mubr.bf16.mxu0 0
      %5737 = vmatmul.mubr.bf16.gmra.mxu0 %v5306
      %v5738 = vpop.f32.mrf.mxu0
      %v5739 = vadd.f32 %v5646, %v5738
      %v5740 = vpop.f32.mrf.mxu0
      %v5741 = vadd.f32 %v5648, %v5740
      %v5742 = vpop.f32.mrf.mxu0
      %v5743 = vadd.f32 %v5650, %v5742
      %v5744 = vpop.f32.mrf.mxu0
      %v5745 = vadd.f32 %v5652, %v5744
      %5746 = vmatprep.mubr.bf16.mxu0 0
      %5747 = vmatmul.mubr.bf16.gmra.mxu0 %v5312
      %v5748 = vpop.f32.mrf.mxu0
      %v5749 = vadd.f32 %v5656, %v5748
      %v5750 = vpop.f32.mrf.mxu0
      %v5751 = vadd.f32 %v5658, %v5750
      %v5752 = vpop.f32.mrf.mxu0
      %v5753 = vadd.f32 %v5660, %v5752
      %v5754 = vpop.f32.mrf.mxu0
      %v5755 = vadd.f32 %v5662, %v5754
      %5756 = vdwg.mxu0
      %v5757 = vadd.f32 %v5181, %v5699
      %v5758 = vadd.f32 %v5182, %v5701
      %v5759 = vadd.f32 %v5183, %v5703
      %v5760 = vadd.f32 %v5184, %v5705
      %v5761 = vadd.f32 %v5185, %v5709
      %v5762 = vadd.f32 %v5186, %v5711
      %v5763 = vadd.f32 %v5187, %v5713
      %v5764 = vadd.f32 %v5188, %v5715
      %v5765 = vadd.f32 %v5189, %v5719
      %v5766 = vadd.f32 %v5190, %v5721
      %v5767 = vadd.f32 %v5191, %v5723
      %v5768 = vadd.f32 %v5192, %v5725
      %v5769 = vadd.f32 %v5193, %v5729
      %v5770 = vadd.f32 %v5194, %v5731
      %v5771 = vadd.f32 %v5195, %v5733
      %v5772 = vadd.f32 %v5196, %v5735
      %v5773 = vadd.f32 %v5197, %v5739
      %v5774 = vadd.f32 %v5198, %v5741
      %v5775 = vadd.f32 %v5199, %v5743
      %v5776 = vadd.f32 %v5200, %v5745
      %v5777 = vadd.f32 %v5201, %v5749
      %v5778 = vadd.f32 %v5202, %v5751
      %v5779 = vadd.f32 %v5203, %v5753
      %v5780 = vadd.f32 %v5204, %v5755
      %v5781 = vld [vmem:[%s3] sm:$0x3]
      %v5783 = vlaneseq
      %v5784 = vshrl.u32 %v5783, 7
      %v5785 = vsub.s32 0, %v5784
      %v5786 = vrot.slane %v5781, %v5785
      %v5787 = vlaneseq
      %v5788 = vshrl.u32 %v5787, 7
      %v5789 = vsub.s32 1, %v5788
      %v5790 = vrot.slane %v5781, %v5789
      %v5793 = vadd.f32 %v5757, %v5786
      %v5794 = vadd.f32 %v5758, %v5790
      %v5795 = vadd.f32 %v5759, %v5786
      %v5796 = vadd.f32 %v5760, %v5790
      %v5797 = vadd.f32 %v5761, %v5786
      %v5798 = vadd.f32 %v5762, %v5790
      %v5799 = vadd.f32 %v5763, %v5786
      %v5800 = vadd.f32 %v5764, %v5790
      %v5801 = vadd.f32 %v5765, %v5786
      %v5802 = vadd.f32 %v5766, %v5790
      %v5803 = vadd.f32 %v5767, %v5786
      %v5804 = vadd.f32 %v5768, %v5790
      %v5805 = vadd.f32 %v5769, %v5786
      %v5806 = vadd.f32 %v5770, %v5790
      %v5807 = vadd.f32 %v5771, %v5786
      %v5808 = vadd.f32 %v5772, %v5790
      %v5809 = vadd.f32 %v5773, %v5786
      %v5810 = vadd.f32 %v5774, %v5790
      %v5811 = vadd.f32 %v5775, %v5786
      %v5812 = vadd.f32 %v5776, %v5790
      %v5813 = vadd.f32 %v5777, %v5786
      %v5814 = vadd.f32 %v5778, %v5790
      %v5815 = vadd.f32 %v5779, %v5786
      %v5816 = vadd.f32 %v5780, %v5790
      %v5817 = vmax.f32 %v5793, 0.0
      %v5818 = vmax.f32 %v5794, 0.0
      %v5819 = vmax.f32 %v5795, 0.0
      %v5820 = vmax.f32 %v5796, 0.0
      %v5821 = vmax.f32 %v5797, 0.0
      %v5822 = vmax.f32 %v5798, 0.0
      %v5823 = vmax.f32 %v5799, 0.0
      %v5824 = vmax.f32 %v5800, 0.0
      %v5825 = vmax.f32 %v5801, 0.0
      %v5826 = vmax.f32 %v5802, 0.0
      %v5827 = vmax.f32 %v5803, 0.0
      %v5828 = vmax.f32 %v5804, 0.0
      %v5829 = vmax.f32 %v5805, 0.0
      %v5830 = vmax.f32 %v5806, 0.0
      %v5831 = vmax.f32 %v5807, 0.0
      %v5832 = vmax.f32 %v5808, 0.0
      %v5833 = vmax.f32 %v5809, 0.0
      %v5834 = vmax.f32 %v5810, 0.0
      %v5835 = vmax.f32 %v5811, 0.0
      %v5836 = vmax.f32 %v5812, 0.0
      %v5837 = vmax.f32 %v5813, 0.0
      %v5838 = vmax.f32 %v5814, 0.0
      %v5839 = vmax.f32 %v5815, 0.0
      %v5840 = vmax.f32 %v5816, 0.0
      %5842 = vset.pattern.permute.xlu0 0
      %5843 = vperm.xlu0 %5842, %v319
      %v5844 = vpop.permute.xlu0 %5843
      %5847 = vset.pattern.permute.xlu0 0
      %5848 = vperm.xlu0 %5847, %v320
      %v5849 = vpop.permute.xlu0 %5848
      %5852 = vset.pattern.permute.xlu0 0
      %5853 = vperm.xlu0 %5852, %v321
      %v5854 = vpop.permute.xlu0 %5853
      %5857 = vset.pattern.permute.xlu0 0
      %5858 = vperm.xlu0 %5857, %v322
      %v5859 = vpop.permute.xlu0 %5858
      %5862 = vset.pattern.permute.xlu0 0
      %5863 = vperm.xlu0 %5862, %v323
      %v5864 = vpop.permute.xlu0 %5863
      %5867 = vset.pattern.permute.xlu0 0
      %5868 = vperm.xlu0 %5867, %v324
      %v5869 = vpop.permute.xlu0 %5868
      %5872 = vset.pattern.permute.xlu0 0
      %5873 = vperm.xlu0 %5872, %v325
      %v5874 = vpop.permute.xlu0 %5873
      %5877 = vset.pattern.permute.xlu0 0
      %5878 = vperm.xlu0 %5877, %v326
      %v5879 = vpop.permute.xlu0 %5878
      %5882 = vset.pattern.permute.xlu0 0
      %5883 = vperm.xlu0 %5882, %v327
      %v5884 = vpop.permute.xlu0 %5883
      %5887 = vset.pattern.permute.xlu0 0
      %5888 = vperm.xlu0 %5887, %v328
      %v5889 = vpop.permute.xlu0 %5888
      %5892 = vset.pattern.permute.xlu0 0
      %5893 = vperm.xlu0 %5892, %v329
      %v5894 = vpop.permute.xlu0 %5893
      %5897 = vset.pattern.permute.xlu0 0
      %5898 = vperm.xlu0 %5897, %v330
      %v5899 = vpop.permute.xlu0 %5898
      %v5901 = vmul.f32 %v5817, %v5844
      %v5902 = vmul.f32 %v5818, %v5844
      %v5903 = vmul.f32 %v5819, %v5849
      %v5904 = vmul.f32 %v5820, %v5849
      %v5905 = vmul.f32 %v5821, %v5854
      %v5906 = vmul.f32 %v5822, %v5854
      %v5907 = vmul.f32 %v5823, %v5859
      %v5908 = vmul.f32 %v5824, %v5859
      %v5909 = vmul.f32 %v5825, %v5864
      %v5910 = vmul.f32 %v5826, %v5864
      %v5911 = vmul.f32 %v5827, %v5869
      %v5912 = vmul.f32 %v5828, %v5869
      %v5913 = vmul.f32 %v5829, %v5874
      %v5914 = vmul.f32 %v5830, %v5874
      %v5915 = vmul.f32 %v5831, %v5879
      %v5916 = vmul.f32 %v5832, %v5879
      %v5917 = vmul.f32 %v5833, %v5884
      %v5918 = vmul.f32 %v5834, %v5884
      %v5919 = vmul.f32 %v5835, %v5889
      %v5920 = vmul.f32 %v5836, %v5889
      %v5921 = vmul.f32 %v5837, %v5894
      %v5922 = vmul.f32 %v5838, %v5894
      %v5923 = vmul.f32 %v5839, %v5899
      %v5924 = vmul.f32 %v5840, %v5899
      %vm5949 = vcmask 1045504
      %v5950 = vrot.slane %v5901, 2
      %v5951 = vrot.slane %v5902, 2
      %v5952 = vrot.slane %v5903, 2
      %v5953 = vsel %vm5949, %v5950, %v5952
      %v5954 = vrot.slane %v5904, 2
      %v5955 = vsel %vm5949, %v5951, %v5954
      %v5956 = vrot.slane %v5905, 2
      %v5957 = vsel %vm5949, %v5952, %v5956
      %v5958 = vrot.slane %v5906, 2
      %v5959 = vsel %vm5949, %v5954, %v5958
      %v5960 = vrot.slane %v5907, 2
      %v5961 = vsel %vm5949, %v5956, %v5960
      %v5962 = vrot.slane %v5908, 2
      %v5963 = vsel %vm5949, %v5958, %v5962
      %v5964 = vrot.slane %v5909, 2
      %v5965 = vsel %vm5949, %v5960, %v5964
      %v5966 = vrot.slane %v5910, 2
      %v5967 = vsel %vm5949, %v5962, %v5966
      %v5968 = vrot.slane %v5911, 2
      %v5969 = vsel %vm5949, %v5964, %v5968
      %v5970 = vrot.slane %v5912, 2
      %v5971 = vsel %vm5949, %v5966, %v5970
      %v5972 = vrot.slane %v5913, 2
      %v5973 = vsel %vm5949, %v5968, %v5972
      %v5974 = vrot.slane %v5914, 2
      %v5975 = vsel %vm5949, %v5970, %v5974
      %v5976 = vrot.slane %v5915, 2
      %v5977 = vsel %vm5949, %v5972, %v5976
      %v5978 = vrot.slane %v5916, 2
      %v5979 = vsel %vm5949, %v5974, %v5978
      %v5980 = vrot.slane %v5917, 2
      %v5981 = vsel %vm5949, %v5976, %v5980
      %v5982 = vrot.slane %v5918, 2
      %v5983 = vsel %vm5949, %v5978, %v5982
      %v5984 = vrot.slane %v5919, 2
      %v5985 = vsel %vm5949, %v5980, %v5984
      %v5986 = vrot.slane %v5920, 2
      %v5987 = vsel %vm5949, %v5982, %v5986
      %v5988 = vrot.slane %v5921, 2
      %v5989 = vsel %vm5949, %v5984, %v5988
      %v5990 = vrot.slane %v5922, 2
      %v5991 = vsel %vm5949, %v5986, %v5990
      %v5992 = vrot.slane %v5923, 2
      %v5993 = vsel %vm5949, %v5988, %v5992
      %v5994 = vrot.slane %v5924, 2
      %v5995 = vsel %vm5949, %v5990, %v5994
      %6022 = vst [vmem:[#allocation2 + $0x10] sm:$0xc0] %v5950
      %6023 = vst [vmem:[#allocation2 + $0x18] sm:$0xc0] %v5951
      %6024 = vst [vmem:[#allocation2 + $0x20] sm:$0xff] %v5953
      %6025 = vst [vmem:[#allocation2 + $0x28] sm:$0xff] %v5955
      %6026 = vst [vmem:[#allocation2 + $0x30] sm:$0xff] %v5957
      %6027 = vst [vmem:[#allocation2 + $0x38] sm:$0xff] %v5959
      %6028 = vst [vmem:[#allocation2 + $0x40] sm:$0xff] %v5961
      %6029 = vst [vmem:[#allocation2 + $0x48] sm:$0xff] %v5963
      %6030 = vst [vmem:[#allocation2 + $0x50] sm:$0xff] %v5965
      %6031 = vst [vmem:[#allocation2 + $0x58] sm:$0xff] %v5967
      %6032 = vst [vmem:[#allocation2 + $0x60] sm:$0xff] %v5969
      %6033 = vst [vmem:[#allocation2 + $0x68] sm:$0xff] %v5971
      %6034 = vst [vmem:[#allocation2 + $0x70] sm:$0xff] %v5973
      %6035 = vst [vmem:[#allocation2 + $0x78] sm:$0xff] %v5975
      %6036 = vst [vmem:[#allocation2 + $0x80] sm:$0xff] %v5977
      %6037 = vst [vmem:[#allocation2 + $0x88] sm:$0xff] %v5979
      %6038 = vst [vmem:[#allocation2 + $0x90] sm:$0xff] %v5981
      %6039 = vst [vmem:[#allocation2 + $0x98] sm:$0xff] %v5983
      %6040 = vst [vmem:[#allocation2 + $0xa0] sm:$0xff] %v5985
      %6041 = vst [vmem:[#allocation2 + $0xa8] sm:$0xff] %v5987
      %6042 = vst [vmem:[#allocation2 + $0xb0] sm:$0xff] %v5989
      %6043 = vst [vmem:[#allocation2 + $0xb8] sm:$0xff] %v5991
      %6044 = vst [vmem:[#allocation2 + $0xc0] sm:$0xff] %v5993
      %6045 = vst [vmem:[#allocation2 + $0xc8] sm:$0xff] %v5995
      %6046 = vst [vmem:[#allocation2 + $0xd0] sm:$0x3f] %v5992
      %6047 = vst [vmem:[#allocation2 + $0xd8] sm:$0x3f] %v5994
      %v6048 = vld [vmem:[#allocation2] sm:$0xfe]
      %v6049 = vld [vmem:[#allocation2 + $0x8] sm:$0xfe]
      %v6050 = vld [vmem:[#allocation2 + $0x10] sm:$0xff]
      %v6051 = vld [vmem:[#allocation2 + $0x18] sm:$0xff]
      %v6052 = vld [vmem:[#allocation2 + $0x20] sm:$0xff]
      %v6053 = vld [vmem:[#allocation2 + $0x28] sm:$0xff]
      %v6054 = vld [vmem:[#allocation2 + $0x30] sm:$0xff]
      %v6055 = vld [vmem:[#allocation2 + $0x38] sm:$0xff]
      %v6056 = vld [vmem:[#allocation2 + $0x40] sm:$0xff]
      %v6057 = vld [vmem:[#allocation2 + $0x48] sm:$0xff]
      %v6058 = vld [vmem:[#allocation2 + $0x50] sm:$0xff]
      %v6059 = vld [vmem:[#allocation2 + $0x58] sm:$0xff]
      %v6060 = vld [vmem:[#allocation2 + $0x60] sm:$0xff]
      %v6061 = vld [vmem:[#allocation2 + $0x68] sm:$0xff]
      %v6062 = vld [vmem:[#allocation2 + $0x70] sm:$0xff]
      %v6063 = vld [vmem:[#allocation2 + $0x78] sm:$0xff]
      %v6064 = vld [vmem:[#allocation2 + $0x80] sm:$0xff]
      %v6065 = vld [vmem:[#allocation2 + $0x88] sm:$0xff]
      %v6066 = vld [vmem:[#allocation2 + $0x90] sm:$0xff]
      %v6067 = vld [vmem:[#allocation2 + $0x98] sm:$0xff]
      %v6068 = vld [vmem:[#allocation2 + $0xa0] sm:$0xff]
      %v6069 = vld [vmem:[#allocation2 + $0xa8] sm:$0xff]
      %v6070 = vld [vmem:[#allocation2 + $0xb0] sm:$0xff]
      %v6071 = vld [vmem:[#allocation2 + $0xb8] sm:$0xff]
      %v6072 = vld [vmem:[#allocation2 + $0xc0] sm:$0x1]
      %v6073 = vld [vmem:[#allocation2 + $0xc8] sm:$0x1]
      %v6074 = vpack.c.bf16 %v6050, %v6048
      %v6075 = vpack.c.bf16 %v6051, %v6049
      %v6076 = vpack.c.bf16 %v6054, %v6052
      %v6077 = vpack.c.bf16 %v6055, %v6053
      %v6078 = vpack.c.bf16 %v6058, %v6056
      %v6079 = vpack.c.bf16 %v6059, %v6057
      %v6080 = vpack.c.bf16 %v6062, %v6060
      %v6081 = vpack.c.bf16 %v6063, %v6061
      %v6082 = vpack.c.bf16 %v6066, %v6064
      %v6083 = vpack.c.bf16 %v6067, %v6065
      %v6084 = vpack.c.bf16 %v6070, %v6068
      %v6085 = vpack.c.bf16 %v6071, %v6069
      %v6086 = vpack.c.bf16 %v6072, %v6072
      %v6087 = vpack.c.bf16 %v6073, %v6073
      %v6088 = vld [vmem:[%s4] sm:$0xff]
      %v6089 = vld [vmem:[%s4 + $0x8] sm:$0xff]
      %v6090 = vld [vmem:[%s4 + $0x10] sm:$0xff]
      %v6091 = vld [vmem:[%s4 + $0x18] sm:$0xff]
      %v6092 = vld [vmem:[%s4 + $0x20] sm:$0xff]
      %v6093 = vld [vmem:[%s4 + $0x28] sm:$0xff]
      %v6094 = vld [vmem:[%s4 + $0x30] sm:$0xff]
      %v6095 = vld [vmem:[%s4 + $0x38] sm:$0xff]
      %v6096 = vld [vmem:[%s4 + $0x40] sm:$0xff]
      %v6097 = vld [vmem:[%s4 + $0x48] sm:$0xff]
      %v6098 = vld [vmem:[%s4 + $0x50] sm:$0xff]
      %v6099 = vld [vmem:[%s4 + $0x58] sm:$0xff]
      %v6100 = vld [vmem:[%s4 + $0x60] sm:$0xff]
      %v6101 = vld [vmem:[%s4 + $0x68] sm:$0xff]
      %v6102 = vld [vmem:[%s4 + $0x70] sm:$0xff]
      %v6103 = vld [vmem:[%s4 + $0x78] sm:$0xff]
      %v6104 = vld [vmem:[%s4 + $0x80] sm:$0xff]
      %v6105 = vld [vmem:[%s4 + $0x88] sm:$0xff]
      %v6106 = vld [vmem:[%s4 + $0x90] sm:$0xff]
      %v6107 = vld [vmem:[%s4 + $0x98] sm:$0xff]
      %v6108 = vld [vmem:[%s4 + $0xa0] sm:$0xff]
      %v6109 = vld [vmem:[%s4 + $0xa8] sm:$0xff]
      %v6110 = vld [vmem:[%s4 + $0xb0] sm:$0xff]
      %v6111 = vld [vmem:[%s4 + $0xb8] sm:$0xff]
      %v6112 = vld [vmem:[%s4 + $0xc0] sm:$0xff]
      %v6113 = vld [vmem:[%s4 + $0xc8] sm:$0xff]
      %v6114 = vld [vmem:[%s4 + $0xd0] sm:$0xff]
      %v6115 = vld [vmem:[%s4 + $0xd8] sm:$0xff]
      %v6116 = vld [vmem:[%s4 + $0xe0] sm:$0xff]
      %v6117 = vld [vmem:[%s4 + $0xe8] sm:$0xff]
      %v6118 = vld [vmem:[%s4 + $0xf0] sm:$0xff]
      %v6119 = vld [vmem:[%s4 + $0xf8] sm:$0xff]
      %v6120 = vld [vmem:[#allocation2] sm:$0xfc]
      %v6121 = vld [vmem:[#allocation2 + $0x8] sm:$0xfc]
      %v6122 = vld [vmem:[#allocation2 + $0xc0] sm:$0x3]
      %v6123 = vld [vmem:[#allocation2 + $0xc8] sm:$0x3]
      %v6124 = vpack.c.bf16 %v6050, %v6120
      %v6125 = vpack.c.bf16 %v6051, %v6121
      %v6126 = vpack.c.bf16 %v6122, %v6122
      %v6127 = vpack.c.bf16 %v6123, %v6123
      %s6128 = scalar_lea.vmem %s4, 256
      %v6129 = vld [vmem:[%s6128] sm:$0xff]
      %v6130 = vld [vmem:[%s6128 + $0x8] sm:$0xff]
      %v6131 = vld [vmem:[%s6128 + $0x10] sm:$0xff]
      %v6132 = vld [vmem:[%s6128 + $0x18] sm:$0xff]
      %v6133 = vld [vmem:[%s6128 + $0x20] sm:$0xff]
      %v6134 = vld [vmem:[%s6128 + $0x28] sm:$0xff]
      %v6135 = vld [vmem:[%s6128 + $0x30] sm:$0xff]
      %v6136 = vld [vmem:[%s6128 + $0x38] sm:$0xff]
      %v6137 = vld [vmem:[%s6128 + $0x40] sm:$0xff]
      %v6138 = vld [vmem:[%s6128 + $0x48] sm:$0xff]
      %v6139 = vld [vmem:[%s6128 + $0x50] sm:$0xff]
      %v6140 = vld [vmem:[%s6128 + $0x58] sm:$0xff]
      %v6141 = vld [vmem:[%s6128 + $0x60] sm:$0xff]
      %v6142 = vld [vmem:[%s6128 + $0x68] sm:$0xff]
      %v6143 = vld [vmem:[%s6128 + $0x70] sm:$0xff]
      %v6144 = vld [vmem:[%s6128 + $0x78] sm:$0xff]
      %v6145 = vld [vmem:[%s6128 + $0x80] sm:$0xff]
      %v6146 = vld [vmem:[%s6128 + $0x88] sm:$0xff]
      %v6147 = vld [vmem:[%s6128 + $0x90] sm:$0xff]
      %v6148 = vld [vmem:[%s6128 + $0x98] sm:$0xff]
      %v6149 = vld [vmem:[%s6128 + $0xa0] sm:$0xff]
      %v6150 = vld [vmem:[%s6128 + $0xa8] sm:$0xff]
      %v6151 = vld [vmem:[%s6128 + $0xb0] sm:$0xff]
      %v6152 = vld [vmem:[%s6128 + $0xb8] sm:$0xff]
      %v6153 = vld [vmem:[%s6128 + $0xc0] sm:$0xff]
      %v6154 = vld [vmem:[%s6128 + $0xc8] sm:$0xff]
      %v6155 = vld [vmem:[%s6128 + $0xd0] sm:$0xff]
      %v6156 = vld [vmem:[%s6128 + $0xd8] sm:$0xff]
      %v6157 = vld [vmem:[%s6128 + $0xe0] sm:$0xff]
      %v6158 = vld [vmem:[%s6128 + $0xe8] sm:$0xff]
      %v6159 = vld [vmem:[%s6128 + $0xf0] sm:$0xff]
      %v6160 = vld [vmem:[%s6128 + $0xf8] sm:$0xff]
      %v6175 = vrot.slane %v6124, 1
      %v6176 = vrot.slane %v6076, 1
      %v6177 = vsel %vm542, %v6175, %v6176
      %v6178 = vrot.slane %v6125, 1
      %v6179 = vrot.slane %v6077, 1
      %v6180 = vsel %vm542, %v6178, %v6179
      %v6181 = vrot.slane %v6078, 1
      %v6182 = vsel %vm542, %v6176, %v6181
      %v6183 = vrot.slane %v6079, 1
      %v6184 = vsel %vm542, %v6179, %v6183
      %v6185 = vrot.slane %v6080, 1
      %v6186 = vsel %vm542, %v6181, %v6185
      %v6187 = vrot.slane %v6081, 1
      %v6188 = vsel %vm542, %v6183, %v6187
      %v6189 = vrot.slane %v6082, 1
      %v6190 = vsel %vm542, %v6185, %v6189
      %v6191 = vrot.slane %v6083, 1
      %v6192 = vsel %vm542, %v6187, %v6191
      %v6193 = vrot.slane %v6084, 1
      %v6194 = vsel %vm542, %v6189, %v6193
      %v6195 = vrot.slane %v6085, 1
      %v6196 = vsel %vm542, %v6191, %v6195
      %v6197 = vrot.slane %v6126, 1
      %v6198 = vsel %vm542, %v6193, %v6197
      %v6199 = vrot.slane %v6127, 1
      %v6200 = vsel %vm542, %v6195, %v6199
      %v6245 = vunpack.c.l.b16 %v6129
      %v6246 = vunpack.c.h.b16 %v6129
      %v6247 = vunpack.c.l.b16 %v6130
      %v6248 = vunpack.c.h.b16 %v6130
      %v6249 = vunpack.c.l.b16 %v6131
      %v6250 = vunpack.c.h.b16 %v6131
      %v6251 = vunpack.c.l.b16 %v6132
      %v6252 = vunpack.c.h.b16 %v6132
      %v6253 = vunpack.c.l.b16 %v6133
      %v6254 = vunpack.c.h.b16 %v6133
      %v6255 = vunpack.c.l.b16 %v6134
      %v6256 = vunpack.c.h.b16 %v6134
      %v6257 = vunpack.c.l.b16 %v6135
      %v6258 = vunpack.c.h.b16 %v6135
      %v6259 = vunpack.c.l.b16 %v6136
      %v6260 = vunpack.c.h.b16 %v6136
      %v6261 = vunpack.c.l.b16 %v6137
      %v6262 = vunpack.c.h.b16 %v6137
      %v6263 = vunpack.c.l.b16 %v6138
      %v6264 = vunpack.c.h.b16 %v6138
      %v6265 = vunpack.c.l.b16 %v6139
      %v6266 = vunpack.c.h.b16 %v6139
      %v6267 = vunpack.c.l.b16 %v6140
      %v6268 = vunpack.c.h.b16 %v6140
      %v6269 = vunpack.c.l.b16 %v6141
      %v6270 = vunpack.c.h.b16 %v6141
      %v6271 = vunpack.c.l.b16 %v6142
      %v6272 = vunpack.c.h.b16 %v6142
      %v6273 = vunpack.c.l.b16 %v6143
      %v6274 = vunpack.c.h.b16 %v6143
      %v6275 = vunpack.c.l.b16 %v6144
      %v6276 = vunpack.c.h.b16 %v6144
      %v6277 = vunpack.c.l.b16 %v6145
      %v6278 = vunpack.c.h.b16 %v6145
      %v6279 = vunpack.c.l.b16 %v6146
      %v6280 = vunpack.c.h.b16 %v6146
      %v6281 = vunpack.c.l.b16 %v6147
      %v6282 = vunpack.c.h.b16 %v6147
      %v6283 = vunpack.c.l.b16 %v6148
      %v6284 = vunpack.c.h.b16 %v6148
      %v6285 = vunpack.c.l.b16 %v6149
      %v6286 = vunpack.c.h.b16 %v6149
      %v6287 = vunpack.c.l.b16 %v6150
      %v6288 = vunpack.c.h.b16 %v6150
      %v6289 = vunpack.c.l.b16 %v6151
      %v6290 = vunpack.c.h.b16 %v6151
      %v6291 = vunpack.c.l.b16 %v6152
      %v6292 = vunpack.c.h.b16 %v6152
      %v6293 = vunpack.c.l.b16 %v6153
      %v6294 = vunpack.c.h.b16 %v6153
      %v6295 = vunpack.c.l.b16 %v6154
      %v6296 = vunpack.c.h.b16 %v6154
      %v6297 = vunpack.c.l.b16 %v6155
      %v6298 = vunpack.c.h.b16 %v6155
      %v6299 = vunpack.c.l.b16 %v6156
      %v6300 = vunpack.c.h.b16 %v6156
      %v6301 = vunpack.c.l.b16 %v6157
      %v6302 = vunpack.c.h.b16 %v6157
      %v6303 = vunpack.c.l.b16 %v6158
      %v6304 = vunpack.c.h.b16 %v6158
      %v6305 = vunpack.c.l.b16 %v6159
      %v6306 = vunpack.c.h.b16 %v6159
      %v6307 = vunpack.c.l.b16 %v6160
      %v6308 = vunpack.c.h.b16 %v6160
      %v6309 = vpack.c.b16 %v6247, %v6245
      %v6310 = vpack.c.b16 %v6248, %v6246
      %v6311 = vpack.c.b16 %v6251, %v6249
      %v6312 = vpack.c.b16 %v6252, %v6250
      %v6313 = vpack.c.b16 %v6255, %v6253
      %v6314 = vpack.c.b16 %v6256, %v6254
      %v6315 = vpack.c.b16 %v6259, %v6257
      %v6316 = vpack.c.b16 %v6260, %v6258
      %v6317 = vpack.c.b16 %v6263, %v6261
      %v6318 = vpack.c.b16 %v6264, %v6262
      %v6319 = vpack.c.b16 %v6267, %v6265
      %v6320 = vpack.c.b16 %v6268, %v6266
      %v6321 = vpack.c.b16 %v6271, %v6269
      %v6322 = vpack.c.b16 %v6272, %v6270
      %v6323 = vpack.c.b16 %v6275, %v6273
      %v6324 = vpack.c.b16 %v6276, %v6274
      %v6325 = vpack.c.b16 %v6279, %v6277
      %v6326 = vpack.c.b16 %v6280, %v6278
      %v6327 = vpack.c.b16 %v6283, %v6281
      %v6328 = vpack.c.b16 %v6284, %v6282
      %v6329 = vpack.c.b16 %v6287, %v6285
      %v6330 = vpack.c.b16 %v6288, %v6286
      %v6331 = vpack.c.b16 %v6291, %v6289
      %v6332 = vpack.c.b16 %v6292, %v6290
      %v6333 = vpack.c.b16 %v6295, %v6293
      %v6334 = vpack.c.b16 %v6296, %v6294
      %v6335 = vpack.c.b16 %v6299, %v6297
      %v6336 = vpack.c.b16 %v6300, %v6298
      %v6337 = vpack.c.b16 %v6303, %v6301
      %v6338 = vpack.c.b16 %v6304, %v6302
      %v6339 = vpack.c.b16 %v6307, %v6305
      %v6340 = vpack.c.b16 %v6308, %v6306
      %6373 = vmatprep.subr.bf16.mxu0 %v6324
      %6374 = vmatpush1.bf16.msra.mxu0 %v6323
      %6375 = vmatprep.subr.bf16.mxu0 %v6322
      %6376 = vmatpush1.bf16.msra.mxu0 %v6321
      %6377 = vmatprep.subr.bf16.mxu0 %v6320
      %6378 = vmatpush1.bf16.msra.mxu0 %v6319
      %6379 = vmatprep.subr.bf16.mxu0 %v6318
      %6380 = vmatpush1.bf16.msra.mxu0 %v6317
      %6381 = vmatprep.subr.bf16.mxu0 %v6316
      %6382 = vmatpush1.bf16.msra.mxu0 %v6315
      %6383 = vmatprep.subr.bf16.mxu0 %v6314
      %6384 = vmatpush1.bf16.msra.mxu0 %v6313
      %6385 = vmatprep.subr.bf16.mxu0 %v6312
      %6386 = vmatpush1.bf16.msra.mxu0 %v6311
      %6387 = vmatprep.subr.bf16.mxu0 %v6310
      %6388 = vmatpush1.bf16.msra.mxu0 %v6309
      %6389 = vmatprep.subr.bf16.mxu0 %v6340
      %6390 = vmatpush2.bf16.msra.mxu0 %v6339
      %6391 = vmatprep.subr.bf16.mxu0 %v6338
      %6392 = vmatpush2.bf16.msra.mxu0 %v6337
      %6393 = vmatprep.subr.bf16.mxu0 %v6336
      %6394 = vmatpush2.bf16.msra.mxu0 %v6335
      %6395 = vmatprep.subr.bf16.mxu0 %v6334
      %6396 = vmatpush2.bf16.msra.mxu0 %v6333
      %6397 = vmatprep.subr.bf16.mxu0 %v6332
      %6398 = vmatpush2.bf16.msra.mxu0 %v6331
      %6399 = vmatprep.subr.bf16.mxu0 %v6330
      %6400 = vmatpush2.bf16.msra.mxu0 %v6329
      %6401 = vmatprep.subr.bf16.mxu0 %v6328
      %6402 = vmatpush2.bf16.msra.mxu0 %v6327
      %6403 = vmatprep.subr.bf16.mxu0 %v6326
      %6404 = vmatpush2.bf16.msra.mxu0 %v6325
      %6405 = vmatprep.mubr.bf16.mxu0 %v6180
      %6406 = vmatmul.mubr.bf16.gmra.mxu0 %v6177
      %v6407 = vpop.f32.mrf.mxu0
      %v6408 = vadd.f32 0.0, %v6407
      %v6409 = vpop.f32.mrf.mxu0
      %v6410 = vadd.f32 0.0, %v6409
      %v6411 = vpop.f32.mrf.mxu0
      %v6412 = vadd.f32 0.0, %v6411
      %v6413 = vpop.f32.mrf.mxu0
      %v6414 = vadd.f32 0.0, %v6413
      %6415 = vmatprep.mubr.bf16.mxu0 %v6184
      %6416 = vmatmul.mubr.bf16.gmra.mxu0 %v6182
      %v6417 = vpop.f32.mrf.mxu0
      %v6418 = vadd.f32 0.0, %v6417
      %v6419 = vpop.f32.mrf.mxu0
      %v6420 = vadd.f32 0.0, %v6419
      %v6421 = vpop.f32.mrf.mxu0
      %v6422 = vadd.f32 0.0, %v6421
      %v6423 = vpop.f32.mrf.mxu0
      %v6424 = vadd.f32 0.0, %v6423
      %6425 = vmatprep.mubr.bf16.mxu0 %v6188
      %6426 = vmatmul.mubr.bf16.gmra.mxu0 %v6186
      %v6427 = vpop.f32.mrf.mxu0
      %v6428 = vadd.f32 0.0, %v6427
      %v6429 = vpop.f32.mrf.mxu0
      %v6430 = vadd.f32 0.0, %v6429
      %v6431 = vpop.f32.mrf.mxu0
      %v6432 = vadd.f32 0.0, %v6431
      %v6433 = vpop.f32.mrf.mxu0
      %v6434 = vadd.f32 0.0, %v6433
      %6435 = vmatprep.mubr.bf16.mxu0 %v6192
      %6436 = vmatmul.mubr.bf16.gmra.mxu0 %v6190
      %v6437 = vpop.f32.mrf.mxu0
      %v6438 = vadd.f32 0.0, %v6437
      %v6439 = vpop.f32.mrf.mxu0
      %v6440 = vadd.f32 0.0, %v6439
      %v6441 = vpop.f32.mrf.mxu0
      %v6442 = vadd.f32 0.0, %v6441
      %v6443 = vpop.f32.mrf.mxu0
      %v6444 = vadd.f32 0.0, %v6443
      %6445 = vmatprep.mubr.bf16.mxu0 %v6196
      %6446 = vmatmul.mubr.bf16.gmra.mxu0 %v6194
      %v6447 = vpop.f32.mrf.mxu0
      %v6448 = vadd.f32 0.0, %v6447
      %v6449 = vpop.f32.mrf.mxu0
      %v6450 = vadd.f32 0.0, %v6449
      %v6451 = vpop.f32.mrf.mxu0
      %v6452 = vadd.f32 0.0, %v6451
      %v6453 = vpop.f32.mrf.mxu0
      %v6454 = vadd.f32 0.0, %v6453
      %6455 = vmatprep.mubr.bf16.mxu0 %v6200
      %6456 = vmatmul.mubr.bf16.gmra.mxu0 %v6198
      %v6457 = vpop.f32.mrf.mxu0
      %v6458 = vadd.f32 0.0, %v6457
      %v6459 = vpop.f32.mrf.mxu0
      %v6460 = vadd.f32 0.0, %v6459
      %v6461 = vpop.f32.mrf.mxu0
      %v6462 = vadd.f32 0.0, %v6461
      %v6463 = vpop.f32.mrf.mxu0
      %v6464 = vadd.f32 0.0, %v6463
      %6465 = vdwg.mxu0
      %vm6466 = vsmask.f32 7424
      %v6468 = vshrl.u32 %v6074, 16
      %v6470 = vshll.u32 %v6074, 16
      %v6472 = vrot.slane %v6470, 1
      %v6473 = vor.u32 %v6468, %v6472
      %v6475 = vshll.u32 %v6076, 16
      %v6477 = vrot.slane %v6475, 1
      %v6478 = vsel %vm6466, %v6473, %v6477
      %v6480 = vshrl.u32 %v6075, 16
      %v6482 = vshll.u32 %v6075, 16
      %v6484 = vrot.slane %v6482, 1
      %v6485 = vor.u32 %v6480, %v6484
      %v6487 = vshll.u32 %v6077, 16
      %v6489 = vrot.slane %v6487, 1
      %v6490 = vsel %vm6466, %v6485, %v6489
      %v6491 = vshrl.u32 %v6076, 16
      %v6493 = vor.u32 %v6491, %v6477
      %v6495 = vshll.u32 %v6078, 16
      %v6497 = vrot.slane %v6495, 1
      %v6498 = vsel %vm6466, %v6493, %v6497
      %v6499 = vshrl.u32 %v6077, 16
      %v6501 = vor.u32 %v6499, %v6489
      %v6503 = vshll.u32 %v6079, 16
      %v6505 = vrot.slane %v6503, 1
      %v6506 = vsel %vm6466, %v6501, %v6505
      %v6507 = vshrl.u32 %v6078, 16
      %v6509 = vor.u32 %v6507, %v6497
      %v6511 = vshll.u32 %v6080, 16
      %v6513 = vrot.slane %v6511, 1
      %v6514 = vsel %vm6466, %v6509, %v6513
      %v6515 = vshrl.u32 %v6079, 16
      %v6517 = vor.u32 %v6515, %v6505
      %v6519 = vshll.u32 %v6081, 16
      %v6521 = vrot.slane %v6519, 1
      %v6522 = vsel %vm6466, %v6517, %v6521
      %v6523 = vshrl.u32 %v6080, 16
      %v6525 = vor.u32 %v6523, %v6513
      %v6527 = vshll.u32 %v6082, 16
      %v6529 = vrot.slane %v6527, 1
      %v6530 = vsel %vm6466, %v6525, %v6529
      %v6531 = vshrl.u32 %v6081, 16
      %v6533 = vor.u32 %v6531, %v6521
      %v6535 = vshll.u32 %v6083, 16
      %v6537 = vrot.slane %v6535, 1
      %v6538 = vsel %vm6466, %v6533, %v6537
      %v6539 = vshrl.u32 %v6082, 16
      %v6541 = vor.u32 %v6539, %v6529
      %v6543 = vshll.u32 %v6084, 16
      %v6545 = vrot.slane %v6543, 1
      %v6546 = vsel %vm6466, %v6541, %v6545
      %v6547 = vshrl.u32 %v6083, 16
      %v6549 = vor.u32 %v6547, %v6537
      %v6551 = vshll.u32 %v6085, 16
      %v6553 = vrot.slane %v6551, 1
      %v6554 = vsel %vm6466, %v6549, %v6553
      %v6555 = vshrl.u32 %v6084, 16
      %v6557 = vor.u32 %v6555, %v6545
      %v6559 = vshll.u32 %v6086, 16
      %v6561 = vrot.slane %v6559, 1
      %v6562 = vsel %vm6466, %v6557, %v6561
      %v6563 = vshrl.u32 %v6085, 16
      %v6565 = vor.u32 %v6563, %v6553
      %v6567 = vshll.u32 %v6087, 16
      %v6569 = vrot.slane %v6567, 1
      %v6570 = vsel %vm6466, %v6565, %v6569
      %v6615 = vunpack.c.l.b16 %v6088
      %v6616 = vunpack.c.h.b16 %v6088
      %v6617 = vunpack.c.l.b16 %v6089
      %v6618 = vunpack.c.h.b16 %v6089
      %v6619 = vunpack.c.l.b16 %v6090
      %v6620 = vunpack.c.h.b16 %v6090
      %v6621 = vunpack.c.l.b16 %v6091
      %v6622 = vunpack.c.h.b16 %v6091
      %v6623 = vunpack.c.l.b16 %v6092
      %v6624 = vunpack.c.h.b16 %v6092
      %v6625 = vunpack.c.l.b16 %v6093
      %v6626 = vunpack.c.h.b16 %v6093
      %v6627 = vunpack.c.l.b16 %v6094
      %v6628 = vunpack.c.h.b16 %v6094
      %v6629 = vunpack.c.l.b16 %v6095
      %v6630 = vunpack.c.h.b16 %v6095
      %v6631 = vunpack.c.l.b16 %v6096
      %v6632 = vunpack.c.h.b16 %v6096
      %v6633 = vunpack.c.l.b16 %v6097
      %v6634 = vunpack.c.h.b16 %v6097
      %v6635 = vunpack.c.l.b16 %v6098
      %v6636 = vunpack.c.h.b16 %v6098
      %v6637 = vunpack.c.l.b16 %v6099
      %v6638 = vunpack.c.h.b16 %v6099
      %v6639 = vunpack.c.l.b16 %v6100
      %v6640 = vunpack.c.h.b16 %v6100
      %v6641 = vunpack.c.l.b16 %v6101
      %v6642 = vunpack.c.h.b16 %v6101
      %v6643 = vunpack.c.l.b16 %v6102
      %v6644 = vunpack.c.h.b16 %v6102
      %v6645 = vunpack.c.l.b16 %v6103
      %v6646 = vunpack.c.h.b16 %v6103
      %v6647 = vunpack.c.l.b16 %v6104
      %v6648 = vunpack.c.h.b16 %v6104
      %v6649 = vunpack.c.l.b16 %v6105
      %v6650 = vunpack.c.h.b16 %v6105
      %v6651 = vunpack.c.l.b16 %v6106
      %v6652 = vunpack.c.h.b16 %v6106
      %v6653 = vunpack.c.l.b16 %v6107
      %v6654 = vunpack.c.h.b16 %v6107
      %v6655 = vunpack.c.l.b16 %v6108
      %v6656 = vunpack.c.h.b16 %v6108
      %v6657 = vunpack.c.l.b16 %v6109
      %v6658 = vunpack.c.h.b16 %v6109
      %v6659 = vunpack.c.l.b16 %v6110
      %v6660 = vunpack.c.h.b16 %v6110
      %v6661 = vunpack.c.l.b16 %v6111
      %v6662 = vunpack.c.h.b16 %v6111
      %v6663 = vunpack.c.l.b16 %v6112
      %v6664 = vunpack.c.h.b16 %v6112
      %v6665 = vunpack.c.l.b16 %v6113
      %v6666 = vunpack.c.h.b16 %v6113
      %v6667 = vunpack.c.l.b16 %v6114
      %v6668 = vunpack.c.h.b16 %v6114
      %v6669 = vunpack.c.l.b16 %v6115
      %v6670 = vunpack.c.h.b16 %v6115
      %v6671 = vunpack.c.l.b16 %v6116
      %v6672 = vunpack.c.h.b16 %v6116
      %v6673 = vunpack.c.l.b16 %v6117
      %v6674 = vunpack.c.h.b16 %v6117
      %v6675 = vunpack.c.l.b16 %v6118
      %v6676 = vunpack.c.h.b16 %v6118
      %v6677 = vunpack.c.l.b16 %v6119
      %v6678 = vunpack.c.h.b16 %v6119
      %v6679 = vpack.c.b16 %v6617, %v6615
      %v6680 = vpack.c.b16 %v6618, %v6616
      %v6681 = vpack.c.b16 %v6621, %v6619
      %v6682 = vpack.c.b16 %v6622, %v6620
      %v6683 = vpack.c.b16 %v6625, %v6623
      %v6684 = vpack.c.b16 %v6626, %v6624
      %v6685 = vpack.c.b16 %v6629, %v6627
      %v6686 = vpack.c.b16 %v6630, %v6628
      %v6687 = vpack.c.b16 %v6633, %v6631
      %v6688 = vpack.c.b16 %v6634, %v6632
      %v6689 = vpack.c.b16 %v6637, %v6635
      %v6690 = vpack.c.b16 %v6638, %v6636
      %v6691 = vpack.c.b16 %v6641, %v6639
      %v6692 = vpack.c.b16 %v6642, %v6640
      %v6693 = vpack.c.b16 %v6645, %v6643
      %v6694 = vpack.c.b16 %v6646, %v6644
      %v6695 = vpack.c.b16 %v6649, %v6647
      %v6696 = vpack.c.b16 %v6650, %v6648
      %v6697 = vpack.c.b16 %v6653, %v6651
      %v6698 = vpack.c.b16 %v6654, %v6652
      %v6699 = vpack.c.b16 %v6657, %v6655
      %v6700 = vpack.c.b16 %v6658, %v6656
      %v6701 = vpack.c.b16 %v6661, %v6659
      %v6702 = vpack.c.b16 %v6662, %v6660
      %v6703 = vpack.c.b16 %v6665, %v6663
      %v6704 = vpack.c.b16 %v6666, %v6664
      %v6705 = vpack.c.b16 %v6669, %v6667
      %v6706 = vpack.c.b16 %v6670, %v6668
      %v6707 = vpack.c.b16 %v6673, %v6671
      %v6708 = vpack.c.b16 %v6674, %v6672
      %v6709 = vpack.c.b16 %v6677, %v6675
      %v6710 = vpack.c.b16 %v6678, %v6676
      %6743 = vmatprep.subr.bf16.mxu0 %v6694
      %6744 = vmatpush1.bf16.msra.mxu0 %v6693
      %6745 = vmatprep.subr.bf16.mxu0 %v6692
      %6746 = vmatpush1.bf16.msra.mxu0 %v6691
      %6747 = vmatprep.subr.bf16.mxu0 %v6690
      %6748 = vmatpush1.bf16.msra.mxu0 %v6689
      %6749 = vmatprep.subr.bf16.mxu0 %v6688
      %6750 = vmatpush1.bf16.msra.mxu0 %v6687
      %6751 = vmatprep.subr.bf16.mxu0 %v6686
      %6752 = vmatpush1.bf16.msra.mxu0 %v6685
      %6753 = vmatprep.subr.bf16.mxu0 %v6684
      %6754 = vmatpush1.bf16.msra.mxu0 %v6683
      %6755 = vmatprep.subr.bf16.mxu0 %v6682
      %6756 = vmatpush1.bf16.msra.mxu0 %v6681
      %6757 = vmatprep.subr.bf16.mxu0 %v6680
      %6758 = vmatpush1.bf16.msra.mxu0 %v6679
      %6759 = vmatprep.subr.bf16.mxu0 %v6710
      %6760 = vmatpush2.bf16.msra.mxu0 %v6709
      %6761 = vmatprep.subr.bf16.mxu0 %v6708
      %6762 = vmatpush2.bf16.msra.mxu0 %v6707
      %6763 = vmatprep.subr.bf16.mxu0 %v6706
      %6764 = vmatpush2.bf16.msra.mxu0 %v6705
      %6765 = vmatprep.subr.bf16.mxu0 %v6704
      %6766 = vmatpush2.bf16.msra.mxu0 %v6703
      %6767 = vmatprep.subr.bf16.mxu0 %v6702
      %6768 = vmatpush2.bf16.msra.mxu0 %v6701
      %6769 = vmatprep.subr.bf16.mxu0 %v6700
      %6770 = vmatpush2.bf16.msra.mxu0 %v6699
      %6771 = vmatprep.subr.bf16.mxu0 %v6698
      %6772 = vmatpush2.bf16.msra.mxu0 %v6697
      %6773 = vmatprep.subr.bf16.mxu0 %v6696
      %6774 = vmatpush2.bf16.msra.mxu0 %v6695
      %6775 = vmatprep.mubr.bf16.mxu0 %v6490
      %6776 = vmatmul.mubr.bf16.gmra.mxu0 %v6478
      %v6777 = vpop.f32.mrf.mxu0
      %v6778 = vadd.f32 %v6408, %v6777
      %v6779 = vpop.f32.mrf.mxu0
      %v6780 = vadd.f32 %v6410, %v6779
      %v6781 = vpop.f32.mrf.mxu0
      %v6782 = vadd.f32 %v6412, %v6781
      %v6783 = vpop.f32.mrf.mxu0
      %v6784 = vadd.f32 %v6414, %v6783
      %6785 = vmatprep.mubr.bf16.mxu0 %v6506
      %6786 = vmatmul.mubr.bf16.gmra.mxu0 %v6498
      %v6787 = vpop.f32.mrf.mxu0
      %v6788 = vadd.f32 %v6418, %v6787
      %v6789 = vpop.f32.mrf.mxu0
      %v6790 = vadd.f32 %v6420, %v6789
      %v6791 = vpop.f32.mrf.mxu0
      %v6792 = vadd.f32 %v6422, %v6791
      %v6793 = vpop.f32.mrf.mxu0
      %v6794 = vadd.f32 %v6424, %v6793
      %6795 = vmatprep.mubr.bf16.mxu0 %v6522
      %6796 = vmatmul.mubr.bf16.gmra.mxu0 %v6514
      %v6797 = vpop.f32.mrf.mxu0
      %v6798 = vadd.f32 %v6428, %v6797
      %v6799 = vpop.f32.mrf.mxu0
      %v6800 = vadd.f32 %v6430, %v6799
      %v6801 = vpop.f32.mrf.mxu0
      %v6802 = vadd.f32 %v6432, %v6801
      %v6803 = vpop.f32.mrf.mxu0
      %v6804 = vadd.f32 %v6434, %v6803
      %6805 = vmatprep.mubr.bf16.mxu0 %v6538
      %6806 = vmatmul.mubr.bf16.gmra.mxu0 %v6530
      %v6807 = vpop.f32.mrf.mxu0
      %v6808 = vadd.f32 %v6438, %v6807
      %v6809 = vpop.f32.mrf.mxu0
      %v6810 = vadd.f32 %v6440, %v6809
      %v6811 = vpop.f32.mrf.mxu0
      %v6812 = vadd.f32 %v6442, %v6811
      %v6813 = vpop.f32.mrf.mxu0
      %v6814 = vadd.f32 %v6444, %v6813
      %6815 = vmatprep.mubr.bf16.mxu0 %v6554
      %6816 = vmatmul.mubr.bf16.gmra.mxu0 %v6546
      %v6817 = vpop.f32.mrf.mxu0
      %v6818 = vadd.f32 %v6448, %v6817
      %v6819 = vpop.f32.mrf.mxu0
      %v6820 = vadd.f32 %v6450, %v6819
      %v6821 = vpop.f32.mrf.mxu0
      %v6822 = vadd.f32 %v6452, %v6821
      %v6823 = vpop.f32.mrf.mxu0
      %v6824 = vadd.f32 %v6454, %v6823
      %6825 = vmatprep.mubr.bf16.mxu0 %v6570
      %6826 = vmatmul.mubr.bf16.gmra.mxu0 %v6562
      %v6827 = vpop.f32.mrf.mxu0
      %v6828 = vadd.f32 %v6458, %v6827
      %v6829 = vpop.f32.mrf.mxu0
      %v6830 = vadd.f32 %v6460, %v6829
      %v6831 = vpop.f32.mrf.mxu0
      %v6832 = vadd.f32 %v6462, %v6831
      %v6833 = vpop.f32.mrf.mxu0
      %v6834 = vadd.f32 %v6464, %v6833
      %6835 = vdwg.mxu0
      %v6836 = vld [vmem:[#allocation2] sm:$0xf8]
      %v6837 = vld [vmem:[#allocation2 + $0x8] sm:$0xf8]
      %v6838 = vld [vmem:[#allocation2 + $0xc0] sm:$0x7]
      %v6839 = vld [vmem:[#allocation2 + $0xc8] sm:$0x7]
      %v6840 = vpack.c.bf16 %v6050, %v6836
      %v6841 = vpack.c.bf16 %v6051, %v6837
      %v6842 = vpack.c.bf16 %v6838, %v6838
      %v6843 = vpack.c.bf16 %v6839, %v6839
      %s6844 = scalar_lea.vmem %s4, 512
      %v6845 = vld [vmem:[%s6844] sm:$0xff]
      %v6846 = vld [vmem:[%s6844 + $0x8] sm:$0xff]
      %v6847 = vld [vmem:[%s6844 + $0x10] sm:$0xff]
      %v6848 = vld [vmem:[%s6844 + $0x18] sm:$0xff]
      %v6849 = vld [vmem:[%s6844 + $0x20] sm:$0xff]
      %v6850 = vld [vmem:[%s6844 + $0x28] sm:$0xff]
      %v6851 = vld [vmem:[%s6844 + $0x30] sm:$0xff]
      %v6852 = vld [vmem:[%s6844 + $0x38] sm:$0xff]
      %v6853 = vld [vmem:[%s6844 + $0x40] sm:$0xff]
      %v6854 = vld [vmem:[%s6844 + $0x48] sm:$0xff]
      %v6855 = vld [vmem:[%s6844 + $0x50] sm:$0xff]
      %v6856 = vld [vmem:[%s6844 + $0x58] sm:$0xff]
      %v6857 = vld [vmem:[%s6844 + $0x60] sm:$0xff]
      %v6858 = vld [vmem:[%s6844 + $0x68] sm:$0xff]
      %v6859 = vld [vmem:[%s6844 + $0x70] sm:$0xff]
      %v6860 = vld [vmem:[%s6844 + $0x78] sm:$0xff]
      %v6861 = vld [vmem:[%s6844 + $0x80] sm:$0xff]
      %v6862 = vld [vmem:[%s6844 + $0x88] sm:$0xff]
      %v6863 = vld [vmem:[%s6844 + $0x90] sm:$0xff]
      %v6864 = vld [vmem:[%s6844 + $0x98] sm:$0xff]
      %v6865 = vld [vmem:[%s6844 + $0xa0] sm:$0xff]
      %v6866 = vld [vmem:[%s6844 + $0xa8] sm:$0xff]
      %v6867 = vld [vmem:[%s6844 + $0xb0] sm:$0xff]
      %v6868 = vld [vmem:[%s6844 + $0xb8] sm:$0xff]
      %v6869 = vld [vmem:[%s6844 + $0xc0] sm:$0xff]
      %v6870 = vld [vmem:[%s6844 + $0xc8] sm:$0xff]
      %v6871 = vld [vmem:[%s6844 + $0xd0] sm:$0xff]
      %v6872 = vld [vmem:[%s6844 + $0xd8] sm:$0xff]
      %v6873 = vld [vmem:[%s6844 + $0xe0] sm:$0xff]
      %v6874 = vld [vmem:[%s6844 + $0xe8] sm:$0xff]
      %v6875 = vld [vmem:[%s6844 + $0xf0] sm:$0xff]
      %v6876 = vld [vmem:[%s6844 + $0xf8] sm:$0xff]
      %vm6877 = vsmask.f32 6400
      %v6879 = vshrl.u32 %v6840, 16
      %v6881 = vrot.slane %v6879, 1
      %v6882 = vshll.u32 %v6840, 16
      %v6884 = vrot.slane %v6882, 2
      %v6885 = vor.u32 %v6881, %v6884
      %v6886 = vrot.slane %v6491, 1
      %v6887 = vrot.slane %v6475, 2
      %v6888 = vor.u32 %v6886, %v6887
      %v6889 = vsel %vm6877, %v6885, %v6888
      %v6891 = vshrl.u32 %v6841, 16
      %v6893 = vrot.slane %v6891, 1
      %v6894 = vshll.u32 %v6841, 16
      %v6896 = vrot.slane %v6894, 2
      %v6897 = vor.u32 %v6893, %v6896
      %v6898 = vrot.slane %v6499, 1
      %v6899 = vrot.slane %v6487, 2
      %v6900 = vor.u32 %v6898, %v6899
      %v6901 = vsel %vm6877, %v6897, %v6900
      %v6902 = vrot.slane %v6507, 1
      %v6903 = vrot.slane %v6495, 2
      %v6904 = vor.u32 %v6902, %v6903
      %v6905 = vsel %vm6877, %v6888, %v6904
      %v6906 = vrot.slane %v6515, 1
      %v6907 = vrot.slane %v6503, 2
      %v6908 = vor.u32 %v6906, %v6907
      %v6909 = vsel %vm6877, %v6900, %v6908
      %v6910 = vrot.slane %v6523, 1
      %v6911 = vrot.slane %v6511, 2
      %v6912 = vor.u32 %v6910, %v6911
      %v6913 = vsel %vm6877, %v6904, %v6912
      %v6914 = vrot.slane %v6531, 1
      %v6915 = vrot.slane %v6519, 2
      %v6916 = vor.u32 %v6914, %v6915
      %v6917 = vsel %vm6877, %v6908, %v6916
      %v6918 = vrot.slane %v6539, 1
      %v6919 = vrot.slane %v6527, 2
      %v6920 = vor.u32 %v6918, %v6919
      %v6921 = vsel %vm6877, %v6912, %v6920
      %v6922 = vrot.slane %v6547, 1
      %v6923 = vrot.slane %v6535, 2
      %v6924 = vor.u32 %v6922, %v6923
      %v6925 = vsel %vm6877, %v6916, %v6924
      %v6926 = vrot.slane %v6555, 1
      %v6927 = vrot.slane %v6543, 2
      %v6928 = vor.u32 %v6926, %v6927
      %v6929 = vsel %vm6877, %v6920, %v6928
      %v6930 = vrot.slane %v6563, 1
      %v6931 = vrot.slane %v6551, 2
      %v6932 = vor.u32 %v6930, %v6931
      %v6933 = vsel %vm6877, %v6924, %v6932
      %v6935 = vshrl.u32 %v6842, 16
      %v6937 = vrot.slane %v6935, 1
      %v6938 = vshll.u32 %v6842, 16
      %v6940 = vrot.slane %v6938, 2
      %v6941 = vor.u32 %v6937, %v6940
      %v6942 = vsel %vm6877, %v6928, %v6941
      %v6944 = vshrl.u32 %v6843, 16
      %v6946 = vrot.slane %v6944, 1
      %v6947 = vshll.u32 %v6843, 16
      %v6949 = vrot.slane %v6947, 2
      %v6950 = vor.u32 %v6946, %v6949
      %v6951 = vsel %vm6877, %v6932, %v6950
      %v6996 = vunpack.c.l.b16 %v6845
      %v6997 = vunpack.c.h.b16 %v6845
      %v6998 = vunpack.c.l.b16 %v6846
      %v6999 = vunpack.c.h.b16 %v6846
      %v7000 = vunpack.c.l.b16 %v6847
      %v7001 = vunpack.c.h.b16 %v6847
      %v7002 = vunpack.c.l.b16 %v6848
      %v7003 = vunpack.c.h.b16 %v6848
      %v7004 = vunpack.c.l.b16 %v6849
      %v7005 = vunpack.c.h.b16 %v6849
      %v7006 = vunpack.c.l.b16 %v6850
      %v7007 = vunpack.c.h.b16 %v6850
      %v7008 = vunpack.c.l.b16 %v6851
      %v7009 = vunpack.c.h.b16 %v6851
      %v7010 = vunpack.c.l.b16 %v6852
      %v7011 = vunpack.c.h.b16 %v6852
      %v7012 = vunpack.c.l.b16 %v6853
      %v7013 = vunpack.c.h.b16 %v6853
      %v7014 = vunpack.c.l.b16 %v6854
      %v7015 = vunpack.c.h.b16 %v6854
      %v7016 = vunpack.c.l.b16 %v6855
      %v7017 = vunpack.c.h.b16 %v6855
      %v7018 = vunpack.c.l.b16 %v6856
      %v7019 = vunpack.c.h.b16 %v6856
      %v7020 = vunpack.c.l.b16 %v6857
      %v7021 = vunpack.c.h.b16 %v6857
      %v7022 = vunpack.c.l.b16 %v6858
      %v7023 = vunpack.c.h.b16 %v6858
      %v7024 = vunpack.c.l.b16 %v6859
      %v7025 = vunpack.c.h.b16 %v6859
      %v7026 = vunpack.c.l.b16 %v6860
      %v7027 = vunpack.c.h.b16 %v6860
      %v7028 = vunpack.c.l.b16 %v6861
      %v7029 = vunpack.c.h.b16 %v6861
      %v7030 = vunpack.c.l.b16 %v6862
      %v7031 = vunpack.c.h.b16 %v6862
      %v7032 = vunpack.c.l.b16 %v6863
      %v7033 = vunpack.c.h.b16 %v6863
      %v7034 = vunpack.c.l.b16 %v6864
      %v7035 = vunpack.c.h.b16 %v6864
      %v7036 = vunpack.c.l.b16 %v6865
      %v7037 = vunpack.c.h.b16 %v6865
      %v7038 = vunpack.c.l.b16 %v6866
      %v7039 = vunpack.c.h.b16 %v6866
      %v7040 = vunpack.c.l.b16 %v6867
      %v7041 = vunpack.c.h.b16 %v6867
      %v7042 = vunpack.c.l.b16 %v6868
      %v7043 = vunpack.c.h.b16 %v6868
      %v7044 = vunpack.c.l.b16 %v6869
      %v7045 = vunpack.c.h.b16 %v6869
      %v7046 = vunpack.c.l.b16 %v6870
      %v7047 = vunpack.c.h.b16 %v6870
      %v7048 = vunpack.c.l.b16 %v6871
      %v7049 = vunpack.c.h.b16 %v6871
      %v7050 = vunpack.c.l.b16 %v6872
      %v7051 = vunpack.c.h.b16 %v6872
      %v7052 = vunpack.c.l.b16 %v6873
      %v7053 = vunpack.c.h.b16 %v6873
      %v7054 = vunpack.c.l.b16 %v6874
      %v7055 = vunpack.c.h.b16 %v6874
      %v7056 = vunpack.c.l.b16 %v6875
      %v7057 = vunpack.c.h.b16 %v6875
      %v7058 = vunpack.c.l.b16 %v6876
      %v7059 = vunpack.c.h.b16 %v6876
      %v7060 = vpack.c.b16 %v6998, %v6996
      %v7061 = vpack.c.b16 %v6999, %v6997
      %v7062 = vpack.c.b16 %v7002, %v7000
      %v7063 = vpack.c.b16 %v7003, %v7001
      %v7064 = vpack.c.b16 %v7006, %v7004
      %v7065 = vpack.c.b16 %v7007, %v7005
      %v7066 = vpack.c.b16 %v7010, %v7008
      %v7067 = vpack.c.b16 %v7011, %v7009
      %v7068 = vpack.c.b16 %v7014, %v7012
      %v7069 = vpack.c.b16 %v7015, %v7013
      %v7070 = vpack.c.b16 %v7018, %v7016
      %v7071 = vpack.c.b16 %v7019, %v7017
      %v7072 = vpack.c.b16 %v7022, %v7020
      %v7073 = vpack.c.b16 %v7023, %v7021
      %v7074 = vpack.c.b16 %v7026, %v7024
      %v7075 = vpack.c.b16 %v7027, %v7025
      %v7076 = vpack.c.b16 %v7030, %v7028
      %v7077 = vpack.c.b16 %v7031, %v7029
      %v7078 = vpack.c.b16 %v7034, %v7032
      %v7079 = vpack.c.b16 %v7035, %v7033
      %v7080 = vpack.c.b16 %v7038, %v7036
      %v7081 = vpack.c.b16 %v7039, %v7037
      %v7082 = vpack.c.b16 %v7042, %v7040
      %v7083 = vpack.c.b16 %v7043, %v7041
      %v7084 = vpack.c.b16 %v7046, %v7044
      %v7085 = vpack.c.b16 %v7047, %v7045
      %v7086 = vpack.c.b16 %v7050, %v7048
      %v7087 = vpack.c.b16 %v7051, %v7049
      %v7088 = vpack.c.b16 %v7054, %v7052
      %v7089 = vpack.c.b16 %v7055, %v7053
      %v7090 = vpack.c.b16 %v7058, %v7056
      %v7091 = vpack.c.b16 %v7059, %v7057
      %7124 = vmatprep.subr.bf16.mxu0 %v7075
      %7125 = vmatpush1.bf16.msra.mxu0 %v7074
      %7126 = vmatprep.subr.bf16.mxu0 %v7073
      %7127 = vmatpush1.bf16.msra.mxu0 %v7072
      %7128 = vmatprep.subr.bf16.mxu0 %v7071
      %7129 = vmatpush1.bf16.msra.mxu0 %v7070
      %7130 = vmatprep.subr.bf16.mxu0 %v7069
      %7131 = vmatpush1.bf16.msra.mxu0 %v7068
      %7132 = vmatprep.subr.bf16.mxu0 %v7067
      %7133 = vmatpush1.bf16.msra.mxu0 %v7066
      %7134 = vmatprep.subr.bf16.mxu0 %v7065
      %7135 = vmatpush1.bf16.msra.mxu0 %v7064
      %7136 = vmatprep.subr.bf16.mxu0 %v7063
      %7137 = vmatpush1.bf16.msra.mxu0 %v7062
      %7138 = vmatprep.subr.bf16.mxu0 %v7061
      %7139 = vmatpush1.bf16.msra.mxu0 %v7060
      %7140 = vmatprep.subr.bf16.mxu0 %v7091
      %7141 = vmatpush2.bf16.msra.mxu0 %v7090
      %7142 = vmatprep.subr.bf16.mxu0 %v7089
      %7143 = vmatpush2.bf16.msra.mxu0 %v7088
      %7144 = vmatprep.subr.bf16.mxu0 %v7087
      %7145 = vmatpush2.bf16.msra.mxu0 %v7086
      %7146 = vmatprep.subr.bf16.mxu0 %v7085
      %7147 = vmatpush2.bf16.msra.mxu0 %v7084
      %7148 = vmatprep.subr.bf16.mxu0 %v7083
      %7149 = vmatpush2.bf16.msra.mxu0 %v7082
      %7150 = vmatprep.subr.bf16.mxu0 %v7081
      %7151 = vmatpush2.bf16.msra.mxu0 %v7080
      %7152 = vmatprep.subr.bf16.mxu0 %v7079
      %7153 = vmatpush2.bf16.msra.mxu0 %v7078
      %7154 = vmatprep.subr.bf16.mxu0 %v7077
      %7155 = vmatpush2.bf16.msra.mxu0 %v7076
      %7156 = vmatprep.mubr.bf16.mxu0 %v6901
      %7157 = vmatmul.mubr.bf16.gmra.mxu0 %v6889
      %v7158 = vpop.f32.mrf.mxu0
      %v7159 = vadd.f32 0.0, %v7158
      %v7160 = vpop.f32.mrf.mxu0
      %v7161 = vadd.f32 0.0, %v7160
      %v7162 = vpop.f32.mrf.mxu0
      %v7163 = vadd.f32 0.0, %v7162
      %v7164 = vpop.f32.mrf.mxu0
      %v7165 = vadd.f32 0.0, %v7164
      %7166 = vmatprep.mubr.bf16.mxu0 %v6909
      %7167 = vmatmul.mubr.bf16.gmra.mxu0 %v6905
      %v7168 = vpop.f32.mrf.mxu0
      %v7169 = vadd.f32 0.0, %v7168
      %v7170 = vpop.f32.mrf.mxu0
      %v7171 = vadd.f32 0.0, %v7170
      %v7172 = vpop.f32.mrf.mxu0
      %v7173 = vadd.f32 0.0, %v7172
      %v7174 = vpop.f32.mrf.mxu0
      %v7175 = vadd.f32 0.0, %v7174
      %7176 = vmatprep.mubr.bf16.mxu0 %v6917
      %7177 = vmatmul.mubr.bf16.gmra.mxu0 %v6913
      %v7178 = vpop.f32.mrf.mxu0
      %v7179 = vadd.f32 0.0, %v7178
      %v7180 = vpop.f32.mrf.mxu0
      %v7181 = vadd.f32 0.0, %v7180
      %v7182 = vpop.f32.mrf.mxu0
      %v7183 = vadd.f32 0.0, %v7182
      %v7184 = vpop.f32.mrf.mxu0
      %v7185 = vadd.f32 0.0, %v7184
      %7186 = vmatprep.mubr.bf16.mxu0 %v6925
      %7187 = vmatmul.mubr.bf16.gmra.mxu0 %v6921
      %v7188 = vpop.f32.mrf.mxu0
      %v7189 = vadd.f32 0.0, %v7188
      %v7190 = vpop.f32.mrf.mxu0
      %v7191 = vadd.f32 0.0, %v7190
      %v7192 = vpop.f32.mrf.mxu0
      %v7193 = vadd.f32 0.0, %v7192
      %v7194 = vpop.f32.mrf.mxu0
      %v7195 = vadd.f32 0.0, %v7194
      %7196 = vmatprep.mubr.bf16.mxu0 %v6933
      %7197 = vmatmul.mubr.bf16.gmra.mxu0 %v6929
      %v7198 = vpop.f32.mrf.mxu0
      %v7199 = vadd.f32 0.0, %v7198
      %v7200 = vpop.f32.mrf.mxu0
      %v7201 = vadd.f32 0.0, %v7200
      %v7202 = vpop.f32.mrf.mxu0
      %v7203 = vadd.f32 0.0, %v7202
      %v7204 = vpop.f32.mrf.mxu0
      %v7205 = vadd.f32 0.0, %v7204
      %7206 = vmatprep.mubr.bf16.mxu0 %v6951
      %7207 = vmatmul.mubr.bf16.gmra.mxu0 %v6942
      %v7208 = vpop.f32.mrf.mxu0
      %v7209 = vadd.f32 0.0, %v7208
      %v7210 = vpop.f32.mrf.mxu0
      %v7211 = vadd.f32 0.0, %v7210
      %v7212 = vpop.f32.mrf.mxu0
      %v7213 = vadd.f32 0.0, %v7212
      %v7214 = vpop.f32.mrf.mxu0
      %v7215 = vadd.f32 0.0, %v7214
      %7216 = vdwg.mxu0
      %v7217 = vadd.f32 %v6778, %v7159
      %v7218 = vadd.f32 %v6780, %v7161
      %v7219 = vadd.f32 %v6782, %v7163
      %v7220 = vadd.f32 %v6784, %v7165
      %v7221 = vadd.f32 %v6788, %v7169
      %v7222 = vadd.f32 %v6790, %v7171
      %v7223 = vadd.f32 %v6792, %v7173
      %v7224 = vadd.f32 %v6794, %v7175
      %v7225 = vadd.f32 %v6798, %v7179
      %v7226 = vadd.f32 %v6800, %v7181
      %v7227 = vadd.f32 %v6802, %v7183
      %v7228 = vadd.f32 %v6804, %v7185
      %v7229 = vadd.f32 %v6808, %v7189
      %v7230 = vadd.f32 %v6810, %v7191
      %v7231 = vadd.f32 %v6812, %v7193
      %v7232 = vadd.f32 %v6814, %v7195
      %v7233 = vadd.f32 %v6818, %v7199
      %v7234 = vadd.f32 %v6820, %v7201
      %v7235 = vadd.f32 %v6822, %v7203
      %v7236 = vadd.f32 %v6824, %v7205
      %v7237 = vadd.f32 %v6828, %v7209
      %v7238 = vadd.f32 %v6830, %v7211
      %v7239 = vadd.f32 %v6832, %v7213
      %v7240 = vadd.f32 %v6834, %v7215
      %v7241 = vld [vmem:[#allocation2 + $0x10] sm:$0xe0]
      %v7242 = vld [vmem:[#allocation2 + $0x18] sm:$0xe0]
      %v7243 = vld [vmem:[#allocation2 + $0x20] sm:$0xff]
      %v7244 = vld [vmem:[#allocation2 + $0x28] sm:$0xff]
      %v7245 = vld [vmem:[#allocation2 + $0x30] sm:$0xff]
      %v7246 = vld [vmem:[#allocation2 + $0x38] sm:$0xff]
      %v7247 = vld [vmem:[#allocation2 + $0x40] sm:$0xff]
      %v7248 = vld [vmem:[#allocation2 + $0x48] sm:$0xff]
      %v7249 = vld [vmem:[#allocation2 + $0x50] sm:$0xff]
      %v7250 = vld [vmem:[#allocation2 + $0x58] sm:$0xff]
      %v7251 = vld [vmem:[#allocation2 + $0x60] sm:$0xff]
      %v7252 = vld [vmem:[#allocation2 + $0x68] sm:$0xff]
      %v7253 = vld [vmem:[#allocation2 + $0x70] sm:$0xff]
      %v7254 = vld [vmem:[#allocation2 + $0x78] sm:$0xff]
      %v7255 = vld [vmem:[#allocation2 + $0x80] sm:$0xff]
      %v7256 = vld [vmem:[#allocation2 + $0x88] sm:$0xff]
      %v7257 = vld [vmem:[#allocation2 + $0x90] sm:$0xff]
      %v7258 = vld [vmem:[#allocation2 + $0x98] sm:$0xff]
      %v7259 = vld [vmem:[#allocation2 + $0xa0] sm:$0xff]
      %v7260 = vld [vmem:[#allocation2 + $0xa8] sm:$0xff]
      %v7261 = vld [vmem:[#allocation2 + $0xb0] sm:$0xff]
      %v7262 = vld [vmem:[#allocation2 + $0xb8] sm:$0xff]
      %v7263 = vld [vmem:[#allocation2 + $0xc0] sm:$0xff]
      %v7264 = vld [vmem:[#allocation2 + $0xc8] sm:$0xff]
      %v7265 = vld [vmem:[#allocation2 + $0xd0] sm:$0x1f]
      %v7266 = vld [vmem:[#allocation2 + $0xd8] sm:$0x1f]
      %v7267 = vpack.c.bf16 %v7243, %v7241
      %v7268 = vpack.c.bf16 %v7244, %v7242
      %v7269 = vpack.c.bf16 %v7247, %v7245
      %v7270 = vpack.c.bf16 %v7248, %v7246
      %v7271 = vpack.c.bf16 %v7251, %v7249
      %v7272 = vpack.c.bf16 %v7252, %v7250
      %v7273 = vpack.c.bf16 %v7255, %v7253
      %v7274 = vpack.c.bf16 %v7256, %v7254
      %v7275 = vpack.c.bf16 %v7259, %v7257
      %v7276 = vpack.c.bf16 %v7260, %v7258
      %v7277 = vpack.c.bf16 %v7263, %v7261
      %v7278 = vpack.c.bf16 %v7264, %v7262
      %v7279 = vpack.c.bf16 %v7265, %v7265
      %v7280 = vpack.c.bf16 %v7266, %v7266
      %s7281 = scalar_lea.vmem %s4, 768
      %v7282 = vld [vmem:[%s7281] sm:$0xff]
      %v7283 = vld [vmem:[%s7281 + $0x8] sm:$0xff]
      %v7284 = vld [vmem:[%s7281 + $0x10] sm:$0xff]
      %v7285 = vld [vmem:[%s7281 + $0x18] sm:$0xff]
      %v7286 = vld [vmem:[%s7281 + $0x20] sm:$0xff]
      %v7287 = vld [vmem:[%s7281 + $0x28] sm:$0xff]
      %v7288 = vld [vmem:[%s7281 + $0x30] sm:$0xff]
      %v7289 = vld [vmem:[%s7281 + $0x38] sm:$0xff]
      %v7290 = vld [vmem:[%s7281 + $0x40] sm:$0xff]
      %v7291 = vld [vmem:[%s7281 + $0x48] sm:$0xff]
      %v7292 = vld [vmem:[%s7281 + $0x50] sm:$0xff]
      %v7293 = vld [vmem:[%s7281 + $0x58] sm:$0xff]
      %v7294 = vld [vmem:[%s7281 + $0x60] sm:$0xff]
      %v7295 = vld [vmem:[%s7281 + $0x68] sm:$0xff]
      %v7296 = vld [vmem:[%s7281 + $0x70] sm:$0xff]
      %v7297 = vld [vmem:[%s7281 + $0x78] sm:$0xff]
      %v7298 = vld [vmem:[%s7281 + $0x80] sm:$0xff]
      %v7299 = vld [vmem:[%s7281 + $0x88] sm:$0xff]
      %v7300 = vld [vmem:[%s7281 + $0x90] sm:$0xff]
      %v7301 = vld [vmem:[%s7281 + $0x98] sm:$0xff]
      %v7302 = vld [vmem:[%s7281 + $0xa0] sm:$0xff]
      %v7303 = vld [vmem:[%s7281 + $0xa8] sm:$0xff]
      %v7304 = vld [vmem:[%s7281 + $0xb0] sm:$0xff]
      %v7305 = vld [vmem:[%s7281 + $0xb8] sm:$0xff]
      %v7306 = vld [vmem:[%s7281 + $0xc0] sm:$0xff]
      %v7307 = vld [vmem:[%s7281 + $0xc8] sm:$0xff]
      %v7308 = vld [vmem:[%s7281 + $0xd0] sm:$0xff]
      %v7309 = vld [vmem:[%s7281 + $0xd8] sm:$0xff]
      %v7310 = vld [vmem:[%s7281 + $0xe0] sm:$0xff]
      %v7311 = vld [vmem:[%s7281 + $0xe8] sm:$0xff]
      %v7312 = vld [vmem:[%s7281 + $0xf0] sm:$0xff]
      %v7313 = vld [vmem:[%s7281 + $0xf8] sm:$0xff]
      %vm7314 = vsmask.f32 5376
      %v7316 = vshrl.u32 %v7267, 16
      %v7318 = vrot.slane %v7316, 2
      %v7319 = vshll.u32 %v7267, 16
      %v7321 = vrot.slane %v7319, 3
      %v7322 = vor.u32 %v7318, %v7321
      %v7324 = vshrl.u32 %v7269, 16
      %v7326 = vrot.slane %v7324, 2
      %v7327 = vshll.u32 %v7269, 16
      %v7329 = vrot.slane %v7327, 3
      %v7330 = vor.u32 %v7326, %v7329
      %v7331 = vsel %vm7314, %v7322, %v7330
      %v7333 = vshrl.u32 %v7268, 16
      %v7335 = vrot.slane %v7333, 2
      %v7336 = vshll.u32 %v7268, 16
      %v7338 = vrot.slane %v7336, 3
      %v7339 = vor.u32 %v7335, %v7338
      %v7341 = vshrl.u32 %v7270, 16
      %v7343 = vrot.slane %v7341, 2
      %v7344 = vshll.u32 %v7270, 16
      %v7346 = vrot.slane %v7344, 3
      %v7347 = vor.u32 %v7343, %v7346
      %v7348 = vsel %vm7314, %v7339, %v7347
      %v7350 = vshrl.u32 %v7271, 16
      %v7352 = vrot.slane %v7350, 2
      %v7353 = vshll.u32 %v7271, 16
      %v7355 = vrot.slane %v7353, 3
      %v7356 = vor.u32 %v7352, %v7355
      %v7357 = vsel %vm7314, %v7330, %v7356
      %v7359 = vshrl.u32 %v7272, 16
      %v7361 = vrot.slane %v7359, 2
      %v7362 = vshll.u32 %v7272, 16
      %v7364 = vrot.slane %v7362, 3
      %v7365 = vor.u32 %v7361, %v7364
      %v7366 = vsel %vm7314, %v7347, %v7365
      %v7368 = vshrl.u32 %v7273, 16
      %v7370 = vrot.slane %v7368, 2
      %v7371 = vshll.u32 %v7273, 16
      %v7373 = vrot.slane %v7371, 3
      %v7374 = vor.u32 %v7370, %v7373
      %v7375 = vsel %vm7314, %v7356, %v7374
      %v7377 = vshrl.u32 %v7274, 16
      %v7379 = vrot.slane %v7377, 2
      %v7380 = vshll.u32 %v7274, 16
      %v7382 = vrot.slane %v7380, 3
      %v7383 = vor.u32 %v7379, %v7382
      %v7384 = vsel %vm7314, %v7365, %v7383
      %v7386 = vshrl.u32 %v7275, 16
      %v7388 = vrot.slane %v7386, 2
      %v7389 = vshll.u32 %v7275, 16
      %v7391 = vrot.slane %v7389, 3
      %v7392 = vor.u32 %v7388, %v7391
      %v7393 = vsel %vm7314, %v7374, %v7392
      %v7395 = vshrl.u32 %v7276, 16
      %v7397 = vrot.slane %v7395, 2
      %v7398 = vshll.u32 %v7276, 16
      %v7400 = vrot.slane %v7398, 3
      %v7401 = vor.u32 %v7397, %v7400
      %v7402 = vsel %vm7314, %v7383, %v7401
      %v7404 = vshrl.u32 %v7277, 16
      %v7406 = vrot.slane %v7404, 2
      %v7407 = vshll.u32 %v7277, 16
      %v7409 = vrot.slane %v7407, 3
      %v7410 = vor.u32 %v7406, %v7409
      %v7411 = vsel %vm7314, %v7392, %v7410
      %v7413 = vshrl.u32 %v7278, 16
      %v7415 = vrot.slane %v7413, 2
      %v7416 = vshll.u32 %v7278, 16
      %v7418 = vrot.slane %v7416, 3
      %v7419 = vor.u32 %v7415, %v7418
      %v7420 = vsel %vm7314, %v7401, %v7419
      %v7422 = vshrl.u32 %v7279, 16
      %v7424 = vrot.slane %v7422, 2
      %v7425 = vshll.u32 %v7279, 16
      %v7427 = vrot.slane %v7425, 3
      %v7428 = vor.u32 %v7424, %v7427
      %v7429 = vsel %vm7314, %v7410, %v7428
      %v7431 = vshrl.u32 %v7280, 16
      %v7433 = vrot.slane %v7431, 2
      %v7434 = vshll.u32 %v7280, 16
      %v7436 = vrot.slane %v7434, 3
      %v7437 = vor.u32 %v7433, %v7436
      %v7438 = vsel %vm7314, %v7419, %v7437
      %v7483 = vunpack.c.l.b16 %v7282
      %v7484 = vunpack.c.h.b16 %v7282
      %v7485 = vunpack.c.l.b16 %v7283
      %v7486 = vunpack.c.h.b16 %v7283
      %v7487 = vunpack.c.l.b16 %v7284
      %v7488 = vunpack.c.h.b16 %v7284
      %v7489 = vunpack.c.l.b16 %v7285
      %v7490 = vunpack.c.h.b16 %v7285
      %v7491 = vunpack.c.l.b16 %v7286
      %v7492 = vunpack.c.h.b16 %v7286
      %v7493 = vunpack.c.l.b16 %v7287
      %v7494 = vunpack.c.h.b16 %v7287
      %v7495 = vunpack.c.l.b16 %v7288
      %v7496 = vunpack.c.h.b16 %v7288
      %v7497 = vunpack.c.l.b16 %v7289
      %v7498 = vunpack.c.h.b16 %v7289
      %v7499 = vunpack.c.l.b16 %v7290
      %v7500 = vunpack.c.h.b16 %v7290
      %v7501 = vunpack.c.l.b16 %v7291
      %v7502 = vunpack.c.h.b16 %v7291
      %v7503 = vunpack.c.l.b16 %v7292
      %v7504 = vunpack.c.h.b16 %v7292
      %v7505 = vunpack.c.l.b16 %v7293
      %v7506 = vunpack.c.h.b16 %v7293
      %v7507 = vunpack.c.l.b16 %v7294
      %v7508 = vunpack.c.h.b16 %v7294
      %v7509 = vunpack.c.l.b16 %v7295
      %v7510 = vunpack.c.h.b16 %v7295
      %v7511 = vunpack.c.l.b16 %v7296
      %v7512 = vunpack.c.h.b16 %v7296
      %v7513 = vunpack.c.l.b16 %v7297
      %v7514 = vunpack.c.h.b16 %v7297
      %v7515 = vunpack.c.l.b16 %v7298
      %v7516 = vunpack.c.h.b16 %v7298
      %v7517 = vunpack.c.l.b16 %v7299
      %v7518 = vunpack.c.h.b16 %v7299
      %v7519 = vunpack.c.l.b16 %v7300
      %v7520 = vunpack.c.h.b16 %v7300
      %v7521 = vunpack.c.l.b16 %v7301
      %v7522 = vunpack.c.h.b16 %v7301
      %v7523 = vunpack.c.l.b16 %v7302
      %v7524 = vunpack.c.h.b16 %v7302
      %v7525 = vunpack.c.l.b16 %v7303
      %v7526 = vunpack.c.h.b16 %v7303
      %v7527 = vunpack.c.l.b16 %v7304
      %v7528 = vunpack.c.h.b16 %v7304
      %v7529 = vunpack.c.l.b16 %v7305
      %v7530 = vunpack.c.h.b16 %v7305
      %v7531 = vunpack.c.l.b16 %v7306
      %v7532 = vunpack.c.h.b16 %v7306
      %v7533 = vunpack.c.l.b16 %v7307
      %v7534 = vunpack.c.h.b16 %v7307
      %v7535 = vunpack.c.l.b16 %v7308
      %v7536 = vunpack.c.h.b16 %v7308
      %v7537 = vunpack.c.l.b16 %v7309
      %v7538 = vunpack.c.h.b16 %v7309
      %v7539 = vunpack.c.l.b16 %v7310
      %v7540 = vunpack.c.h.b16 %v7310
      %v7541 = vunpack.c.l.b16 %v7311
      %v7542 = vunpack.c.h.b16 %v7311
      %v7543 = vunpack.c.l.b16 %v7312
      %v7544 = vunpack.c.h.b16 %v7312
      %v7545 = vunpack.c.l.b16 %v7313
      %v7546 = vunpack.c.h.b16 %v7313
      %v7547 = vpack.c.b16 %v7485, %v7483
      %v7548 = vpack.c.b16 %v7486, %v7484
      %v7549 = vpack.c.b16 %v7489, %v7487
      %v7550 = vpack.c.b16 %v7490, %v7488
      %v7551 = vpack.c.b16 %v7493, %v7491
      %v7552 = vpack.c.b16 %v7494, %v7492
      %v7553 = vpack.c.b16 %v7497, %v7495
      %v7554 = vpack.c.b16 %v7498, %v7496
      %v7555 = vpack.c.b16 %v7501, %v7499
      %v7556 = vpack.c.b16 %v7502, %v7500
      %v7557 = vpack.c.b16 %v7505, %v7503
      %v7558 = vpack.c.b16 %v7506, %v7504
      %v7559 = vpack.c.b16 %v7509, %v7507
      %v7560 = vpack.c.b16 %v7510, %v7508
      %v7561 = vpack.c.b16 %v7513, %v7511
      %v7562 = vpack.c.b16 %v7514, %v7512
      %v7563 = vpack.c.b16 %v7517, %v7515
      %v7564 = vpack.c.b16 %v7518, %v7516
      %v7565 = vpack.c.b16 %v7521, %v7519
      %v7566 = vpack.c.b16 %v7522, %v7520
      %v7567 = vpack.c.b16 %v7525, %v7523
      %v7568 = vpack.c.b16 %v7526, %v7524
      %v7569 = vpack.c.b16 %v7529, %v7527
      %v7570 = vpack.c.b16 %v7530, %v7528
      %v7571 = vpack.c.b16 %v7533, %v7531
      %v7572 = vpack.c.b16 %v7534, %v7532
      %v7573 = vpack.c.b16 %v7537, %v7535
      %v7574 = vpack.c.b16 %v7538, %v7536
      %v7575 = vpack.c.b16 %v7541, %v7539
      %v7576 = vpack.c.b16 %v7542, %v7540
      %v7577 = vpack.c.b16 %v7545, %v7543
      %v7578 = vpack.c.b16 %v7546, %v7544
      %7611 = vmatprep.subr.bf16.mxu0 %v7562
      %7612 = vmatpush1.bf16.msra.mxu0 %v7561
      %7613 = vmatprep.subr.bf16.mxu0 %v7560
      %7614 = vmatpush1.bf16.msra.mxu0 %v7559
      %7615 = vmatprep.subr.bf16.mxu0 %v7558
      %7616 = vmatpush1.bf16.msra.mxu0 %v7557
      %7617 = vmatprep.subr.bf16.mxu0 %v7556
      %7618 = vmatpush1.bf16.msra.mxu0 %v7555
      %7619 = vmatprep.subr.bf16.mxu0 %v7554
      %7620 = vmatpush1.bf16.msra.mxu0 %v7553
      %7621 = vmatprep.subr.bf16.mxu0 %v7552
      %7622 = vmatpush1.bf16.msra.mxu0 %v7551
      %7623 = vmatprep.subr.bf16.mxu0 %v7550
      %7624 = vmatpush1.bf16.msra.mxu0 %v7549
      %7625 = vmatprep.subr.bf16.mxu0 %v7548
      %7626 = vmatpush1.bf16.msra.mxu0 %v7547
      %7627 = vmatprep.subr.bf16.mxu0 %v7578
      %7628 = vmatpush2.bf16.msra.mxu0 %v7577
      %7629 = vmatprep.subr.bf16.mxu0 %v7576
      %7630 = vmatpush2.bf16.msra.mxu0 %v7575
      %7631 = vmatprep.subr.bf16.mxu0 %v7574
      %7632 = vmatpush2.bf16.msra.mxu0 %v7573
      %7633 = vmatprep.subr.bf16.mxu0 %v7572
      %7634 = vmatpush2.bf16.msra.mxu0 %v7571
      %7635 = vmatprep.subr.bf16.mxu0 %v7570
      %7636 = vmatpush2.bf16.msra.mxu0 %v7569
      %7637 = vmatprep.subr.bf16.mxu0 %v7568
      %7638 = vmatpush2.bf16.msra.mxu0 %v7567
      %7639 = vmatprep.subr.bf16.mxu0 %v7566
      %7640 = vmatpush2.bf16.msra.mxu0 %v7565
      %7641 = vmatprep.subr.bf16.mxu0 %v7564
      %7642 = vmatpush2.bf16.msra.mxu0 %v7563
      %7643 = vmatprep.mubr.bf16.mxu0 %v7348
      %7644 = vmatmul.mubr.bf16.gmra.mxu0 %v7331
      %v7645 = vpop.f32.mrf.mxu0
      %v7646 = vadd.f32 0.0, %v7645
      %v7647 = vpop.f32.mrf.mxu0
      %v7648 = vadd.f32 0.0, %v7647
      %v7649 = vpop.f32.mrf.mxu0
      %v7650 = vadd.f32 0.0, %v7649
      %v7651 = vpop.f32.mrf.mxu0
      %v7652 = vadd.f32 0.0, %v7651
      %7653 = vmatprep.mubr.bf16.mxu0 %v7366
      %7654 = vmatmul.mubr.bf16.gmra.mxu0 %v7357
      %v7655 = vpop.f32.mrf.mxu0
      %v7656 = vadd.f32 0.0, %v7655
      %v7657 = vpop.f32.mrf.mxu0
      %v7658 = vadd.f32 0.0, %v7657
      %v7659 = vpop.f32.mrf.mxu0
      %v7660 = vadd.f32 0.0, %v7659
      %v7661 = vpop.f32.mrf.mxu0
      %v7662 = vadd.f32 0.0, %v7661
      %7663 = vmatprep.mubr.bf16.mxu0 %v7384
      %7664 = vmatmul.mubr.bf16.gmra.mxu0 %v7375
      %v7665 = vpop.f32.mrf.mxu0
      %v7666 = vadd.f32 0.0, %v7665
      %v7667 = vpop.f32.mrf.mxu0
      %v7668 = vadd.f32 0.0, %v7667
      %v7669 = vpop.f32.mrf.mxu0
      %v7670 = vadd.f32 0.0, %v7669
      %v7671 = vpop.f32.mrf.mxu0
      %v7672 = vadd.f32 0.0, %v7671
      %7673 = vmatprep.mubr.bf16.mxu0 %v7402
      %7674 = vmatmul.mubr.bf16.gmra.mxu0 %v7393
      %v7675 = vpop.f32.mrf.mxu0
      %v7676 = vadd.f32 0.0, %v7675
      %v7677 = vpop.f32.mrf.mxu0
      %v7678 = vadd.f32 0.0, %v7677
      %v7679 = vpop.f32.mrf.mxu0
      %v7680 = vadd.f32 0.0, %v7679
      %v7681 = vpop.f32.mrf.mxu0
      %v7682 = vadd.f32 0.0, %v7681
      %7683 = vmatprep.mubr.bf16.mxu0 %v7420
      %7684 = vmatmul.mubr.bf16.gmra.mxu0 %v7411
      %v7685 = vpop.f32.mrf.mxu0
      %v7686 = vadd.f32 0.0, %v7685
      %v7687 = vpop.f32.mrf.mxu0
      %v7688 = vadd.f32 0.0, %v7687
      %v7689 = vpop.f32.mrf.mxu0
      %v7690 = vadd.f32 0.0, %v7689
      %v7691 = vpop.f32.mrf.mxu0
      %v7692 = vadd.f32 0.0, %v7691
      %7693 = vmatprep.mubr.bf16.mxu0 %v7438
      %7694 = vmatmul.mubr.bf16.gmra.mxu0 %v7429
      %v7695 = vpop.f32.mrf.mxu0
      %v7696 = vadd.f32 0.0, %v7695
      %v7697 = vpop.f32.mrf.mxu0
      %v7698 = vadd.f32 0.0, %v7697
      %v7699 = vpop.f32.mrf.mxu0
      %v7700 = vadd.f32 0.0, %v7699
      %v7701 = vpop.f32.mrf.mxu0
      %v7702 = vadd.f32 0.0, %v7701
      %7703 = vdwg.mxu0
      %v7704 = vadd.f32 %v7217, %v7646
      %v7705 = vadd.f32 %v7218, %v7648
      %v7706 = vadd.f32 %v7219, %v7650
      %v7707 = vadd.f32 %v7220, %v7652
      %v7708 = vadd.f32 %v7221, %v7656
      %v7709 = vadd.f32 %v7222, %v7658
      %v7710 = vadd.f32 %v7223, %v7660
      %v7711 = vadd.f32 %v7224, %v7662
      %v7712 = vadd.f32 %v7225, %v7666
      %v7713 = vadd.f32 %v7226, %v7668
      %v7714 = vadd.f32 %v7227, %v7670
      %v7715 = vadd.f32 %v7228, %v7672
      %v7716 = vadd.f32 %v7229, %v7676
      %v7717 = vadd.f32 %v7230, %v7678
      %v7718 = vadd.f32 %v7231, %v7680
      %v7719 = vadd.f32 %v7232, %v7682
      %v7720 = vadd.f32 %v7233, %v7686
      %v7721 = vadd.f32 %v7234, %v7688
      %v7722 = vadd.f32 %v7235, %v7690
      %v7723 = vadd.f32 %v7236, %v7692
      %v7724 = vadd.f32 %v7237, %v7696
      %v7725 = vadd.f32 %v7238, %v7698
      %v7726 = vadd.f32 %v7239, %v7700
      %v7727 = vadd.f32 %v7240, %v7702
      %v7728 = vld [vmem:[#allocation2 + $0x10] sm:$0xc0]
      %v7729 = vld [vmem:[#allocation2 + $0x18] sm:$0xc0]
      %v7730 = vld [vmem:[#allocation2 + $0xd0] sm:$0x3f]
      %v7731 = vld [vmem:[#allocation2 + $0xd8] sm:$0x3f]
      %v7732 = vpack.c.bf16 %v7243, %v7728
      %v7733 = vpack.c.bf16 %v7244, %v7729
      %v7734 = vpack.c.bf16 %v7730, %v7730
      %v7735 = vpack.c.bf16 %v7731, %v7731
      %s7736 = scalar_lea.vmem %s4, 1024
      %v7737 = vld [vmem:[%s7736] sm:$0xff]
      %v7738 = vld [vmem:[%s7736 + $0x8] sm:$0xff]
      %v7739 = vld [vmem:[%s7736 + $0x10] sm:$0xff]
      %v7740 = vld [vmem:[%s7736 + $0x18] sm:$0xff]
      %v7741 = vld [vmem:[%s7736 + $0x20] sm:$0xff]
      %v7742 = vld [vmem:[%s7736 + $0x28] sm:$0xff]
      %v7743 = vld [vmem:[%s7736 + $0x30] sm:$0xff]
      %v7744 = vld [vmem:[%s7736 + $0x38] sm:$0xff]
      %v7745 = vld [vmem:[%s7736 + $0x40] sm:$0xff]
      %v7746 = vld [vmem:[%s7736 + $0x48] sm:$0xff]
      %v7747 = vld [vmem:[%s7736 + $0x50] sm:$0xff]
      %v7748 = vld [vmem:[%s7736 + $0x58] sm:$0xff]
      %v7749 = vld [vmem:[%s7736 + $0x60] sm:$0xff]
      %v7750 = vld [vmem:[%s7736 + $0x68] sm:$0xff]
      %v7751 = vld [vmem:[%s7736 + $0x70] sm:$0xff]
      %v7752 = vld [vmem:[%s7736 + $0x78] sm:$0xff]
      %v7753 = vld [vmem:[%s7736 + $0x80] sm:$0xff]
      %v7754 = vld [vmem:[%s7736 + $0x88] sm:$0xff]
      %v7755 = vld [vmem:[%s7736 + $0x90] sm:$0xff]
      %v7756 = vld [vmem:[%s7736 + $0x98] sm:$0xff]
      %v7757 = vld [vmem:[%s7736 + $0xa0] sm:$0xff]
      %v7758 = vld [vmem:[%s7736 + $0xa8] sm:$0xff]
      %v7759 = vld [vmem:[%s7736 + $0xb0] sm:$0xff]
      %v7760 = vld [vmem:[%s7736 + $0xb8] sm:$0xff]
      %v7761 = vld [vmem:[%s7736 + $0xc0] sm:$0xff]
      %v7762 = vld [vmem:[%s7736 + $0xc8] sm:$0xff]
      %v7763 = vld [vmem:[%s7736 + $0xd0] sm:$0xff]
      %v7764 = vld [vmem:[%s7736 + $0xd8] sm:$0xff]
      %v7765 = vld [vmem:[%s7736 + $0xe0] sm:$0xff]
      %v7766 = vld [vmem:[%s7736 + $0xe8] sm:$0xff]
      %v7767 = vld [vmem:[%s7736 + $0xf0] sm:$0xff]
      %v7768 = vld [vmem:[%s7736 + $0xf8] sm:$0xff]
      %vm7783 = vcmask 1044480
      %v7784 = vrot.slane %v7732, 3
      %v7785 = vrot.slane %v7269, 3
      %v7786 = vsel %vm7783, %v7784, %v7785
      %v7787 = vrot.slane %v7733, 3
      %v7788 = vrot.slane %v7270, 3
      %v7789 = vsel %vm7783, %v7787, %v7788
      %v7790 = vrot.slane %v7271, 3
      %v7791 = vsel %vm7783, %v7785, %v7790
      %v7792 = vrot.slane %v7272, 3
      %v7793 = vsel %vm7783, %v7788, %v7792
      %v7794 = vrot.slane %v7273, 3
      %v7795 = vsel %vm7783, %v7790, %v7794
      %v7796 = vrot.slane %v7274, 3
      %v7797 = vsel %vm7783, %v7792, %v7796
      %v7798 = vrot.slane %v7275, 3
      %v7799 = vsel %vm7783, %v7794, %v7798
      %v7800 = vrot.slane %v7276, 3
      %v7801 = vsel %vm7783, %v7796, %v7800
      %v7802 = vrot.slane %v7277, 3
      %v7803 = vsel %vm7783, %v7798, %v7802
      %v7804 = vrot.slane %v7278, 3
      %v7805 = vsel %vm7783, %v7800, %v7804
      %v7806 = vrot.slane %v7734, 3
      %v7807 = vsel %vm7783, %v7802, %v7806
      %v7808 = vrot.slane %v7735, 3
      %v7809 = vsel %vm7783, %v7804, %v7808
      %v7854 = vunpack.c.l.b16 %v7737
      %v7855 = vunpack.c.h.b16 %v7737
      %v7856 = vunpack.c.l.b16 %v7738
      %v7857 = vunpack.c.h.b16 %v7738
      %v7858 = vunpack.c.l.b16 %v7739
      %v7859 = vunpack.c.h.b16 %v7739
      %v7860 = vunpack.c.l.b16 %v7740
      %v7861 = vunpack.c.h.b16 %v7740
      %v7862 = vunpack.c.l.b16 %v7741
      %v7863 = vunpack.c.h.b16 %v7741
      %v7864 = vunpack.c.l.b16 %v7742
      %v7865 = vunpack.c.h.b16 %v7742
      %v7866 = vunpack.c.l.b16 %v7743
      %v7867 = vunpack.c.h.b16 %v7743
      %v7868 = vunpack.c.l.b16 %v7744
      %v7869 = vunpack.c.h.b16 %v7744
      %v7870 = vunpack.c.l.b16 %v7745
      %v7871 = vunpack.c.h.b16 %v7745
      %v7872 = vunpack.c.l.b16 %v7746
      %v7873 = vunpack.c.h.b16 %v7746
      %v7874 = vunpack.c.l.b16 %v7747
      %v7875 = vunpack.c.h.b16 %v7747
      %v7876 = vunpack.c.l.b16 %v7748
      %v7877 = vunpack.c.h.b16 %v7748
      %v7878 = vunpack.c.l.b16 %v7749
      %v7879 = vunpack.c.h.b16 %v7749
      %v7880 = vunpack.c.l.b16 %v7750
      %v7881 = vunpack.c.h.b16 %v7750
      %v7882 = vunpack.c.l.b16 %v7751
      %v7883 = vunpack.c.h.b16 %v7751
      %v7884 = vunpack.c.l.b16 %v7752
      %v7885 = vunpack.c.h.b16 %v7752
      %v7886 = vunpack.c.l.b16 %v7753
      %v7887 = vunpack.c.h.b16 %v7753
      %v7888 = vunpack.c.l.b16 %v7754
      %v7889 = vunpack.c.h.b16 %v7754
      %v7890 = vunpack.c.l.b16 %v7755
      %v7891 = vunpack.c.h.b16 %v7755
      %v7892 = vunpack.c.l.b16 %v7756
      %v7893 = vunpack.c.h.b16 %v7756
      %v7894 = vunpack.c.l.b16 %v7757
      %v7895 = vunpack.c.h.b16 %v7757
      %v7896 = vunpack.c.l.b16 %v7758
      %v7897 = vunpack.c.h.b16 %v7758
      %v7898 = vunpack.c.l.b16 %v7759
      %v7899 = vunpack.c.h.b16 %v7759
      %v7900 = vunpack.c.l.b16 %v7760
      %v7901 = vunpack.c.h.b16 %v7760
      %v7902 = vunpack.c.l.b16 %v7761
      %v7903 = vunpack.c.h.b16 %v7761
      %v7904 = vunpack.c.l.b16 %v7762
      %v7905 = vunpack.c.h.b16 %v7762
      %v7906 = vunpack.c.l.b16 %v7763
      %v7907 = vunpack.c.h.b16 %v7763
      %v7908 = vunpack.c.l.b16 %v7764
      %v7909 = vunpack.c.h.b16 %v7764
      %v7910 = vunpack.c.l.b16 %v7765
      %v7911 = vunpack.c.h.b16 %v7765
      %v7912 = vunpack.c.l.b16 %v7766
      %v7913 = vunpack.c.h.b16 %v7766
      %v7914 = vunpack.c.l.b16 %v7767
      %v7915 = vunpack.c.h.b16 %v7767
      %v7916 = vunpack.c.l.b16 %v7768
      %v7917 = vunpack.c.h.b16 %v7768
      %v7918 = vpack.c.b16 %v7856, %v7854
      %v7919 = vpack.c.b16 %v7857, %v7855
      %v7920 = vpack.c.b16 %v7860, %v7858
      %v7921 = vpack.c.b16 %v7861, %v7859
      %v7922 = vpack.c.b16 %v7864, %v7862
      %v7923 = vpack.c.b16 %v7865, %v7863
      %v7924 = vpack.c.b16 %v7868, %v7866
      %v7925 = vpack.c.b16 %v7869, %v7867
      %v7926 = vpack.c.b16 %v7872, %v7870
      %v7927 = vpack.c.b16 %v7873, %v7871
      %v7928 = vpack.c.b16 %v7876, %v7874
      %v7929 = vpack.c.b16 %v7877, %v7875
      %v7930 = vpack.c.b16 %v7880, %v7878
      %v7931 = vpack.c.b16 %v7881, %v7879
      %v7932 = vpack.c.b16 %v7884, %v7882
      %v7933 = vpack.c.b16 %v7885, %v7883
      %v7934 = vpack.c.b16 %v7888, %v7886
      %v7935 = vpack.c.b16 %v7889, %v7887
      %v7936 = vpack.c.b16 %v7892, %v7890
      %v7937 = vpack.c.b16 %v7893, %v7891
      %v7938 = vpack.c.b16 %v7896, %v7894
      %v7939 = vpack.c.b16 %v7897, %v7895
      %v7940 = vpack.c.b16 %v7900, %v7898
      %v7941 = vpack.c.b16 %v7901, %v7899
      %v7942 = vpack.c.b16 %v7904, %v7902
      %v7943 = vpack.c.b16 %v7905, %v7903
      %v7944 = vpack.c.b16 %v7908, %v7906
      %v7945 = vpack.c.b16 %v7909, %v7907
      %v7946 = vpack.c.b16 %v7912, %v7910
      %v7947 = vpack.c.b16 %v7913, %v7911
      %v7948 = vpack.c.b16 %v7916, %v7914
      %v7949 = vpack.c.b16 %v7917, %v7915
      %7982 = vmatprep.subr.bf16.mxu0 %v7933
      %7983 = vmatpush1.bf16.msra.mxu0 %v7932
      %7984 = vmatprep.subr.bf16.mxu0 %v7931
      %7985 = vmatpush1.bf16.msra.mxu0 %v7930
      %7986 = vmatprep.subr.bf16.mxu0 %v7929
      %7987 = vmatpush1.bf16.msra.mxu0 %v7928
      %7988 = vmatprep.subr.bf16.mxu0 %v7927
      %7989 = vmatpush1.bf16.msra.mxu0 %v7926
      %7990 = vmatprep.subr.bf16.mxu0 %v7925
      %7991 = vmatpush1.bf16.msra.mxu0 %v7924
      %7992 = vmatprep.subr.bf16.mxu0 %v7923
      %7993 = vmatpush1.bf16.msra.mxu0 %v7922
      %7994 = vmatprep.subr.bf16.mxu0 %v7921
      %7995 = vmatpush1.bf16.msra.mxu0 %v7920
      %7996 = vmatprep.subr.bf16.mxu0 %v7919
      %7997 = vmatpush1.bf16.msra.mxu0 %v7918
      %7998 = vmatprep.subr.bf16.mxu0 %v7949
      %7999 = vmatpush2.bf16.msra.mxu0 %v7948
      %8000 = vmatprep.subr.bf16.mxu0 %v7947
      %8001 = vmatpush2.bf16.msra.mxu0 %v7946
      %8002 = vmatprep.subr.bf16.mxu0 %v7945
      %8003 = vmatpush2.bf16.msra.mxu0 %v7944
      %8004 = vmatprep.subr.bf16.mxu0 %v7943
      %8005 = vmatpush2.bf16.msra.mxu0 %v7942
      %8006 = vmatprep.subr.bf16.mxu0 %v7941
      %8007 = vmatpush2.bf16.msra.mxu0 %v7940
      %8008 = vmatprep.subr.bf16.mxu0 %v7939
      %8009 = vmatpush2.bf16.msra.mxu0 %v7938
      %8010 = vmatprep.subr.bf16.mxu0 %v7937
      %8011 = vmatpush2.bf16.msra.mxu0 %v7936
      %8012 = vmatprep.subr.bf16.mxu0 %v7935
      %8013 = vmatpush2.bf16.msra.mxu0 %v7934
      %8014 = vmatprep.mubr.bf16.mxu0 %v7789
      %8015 = vmatmul.mubr.bf16.gmra.mxu0 %v7786
      %v8016 = vpop.f32.mrf.mxu0
      %v8017 = vadd.f32 0.0, %v8016
      %v8018 = vpop.f32.mrf.mxu0
      %v8019 = vadd.f32 0.0, %v8018
      %v8020 = vpop.f32.mrf.mxu0
      %v8021 = vadd.f32 0.0, %v8020
      %v8022 = vpop.f32.mrf.mxu0
      %v8023 = vadd.f32 0.0, %v8022
      %8024 = vmatprep.mubr.bf16.mxu0 %v7793
      %8025 = vmatmul.mubr.bf16.gmra.mxu0 %v7791
      %v8026 = vpop.f32.mrf.mxu0
      %v8027 = vadd.f32 0.0, %v8026
      %v8028 = vpop.f32.mrf.mxu0
      %v8029 = vadd.f32 0.0, %v8028
      %v8030 = vpop.f32.mrf.mxu0
      %v8031 = vadd.f32 0.0, %v8030
      %v8032 = vpop.f32.mrf.mxu0
      %v8033 = vadd.f32 0.0, %v8032
      %8034 = vmatprep.mubr.bf16.mxu0 %v7797
      %8035 = vmatmul.mubr.bf16.gmra.mxu0 %v7795
      %v8036 = vpop.f32.mrf.mxu0
      %v8037 = vadd.f32 0.0, %v8036
      %v8038 = vpop.f32.mrf.mxu0
      %v8039 = vadd.f32 0.0, %v8038
      %v8040 = vpop.f32.mrf.mxu0
      %v8041 = vadd.f32 0.0, %v8040
      %v8042 = vpop.f32.mrf.mxu0
      %v8043 = vadd.f32 0.0, %v8042
      %8044 = vmatprep.mubr.bf16.mxu0 %v7801
      %8045 = vmatmul.mubr.bf16.gmra.mxu0 %v7799
      %v8046 = vpop.f32.mrf.mxu0
      %v8047 = vadd.f32 0.0, %v8046
      %v8048 = vpop.f32.mrf.mxu0
      %v8049 = vadd.f32 0.0, %v8048
      %v8050 = vpop.f32.mrf.mxu0
      %v8051 = vadd.f32 0.0, %v8050
      %v8052 = vpop.f32.mrf.mxu0
      %v8053 = vadd.f32 0.0, %v8052
      %8054 = vmatprep.mubr.bf16.mxu0 %v7805
      %8055 = vmatmul.mubr.bf16.gmra.mxu0 %v7803
      %v8056 = vpop.f32.mrf.mxu0
      %v8057 = vadd.f32 0.0, %v8056
      %v8058 = vpop.f32.mrf.mxu0
      %v8059 = vadd.f32 0.0, %v8058
      %v8060 = vpop.f32.mrf.mxu0
      %v8061 = vadd.f32 0.0, %v8060
      %v8062 = vpop.f32.mrf.mxu0
      %v8063 = vadd.f32 0.0, %v8062
      %8064 = vmatprep.mubr.bf16.mxu0 %v7809
      %8065 = vmatmul.mubr.bf16.gmra.mxu0 %v7807
      %v8066 = vpop.f32.mrf.mxu0
      %v8067 = vadd.f32 0.0, %v8066
      %v8068 = vpop.f32.mrf.mxu0
      %v8069 = vadd.f32 0.0, %v8068
      %v8070 = vpop.f32.mrf.mxu0
      %v8071 = vadd.f32 0.0, %v8070
      %v8072 = vpop.f32.mrf.mxu0
      %v8073 = vadd.f32 0.0, %v8072
      %8074 = vdwg.mxu0
      %v8075 = vadd.f32 %v7704, %v8017
      %v8076 = vadd.f32 %v7705, %v8019
      %v8077 = vadd.f32 %v7706, %v8021
      %v8078 = vadd.f32 %v7707, %v8023
      %v8079 = vadd.f32 %v7708, %v8027
      %v8080 = vadd.f32 %v7709, %v8029
      %v8081 = vadd.f32 %v7710, %v8031
      %v8082 = vadd.f32 %v7711, %v8033
      %v8083 = vadd.f32 %v7712, %v8037
      %v8084 = vadd.f32 %v7713, %v8039
      %v8085 = vadd.f32 %v7714, %v8041
      %v8086 = vadd.f32 %v7715, %v8043
      %v8087 = vadd.f32 %v7716, %v8047
      %v8088 = vadd.f32 %v7717, %v8049
      %v8089 = vadd.f32 %v7718, %v8051
      %v8090 = vadd.f32 %v7719, %v8053
      %v8091 = vadd.f32 %v7720, %v8057
      %v8092 = vadd.f32 %v7721, %v8059
      %v8093 = vadd.f32 %v7722, %v8061
      %v8094 = vadd.f32 %v7723, %v8063
      %v8095 = vadd.f32 %v7724, %v8067
      %v8096 = vadd.f32 %v7725, %v8069
      %v8097 = vadd.f32 %v7726, %v8071
      %v8098 = vadd.f32 %v7727, %v8073
      %v8099 = vld [vmem:[#allocation2 + $0x10] sm:$0x80]
      %v8100 = vld [vmem:[#allocation2 + $0x18] sm:$0x80]
      %v8101 = vld [vmem:[#allocation2 + $0xd0] sm:$0x7f]
      %v8102 = vld [vmem:[#allocation2 + $0xd8] sm:$0x7f]
      %v8103 = vpack.c.bf16 %v7243, %v8099
      %v8104 = vpack.c.bf16 %v7244, %v8100
      %v8105 = vpack.c.bf16 %v8101, %v8101
      %v8106 = vpack.c.bf16 %v8102, %v8102
      %s8107 = scalar_lea.vmem %s4, 1280
      %v8108 = vld [vmem:[%s8107] sm:$0xff]
      %v8109 = vld [vmem:[%s8107 + $0x8] sm:$0xff]
      %v8110 = vld [vmem:[%s8107 + $0x10] sm:$0xff]
      %v8111 = vld [vmem:[%s8107 + $0x18] sm:$0xff]
      %v8112 = vld [vmem:[%s8107 + $0x20] sm:$0xff]
      %v8113 = vld [vmem:[%s8107 + $0x28] sm:$0xff]
      %v8114 = vld [vmem:[%s8107 + $0x30] sm:$0xff]
      %v8115 = vld [vmem:[%s8107 + $0x38] sm:$0xff]
      %v8116 = vld [vmem:[%s8107 + $0x40] sm:$0xff]
      %v8117 = vld [vmem:[%s8107 + $0x48] sm:$0xff]
      %v8118 = vld [vmem:[%s8107 + $0x50] sm:$0xff]
      %v8119 = vld [vmem:[%s8107 + $0x58] sm:$0xff]
      %v8120 = vld [vmem:[%s8107 + $0x60] sm:$0xff]
      %v8121 = vld [vmem:[%s8107 + $0x68] sm:$0xff]
      %v8122 = vld [vmem:[%s8107 + $0x70] sm:$0xff]
      %v8123 = vld [vmem:[%s8107 + $0x78] sm:$0xff]
      %v8124 = vld [vmem:[%s8107 + $0x80] sm:$0xff]
      %v8125 = vld [vmem:[%s8107 + $0x88] sm:$0xff]
      %v8126 = vld [vmem:[%s8107 + $0x90] sm:$0xff]
      %v8127 = vld [vmem:[%s8107 + $0x98] sm:$0xff]
      %v8128 = vld [vmem:[%s8107 + $0xa0] sm:$0xff]
      %v8129 = vld [vmem:[%s8107 + $0xa8] sm:$0xff]
      %v8130 = vld [vmem:[%s8107 + $0xb0] sm:$0xff]
      %v8131 = vld [vmem:[%s8107 + $0xb8] sm:$0xff]
      %v8132 = vld [vmem:[%s8107 + $0xc0] sm:$0xff]
      %v8133 = vld [vmem:[%s8107 + $0xc8] sm:$0xff]
      %v8134 = vld [vmem:[%s8107 + $0xd0] sm:$0xff]
      %v8135 = vld [vmem:[%s8107 + $0xd8] sm:$0xff]
      %v8136 = vld [vmem:[%s8107 + $0xe0] sm:$0xff]
      %v8137 = vld [vmem:[%s8107 + $0xe8] sm:$0xff]
      %v8138 = vld [vmem:[%s8107 + $0xf0] sm:$0xff]
      %v8139 = vld [vmem:[%s8107 + $0xf8] sm:$0xff]
      %vm8140 = vsmask.f32 4352
      %v8142 = vshrl.u32 %v8103, 16
      %v8144 = vrot.slane %v8142, 3
      %v8145 = vshll.u32 %v8103, 16
      %v8147 = vrot.slane %v8145, 4
      %v8148 = vor.u32 %v8144, %v8147
      %v8149 = vrot.slane %v7324, 3
      %v8150 = vrot.slane %v7327, 4
      %v8151 = vor.u32 %v8149, %v8150
      %v8152 = vsel %vm8140, %v8148, %v8151
      %v8154 = vshrl.u32 %v8104, 16
      %v8156 = vrot.slane %v8154, 3
      %v8157 = vshll.u32 %v8104, 16
      %v8159 = vrot.slane %v8157, 4
      %v8160 = vor.u32 %v8156, %v8159
      %v8161 = vrot.slane %v7341, 3
      %v8162 = vrot.slane %v7344, 4
      %v8163 = vor.u32 %v8161, %v8162
      %v8164 = vsel %vm8140, %v8160, %v8163
      %v8165 = vrot.slane %v7350, 3
      %v8166 = vrot.slane %v7353, 4
      %v8167 = vor.u32 %v8165, %v8166
      %v8168 = vsel %vm8140, %v8151, %v8167
      %v8169 = vrot.slane %v7359, 3
      %v8170 = vrot.slane %v7362, 4
      %v8171 = vor.u32 %v8169, %v8170
      %v8172 = vsel %vm8140, %v8163, %v8171
      %v8173 = vrot.slane %v7368, 3
      %v8174 = vrot.slane %v7371, 4
      %v8175 = vor.u32 %v8173, %v8174
      %v8176 = vsel %vm8140, %v8167, %v8175
      %v8177 = vrot.slane %v7377, 3
      %v8178 = vrot.slane %v7380, 4
      %v8179 = vor.u32 %v8177, %v8178
      %v8180 = vsel %vm8140, %v8171, %v8179
      %v8181 = vrot.slane %v7386, 3
      %v8182 = vrot.slane %v7389, 4
      %v8183 = vor.u32 %v8181, %v8182
      %v8184 = vsel %vm8140, %v8175, %v8183
      %v8185 = vrot.slane %v7395, 3
      %v8186 = vrot.slane %v7398, 4
      %v8187 = vor.u32 %v8185, %v8186
      %v8188 = vsel %vm8140, %v8179, %v8187
      %v8189 = vrot.slane %v7404, 3
      %v8190 = vrot.slane %v7407, 4
      %v8191 = vor.u32 %v8189, %v8190
      %v8192 = vsel %vm8140, %v8183, %v8191
      %v8193 = vrot.slane %v7413, 3
      %v8194 = vrot.slane %v7416, 4
      %v8195 = vor.u32 %v8193, %v8194
      %v8196 = vsel %vm8140, %v8187, %v8195
      %v8198 = vshrl.u32 %v8105, 16
      %v8200 = vrot.slane %v8198, 3
      %v8201 = vshll.u32 %v8105, 16
      %v8203 = vrot.slane %v8201, 4
      %v8204 = vor.u32 %v8200, %v8203
      %v8205 = vsel %vm8140, %v8191, %v8204
      %v8207 = vshrl.u32 %v8106, 16
      %v8209 = vrot.slane %v8207, 3
      %v8210 = vshll.u32 %v8106, 16
      %v8212 = vrot.slane %v8210, 4
      %v8213 = vor.u32 %v8209, %v8212
      %v8214 = vsel %vm8140, %v8195, %v8213
      %v8259 = vunpack.c.l.b16 %v8108
      %v8260 = vunpack.c.h.b16 %v8108
      %v8261 = vunpack.c.l.b16 %v8109
      %v8262 = vunpack.c.h.b16 %v8109
      %v8263 = vunpack.c.l.b16 %v8110
      %v8264 = vunpack.c.h.b16 %v8110
      %v8265 = vunpack.c.l.b16 %v8111
      %v8266 = vunpack.c.h.b16 %v8111
      %v8267 = vunpack.c.l.b16 %v8112
      %v8268 = vunpack.c.h.b16 %v8112
      %v8269 = vunpack.c.l.b16 %v8113
      %v8270 = vunpack.c.h.b16 %v8113
      %v8271 = vunpack.c.l.b16 %v8114
      %v8272 = vunpack.c.h.b16 %v8114
      %v8273 = vunpack.c.l.b16 %v8115
      %v8274 = vunpack.c.h.b16 %v8115
      %v8275 = vunpack.c.l.b16 %v8116
      %v8276 = vunpack.c.h.b16 %v8116
      %v8277 = vunpack.c.l.b16 %v8117
      %v8278 = vunpack.c.h.b16 %v8117
      %v8279 = vunpack.c.l.b16 %v8118
      %v8280 = vunpack.c.h.b16 %v8118
      %v8281 = vunpack.c.l.b16 %v8119
      %v8282 = vunpack.c.h.b16 %v8119
      %v8283 = vunpack.c.l.b16 %v8120
      %v8284 = vunpack.c.h.b16 %v8120
      %v8285 = vunpack.c.l.b16 %v8121
      %v8286 = vunpack.c.h.b16 %v8121
      %v8287 = vunpack.c.l.b16 %v8122
      %v8288 = vunpack.c.h.b16 %v8122
      %v8289 = vunpack.c.l.b16 %v8123
      %v8290 = vunpack.c.h.b16 %v8123
      %v8291 = vunpack.c.l.b16 %v8124
      %v8292 = vunpack.c.h.b16 %v8124
      %v8293 = vunpack.c.l.b16 %v8125
      %v8294 = vunpack.c.h.b16 %v8125
      %v8295 = vunpack.c.l.b16 %v8126
      %v8296 = vunpack.c.h.b16 %v8126
      %v8297 = vunpack.c.l.b16 %v8127
      %v8298 = vunpack.c.h.b16 %v8127
      %v8299 = vunpack.c.l.b16 %v8128
      %v8300 = vunpack.c.h.b16 %v8128
      %v8301 = vunpack.c.l.b16 %v8129
      %v8302 = vunpack.c.h.b16 %v8129
      %v8303 = vunpack.c.l.b16 %v8130
      %v8304 = vunpack.c.h.b16 %v8130
      %v8305 = vunpack.c.l.b16 %v8131
      %v8306 = vunpack.c.h.b16 %v8131
      %v8307 = vunpack.c.l.b16 %v8132
      %v8308 = vunpack.c.h.b16 %v8132
      %v8309 = vunpack.c.l.b16 %v8133
      %v8310 = vunpack.c.h.b16 %v8133
      %v8311 = vunpack.c.l.b16 %v8134
      %v8312 = vunpack.c.h.b16 %v8134
      %v8313 = vunpack.c.l.b16 %v8135
      %v8314 = vunpack.c.h.b16 %v8135
      %v8315 = vunpack.c.l.b16 %v8136
      %v8316 = vunpack.c.h.b16 %v8136
      %v8317 = vunpack.c.l.b16 %v8137
      %v8318 = vunpack.c.h.b16 %v8137
      %v8319 = vunpack.c.l.b16 %v8138
      %v8320 = vunpack.c.h.b16 %v8138
      %v8321 = vunpack.c.l.b16 %v8139
      %v8322 = vunpack.c.h.b16 %v8139
      %v8323 = vpack.c.b16 %v8261, %v8259
      %v8324 = vpack.c.b16 %v8262, %v8260
      %v8325 = vpack.c.b16 %v8265, %v8263
      %v8326 = vpack.c.b16 %v8266, %v8264
      %v8327 = vpack.c.b16 %v8269, %v8267
      %v8328 = vpack.c.b16 %v8270, %v8268
      %v8329 = vpack.c.b16 %v8273, %v8271
      %v8330 = vpack.c.b16 %v8274, %v8272
      %v8331 = vpack.c.b16 %v8277, %v8275
      %v8332 = vpack.c.b16 %v8278, %v8276
      %v8333 = vpack.c.b16 %v8281, %v8279
      %v8334 = vpack.c.b16 %v8282, %v8280
      %v8335 = vpack.c.b16 %v8285, %v8283
      %v8336 = vpack.c.b16 %v8286, %v8284
      %v8337 = vpack.c.b16 %v8289, %v8287
      %v8338 = vpack.c.b16 %v8290, %v8288
      %v8339 = vpack.c.b16 %v8293, %v8291
      %v8340 = vpack.c.b16 %v8294, %v8292
      %v8341 = vpack.c.b16 %v8297, %v8295
      %v8342 = vpack.c.b16 %v8298, %v8296
      %v8343 = vpack.c.b16 %v8301, %v8299
      %v8344 = vpack.c.b16 %v8302, %v8300
      %v8345 = vpack.c.b16 %v8305, %v8303
      %v8346 = vpack.c.b16 %v8306, %v8304
      %v8347 = vpack.c.b16 %v8309, %v8307
      %v8348 = vpack.c.b16 %v8310, %v8308
      %v8349 = vpack.c.b16 %v8313, %v8311
      %v8350 = vpack.c.b16 %v8314, %v8312
      %v8351 = vpack.c.b16 %v8317, %v8315
      %v8352 = vpack.c.b16 %v8318, %v8316
      %v8353 = vpack.c.b16 %v8321, %v8319
      %v8354 = vpack.c.b16 %v8322, %v8320
      %8387 = vmatprep.subr.bf16.mxu0 %v8338
      %8388 = vmatpush1.bf16.msra.mxu0 %v8337
      %8389 = vmatprep.subr.bf16.mxu0 %v8336
      %8390 = vmatpush1.bf16.msra.mxu0 %v8335
      %8391 = vmatprep.subr.bf16.mxu0 %v8334
      %8392 = vmatpush1.bf16.msra.mxu0 %v8333
      %8393 = vmatprep.subr.bf16.mxu0 %v8332
      %8394 = vmatpush1.bf16.msra.mxu0 %v8331
      %8395 = vmatprep.subr.bf16.mxu0 %v8330
      %8396 = vmatpush1.bf16.msra.mxu0 %v8329
      %8397 = vmatprep.subr.bf16.mxu0 %v8328
      %8398 = vmatpush1.bf16.msra.mxu0 %v8327
      %8399 = vmatprep.subr.bf16.mxu0 %v8326
      %8400 = vmatpush1.bf16.msra.mxu0 %v8325
      %8401 = vmatprep.subr.bf16.mxu0 %v8324
      %8402 = vmatpush1.bf16.msra.mxu0 %v8323
      %8403 = vmatprep.subr.bf16.mxu0 %v8354
      %8404 = vmatpush2.bf16.msra.mxu0 %v8353
      %8405 = vmatprep.subr.bf16.mxu0 %v8352
      %8406 = vmatpush2.bf16.msra.mxu0 %v8351
      %8407 = vmatprep.subr.bf16.mxu0 %v8350
      %8408 = vmatpush2.bf16.msra.mxu0 %v8349
      %8409 = vmatprep.subr.bf16.mxu0 %v8348
      %8410 = vmatpush2.bf16.msra.mxu0 %v8347
      %8411 = vmatprep.subr.bf16.mxu0 %v8346
      %8412 = vmatpush2.bf16.msra.mxu0 %v8345
      %8413 = vmatprep.subr.bf16.mxu0 %v8344
      %8414 = vmatpush2.bf16.msra.mxu0 %v8343
      %8415 = vmatprep.subr.bf16.mxu0 %v8342
      %8416 = vmatpush2.bf16.msra.mxu0 %v8341
      %8417 = vmatprep.subr.bf16.mxu0 %v8340
      %8418 = vmatpush2.bf16.msra.mxu0 %v8339
      %8419 = vmatprep.mubr.bf16.mxu0 %v8164
      %8420 = vmatmul.mubr.bf16.gmra.mxu0 %v8152
      %v8421 = vpop.f32.mrf.mxu0
      %v8422 = vadd.f32 0.0, %v8421
      %v8423 = vpop.f32.mrf.mxu0
      %v8424 = vadd.f32 0.0, %v8423
      %v8425 = vpop.f32.mrf.mxu0
      %v8426 = vadd.f32 0.0, %v8425
      %v8427 = vpop.f32.mrf.mxu0
      %v8428 = vadd.f32 0.0, %v8427
      %8429 = vmatprep.mubr.bf16.mxu0 %v8172
      %8430 = vmatmul.mubr.bf16.gmra.mxu0 %v8168
      %v8431 = vpop.f32.mrf.mxu0
      %v8432 = vadd.f32 0.0, %v8431
      %v8433 = vpop.f32.mrf.mxu0
      %v8434 = vadd.f32 0.0, %v8433
      %v8435 = vpop.f32.mrf.mxu0
      %v8436 = vadd.f32 0.0, %v8435
      %v8437 = vpop.f32.mrf.mxu0
      %v8438 = vadd.f32 0.0, %v8437
      %8439 = vmatprep.mubr.bf16.mxu0 %v8180
      %8440 = vmatmul.mubr.bf16.gmra.mxu0 %v8176
      %v8441 = vpop.f32.mrf.mxu0
      %v8442 = vadd.f32 0.0, %v8441
      %v8443 = vpop.f32.mrf.mxu0
      %v8444 = vadd.f32 0.0, %v8443
      %v8445 = vpop.f32.mrf.mxu0
      %v8446 = vadd.f32 0.0, %v8445
      %v8447 = vpop.f32.mrf.mxu0
      %v8448 = vadd.f32 0.0, %v8447
      %8449 = vmatprep.mubr.bf16.mxu0 %v8188
      %8450 = vmatmul.mubr.bf16.gmra.mxu0 %v8184
      %v8451 = vpop.f32.mrf.mxu0
      %v8452 = vadd.f32 0.0, %v8451
      %v8453 = vpop.f32.mrf.mxu0
      %v8454 = vadd.f32 0.0, %v8453
      %v8455 = vpop.f32.mrf.mxu0
      %v8456 = vadd.f32 0.0, %v8455
      %v8457 = vpop.f32.mrf.mxu0
      %v8458 = vadd.f32 0.0, %v8457
      %8459 = vmatprep.mubr.bf16.mxu0 %v8196
      %8460 = vmatmul.mubr.bf16.gmra.mxu0 %v8192
      %v8461 = vpop.f32.mrf.mxu0
      %v8462 = vadd.f32 0.0, %v8461
      %v8463 = vpop.f32.mrf.mxu0
      %v8464 = vadd.f32 0.0, %v8463
      %v8465 = vpop.f32.mrf.mxu0
      %v8466 = vadd.f32 0.0, %v8465
      %v8467 = vpop.f32.mrf.mxu0
      %v8468 = vadd.f32 0.0, %v8467
      %8469 = vmatprep.mubr.bf16.mxu0 %v8214
      %8470 = vmatmul.mubr.bf16.gmra.mxu0 %v8205
      %v8471 = vpop.f32.mrf.mxu0
      %v8472 = vadd.f32 0.0, %v8471
      %v8473 = vpop.f32.mrf.mxu0
      %v8474 = vadd.f32 0.0, %v8473
      %v8475 = vpop.f32.mrf.mxu0
      %v8476 = vadd.f32 0.0, %v8475
      %v8477 = vpop.f32.mrf.mxu0
      %v8478 = vadd.f32 0.0, %v8477
      %8479 = vdwg.mxu0
      %v8480 = vadd.f32 %v8075, %v8422
      %v8481 = vadd.f32 %v8076, %v8424
      %v8482 = vadd.f32 %v8077, %v8426
      %v8483 = vadd.f32 %v8078, %v8428
      %v8484 = vadd.f32 %v8079, %v8432
      %v8485 = vadd.f32 %v8080, %v8434
      %v8486 = vadd.f32 %v8081, %v8436
      %v8487 = vadd.f32 %v8082, %v8438
      %v8488 = vadd.f32 %v8083, %v8442
      %v8489 = vadd.f32 %v8084, %v8444
      %v8490 = vadd.f32 %v8085, %v8446
      %v8491 = vadd.f32 %v8086, %v8448
      %v8492 = vadd.f32 %v8087, %v8452
      %v8493 = vadd.f32 %v8088, %v8454
      %v8494 = vadd.f32 %v8089, %v8456
      %v8495 = vadd.f32 %v8090, %v8458
      %v8496 = vadd.f32 %v8091, %v8462
      %v8497 = vadd.f32 %v8092, %v8464
      %v8498 = vadd.f32 %v8093, %v8466
      %v8499 = vadd.f32 %v8094, %v8468
      %v8500 = vadd.f32 %v8095, %v8472
      %v8501 = vadd.f32 %v8096, %v8474
      %v8502 = vadd.f32 %v8097, %v8476
      %v8503 = vadd.f32 %v8098, %v8478
      %v8504 = vld [vmem:[#allocation2 + $0x30] sm:$0xfe]
      %v8505 = vld [vmem:[#allocation2 + $0x38] sm:$0xfe]
      %v8506 = vld [vmem:[#allocation2 + $0x40] sm:$0xff]
      %v8507 = vld [vmem:[#allocation2 + $0x48] sm:$0xff]
      %v8508 = vld [vmem:[#allocation2 + $0x50] sm:$0xff]
      %v8509 = vld [vmem:[#allocation2 + $0x58] sm:$0xff]
      %v8510 = vld [vmem:[#allocation2 + $0x60] sm:$0xff]
      %v8511 = vld [vmem:[#allocation2 + $0x68] sm:$0xff]
      %v8512 = vld [vmem:[#allocation2 + $0x70] sm:$0xff]
      %v8513 = vld [vmem:[#allocation2 + $0x78] sm:$0xff]
      %v8514 = vld [vmem:[#allocation2 + $0x80] sm:$0xff]
      %v8515 = vld [vmem:[#allocation2 + $0x88] sm:$0xff]
      %v8516 = vld [vmem:[#allocation2 + $0x90] sm:$0xff]
      %v8517 = vld [vmem:[#allocation2 + $0x98] sm:$0xff]
      %v8518 = vld [vmem:[#allocation2 + $0xa0] sm:$0xff]
      %v8519 = vld [vmem:[#allocation2 + $0xa8] sm:$0xff]
      %v8520 = vld [vmem:[#allocation2 + $0xb0] sm:$0xff]
      %v8521 = vld [vmem:[#allocation2 + $0xb8] sm:$0xff]
      %v8522 = vld [vmem:[#allocation2 + $0xc0] sm:$0xff]
      %v8523 = vld [vmem:[#allocation2 + $0xc8] sm:$0xff]
      %v8524 = vld [vmem:[#allocation2 + $0xd0] sm:$0xff]
      %v8525 = vld [vmem:[#allocation2 + $0xd8] sm:$0xff]
      %v8526 = vld [vmem:[#allocation2 + $0xe0] sm:$0xff]
      %v8527 = vld [vmem:[#allocation2 + $0xe8] sm:$0xff]
      %v8528 = vld [vmem:[#allocation2 + $0xf0] sm:$0x1]
      %v8529 = vld [vmem:[#allocation2 + $0xf8] sm:$0x1]
      %v8530 = vpack.c.bf16 %v8506, %v8504
      %v8531 = vpack.c.bf16 %v8507, %v8505
      %v8532 = vpack.c.bf16 %v8510, %v8508
      %v8533 = vpack.c.bf16 %v8511, %v8509
      %v8534 = vpack.c.bf16 %v8514, %v8512
      %v8535 = vpack.c.bf16 %v8515, %v8513
      %v8536 = vpack.c.bf16 %v8518, %v8516
      %v8537 = vpack.c.bf16 %v8519, %v8517
      %v8538 = vpack.c.bf16 %v8522, %v8520
      %v8539 = vpack.c.bf16 %v8523, %v8521
      %v8540 = vpack.c.bf16 %v8526, %v8524
      %v8541 = vpack.c.bf16 %v8527, %v8525
      %v8542 = vpack.c.bf16 %v8528, %v8528
      %v8543 = vpack.c.bf16 %v8529, %v8529
      %s8544 = scalar_lea.vmem %s4, 1536
      %v8545 = vld [vmem:[%s8544] sm:$0xff]
      %v8546 = vld [vmem:[%s8544 + $0x8] sm:$0xff]
      %v8547 = vld [vmem:[%s8544 + $0x10] sm:$0xff]
      %v8548 = vld [vmem:[%s8544 + $0x18] sm:$0xff]
      %v8549 = vld [vmem:[%s8544 + $0x20] sm:$0xff]
      %v8550 = vld [vmem:[%s8544 + $0x28] sm:$0xff]
      %v8551 = vld [vmem:[%s8544 + $0x30] sm:$0xff]
      %v8552 = vld [vmem:[%s8544 + $0x38] sm:$0xff]
      %v8553 = vld [vmem:[%s8544 + $0x40] sm:$0xff]
      %v8554 = vld [vmem:[%s8544 + $0x48] sm:$0xff]
      %v8555 = vld [vmem:[%s8544 + $0x50] sm:$0xff]
      %v8556 = vld [vmem:[%s8544 + $0x58] sm:$0xff]
      %v8557 = vld [vmem:[%s8544 + $0x60] sm:$0xff]
      %v8558 = vld [vmem:[%s8544 + $0x68] sm:$0xff]
      %v8559 = vld [vmem:[%s8544 + $0x70] sm:$0xff]
      %v8560 = vld [vmem:[%s8544 + $0x78] sm:$0xff]
      %v8561 = vld [vmem:[%s8544 + $0x80] sm:$0xff]
      %v8562 = vld [vmem:[%s8544 + $0x88] sm:$0xff]
      %v8563 = vld [vmem:[%s8544 + $0x90] sm:$0xff]
      %v8564 = vld [vmem:[%s8544 + $0x98] sm:$0xff]
      %v8565 = vld [vmem:[%s8544 + $0xa0] sm:$0xff]
      %v8566 = vld [vmem:[%s8544 + $0xa8] sm:$0xff]
      %v8567 = vld [vmem:[%s8544 + $0xb0] sm:$0xff]
      %v8568 = vld [vmem:[%s8544 + $0xb8] sm:$0xff]
      %v8569 = vld [vmem:[%s8544 + $0xc0] sm:$0xff]
      %v8570 = vld [vmem:[%s8544 + $0xc8] sm:$0xff]
      %v8571 = vld [vmem:[%s8544 + $0xd0] sm:$0xff]
      %v8572 = vld [vmem:[%s8544 + $0xd8] sm:$0xff]
      %v8573 = vld [vmem:[%s8544 + $0xe0] sm:$0xff]
      %v8574 = vld [vmem:[%s8544 + $0xe8] sm:$0xff]
      %v8575 = vld [vmem:[%s8544 + $0xf0] sm:$0xff]
      %v8576 = vld [vmem:[%s8544 + $0xf8] sm:$0xff]
      %v8578 = vshrl.u32 %v8530, 16
      %v8580 = vshll.u32 %v8530, 16
      %v8582 = vrot.slane %v8580, 1
      %v8583 = vor.u32 %v8578, %v8582
      %v8585 = vshll.u32 %v8532, 16
      %v8587 = vrot.slane %v8585, 1
      %v8588 = vsel %vm6466, %v8583, %v8587
      %v8590 = vshrl.u32 %v8531, 16
      %v8592 = vshll.u32 %v8531, 16
      %v8594 = vrot.slane %v8592, 1
      %v8595 = vor.u32 %v8590, %v8594
      %v8597 = vshll.u32 %v8533, 16
      %v8599 = vrot.slane %v8597, 1
      %v8600 = vsel %vm6466, %v8595, %v8599
      %v8601 = vshrl.u32 %v8532, 16
      %v8603 = vor.u32 %v8601, %v8587
      %v8605 = vshll.u32 %v8534, 16
      %v8607 = vrot.slane %v8605, 1
      %v8608 = vsel %vm6466, %v8603, %v8607
      %v8609 = vshrl.u32 %v8533, 16
      %v8611 = vor.u32 %v8609, %v8599
      %v8613 = vshll.u32 %v8535, 16
      %v8615 = vrot.slane %v8613, 1
      %v8616 = vsel %vm6466, %v8611, %v8615
      %v8617 = vshrl.u32 %v8534, 16
      %v8619 = vor.u32 %v8617, %v8607
      %v8621 = vshll.u32 %v8536, 16
      %v8623 = vrot.slane %v8621, 1
      %v8624 = vsel %vm6466, %v8619, %v8623
      %v8625 = vshrl.u32 %v8535, 16
      %v8627 = vor.u32 %v8625, %v8615
      %v8629 = vshll.u32 %v8537, 16
      %v8631 = vrot.slane %v8629, 1
      %v8632 = vsel %vm6466, %v8627, %v8631
      %v8633 = vshrl.u32 %v8536, 16
      %v8635 = vor.u32 %v8633, %v8623
      %v8637 = vshll.u32 %v8538, 16
      %v8639 = vrot.slane %v8637, 1
      %v8640 = vsel %vm6466, %v8635, %v8639
      %v8641 = vshrl.u32 %v8537, 16
      %v8643 = vor.u32 %v8641, %v8631
      %v8645 = vshll.u32 %v8539, 16
      %v8647 = vrot.slane %v8645, 1
      %v8648 = vsel %vm6466, %v8643, %v8647
      %v8649 = vshrl.u32 %v8538, 16
      %v8651 = vor.u32 %v8649, %v8639
      %v8653 = vshll.u32 %v8540, 16
      %v8655 = vrot.slane %v8653, 1
      %v8656 = vsel %vm6466, %v8651, %v8655
      %v8657 = vshrl.u32 %v8539, 16
      %v8659 = vor.u32 %v8657, %v8647
      %v8661 = vshll.u32 %v8541, 16
      %v8663 = vrot.slane %v8661, 1
      %v8664 = vsel %vm6466, %v8659, %v8663
      %v8665 = vshrl.u32 %v8540, 16
      %v8667 = vor.u32 %v8665, %v8655
      %v8669 = vshll.u32 %v8542, 16
      %v8671 = vrot.slane %v8669, 1
      %v8672 = vsel %vm6466, %v8667, %v8671
      %v8673 = vshrl.u32 %v8541, 16
      %v8675 = vor.u32 %v8673, %v8663
      %v8677 = vshll.u32 %v8543, 16
      %v8679 = vrot.slane %v8677, 1
      %v8680 = vsel %vm6466, %v8675, %v8679
      %v8725 = vunpack.c.l.b16 %v8545
      %v8726 = vunpack.c.h.b16 %v8545
      %v8727 = vunpack.c.l.b16 %v8546
      %v8728 = vunpack.c.h.b16 %v8546
      %v8729 = vunpack.c.l.b16 %v8547
      %v8730 = vunpack.c.h.b16 %v8547
      %v8731 = vunpack.c.l.b16 %v8548
      %v8732 = vunpack.c.h.b16 %v8548
      %v8733 = vunpack.c.l.b16 %v8549
      %v8734 = vunpack.c.h.b16 %v8549
      %v8735 = vunpack.c.l.b16 %v8550
      %v8736 = vunpack.c.h.b16 %v8550
      %v8737 = vunpack.c.l.b16 %v8551
      %v8738 = vunpack.c.h.b16 %v8551
      %v8739 = vunpack.c.l.b16 %v8552
      %v8740 = vunpack.c.h.b16 %v8552
      %v8741 = vunpack.c.l.b16 %v8553
      %v8742 = vunpack.c.h.b16 %v8553
      %v8743 = vunpack.c.l.b16 %v8554
      %v8744 = vunpack.c.h.b16 %v8554
      %v8745 = vunpack.c.l.b16 %v8555
      %v8746 = vunpack.c.h.b16 %v8555
      %v8747 = vunpack.c.l.b16 %v8556
      %v8748 = vunpack.c.h.b16 %v8556
      %v8749 = vunpack.c.l.b16 %v8557
      %v8750 = vunpack.c.h.b16 %v8557
      %v8751 = vunpack.c.l.b16 %v8558
      %v8752 = vunpack.c.h.b16 %v8558
      %v8753 = vunpack.c.l.b16 %v8559
      %v8754 = vunpack.c.h.b16 %v8559
      %v8755 = vunpack.c.l.b16 %v8560
      %v8756 = vunpack.c.h.b16 %v8560
      %v8757 = vunpack.c.l.b16 %v8561
      %v8758 = vunpack.c.h.b16 %v8561
      %v8759 = vunpack.c.l.b16 %v8562
      %v8760 = vunpack.c.h.b16 %v8562
      %v8761 = vunpack.c.l.b16 %v8563
      %v8762 = vunpack.c.h.b16 %v8563
      %v8763 = vunpack.c.l.b16 %v8564
      %v8764 = vunpack.c.h.b16 %v8564
      %v8765 = vunpack.c.l.b16 %v8565
      %v8766 = vunpack.c.h.b16 %v8565
      %v8767 = vunpack.c.l.b16 %v8566
      %v8768 = vunpack.c.h.b16 %v8566
      %v8769 = vunpack.c.l.b16 %v8567
      %v8770 = vunpack.c.h.b16 %v8567
      %v8771 = vunpack.c.l.b16 %v8568
      %v8772 = vunpack.c.h.b16 %v8568
      %v8773 = vunpack.c.l.b16 %v8569
      %v8774 = vunpack.c.h.b16 %v8569
      %v8775 = vunpack.c.l.b16 %v8570
      %v8776 = vunpack.c.h.b16 %v8570
      %v8777 = vunpack.c.l.b16 %v8571
      %v8778 = vunpack.c.h.b16 %v8571
      %v8779 = vunpack.c.l.b16 %v8572
      %v8780 = vunpack.c.h.b16 %v8572
      %v8781 = vunpack.c.l.b16 %v8573
      %v8782 = vunpack.c.h.b16 %v8573
      %v8783 = vunpack.c.l.b16 %v8574
      %v8784 = vunpack.c.h.b16 %v8574
      %v8785 = vunpack.c.l.b16 %v8575
      %v8786 = vunpack.c.h.b16 %v8575
      %v8787 = vunpack.c.l.b16 %v8576
      %v8788 = vunpack.c.h.b16 %v8576
      %v8789 = vpack.c.b16 %v8727, %v8725
      %v8790 = vpack.c.b16 %v8728, %v8726
      %v8791 = vpack.c.b16 %v8731, %v8729
      %v8792 = vpack.c.b16 %v8732, %v8730
      %v8793 = vpack.c.b16 %v8735, %v8733
      %v8794 = vpack.c.b16 %v8736, %v8734
      %v8795 = vpack.c.b16 %v8739, %v8737
      %v8796 = vpack.c.b16 %v8740, %v8738
      %v8797 = vpack.c.b16 %v8743, %v8741
      %v8798 = vpack.c.b16 %v8744, %v8742
      %v8799 = vpack.c.b16 %v8747, %v8745
      %v8800 = vpack.c.b16 %v8748, %v8746
      %v8801 = vpack.c.b16 %v8751, %v8749
      %v8802 = vpack.c.b16 %v8752, %v8750
      %v8803 = vpack.c.b16 %v8755, %v8753
      %v8804 = vpack.c.b16 %v8756, %v8754
      %v8805 = vpack.c.b16 %v8759, %v8757
      %v8806 = vpack.c.b16 %v8760, %v8758
      %v8807 = vpack.c.b16 %v8763, %v8761
      %v8808 = vpack.c.b16 %v8764, %v8762
      %v8809 = vpack.c.b16 %v8767, %v8765
      %v8810 = vpack.c.b16 %v8768, %v8766
      %v8811 = vpack.c.b16 %v8771, %v8769
      %v8812 = vpack.c.b16 %v8772, %v8770
      %v8813 = vpack.c.b16 %v8775, %v8773
      %v8814 = vpack.c.b16 %v8776, %v8774
      %v8815 = vpack.c.b16 %v8779, %v8777
      %v8816 = vpack.c.b16 %v8780, %v8778
      %v8817 = vpack.c.b16 %v8783, %v8781
      %v8818 = vpack.c.b16 %v8784, %v8782
      %v8819 = vpack.c.b16 %v8787, %v8785
      %v8820 = vpack.c.b16 %v8788, %v8786
      %8853 = vmatprep.subr.bf16.mxu0 %v8804
      %8854 = vmatpush1.bf16.msra.mxu0 %v8803
      %8855 = vmatprep.subr.bf16.mxu0 %v8802
      %8856 = vmatpush1.bf16.msra.mxu0 %v8801
      %8857 = vmatprep.subr.bf16.mxu0 %v8800
      %8858 = vmatpush1.bf16.msra.mxu0 %v8799
      %8859 = vmatprep.subr.bf16.mxu0 %v8798
      %8860 = vmatpush1.bf16.msra.mxu0 %v8797
      %8861 = vmatprep.subr.bf16.mxu0 %v8796
      %8862 = vmatpush1.bf16.msra.mxu0 %v8795
      %8863 = vmatprep.subr.bf16.mxu0 %v8794
      %8864 = vmatpush1.bf16.msra.mxu0 %v8793
      %8865 = vmatprep.subr.bf16.mxu0 %v8792
      %8866 = vmatpush1.bf16.msra.mxu0 %v8791
      %8867 = vmatprep.subr.bf16.mxu0 %v8790
      %8868 = vmatpush1.bf16.msra.mxu0 %v8789
      %8869 = vmatprep.subr.bf16.mxu0 %v8820
      %8870 = vmatpush2.bf16.msra.mxu0 %v8819
      %8871 = vmatprep.subr.bf16.mxu0 %v8818
      %8872 = vmatpush2.bf16.msra.mxu0 %v8817
      %8873 = vmatprep.subr.bf16.mxu0 %v8816
      %8874 = vmatpush2.bf16.msra.mxu0 %v8815
      %8875 = vmatprep.subr.bf16.mxu0 %v8814
      %8876 = vmatpush2.bf16.msra.mxu0 %v8813
      %8877 = vmatprep.subr.bf16.mxu0 %v8812
      %8878 = vmatpush2.bf16.msra.mxu0 %v8811
      %8879 = vmatprep.subr.bf16.mxu0 %v8810
      %8880 = vmatpush2.bf16.msra.mxu0 %v8809
      %8881 = vmatprep.subr.bf16.mxu0 %v8808
      %8882 = vmatpush2.bf16.msra.mxu0 %v8807
      %8883 = vmatprep.subr.bf16.mxu0 %v8806
      %8884 = vmatpush2.bf16.msra.mxu0 %v8805
      %8885 = vmatprep.mubr.bf16.mxu0 %v8600
      %8886 = vmatmul.mubr.bf16.gmra.mxu0 %v8588
      %v8887 = vpop.f32.mrf.mxu0
      %v8888 = vadd.f32 0.0, %v8887
      %v8889 = vpop.f32.mrf.mxu0
      %v8890 = vadd.f32 0.0, %v8889
      %v8891 = vpop.f32.mrf.mxu0
      %v8892 = vadd.f32 0.0, %v8891
      %v8893 = vpop.f32.mrf.mxu0
      %v8894 = vadd.f32 0.0, %v8893
      %8895 = vmatprep.mubr.bf16.mxu0 %v8616
      %8896 = vmatmul.mubr.bf16.gmra.mxu0 %v8608
      %v8897 = vpop.f32.mrf.mxu0
      %v8898 = vadd.f32 0.0, %v8897
      %v8899 = vpop.f32.mrf.mxu0
      %v8900 = vadd.f32 0.0, %v8899
      %v8901 = vpop.f32.mrf.mxu0
      %v8902 = vadd.f32 0.0, %v8901
      %v8903 = vpop.f32.mrf.mxu0
      %v8904 = vadd.f32 0.0, %v8903
      %8905 = vmatprep.mubr.bf16.mxu0 %v8632
      %8906 = vmatmul.mubr.bf16.gmra.mxu0 %v8624
      %v8907 = vpop.f32.mrf.mxu0
      %v8908 = vadd.f32 0.0, %v8907
      %v8909 = vpop.f32.mrf.mxu0
      %v8910 = vadd.f32 0.0, %v8909
      %v8911 = vpop.f32.mrf.mxu0
      %v8912 = vadd.f32 0.0, %v8911
      %v8913 = vpop.f32.mrf.mxu0
      %v8914 = vadd.f32 0.0, %v8913
      %8915 = vmatprep.mubr.bf16.mxu0 %v8648
      %8916 = vmatmul.mubr.bf16.gmra.mxu0 %v8640
      %v8917 = vpop.f32.mrf.mxu0
      %v8918 = vadd.f32 0.0, %v8917
      %v8919 = vpop.f32.mrf.mxu0
      %v8920 = vadd.f32 0.0, %v8919
      %v8921 = vpop.f32.mrf.mxu0
      %v8922 = vadd.f32 0.0, %v8921
      %v8923 = vpop.f32.mrf.mxu0
      %v8924 = vadd.f32 0.0, %v8923
      %8925 = vmatprep.mubr.bf16.mxu0 %v8664
      %8926 = vmatmul.mubr.bf16.gmra.mxu0 %v8656
      %v8927 = vpop.f32.mrf.mxu0
      %v8928 = vadd.f32 0.0, %v8927
      %v8929 = vpop.f32.mrf.mxu0
      %v8930 = vadd.f32 0.0, %v8929
      %v8931 = vpop.f32.mrf.mxu0
      %v8932 = vadd.f32 0.0, %v8931
      %v8933 = vpop.f32.mrf.mxu0
      %v8934 = vadd.f32 0.0, %v8933
      %8935 = vmatprep.mubr.bf16.mxu0 %v8680
      %8936 = vmatmul.mubr.bf16.gmra.mxu0 %v8672
      %v8937 = vpop.f32.mrf.mxu0
      %v8938 = vadd.f32 0.0, %v8937
      %v8939 = vpop.f32.mrf.mxu0
      %v8940 = vadd.f32 0.0, %v8939
      %v8941 = vpop.f32.mrf.mxu0
      %v8942 = vadd.f32 0.0, %v8941
      %v8943 = vpop.f32.mrf.mxu0
      %v8944 = vadd.f32 0.0, %v8943
      %8945 = vdwg.mxu0
      %v8946 = vadd.f32 %v8480, %v8888
      %v8947 = vadd.f32 %v8481, %v8890
      %v8948 = vadd.f32 %v8482, %v8892
      %v8949 = vadd.f32 %v8483, %v8894
      %v8950 = vadd.f32 %v8484, %v8898
      %v8951 = vadd.f32 %v8485, %v8900
      %v8952 = vadd.f32 %v8486, %v8902
      %v8953 = vadd.f32 %v8487, %v8904
      %v8954 = vadd.f32 %v8488, %v8908
      %v8955 = vadd.f32 %v8489, %v8910
      %v8956 = vadd.f32 %v8490, %v8912
      %v8957 = vadd.f32 %v8491, %v8914
      %v8958 = vadd.f32 %v8492, %v8918
      %v8959 = vadd.f32 %v8493, %v8920
      %v8960 = vadd.f32 %v8494, %v8922
      %v8961 = vadd.f32 %v8495, %v8924
      %v8962 = vadd.f32 %v8496, %v8928
      %v8963 = vadd.f32 %v8497, %v8930
      %v8964 = vadd.f32 %v8498, %v8932
      %v8965 = vadd.f32 %v8499, %v8934
      %v8966 = vadd.f32 %v8500, %v8938
      %v8967 = vadd.f32 %v8501, %v8940
      %v8968 = vadd.f32 %v8502, %v8942
      %v8969 = vadd.f32 %v8503, %v8944
      %v8970 = vld [vmem:[#allocation2 + $0x30] sm:$0xfc]
      %v8971 = vld [vmem:[#allocation2 + $0x38] sm:$0xfc]
      %v8972 = vld [vmem:[#allocation2 + $0xf0] sm:$0x3]
      %v8973 = vld [vmem:[#allocation2 + $0xf8] sm:$0x3]
      %v8974 = vpack.c.bf16 %v8506, %v8970
      %v8975 = vpack.c.bf16 %v8507, %v8971
      %v8976 = vpack.c.bf16 %v8972, %v8972
      %v8977 = vpack.c.bf16 %v8973, %v8973
      %s8978 = scalar_lea.vmem %s4, 1792
      %v8979 = vld [vmem:[%s8978] sm:$0xff]
      %v8980 = vld [vmem:[%s8978 + $0x8] sm:$0xff]
      %v8981 = vld [vmem:[%s8978 + $0x10] sm:$0xff]
      %v8982 = vld [vmem:[%s8978 + $0x18] sm:$0xff]
      %v8983 = vld [vmem:[%s8978 + $0x20] sm:$0xff]
      %v8984 = vld [vmem:[%s8978 + $0x28] sm:$0xff]
      %v8985 = vld [vmem:[%s8978 + $0x30] sm:$0xff]
      %v8986 = vld [vmem:[%s8978 + $0x38] sm:$0xff]
      %v8987 = vld [vmem:[%s8978 + $0x40] sm:$0xff]
      %v8988 = vld [vmem:[%s8978 + $0x48] sm:$0xff]
      %v8989 = vld [vmem:[%s8978 + $0x50] sm:$0xff]
      %v8990 = vld [vmem:[%s8978 + $0x58] sm:$0xff]
      %v8991 = vld [vmem:[%s8978 + $0x60] sm:$0xff]
      %v8992 = vld [vmem:[%s8978 + $0x68] sm:$0xff]
      %v8993 = vld [vmem:[%s8978 + $0x70] sm:$0xff]
      %v8994 = vld [vmem:[%s8978 + $0x78] sm:$0xff]
      %v8995 = vld [vmem:[%s8978 + $0x80] sm:$0xff]
      %v8996 = vld [vmem:[%s8978 + $0x88] sm:$0xff]
      %v8997 = vld [vmem:[%s8978 + $0x90] sm:$0xff]
      %v8998 = vld [vmem:[%s8978 + $0x98] sm:$0xff]
      %v8999 = vld [vmem:[%s8978 + $0xa0] sm:$0xff]
      %v9000 = vld [vmem:[%s8978 + $0xa8] sm:$0xff]
      %v9001 = vld [vmem:[%s8978 + $0xb0] sm:$0xff]
      %v9002 = vld [vmem:[%s8978 + $0xb8] sm:$0xff]
      %v9003 = vld [vmem:[%s8978 + $0xc0] sm:$0xff]
      %v9004 = vld [vmem:[%s8978 + $0xc8] sm:$0xff]
      %v9005 = vld [vmem:[%s8978 + $0xd0] sm:$0xff]
      %v9006 = vld [vmem:[%s8978 + $0xd8] sm:$0xff]
      %v9007 = vld [vmem:[%s8978 + $0xe0] sm:$0xff]
      %v9008 = vld [vmem:[%s8978 + $0xe8] sm:$0xff]
      %v9009 = vld [vmem:[%s8978 + $0xf0] sm:$0xff]
      %v9010 = vld [vmem:[%s8978 + $0xf8] sm:$0xff]
      %v9025 = vrot.slane %v8974, 1
      %v9026 = vrot.slane %v8532, 1
      %v9027 = vsel %vm542, %v9025, %v9026
      %v9028 = vrot.slane %v8975, 1
      %v9029 = vrot.slane %v8533, 1
      %v9030 = vsel %vm542, %v9028, %v9029
      %v9031 = vrot.slane %v8534, 1
      %v9032 = vsel %vm542, %v9026, %v9031
      %v9033 = vrot.slane %v8535, 1
      %v9034 = vsel %vm542, %v9029, %v9033
      %v9035 = vrot.slane %v8536, 1
      %v9036 = vsel %vm542, %v9031, %v9035
      %v9037 = vrot.slane %v8537, 1
      %v9038 = vsel %vm542, %v9033, %v9037
      %v9039 = vrot.slane %v8538, 1
      %v9040 = vsel %vm542, %v9035, %v9039
      %v9041 = vrot.slane %v8539, 1
      %v9042 = vsel %vm542, %v9037, %v9041
      %v9043 = vrot.slane %v8540, 1
      %v9044 = vsel %vm542, %v9039, %v9043
      %v9045 = vrot.slane %v8541, 1
      %v9046 = vsel %vm542, %v9041, %v9045
      %v9047 = vrot.slane %v8976, 1
      %v9048 = vsel %vm542, %v9043, %v9047
      %v9049 = vrot.slane %v8977, 1
      %v9050 = vsel %vm542, %v9045, %v9049
      %v9095 = vunpack.c.l.b16 %v8979
      %v9096 = vunpack.c.h.b16 %v8979
      %v9097 = vunpack.c.l.b16 %v8980
      %v9098 = vunpack.c.h.b16 %v8980
      %v9099 = vunpack.c.l.b16 %v8981
      %v9100 = vunpack.c.h.b16 %v8981
      %v9101 = vunpack.c.l.b16 %v8982
      %v9102 = vunpack.c.h.b16 %v8982
      %v9103 = vunpack.c.l.b16 %v8983
      %v9104 = vunpack.c.h.b16 %v8983
      %v9105 = vunpack.c.l.b16 %v8984
      %v9106 = vunpack.c.h.b16 %v8984
      %v9107 = vunpack.c.l.b16 %v8985
      %v9108 = vunpack.c.h.b16 %v8985
      %v9109 = vunpack.c.l.b16 %v8986
      %v9110 = vunpack.c.h.b16 %v8986
      %v9111 = vunpack.c.l.b16 %v8987
      %v9112 = vunpack.c.h.b16 %v8987
      %v9113 = vunpack.c.l.b16 %v8988
      %v9114 = vunpack.c.h.b16 %v8988
      %v9115 = vunpack.c.l.b16 %v8989
      %v9116 = vunpack.c.h.b16 %v8989
      %v9117 = vunpack.c.l.b16 %v8990
      %v9118 = vunpack.c.h.b16 %v8990
      %v9119 = vunpack.c.l.b16 %v8991
      %v9120 = vunpack.c.h.b16 %v8991
      %v9121 = vunpack.c.l.b16 %v8992
      %v9122 = vunpack.c.h.b16 %v8992
      %v9123 = vunpack.c.l.b16 %v8993
      %v9124 = vunpack.c.h.b16 %v8993
      %v9125 = vunpack.c.l.b16 %v8994
      %v9126 = vunpack.c.h.b16 %v8994
      %v9127 = vunpack.c.l.b16 %v8995
      %v9128 = vunpack.c.h.b16 %v8995
      %v9129 = vunpack.c.l.b16 %v8996
      %v9130 = vunpack.c.h.b16 %v8996
      %v9131 = vunpack.c.l.b16 %v8997
      %v9132 = vunpack.c.h.b16 %v8997
      %v9133 = vunpack.c.l.b16 %v8998
      %v9134 = vunpack.c.h.b16 %v8998
      %v9135 = vunpack.c.l.b16 %v8999
      %v9136 = vunpack.c.h.b16 %v8999
      %v9137 = vunpack.c.l.b16 %v9000
      %v9138 = vunpack.c.h.b16 %v9000
      %v9139 = vunpack.c.l.b16 %v9001
      %v9140 = vunpack.c.h.b16 %v9001
      %v9141 = vunpack.c.l.b16 %v9002
      %v9142 = vunpack.c.h.b16 %v9002
      %v9143 = vunpack.c.l.b16 %v9003
      %v9144 = vunpack.c.h.b16 %v9003
      %v9145 = vunpack.c.l.b16 %v9004
      %v9146 = vunpack.c.h.b16 %v9004
      %v9147 = vunpack.c.l.b16 %v9005
      %v9148 = vunpack.c.h.b16 %v9005
      %v9149 = vunpack.c.l.b16 %v9006
      %v9150 = vunpack.c.h.b16 %v9006
      %v9151 = vunpack.c.l.b16 %v9007
      %v9152 = vunpack.c.h.b16 %v9007
      %v9153 = vunpack.c.l.b16 %v9008
      %v9154 = vunpack.c.h.b16 %v9008
      %v9155 = vunpack.c.l.b16 %v9009
      %v9156 = vunpack.c.h.b16 %v9009
      %v9157 = vunpack.c.l.b16 %v9010
      %v9158 = vunpack.c.h.b16 %v9010
      %v9159 = vpack.c.b16 %v9097, %v9095
      %v9160 = vpack.c.b16 %v9098, %v9096
      %v9161 = vpack.c.b16 %v9101, %v9099
      %v9162 = vpack.c.b16 %v9102, %v9100
      %v9163 = vpack.c.b16 %v9105, %v9103
      %v9164 = vpack.c.b16 %v9106, %v9104
      %v9165 = vpack.c.b16 %v9109, %v9107
      %v9166 = vpack.c.b16 %v9110, %v9108
      %v9167 = vpack.c.b16 %v9113, %v9111
      %v9168 = vpack.c.b16 %v9114, %v9112
      %v9169 = vpack.c.b16 %v9117, %v9115
      %v9170 = vpack.c.b16 %v9118, %v9116
      %v9171 = vpack.c.b16 %v9121, %v9119
      %v9172 = vpack.c.b16 %v9122, %v9120
      %v9173 = vpack.c.b16 %v9125, %v9123
      %v9174 = vpack.c.b16 %v9126, %v9124
      %v9175 = vpack.c.b16 %v9129, %v9127
      %v9176 = vpack.c.b16 %v9130, %v9128
      %v9177 = vpack.c.b16 %v9133, %v9131
      %v9178 = vpack.c.b16 %v9134, %v9132
      %v9179 = vpack.c.b16 %v9137, %v9135
      %v9180 = vpack.c.b16 %v9138, %v9136
      %v9181 = vpack.c.b16 %v9141, %v9139
      %v9182 = vpack.c.b16 %v9142, %v9140
      %v9183 = vpack.c.b16 %v9145, %v9143
      %v9184 = vpack.c.b16 %v9146, %v9144
      %v9185 = vpack.c.b16 %v9149, %v9147
      %v9186 = vpack.c.b16 %v9150, %v9148
      %v9187 = vpack.c.b16 %v9153, %v9151
      %v9188 = vpack.c.b16 %v9154, %v9152
      %v9189 = vpack.c.b16 %v9157, %v9155
      %v9190 = vpack.c.b16 %v9158, %v9156
      %9223 = vmatprep.subr.bf16.mxu0 %v9174
      %9224 = vmatpush1.bf16.msra.mxu0 %v9173
      %9225 = vmatprep.subr.bf16.mxu0 %v9172
      %9226 = vmatpush1.bf16.msra.mxu0 %v9171
      %9227 = vmatprep.subr.bf16.mxu0 %v9170
      %9228 = vmatpush1.bf16.msra.mxu0 %v9169
      %9229 = vmatprep.subr.bf16.mxu0 %v9168
      %9230 = vmatpush1.bf16.msra.mxu0 %v9167
      %9231 = vmatprep.subr.bf16.mxu0 %v9166
      %9232 = vmatpush1.bf16.msra.mxu0 %v9165
      %9233 = vmatprep.subr.bf16.mxu0 %v9164
      %9234 = vmatpush1.bf16.msra.mxu0 %v9163
      %9235 = vmatprep.subr.bf16.mxu0 %v9162
      %9236 = vmatpush1.bf16.msra.mxu0 %v9161
      %9237 = vmatprep.subr.bf16.mxu0 %v9160
      %9238 = vmatpush1.bf16.msra.mxu0 %v9159
      %9239 = vmatprep.subr.bf16.mxu0 %v9190
      %9240 = vmatpush2.bf16.msra.mxu0 %v9189
      %9241 = vmatprep.subr.bf16.mxu0 %v9188
      %9242 = vmatpush2.bf16.msra.mxu0 %v9187
      %9243 = vmatprep.subr.bf16.mxu0 %v9186
      %9244 = vmatpush2.bf16.msra.mxu0 %v9185
      %9245 = vmatprep.subr.bf16.mxu0 %v9184
      %9246 = vmatpush2.bf16.msra.mxu0 %v9183
      %9247 = vmatprep.subr.bf16.mxu0 %v9182
      %9248 = vmatpush2.bf16.msra.mxu0 %v9181
      %9249 = vmatprep.subr.bf16.mxu0 %v9180
      %9250 = vmatpush2.bf16.msra.mxu0 %v9179
      %9251 = vmatprep.subr.bf16.mxu0 %v9178
      %9252 = vmatpush2.bf16.msra.mxu0 %v9177
      %9253 = vmatprep.subr.bf16.mxu0 %v9176
      %9254 = vmatpush2.bf16.msra.mxu0 %v9175
      %9255 = vmatprep.mubr.bf16.mxu0 %v9030
      %9256 = vmatmul.mubr.bf16.gmra.mxu0 %v9027
      %v9257 = vpop.f32.mrf.mxu0
      %v9258 = vadd.f32 0.0, %v9257
      %v9259 = vpop.f32.mrf.mxu0
      %v9260 = vadd.f32 0.0, %v9259
      %v9261 = vpop.f32.mrf.mxu0
      %v9262 = vadd.f32 0.0, %v9261
      %v9263 = vpop.f32.mrf.mxu0
      %v9264 = vadd.f32 0.0, %v9263
      %9265 = vmatprep.mubr.bf16.mxu0 %v9034
      %9266 = vmatmul.mubr.bf16.gmra.mxu0 %v9032
      %v9267 = vpop.f32.mrf.mxu0
      %v9268 = vadd.f32 0.0, %v9267
      %v9269 = vpop.f32.mrf.mxu0
      %v9270 = vadd.f32 0.0, %v9269
      %v9271 = vpop.f32.mrf.mxu0
      %v9272 = vadd.f32 0.0, %v9271
      %v9273 = vpop.f32.mrf.mxu0
      %v9274 = vadd.f32 0.0, %v9273
      %9275 = vmatprep.mubr.bf16.mxu0 %v9038
      %9276 = vmatmul.mubr.bf16.gmra.mxu0 %v9036
      %v9277 = vpop.f32.mrf.mxu0
      %v9278 = vadd.f32 0.0, %v9277
      %v9279 = vpop.f32.mrf.mxu0
      %v9280 = vadd.f32 0.0, %v9279
      %v9281 = vpop.f32.mrf.mxu0
      %v9282 = vadd.f32 0.0, %v9281
      %v9283 = vpop.f32.mrf.mxu0
      %v9284 = vadd.f32 0.0, %v9283
      %9285 = vmatprep.mubr.bf16.mxu0 %v9042
      %9286 = vmatmul.mubr.bf16.gmra.mxu0 %v9040
      %v9287 = vpop.f32.mrf.mxu0
      %v9288 = vadd.f32 0.0, %v9287
      %v9289 = vpop.f32.mrf.mxu0
      %v9290 = vadd.f32 0.0, %v9289
      %v9291 = vpop.f32.mrf.mxu0
      %v9292 = vadd.f32 0.0, %v9291
      %v9293 = vpop.f32.mrf.mxu0
      %v9294 = vadd.f32 0.0, %v9293
      %9295 = vmatprep.mubr.bf16.mxu0 %v9046
      %9296 = vmatmul.mubr.bf16.gmra.mxu0 %v9044
      %v9297 = vpop.f32.mrf.mxu0
      %v9298 = vadd.f32 0.0, %v9297
      %v9299 = vpop.f32.mrf.mxu0
      %v9300 = vadd.f32 0.0, %v9299
      %v9301 = vpop.f32.mrf.mxu0
      %v9302 = vadd.f32 0.0, %v9301
      %v9303 = vpop.f32.mrf.mxu0
      %v9304 = vadd.f32 0.0, %v9303
      %9305 = vmatprep.mubr.bf16.mxu0 %v9050
      %9306 = vmatmul.mubr.bf16.gmra.mxu0 %v9048
      %v9307 = vpop.f32.mrf.mxu0
      %v9308 = vadd.f32 0.0, %v9307
      %v9309 = vpop.f32.mrf.mxu0
      %v9310 = vadd.f32 0.0, %v9309
      %v9311 = vpop.f32.mrf.mxu0
      %v9312 = vadd.f32 0.0, %v9311
      %v9313 = vpop.f32.mrf.mxu0
      %v9314 = vadd.f32 0.0, %v9313
      %9315 = vdwg.mxu0
      %v9316 = vadd.f32 %v8946, %v9258
      %v9317 = vadd.f32 %v8947, %v9260
      %v9318 = vadd.f32 %v8948, %v9262
      %v9319 = vadd.f32 %v8949, %v9264
      %v9320 = vadd.f32 %v8950, %v9268
      %v9321 = vadd.f32 %v8951, %v9270
      %v9322 = vadd.f32 %v8952, %v9272
      %v9323 = vadd.f32 %v8953, %v9274
      %v9324 = vadd.f32 %v8954, %v9278
      %v9325 = vadd.f32 %v8955, %v9280
      %v9326 = vadd.f32 %v8956, %v9282
      %v9327 = vadd.f32 %v8957, %v9284
      %v9328 = vadd.f32 %v8958, %v9288
      %v9329 = vadd.f32 %v8959, %v9290
      %v9330 = vadd.f32 %v8960, %v9292
      %v9331 = vadd.f32 %v8961, %v9294
      %v9332 = vadd.f32 %v8962, %v9298
      %v9333 = vadd.f32 %v8963, %v9300
      %v9334 = vadd.f32 %v8964, %v9302
      %v9335 = vadd.f32 %v8965, %v9304
      %v9336 = vadd.f32 %v8966, %v9308
      %v9337 = vadd.f32 %v8967, %v9310
      %v9338 = vadd.f32 %v8968, %v9312
      %v9339 = vadd.f32 %v8969, %v9314
      %v9340 = vld [vmem:[#allocation2 + $0x30] sm:$0xf8]
      %v9341 = vld [vmem:[#allocation2 + $0x38] sm:$0xf8]
      %v9342 = vld [vmem:[#allocation2 + $0xf0] sm:$0x7]
      %v9343 = vld [vmem:[#allocation2 + $0xf8] sm:$0x7]
      %v9344 = vpack.c.bf16 %v8506, %v9340
      %v9345 = vpack.c.bf16 %v8507, %v9341
      %v9346 = vpack.c.bf16 %v9342, %v9342
      %v9347 = vpack.c.bf16 %v9343, %v9343
      %s9348 = scalar_lea.vmem %s4, 2048
      %v9349 = vld [vmem:[%s9348] sm:$0xff]
      %v9350 = vld [vmem:[%s9348 + $0x8] sm:$0xff]
      %v9351 = vld [vmem:[%s9348 + $0x10] sm:$0xff]
      %v9352 = vld [vmem:[%s9348 + $0x18] sm:$0xff]
      %v9353 = vld [vmem:[%s9348 + $0x20] sm:$0xff]
      %v9354 = vld [vmem:[%s9348 + $0x28] sm:$0xff]
      %v9355 = vld [vmem:[%s9348 + $0x30] sm:$0xff]
      %v9356 = vld [vmem:[%s9348 + $0x38] sm:$0xff]
      %v9357 = vld [vmem:[%s9348 + $0x40] sm:$0xff]
      %v9358 = vld [vmem:[%s9348 + $0x48] sm:$0xff]
      %v9359 = vld [vmem:[%s9348 + $0x50] sm:$0xff]
      %v9360 = vld [vmem:[%s9348 + $0x58] sm:$0xff]
      %v9361 = vld [vmem:[%s9348 + $0x60] sm:$0xff]
      %v9362 = vld [vmem:[%s9348 + $0x68] sm:$0xff]
      %v9363 = vld [vmem:[%s9348 + $0x70] sm:$0xff]
      %v9364 = vld [vmem:[%s9348 + $0x78] sm:$0xff]
      %v9365 = vld [vmem:[%s9348 + $0x80] sm:$0xff]
      %v9366 = vld [vmem:[%s9348 + $0x88] sm:$0xff]
      %v9367 = vld [vmem:[%s9348 + $0x90] sm:$0xff]
      %v9368 = vld [vmem:[%s9348 + $0x98] sm:$0xff]
      %v9369 = vld [vmem:[%s9348 + $0xa0] sm:$0xff]
      %v9370 = vld [vmem:[%s9348 + $0xa8] sm:$0xff]
      %v9371 = vld [vmem:[%s9348 + $0xb0] sm:$0xff]
      %v9372 = vld [vmem:[%s9348 + $0xb8] sm:$0xff]
      %v9373 = vld [vmem:[%s9348 + $0xc0] sm:$0xff]
      %v9374 = vld [vmem:[%s9348 + $0xc8] sm:$0xff]
      %v9375 = vld [vmem:[%s9348 + $0xd0] sm:$0xff]
      %v9376 = vld [vmem:[%s9348 + $0xd8] sm:$0xff]
      %v9377 = vld [vmem:[%s9348 + $0xe0] sm:$0xff]
      %v9378 = vld [vmem:[%s9348 + $0xe8] sm:$0xff]
      %v9379 = vld [vmem:[%s9348 + $0xf0] sm:$0xff]
      %v9380 = vld [vmem:[%s9348 + $0xf8] sm:$0xff]
      %v9382 = vshrl.u32 %v9344, 16
      %v9384 = vrot.slane %v9382, 1
      %v9385 = vshll.u32 %v9344, 16
      %v9387 = vrot.slane %v9385, 2
      %v9388 = vor.u32 %v9384, %v9387
      %v9389 = vrot.slane %v8601, 1
      %v9390 = vrot.slane %v8585, 2
      %v9391 = vor.u32 %v9389, %v9390
      %v9392 = vsel %vm6877, %v9388, %v9391
      %v9394 = vshrl.u32 %v9345, 16
      %v9396 = vrot.slane %v9394, 1
      %v9397 = vshll.u32 %v9345, 16
      %v9399 = vrot.slane %v9397, 2
      %v9400 = vor.u32 %v9396, %v9399
      %v9401 = vrot.slane %v8609, 1
      %v9402 = vrot.slane %v8597, 2
      %v9403 = vor.u32 %v9401, %v9402
      %v9404 = vsel %vm6877, %v9400, %v9403
      %v9405 = vrot.slane %v8617, 1
      %v9406 = vrot.slane %v8605, 2
      %v9407 = vor.u32 %v9405, %v9406
      %v9408 = vsel %vm6877, %v9391, %v9407
      %v9409 = vrot.slane %v8625, 1
      %v9410 = vrot.slane %v8613, 2
      %v9411 = vor.u32 %v9409, %v9410
      %v9412 = vsel %vm6877, %v9403, %v9411
      %v9413 = vrot.slane %v8633, 1
      %v9414 = vrot.slane %v8621, 2
      %v9415 = vor.u32 %v9413, %v9414
      %v9416 = vsel %vm6877, %v9407, %v9415
      %v9417 = vrot.slane %v8641, 1
      %v9418 = vrot.slane %v8629, 2
      %v9419 = vor.u32 %v9417, %v9418
      %v9420 = vsel %vm6877, %v9411, %v9419
      %v9421 = vrot.slane %v8649, 1
      %v9422 = vrot.slane %v8637, 2
      %v9423 = vor.u32 %v9421, %v9422
      %v9424 = vsel %vm6877, %v9415, %v9423
      %v9425 = vrot.slane %v8657, 1
      %v9426 = vrot.slane %v8645, 2
      %v9427 = vor.u32 %v9425, %v9426
      %v9428 = vsel %vm6877, %v9419, %v9427
      %v9429 = vrot.slane %v8665, 1
      %v9430 = vrot.slane %v8653, 2
      %v9431 = vor.u32 %v9429, %v9430
      %v9432 = vsel %vm6877, %v9423, %v9431
      %v9433 = vrot.slane %v8673, 1
      %v9434 = vrot.slane %v8661, 2
      %v9435 = vor.u32 %v9433, %v9434
      %v9436 = vsel %vm6877, %v9427, %v9435
      %v9438 = vshrl.u32 %v9346, 16
      %v9440 = vrot.slane %v9438, 1
      %v9441 = vshll.u32 %v9346, 16
      %v9443 = vrot.slane %v9441, 2
      %v9444 = vor.u32 %v9440, %v9443
      %v9445 = vsel %vm6877, %v9431, %v9444
      %v9447 = vshrl.u32 %v9347, 16
      %v9449 = vrot.slane %v9447, 1
      %v9450 = vshll.u32 %v9347, 16
      %v9452 = vrot.slane %v9450, 2
      %v9453 = vor.u32 %v9449, %v9452
      %v9454 = vsel %vm6877, %v9435, %v9453
      %v9499 = vunpack.c.l.b16 %v9349
      %v9500 = vunpack.c.h.b16 %v9349
      %v9501 = vunpack.c.l.b16 %v9350
      %v9502 = vunpack.c.h.b16 %v9350
      %v9503 = vunpack.c.l.b16 %v9351
      %v9504 = vunpack.c.h.b16 %v9351
      %v9505 = vunpack.c.l.b16 %v9352
      %v9506 = vunpack.c.h.b16 %v9352
      %v9507 = vunpack.c.l.b16 %v9353
      %v9508 = vunpack.c.h.b16 %v9353
      %v9509 = vunpack.c.l.b16 %v9354
      %v9510 = vunpack.c.h.b16 %v9354
      %v9511 = vunpack.c.l.b16 %v9355
      %v9512 = vunpack.c.h.b16 %v9355
      %v9513 = vunpack.c.l.b16 %v9356
      %v9514 = vunpack.c.h.b16 %v9356
      %v9515 = vunpack.c.l.b16 %v9357
      %v9516 = vunpack.c.h.b16 %v9357
      %v9517 = vunpack.c.l.b16 %v9358
      %v9518 = vunpack.c.h.b16 %v9358
      %v9519 = vunpack.c.l.b16 %v9359
      %v9520 = vunpack.c.h.b16 %v9359
      %v9521 = vunpack.c.l.b16 %v9360
      %v9522 = vunpack.c.h.b16 %v9360
      %v9523 = vunpack.c.l.b16 %v9361
      %v9524 = vunpack.c.h.b16 %v9361
      %v9525 = vunpack.c.l.b16 %v9362
      %v9526 = vunpack.c.h.b16 %v9362
      %v9527 = vunpack.c.l.b16 %v9363
      %v9528 = vunpack.c.h.b16 %v9363
      %v9529 = vunpack.c.l.b16 %v9364
      %v9530 = vunpack.c.h.b16 %v9364
      %v9531 = vunpack.c.l.b16 %v9365
      %v9532 = vunpack.c.h.b16 %v9365
      %v9533 = vunpack.c.l.b16 %v9366
      %v9534 = vunpack.c.h.b16 %v9366
      %v9535 = vunpack.c.l.b16 %v9367
      %v9536 = vunpack.c.h.b16 %v9367
      %v9537 = vunpack.c.l.b16 %v9368
      %v9538 = vunpack.c.h.b16 %v9368
      %v9539 = vunpack.c.l.b16 %v9369
      %v9540 = vunpack.c.h.b16 %v9369
      %v9541 = vunpack.c.l.b16 %v9370
      %v9542 = vunpack.c.h.b16 %v9370
      %v9543 = vunpack.c.l.b16 %v9371
      %v9544 = vunpack.c.h.b16 %v9371
      %v9545 = vunpack.c.l.b16 %v9372
      %v9546 = vunpack.c.h.b16 %v9372
      %v9547 = vunpack.c.l.b16 %v9373
      %v9548 = vunpack.c.h.b16 %v9373
      %v9549 = vunpack.c.l.b16 %v9374
      %v9550 = vunpack.c.h.b16 %v9374
      %v9551 = vunpack.c.l.b16 %v9375
      %v9552 = vunpack.c.h.b16 %v9375
      %v9553 = vunpack.c.l.b16 %v9376
      %v9554 = vunpack.c.h.b16 %v9376
      %v9555 = vunpack.c.l.b16 %v9377
      %v9556 = vunpack.c.h.b16 %v9377
      %v9557 = vunpack.c.l.b16 %v9378
      %v9558 = vunpack.c.h.b16 %v9378
      %v9559 = vunpack.c.l.b16 %v9379
      %v9560 = vunpack.c.h.b16 %v9379
      %v9561 = vunpack.c.l.b16 %v9380
      %v9562 = vunpack.c.h.b16 %v9380
      %v9563 = vpack.c.b16 %v9501, %v9499
      %v9564 = vpack.c.b16 %v9502, %v9500
      %v9565 = vpack.c.b16 %v9505, %v9503
      %v9566 = vpack.c.b16 %v9506, %v9504
      %v9567 = vpack.c.b16 %v9509, %v9507
      %v9568 = vpack.c.b16 %v9510, %v9508
      %v9569 = vpack.c.b16 %v9513, %v9511
      %v9570 = vpack.c.b16 %v9514, %v9512
      %v9571 = vpack.c.b16 %v9517, %v9515
      %v9572 = vpack.c.b16 %v9518, %v9516
      %v9573 = vpack.c.b16 %v9521, %v9519
      %v9574 = vpack.c.b16 %v9522, %v9520
      %v9575 = vpack.c.b16 %v9525, %v9523
      %v9576 = vpack.c.b16 %v9526, %v9524
      %v9577 = vpack.c.b16 %v9529, %v9527
      %v9578 = vpack.c.b16 %v9530, %v9528
      %v9579 = vpack.c.b16 %v9533, %v9531
      %v9580 = vpack.c.b16 %v9534, %v9532
      %v9581 = vpack.c.b16 %v9537, %v9535
      %v9582 = vpack.c.b16 %v9538, %v9536
      %v9583 = vpack.c.b16 %v9541, %v9539
      %v9584 = vpack.c.b16 %v9542, %v9540
      %v9585 = vpack.c.b16 %v9545, %v9543
      %v9586 = vpack.c.b16 %v9546, %v9544
      %v9587 = vpack.c.b16 %v9549, %v9547
      %v9588 = vpack.c.b16 %v9550, %v9548
      %v9589 = vpack.c.b16 %v9553, %v9551
      %v9590 = vpack.c.b16 %v9554, %v9552
      %v9591 = vpack.c.b16 %v9557, %v9555
      %v9592 = vpack.c.b16 %v9558, %v9556
      %v9593 = vpack.c.b16 %v9561, %v9559
      %v9594 = vpack.c.b16 %v9562, %v9560
      %9627 = vmatprep.subr.bf16.mxu0 %v9578
      %9628 = vmatpush1.bf16.msra.mxu0 %v9577
      %9629 = vmatprep.subr.bf16.mxu0 %v9576
      %9630 = vmatpush1.bf16.msra.mxu0 %v9575
      %9631 = vmatprep.subr.bf16.mxu0 %v9574
      %9632 = vmatpush1.bf16.msra.mxu0 %v9573
      %9633 = vmatprep.subr.bf16.mxu0 %v9572
      %9634 = vmatpush1.bf16.msra.mxu0 %v9571
      %9635 = vmatprep.subr.bf16.mxu0 %v9570
      %9636 = vmatpush1.bf16.msra.mxu0 %v9569
      %9637 = vmatprep.subr.bf16.mxu0 %v9568
      %9638 = vmatpush1.bf16.msra.mxu0 %v9567
      %9639 = vmatprep.subr.bf16.mxu0 %v9566
      %9640 = vmatpush1.bf16.msra.mxu0 %v9565
      %9641 = vmatprep.subr.bf16.mxu0 %v9564
      %9642 = vmatpush1.bf16.msra.mxu0 %v9563
      %9643 = vmatprep.subr.bf16.mxu0 %v9594
      %9644 = vmatpush2.bf16.msra.mxu0 %v9593
      %9645 = vmatprep.subr.bf16.mxu0 %v9592
      %9646 = vmatpush2.bf16.msra.mxu0 %v9591
      %9647 = vmatprep.subr.bf16.mxu0 %v9590
      %9648 = vmatpush2.bf16.msra.mxu0 %v9589
      %9649 = vmatprep.subr.bf16.mxu0 %v9588
      %9650 = vmatpush2.bf16.msra.mxu0 %v9587
      %9651 = vmatprep.subr.bf16.mxu0 %v9586
      %9652 = vmatpush2.bf16.msra.mxu0 %v9585
      %9653 = vmatprep.subr.bf16.mxu0 %v9584
      %9654 = vmatpush2.bf16.msra.mxu0 %v9583
      %9655 = vmatprep.subr.bf16.mxu0 %v9582
      %9656 = vmatpush2.bf16.msra.mxu0 %v9581
      %9657 = vmatprep.subr.bf16.mxu0 %v9580
      %9658 = vmatpush2.bf16.msra.mxu0 %v9579
      %9659 = vmatprep.mubr.bf16.mxu0 %v9404
      %9660 = vmatmul.mubr.bf16.gmra.mxu0 %v9392
      %v9661 = vpop.f32.mrf.mxu0
      %v9662 = vadd.f32 0.0, %v9661
      %v9663 = vpop.f32.mrf.mxu0
      %v9664 = vadd.f32 0.0, %v9663
      %v9665 = vpop.f32.mrf.mxu0
      %v9666 = vadd.f32 0.0, %v9665
      %v9667 = vpop.f32.mrf.mxu0
      %v9668 = vadd.f32 0.0, %v9667
      %9669 = vmatprep.mubr.bf16.mxu0 %v9412
      %9670 = vmatmul.mubr.bf16.gmra.mxu0 %v9408
      %v9671 = vpop.f32.mrf.mxu0
      %v9672 = vadd.f32 0.0, %v9671
      %v9673 = vpop.f32.mrf.mxu0
      %v9674 = vadd.f32 0.0, %v9673
      %v9675 = vpop.f32.mrf.mxu0
      %v9676 = vadd.f32 0.0, %v9675
      %v9677 = vpop.f32.mrf.mxu0
      %v9678 = vadd.f32 0.0, %v9677
      %9679 = vmatprep.mubr.bf16.mxu0 %v9420
      %9680 = vmatmul.mubr.bf16.gmra.mxu0 %v9416
      %v9681 = vpop.f32.mrf.mxu0
      %v9682 = vadd.f32 0.0, %v9681
      %v9683 = vpop.f32.mrf.mxu0
      %v9684 = vadd.f32 0.0, %v9683
      %v9685 = vpop.f32.mrf.mxu0
      %v9686 = vadd.f32 0.0, %v9685
      %v9687 = vpop.f32.mrf.mxu0
      %v9688 = vadd.f32 0.0, %v9687
      %9689 = vmatprep.mubr.bf16.mxu0 %v9428
      %9690 = vmatmul.mubr.bf16.gmra.mxu0 %v9424
      %v9691 = vpop.f32.mrf.mxu0
      %v9692 = vadd.f32 0.0, %v9691
      %v9693 = vpop.f32.mrf.mxu0
      %v9694 = vadd.f32 0.0, %v9693
      %v9695 = vpop.f32.mrf.mxu0
      %v9696 = vadd.f32 0.0, %v9695
      %v9697 = vpop.f32.mrf.mxu0
      %v9698 = vadd.f32 0.0, %v9697
      %9699 = vmatprep.mubr.bf16.mxu0 %v9436
      %9700 = vmatmul.mubr.bf16.gmra.mxu0 %v9432
      %v9701 = vpop.f32.mrf.mxu0
      %v9702 = vadd.f32 0.0, %v9701
      %v9703 = vpop.f32.mrf.mxu0
      %v9704 = vadd.f32 0.0, %v9703
      %v9705 = vpop.f32.mrf.mxu0
      %v9706 = vadd.f32 0.0, %v9705
      %v9707 = vpop.f32.mrf.mxu0
      %v9708 = vadd.f32 0.0, %v9707
      %9709 = vmatprep.mubr.bf16.mxu0 %v9454
      %9710 = vmatmul.mubr.bf16.gmra.mxu0 %v9445
      %v9711 = vpop.f32.mrf.mxu0
      %v9712 = vadd.f32 0.0, %v9711
      %v9713 = vpop.f32.mrf.mxu0
      %v9714 = vadd.f32 0.0, %v9713
      %v9715 = vpop.f32.mrf.mxu0
      %v9716 = vadd.f32 0.0, %v9715
      %v9717 = vpop.f32.mrf.mxu0
      %v9718 = vadd.f32 0.0, %v9717
      %9719 = vdwg.mxu0
      %v9720 = vadd.f32 %v9316, %v9662
      %v9721 = vadd.f32 %v9317, %v9664
      %v9722 = vadd.f32 %v9318, %v9666
      %v9723 = vadd.f32 %v9319, %v9668
      %v9724 = vadd.f32 %v9320, %v9672
      %v9725 = vadd.f32 %v9321, %v9674
      %v9726 = vadd.f32 %v9322, %v9676
      %v9727 = vadd.f32 %v9323, %v9678
      %v9728 = vadd.f32 %v9324, %v9682
      %v9729 = vadd.f32 %v9325, %v9684
      %v9730 = vadd.f32 %v9326, %v9686
      %v9731 = vadd.f32 %v9327, %v9688
      %v9732 = vadd.f32 %v9328, %v9692
      %v9733 = vadd.f32 %v9329, %v9694
      %v9734 = vadd.f32 %v9330, %v9696
      %v9735 = vadd.f32 %v9331, %v9698
      %v9736 = vadd.f32 %v9332, %v9702
      %v9737 = vadd.f32 %v9333, %v9704
      %v9738 = vadd.f32 %v9334, %v9706
      %v9739 = vadd.f32 %v9335, %v9708
      %v9740 = vadd.f32 %v9336, %v9712
      %v9741 = vadd.f32 %v9337, %v9714
      %v9742 = vadd.f32 %v9338, %v9716
      %v9743 = vadd.f32 %v9339, %v9718
      %v9744 = vld [vmem:[%s5] sm:$0x3]
      %v9746 = vlaneseq
      %v9747 = vshrl.u32 %v9746, 7
      %v9748 = vsub.s32 0, %v9747
      %v9749 = vrot.slane %v9744, %v9748
      %v9750 = vlaneseq
      %v9751 = vshrl.u32 %v9750, 7
      %v9752 = vsub.s32 1, %v9751
      %v9753 = vrot.slane %v9744, %v9752
      %v9756 = vadd.f32 %v9720, %v9749
      %v9757 = vadd.f32 %v9721, %v9753
      %v9758 = vadd.f32 %v9722, %v9749
      %v9759 = vadd.f32 %v9723, %v9753
      %v9760 = vadd.f32 %v9724, %v9749
      %v9761 = vadd.f32 %v9725, %v9753
      %v9762 = vadd.f32 %v9726, %v9749
      %v9763 = vadd.f32 %v9727, %v9753
      %v9764 = vadd.f32 %v9728, %v9749
      %v9765 = vadd.f32 %v9729, %v9753
      %v9766 = vadd.f32 %v9730, %v9749
      %v9767 = vadd.f32 %v9731, %v9753
      %v9768 = vadd.f32 %v9732, %v9749
      %v9769 = vadd.f32 %v9733, %v9753
      %v9770 = vadd.f32 %v9734, %v9749
      %v9771 = vadd.f32 %v9735, %v9753
      %v9772 = vadd.f32 %v9736, %v9749
      %v9773 = vadd.f32 %v9737, %v9753
      %v9774 = vadd.f32 %v9738, %v9749
      %v9775 = vadd.f32 %v9739, %v9753
      %v9776 = vadd.f32 %v9740, %v9749
      %v9777 = vadd.f32 %v9741, %v9753
      %v9778 = vadd.f32 %v9742, %v9749
      %v9779 = vadd.f32 %v9743, %v9753
      %v9780 = vmax.f32 %v9756, 0.0
      %v9781 = vmax.f32 %v9757, 0.0
      %v9782 = vmax.f32 %v9758, 0.0
      %v9783 = vmax.f32 %v9759, 0.0
      %v9784 = vmax.f32 %v9760, 0.0
      %v9785 = vmax.f32 %v9761, 0.0
      %v9786 = vmax.f32 %v9762, 0.0
      %v9787 = vmax.f32 %v9763, 0.0
      %v9788 = vmax.f32 %v9764, 0.0
      %v9789 = vmax.f32 %v9765, 0.0
      %v9790 = vmax.f32 %v9766, 0.0
      %v9791 = vmax.f32 %v9767, 0.0
      %v9792 = vmax.f32 %v9768, 0.0
      %v9793 = vmax.f32 %v9769, 0.0
      %v9794 = vmax.f32 %v9770, 0.0
      %v9795 = vmax.f32 %v9771, 0.0
      %v9796 = vmax.f32 %v9772, 0.0
      %v9797 = vmax.f32 %v9773, 0.0
      %v9798 = vmax.f32 %v9774, 0.0
      %v9799 = vmax.f32 %v9775, 0.0
      %v9800 = vmax.f32 %v9776, 0.0
      %v9801 = vmax.f32 %v9777, 0.0
      %v9802 = vmax.f32 %v9778, 0.0
      %v9803 = vmax.f32 %v9779, 0.0
      %v9804 = vpack.c.bf16 %v9782, %v9780
      %v9805 = vpack.c.bf16 %v9783, %v9781
      %v9806 = vpack.c.bf16 %v9786, %v9784
      %v9807 = vpack.c.bf16 %v9787, %v9785
      %v9808 = vpack.c.bf16 %v9790, %v9788
      %v9809 = vpack.c.bf16 %v9791, %v9789
      %v9810 = vpack.c.bf16 %v9794, %v9792
      %v9811 = vpack.c.bf16 %v9795, %v9793
      %v9812 = vpack.c.bf16 %v9798, %v9796
      %v9813 = vpack.c.bf16 %v9799, %v9797
      %v9814 = vpack.c.bf16 %v9802, %v9800
      %v9815 = vpack.c.bf16 %v9803, %v9801
      %v9816 = vld [vmem:[%s6] sm:$0xf]
      %v9817 = vld [vmem:[%s6 + $0x4] sm:$0xf]
      %v9818 = vld [vmem:[%s6 + $0x8] sm:$0xf]
      %v9819 = vld [vmem:[%s6 + $0xc] sm:$0xf]
      %v9820 = vld [vmem:[%s6 + $0x10] sm:$0xf]
      %v9821 = vld [vmem:[%s6 + $0x14] sm:$0xf]
      %v9822 = vld [vmem:[%s6 + $0x18] sm:$0xf]
      %v9823 = vld [vmem:[%s6 + $0x1c] sm:$0xf]
      %v9824 = vld [vmem:[%s6 + $0x20] sm:$0xf]
      %v9825 = vld [vmem:[%s6 + $0x24] sm:$0xf]
      %v9826 = vld [vmem:[%s6 + $0x28] sm:$0xf]
      %v9827 = vld [vmem:[%s6 + $0x2c] sm:$0xf]
      %v9828 = vld [vmem:[%s6 + $0x30] sm:$0xf]
      %v9829 = vld [vmem:[%s6 + $0x34] sm:$0xf]
      %v9830 = vld [vmem:[%s6 + $0x38] sm:$0xf]
      %v9831 = vld [vmem:[%s6 + $0x3c] sm:$0xf]
      %v9832 = vld [vmem:[%s6 + $0x40] sm:$0xf]
      %v9833 = vld [vmem:[%s6 + $0x44] sm:$0xf]
      %v9834 = vld [vmem:[%s6 + $0x48] sm:$0xf]
      %v9835 = vld [vmem:[%s6 + $0x4c] sm:$0xf]
      %v9836 = vld [vmem:[%s6 + $0x50] sm:$0xf]
      %v9837 = vld [vmem:[%s6 + $0x54] sm:$0xf]
      %v9838 = vld [vmem:[%s6 + $0x58] sm:$0xf]
      %v9839 = vld [vmem:[%s6 + $0x5c] sm:$0xf]
      %v9840 = vld [vmem:[%s6 + $0x60] sm:$0xf]
      %v9841 = vld [vmem:[%s6 + $0x64] sm:$0xf]
      %v9842 = vld [vmem:[%s6 + $0x68] sm:$0xf]
      %v9843 = vld [vmem:[%s6 + $0x6c] sm:$0xf]
      %v9844 = vld [vmem:[%s6 + $0x70] sm:$0xf]
      %v9845 = vld [vmem:[%s6 + $0x74] sm:$0xf]
      %v9846 = vld [vmem:[%s6 + $0x78] sm:$0xf]
      %v9847 = vld [vmem:[%s6 + $0x7c] sm:$0xf]
      %v9848 = vld [vmem:[%s7] sm:$0x1]
      %v9850 = vlaneseq
      %v9851 = vshrl.u32 %v9850, 7
      %v9852 = vsub.s32 0, %v9851
      %v9853 = vrot.slane %v9848, %v9852
      %v9887 = vunpack.c.l.b16 %v9816
      %v9888 = vunpack.c.l.b16 %v9817
      %v9889 = vunpack.c.l.b16 %v9818
      %v9890 = vunpack.c.l.b16 %v9819
      %v9891 = vunpack.c.l.b16 %v9820
      %v9892 = vunpack.c.l.b16 %v9821
      %v9893 = vunpack.c.l.b16 %v9822
      %v9894 = vunpack.c.l.b16 %v9823
      %v9895 = vunpack.c.l.b16 %v9824
      %v9896 = vunpack.c.l.b16 %v9825
      %v9897 = vunpack.c.l.b16 %v9826
      %v9898 = vunpack.c.l.b16 %v9827
      %v9899 = vunpack.c.l.b16 %v9828
      %v9900 = vunpack.c.l.b16 %v9829
      %v9901 = vunpack.c.l.b16 %v9830
      %v9902 = vunpack.c.l.b16 %v9831
      %v9903 = vunpack.c.l.b16 %v9832
      %v9904 = vunpack.c.l.b16 %v9833
      %v9905 = vunpack.c.l.b16 %v9834
      %v9906 = vunpack.c.l.b16 %v9835
      %v9907 = vunpack.c.l.b16 %v9836
      %v9908 = vunpack.c.l.b16 %v9837
      %v9909 = vunpack.c.l.b16 %v9838
      %v9910 = vunpack.c.l.b16 %v9839
      %v9911 = vunpack.c.l.b16 %v9840
      %v9912 = vunpack.c.l.b16 %v9841
      %v9913 = vunpack.c.l.b16 %v9842
      %v9914 = vunpack.c.l.b16 %v9843
      %v9915 = vunpack.c.l.b16 %v9844
      %v9916 = vunpack.c.l.b16 %v9845
      %v9917 = vunpack.c.l.b16 %v9846
      %v9918 = vunpack.c.l.b16 %v9847
      %v9919 = vpack.c.b16 %v9888, %v9887
      %v9920 = vpack.c.b16 %v9890, %v9889
      %v9921 = vpack.c.b16 %v9892, %v9891
      %v9922 = vpack.c.b16 %v9894, %v9893
      %v9923 = vpack.c.b16 %v9896, %v9895
      %v9924 = vpack.c.b16 %v9898, %v9897
      %v9925 = vpack.c.b16 %v9900, %v9899
      %v9926 = vpack.c.b16 %v9902, %v9901
      %v9927 = vpack.c.b16 %v9904, %v9903
      %v9928 = vpack.c.b16 %v9906, %v9905
      %v9929 = vpack.c.b16 %v9908, %v9907
      %v9930 = vpack.c.b16 %v9910, %v9909
      %v9931 = vpack.c.b16 %v9912, %v9911
      %v9932 = vpack.c.b16 %v9914, %v9913
      %v9933 = vpack.c.b16 %v9916, %v9915
      %v9934 = vpack.c.b16 %v9918, %v9917
      %9951 = vmatprep.subr.bf16.mxu0 0
      %9952 = vmatpush1.bf16.msra.mxu0 %v9926
      %9953 = vmatprep.subr.bf16.mxu0 0
      %9954 = vmatpush1.bf16.msra.mxu0 %v9925
      %9955 = vmatprep.subr.bf16.mxu0 0
      %9956 = vmatpush1.bf16.msra.mxu0 %v9924
      %9957 = vmatprep.subr.bf16.mxu0 0
      %9958 = vmatpush1.bf16.msra.mxu0 %v9923
      %9959 = vmatprep.subr.bf16.mxu0 0
      %9960 = vmatpush1.bf16.msra.mxu0 %v9922
      %9961 = vmatprep.subr.bf16.mxu0 0
      %9962 = vmatpush1.bf16.msra.mxu0 %v9921
      %9963 = vmatprep.subr.bf16.mxu0 0
      %9964 = vmatpush1.bf16.msra.mxu0 %v9920
      %9965 = vmatprep.subr.bf16.mxu0 0
      %9966 = vmatpush1.bf16.msra.mxu0 %v9919
      %9967 = vmatprep.subr.bf16.mxu0 0
      %9968 = vmatpush2.bf16.msra.mxu0 %v9934
      %9969 = vmatprep.subr.bf16.mxu0 0
      %9970 = vmatpush2.bf16.msra.mxu0 %v9933
      %9971 = vmatprep.subr.bf16.mxu0 0
      %9972 = vmatpush2.bf16.msra.mxu0 %v9932
      %9973 = vmatprep.subr.bf16.mxu0 0
      %9974 = vmatpush2.bf16.msra.mxu0 %v9931
      %9975 = vmatprep.subr.bf16.mxu0 0
      %9976 = vmatpush2.bf16.msra.mxu0 %v9930
      %9977 = vmatprep.subr.bf16.mxu0 0
      %9978 = vmatpush2.bf16.msra.mxu0 %v9929
      %9979 = vmatprep.subr.bf16.mxu0 0
      %9980 = vmatpush2.bf16.msra.mxu0 %v9928
      %9981 = vmatprep.subr.bf16.mxu0 0
      %9982 = vmatpush2.bf16.msra.mxu0 %v9927
      %9983 = vmatprep.mubr.bf16.mxu0 %v9805
      %9984 = vmatmul.mubr.bf16.gmra.mxu0 %v9804
      %v9985 = vpop.f32.mrf.mxu0
      %v9986 = vadd.f32 %v9853, %v9985
      %v9987 = vpop.f32.mrf.mxu0
      %v9988 = vpop.f32.mrf.mxu0
      %v9989 = vadd.f32 %v9853, %v9988
      %v9990 = vpop.f32.mrf.mxu0
      %9991 = vmatprep.mubr.bf16.mxu0 %v9807
      %9992 = vmatmul.mubr.bf16.gmra.mxu0 %v9806
      %v9993 = vpop.f32.mrf.mxu0
      %v9994 = vadd.f32 %v9853, %v9993
      %v9995 = vpop.f32.mrf.mxu0
      %v9996 = vpop.f32.mrf.mxu0
      %v9997 = vadd.f32 %v9853, %v9996
      %v9998 = vpop.f32.mrf.mxu0
      %9999 = vmatprep.mubr.bf16.mxu0 %v9809
      %10000 = vmatmul.mubr.bf16.gmra.mxu0 %v9808
      %v10001 = vpop.f32.mrf.mxu0
      %v10002 = vadd.f32 %v9853, %v10001
      %v10003 = vpop.f32.mrf.mxu0
      %v10004 = vpop.f32.mrf.mxu0
      %v10005 = vadd.f32 %v9853, %v10004
      %v10006 = vpop.f32.mrf.mxu0
      %10007 = vmatprep.mubr.bf16.mxu0 %v9811
      %10008 = vmatmul.mubr.bf16.gmra.mxu0 %v9810
      %v10009 = vpop.f32.mrf.mxu0
      %v10010 = vadd.f32 %v9853, %v10009
      %v10011 = vpop.f32.mrf.mxu0
      %v10012 = vpop.f32.mrf.mxu0
      %v10013 = vadd.f32 %v9853, %v10012
      %v10014 = vpop.f32.mrf.mxu0
      %10015 = vmatprep.mubr.bf16.mxu0 %v9813
      %10016 = vmatmul.mubr.bf16.gmra.mxu0 %v9812
      %v10017 = vpop.f32.mrf.mxu0
      %v10018 = vadd.f32 %v9853, %v10017
      %v10019 = vpop.f32.mrf.mxu0
      %v10020 = vpop.f32.mrf.mxu0
      %v10021 = vadd.f32 %v9853, %v10020
      %v10022 = vpop.f32.mrf.mxu0
      %10023 = vmatprep.mubr.bf16.mxu0 %v9815
      %10024 = vmatmul.mubr.bf16.gmra.mxu0 %v9814
      %v10025 = vpop.f32.mrf.mxu0
      %v10026 = vadd.f32 %v9853, %v10025
      %v10027 = vpop.f32.mrf.mxu0
      %v10028 = vpop.f32.mrf.mxu0
      %v10029 = vadd.f32 %v9853, %v10028
      %v10030 = vpop.f32.mrf.mxu0
      %10031 = vdwg.mxu0
      %10032 = vst [vmem:[%s305] sm:$0xff] %v9986
      %10033 = vst [vmem:[%s305 + $0x8] sm:$0xff] %v9989
      %10034 = vst [vmem:[%s305 + $0x10] sm:$0xff] %v9994
      %10035 = vst [vmem:[%s305 + $0x18] sm:$0xff] %v9997
      %10036 = vst [vmem:[%s305 + $0x20] sm:$0xff] %v10002
      %10037 = vst [vmem:[%s305 + $0x28] sm:$0xff] %v10005
      %10038 = vst [vmem:[%s305 + $0x30] sm:$0xff] %v10010
      %10039 = vst [vmem:[%s305 + $0x38] sm:$0xff] %v10013
      %10040 = vst [vmem:[%s305 + $0x40] sm:$0xff] %v10018
      %10041 = vst [vmem:[%s305 + $0x48] sm:$0xff] %v10021
      %10042 = vst [vmem:[%s305 + $0x50] sm:$0xff] %v10026
      %10043 = vst [vmem:[%s305 + $0x58] sm:$0xff] %v10029
      %p10044 = scmp.lt.s32.totalorder %s19, 1
      %s10045 = scalar_select %p10044, %s19, 1
      %s10046 = smul.addr %s10045, 12
      %s10047 = smul.addr %s10046, 8
      %s10048 = scalar_lea.vmem %s8, %s10047
      // Predicated region
      $region53: #{decoder_forward.1} parent=51 // pred_check
        %p10049 = pneg %p210
      $region54: #{decoder_forward.1} parent=51 // pred_check_branch
        %10051 = sbr.rel (%p10049) target = $region56
      $region55: #{decoder_forward.1} parent=51 // pred_region
        _
      $region56: #{decoder_forward.1} parent=51 // pred_fallthru
        _
    $region52: #{decoder_forward.1} parent=5 // pred_fallthru
      _
    %p10052 = scmp.le.s32.totalorder 2, %s14
    // Predicated region
    $region57: #{decoder_forward.1} parent=5 // pred_check
      %p10053 = pneg %p10052
    $region58: #{decoder_forward.1} parent=5 // pred_check_branch
      %10055 = sbr.rel (%p10053) target = $region60
    $region59: #{decoder_forward.1} parent=5 // pred_region
      %s10056 = ssub.s32 %s14, 2
      // Predicated region
      $region61: #{decoder_forward.1} parent=59 // pred_check
        %p10057 = pneg %p216
      $region62: #{decoder_forward.1} parent=59 // pred_check_branch
        %10059 = sbr.rel (%p10057) target = $region64
      $region63: #{decoder_forward.1} parent=59 // pred_region
        %p10060 = scmp.lt.s32.totalorder %s20, 1
        %s10061 = scalar_select %p10060, %s20, 1
        %s10062 = smul.addr %s10061, 12
        %s10063 = smul.addr %s10062, 8
        %s10064 = scalar_lea.vmem %s8, %s10063
      $region64: #{decoder_forward.1} parent=59 // pred_fallthru
        _
    $region60: #{decoder_forward.1} parent=5 // pred_fallthru
      _
  $region6: #{decoder_forward.1} parent=0 // loop_footer
    %s18 = sadd.s32 1, %s14
  $region7: #{decoder_forward.1} parent=0 // loop_footer_branch
    %13 = sbr.rel target = $region3
  $region8: #{decoder_forward.1} parent=0 // loop_exit
    _

</llo_original>
